<compile_context>
chip_gen: v6e
topology: v6e:2x2x1
jax: 0.10.0
libtpu: 0.0.40
codegen_flags: <defaults>
</compile_context>

<pallas_src>
import functools
import math

import jax
import jax.numpy as jnp
from jax.experimental import pallas as pl
from jax.experimental.pallas import tpu as pltpu

F32 = jnp.float32
MXU_DTYPE = jnp.bfloat16     # MXU operand dtype; accumulation is always f32
VMEM = pl.BlockSpec(memory_space=pltpu.MemorySpace.VMEM)
SMEM = pl.BlockSpec(memory_space=pltpu.MemorySpace.SMEM)
NEG_INF = float(jnp.finfo(jnp.float32).min)


def _ln(x, g, b, eps):
    """LayerNorm in f32 on a (rows, D) tile; g/b are (1, D)."""
    mu = jnp.mean(x, axis=-1, keepdims=True)
    var = jnp.mean(jnp.square(x - mu), axis=-1, keepdims=True)
    return (x - mu) * jax.lax.rsqrt(var + eps) * g + b


# ------------------- fused residual attention sub-block -------------------

def _attn_block_kernel(*refs, n_heads, causal, eps, has_pre):
    if has_pre:
        (x_ref, pre_ref, g_ref, b_ref, wqkv_ref, bqkv_ref,
         wo_ref, bo_ref, o_ref) = refs
    else:
        (x_ref, g_ref, b_ref, wqkv_ref, bqkv_ref,
         wo_ref, bo_ref, o_ref) = refs
        pre_ref = None

    x = x_ref[0].astype(jnp.float32)                       # (S, D)
    if pre_ref is not None:                                # folded pos-emb add
        x = x + pre_ref[...].astype(jnp.float32)
    S, D = x.shape
    dh = D // n_heads
    scale = 1.0 / math.sqrt(dh)

    y = _ln(x, g_ref[...], b_ref[...], eps)
    # single fused QKV projection (bf16 MXU operands, f32 accumulation)
    qkv = jnp.dot(y.astype(MXU_DTYPE), wqkv_ref[...].astype(MXU_DTYPE),
                  preferred_element_type=jnp.float32) + bqkv_ref[...]

    if causal:
        row = jax.lax.broadcasted_iota(jnp.int32, (S, S), 0)
        col = jax.lax.broadcasted_iota(jnp.int32, (S, S), 1)
        keep = col <= row

    acc = jnp.zeros((S, D), jnp.float32)
    for h in range(n_heads):                               # static unroll
        q = qkv[:, h * dh:(h + 1) * dh] * scale            # scale folded into q
        k = qkv[:, D + h * dh:D + (h + 1) * dh]
        v = qkv[:, 2 * D + h * dh:2 * D + (h + 1) * dh]
        # scores: contract last dims (no explicit transpose materialized)
        s = jax.lax.dot_general(q.astype(MXU_DTYPE), k.astype(MXU_DTYPE),
                                (((1,), (1,)), ((), ())),
                                preferred_element_type=jnp.float32)
        if causal:
            s = jnp.where(keep, s, NEG_INF)
        m = jnp.max(s, axis=-1, keepdims=True)             # f32 softmax stats
        p = jnp.exp(s - m)
        inv_l = pl.reciprocal(jnp.sum(p, axis=-1, keepdims=True), approx=True)
        ctx = jnp.dot(p.astype(MXU_DTYPE), v.astype(MXU_DTYPE),
                      preferred_element_type=jnp.float32) * inv_l
        # out-projection fused per head: o @ Wo == sum_h ctx_h @ Wo[h*dh:(h+1)*dh]
        wo_h = wo_ref[h * dh:(h + 1) * dh, :]
        acc = acc + jnp.dot(ctx.astype(MXU_DTYPE), wo_h.astype(MXU_DTYPE),
                            preferred_element_type=jnp.float32)

    # residual folded into the kernel output
    o_ref[0] = (x + acc + bo_ref[...]).astype(o_ref.dtype)


def pallas_attn_block(x, p, n_heads, causal, pre_add=None, eps=1e-5):
    """x: [B, S, D]  ->  x(+pre_add) + MHA(LN1(x(+pre_add))), one kernel."""
    B, S, D = x.shape
    a = p["attn"]

    x_spec = pl.BlockSpec((1, S, D), lambda b: (b, 0, 0))

    def rep(shape):                                        # broadcast operand
        return pl.BlockSpec(shape, lambda b: (0, 0))

    args = [x]
    in_specs = [x_spec]
    if pre_add is not None:
        args.append(pre_add.astype(x.dtype))
        in_specs.append(rep((S, D)))
    args += [p["ln1_g"].reshape(1, D), p["ln1_b"].reshape(1, D),
             a["in_w"], a["in_b"].reshape(1, 3 * D),
             a["out_w"], a["out_b"].reshape(1, D)]
    in_specs += [rep((1, D)), rep((1, D)),
                 rep((D, 3 * D)), rep((1, 3 * D)),
                 rep((D, D)), rep((1, D))]

    return pl.pallas_call(
        functools.partial(_attn_block_kernel, n_heads=n_heads, causal=causal,
                          eps=eps, has_pre=pre_add is not None),
        out_shape=jax.ShapeDtypeStruct((B, S, D), x.dtype),
        grid=(B,),
        in_specs=in_specs,
        out_specs=x_spec,
        compiler_params=pltpu.CompilerParams(dimension_semantics=("parallel",)),
    )(*args)


# ----------------------- fused residual MLP sub-block -----------------------

def _mlp_block_kernel(x_ref, g_ref, b_ref, w1_ref, b1_ref, w2_ref, b2_ref,
                      o_ref, *, eps):
    x = x_ref[...].astype(jnp.float32)                     # (tm, D)
    y = _ln(x, g_ref[...], b_ref[...], eps)
    h = jnp.dot(y.astype(MXU_DTYPE), w1_ref[...].astype(MXU_DTYPE),
                preferred_element_type=jnp.float32) + b1_ref[...]
    h = h * jax.nn.sigmoid(1.702 * h)                      # QuickGELU in f32
    out = jnp.dot(h.astype(MXU_DTYPE), w2_ref[...].astype(MXU_DTYPE),
                  preferred_element_type=jnp.float32) + b2_ref[...]
    o_ref[...] = (x + out).astype(o_ref.dtype)             # residual folded in


def pallas_mlp_block(x, p, eps=1e-5, row_tile=256):
    B, S, D = x.shape
    M = B * S
    Dh = p["mlp_w1"].shape[1]
    x2 = x.reshape(M, D)
    tm = M if M <= row_tile else row_tile                  # row-tiled grid
    grid = (pl.cdiv(M, tm),)

    def rep(shape):
        return pl.BlockSpec(shape, lambda i: (0, 0))

    out = pl.pallas_call(
        functools.partial(_mlp_block_kernel, eps=eps),
        out_shape=jax.ShapeDtypeStruct((M, D), x.dtype),
        grid=grid,
        in_specs=[pl.BlockSpec((tm, D), lambda i: (i, 0)),
                  rep((1, D)), rep((1, D)),
                  rep((D, Dh)), rep((1, Dh)),
                  rep((Dh, D)), rep((1, D))],
        out_specs=pl.BlockSpec((tm, D), lambda i: (i, 0)),
        compiler_params=pltpu.CompilerParams(dimension_semantics=("parallel",)),
    )(x2, p["ln2_g"].reshape(1, D), p["ln2_b"].reshape(1, D),
      p["mlp_w1"], p["mlp_b1"].reshape(1, Dh),
      p["mlp_w2"], p["mlp_b2"].reshape(1, D))
    return out.reshape(B, S, D)


# ------------- fused visual stem: patch matmul + cls + pos + ln_pre -------------

def _visual_embed_kernel(patch_ref, wp_ref, cls_ref, pos_ref, g_ref, b_ref,
                         o_ref, *, eps):
    patches = patch_ref[0].astype(jnp.float32)             # (NP, C*P*P)
    emb = jnp.dot(patches.astype(MXU_DTYPE), wp_ref[...].astype(MXU_DTYPE),
                  preferred_element_type=jnp.float32)      # (NP, width)
    pos = pos_ref[...].astype(jnp.float32)                 # (NP+1, width)
    g = g_ref[...]
    b = b_ref[...]
    cls_row = cls_ref[...].astype(jnp.float32) + pos[0:1, :]
    pat_rows = emb + pos[1:, :]
    o_ref[0, 0:1, :] = _ln(cls_row, g, b, eps).astype(o_ref.dtype)
    o_ref[0, 1:, :] = _ln(pat_rows, g, b, eps).astype(o_ref.dtype)


def pallas_visual_embed(patches, p, width, eps=1e-5):
    B, NP, CPP = patches.shape
    S = NP + 1

    def rep(shape):
        return pl.BlockSpec(shape, lambda b: (0, 0))

    return pl.pallas_call(
        functools.partial(_visual_embed_kernel, eps=eps),
        out_shape=jax.ShapeDtypeStruct((B, S, width), patches.dtype),
        grid=(B,),
        in_specs=[pl.BlockSpec((1, NP, CPP), lambda b: (b, 0, 0)),
                  rep((CPP, width)), rep((1, width)), rep((S, width)),
                  rep((1, width)), rep((1, width))],
        out_specs=pl.BlockSpec((1, S, width), lambda b: (b, 0, 0)),
        compiler_params=pltpu.CompilerParams(dimension_semantics=("parallel",)),
    )(patches, p["patch_w"], p["class_emb"].reshape(1, width), p["pos_emb"],
      p["ln_pre_g"].reshape(1, width), p["ln_pre_b"].reshape(1, width))


# -------------------- fused LN + projection (encoder heads) --------------------

def _ln_linear_kernel(x_ref, g_ref, b_ref, w_ref, o_ref, *, eps):
    x = x_ref[...].astype(jnp.float32)
    y = _ln(x, g_ref[...], b_ref[...], eps)
    o_ref[...] = jnp.dot(y.astype(MXU_DTYPE), w_ref[...].astype(MXU_DTYPE),
                         preferred_element_type=jnp.float32).astype(o_ref.dtype)


def pallas_ln_linear(x, g, b, w, eps=1e-5):
    M, D = x.shape
    N = w.shape[1]
    return pl.pallas_call(
        functools.partial(_ln_linear_kernel, eps=eps),
        out_shape=jax.ShapeDtypeStruct((M, N), x.dtype),
        in_specs=[VMEM, VMEM, VMEM, VMEM],
        out_specs=VMEM,
    )(x, g.reshape(1, D), b.reshape(1, D), w)


# --------------------- CLIP cosine-similarity logits kernel ---------------------

def _logits_kernel(img_ref, txt_ref, scale_ref, o_ref):
    img = img_ref[...].astype(jnp.float32)
    txt = txt_ref[...].astype(jnp.float32)
    img = img * jax.lax.rsqrt(jnp.sum(img * img, axis=-1, keepdims=True))
    txt = txt * jax.lax.rsqrt(jnp.sum(txt * txt, axis=-1, keepdims=True))
    scale = jnp.exp(scale_ref[0, 0])                       # logit_scale.exp()
    logits = jax.lax.dot_general(img, txt, (((1,), (1,)), ((), ())),
                                 preferred_element_type=jnp.float32)
    o_ref[...] = (scale * logits).astype(o_ref.dtype)


def pallas_clip_logits(img_feats, txt_feats, logit_scale):
    B = img_feats.shape[0]
    N = txt_feats.shape[0]
    # TODO(synk): for large n_cls pad N to a multiple of 128 lanes; at n_cls=3
    # the single masked store is negligible.
    return pl.pallas_call(
        _logits_kernel,
        out_shape=jax.ShapeDtypeStruct((B, N), F32),
        in_specs=[VMEM, VMEM, SMEM],
        out_specs=VMEM,
    )(img_feats, txt_feats, logit_scale.reshape(1, 1))


# ------------------------------- CLIP sub-modules -------------------------------

def image_encoder(image, p, cfg):
    # image: NCHW, like PyTorch.
    B, C, H, W = image.shape
    P = cfg["patch"]
    nh, nw = H // P, W // P
    width = cfg["width"]
    # patchify (pure layout glue) == Conv2d(kernel=P, stride=P, bias=False)
    patches = (image.reshape(B, C, nh, P, nw, P)
                    .transpose(0, 2, 4, 1, 3, 5)
                    .reshape(B, nh * nw, C * P * P))
    # fused: patch matmul + CLS concat + pos add + ln_pre
    x = pallas_visual_embed(patches, p, width)
    for blk in p["blocks"]:
        x = pallas_attn_block(x, blk, cfg["heads"], causal=False)
        x = pallas_mlp_block(x, blk)
    cls_tok = x[:, 0]                                      # CLS token (glue)
    return pallas_ln_linear(cls_tok, p["ln_post_g"], p["ln_post_b"], p["proj"])


def text_encoder(prompts, tokenized_prompts, p, cfg):
    # prompts: frozen token-embedding buffer [n_cls, L, ctx_dim]
    N, L, D = prompts.shape
    x = prompts
    for i, blk in enumerate(p["blocks"]):
        pre = p["pos_emb"] if i == 0 else None             # pos-add folded in
        x = pallas_attn_block(x, blk, cfg["heads"], causal=True, pre_add=pre)
        x = pallas_mlp_block(x, blk)
    # LayerNorm is per-token, so gather EOT first, then fused ln_final + proj.
    eot = jnp.argmax(tokenized_prompts, axis=-1)
    x_eot = x[jnp.arange(N), eot]                          # (N, D) glue gather
    return pallas_ln_linear(x_eot, p["ln_final_g"], p["ln_final_b"],
                            p["text_proj"])


def custom_clip_forward(image, params, cfg):
    # doms_pro = False branch of CustomCLIP.forward
    image_features = image_encoder(image, params["visual"], cfg["visual"])
    # PromptLearner.forward ignores im_features and returns the frozen buffer;
    # text features are image-independent, so compute them once (the PyTorch
    # per-image loop recomputes identical text_features each iteration, and
    # the stacked result equals one batched matmul).
    prompts = params["token_embedding"]
    text_features = text_encoder(prompts, params["tokenized_prompts"],
                                 params["text"], cfg["text"])
    return pallas_clip_logits(image_features, text_features,
                              params["logit_scale"])       # [B, n_cls]


# -------------------------------- parameter init --------------------------------

def _normal(key, shape, scale=0.02):
    return scale * jax.random.normal(key, shape, dtype=F32)


def _init_block(key, width):
    ks = jax.random.split(key, 4)
    return {
        "ln1_g": jnp.ones((width,), F32), "ln1_b": jnp.zeros((width,), F32),
        "ln2_g": jnp.ones((width,), F32), "ln2_b": jnp.zeros((width,), F32),
        "attn": {
            "in_w": _normal(ks[0], (width, 3 * width)),
            "in_b": jnp.zeros((3 * width,), F32),
            "out_w": _normal(ks[1], (width, width)),
            "out_b": jnp.zeros((width,), F32),
        },
        "mlp_w1": _normal(ks[2], (width, 4 * width)),
        "mlp_b1": jnp.zeros((4 * width,), F32),
        "mlp_w2": _normal(ks[3], (4 * width, width)),
        "mlp_b2": jnp.zeros((width,), F32),
    }


def init_custom_clip(key):
    # Small synthetic CLIP consistent with the module's shape relationships.
    vcfg = dict(patch=8, width=32, heads=4, layers=2, vis_dim=32)
    tcfg = dict(ctx_dim=32, heads=4, layers=2, seq_len=8, n_cls=3, embed_dim=32)
    C, H, W = 3, 16, 16
    n_patches = (H // vcfg["patch"]) * (W // vcfg["patch"])
    ks = iter(jax.random.split(key, 32))

    visual = {
        "patch_w": _normal(next(ks), (C * vcfg["patch"] ** 2, vcfg["width"])),
        "class_emb": _normal(next(ks), (vcfg["width"],)),
        "pos_emb": _normal(next(ks), (n_patches + 1, vcfg["width"])),
        "ln_pre_g": jnp.ones((vcfg["width"],), F32),
        "ln_pre_b": jnp.zeros((vcfg["width"],), F32),
        "blocks": [_init_block(next(ks), vcfg["width"]) for _ in range(vcfg["layers"])],
        "ln_post_g": jnp.ones((vcfg["width"],), F32),
        "ln_post_b": jnp.zeros((vcfg["width"],), F32),
        "proj": _normal(next(ks), (vcfg["width"], vcfg["vis_dim"])),
    }
    text = {
        "pos_emb": _normal(next(ks), (tcfg["seq_len"], tcfg["ctx_dim"])),
        "blocks": [_init_block(next(ks), tcfg["ctx_dim"]) for _ in range(tcfg["layers"])],
        "ln_final_g": jnp.ones((tcfg["ctx_dim"],), F32),
        "ln_final_b": jnp.zeros((tcfg["ctx_dim"],), F32),
        "text_proj": _normal(next(ks), (tcfg["ctx_dim"], tcfg["embed_dim"])),
    }

    # Synthetic "tokenized prompts" (SOT=49406, EOT=49407 is the per-row argmax)
    # and the frozen token-embedding buffer produced at PromptLearner.__init__.
    # TODO(synk): real tokenizer + clip.tokenize happen at __init__ time on host;
    # here they are replaced by a deterministic synthetic buffer.
    tok_rows = []
    for i in range(tcfg["n_cls"]):
        length = 4 + i
        row = [49406] + [330 + i] * (length - 2) + [49407] + [0] * (tcfg["seq_len"] - length)
        tok_rows.append(row)
    tokenized_prompts = jnp.array(tok_rows, dtype=jnp.int32)
    token_embedding = _normal(next(ks), (tcfg["n_cls"], tcfg["seq_len"], tcfg["ctx_dim"]))

    params = {
        "visual": visual,
        "text": text,
        "token_embedding": token_embedding,
        "tokenized_prompts": tokenized_prompts,
        "logit_scale": jnp.array(math.log(1.0 / 0.07), dtype=F32),
    }
    cfg = {"visual": vcfg, "text": tcfg}
    return params, cfg


# -------------------------------------- main --------------------------------------

if __name__ == "__main__":
    key = jax.random.PRNGKey(0)
    k_img, k_par = jax.random.split(key)
    image = jax.random.normal(k_img, (2, 3, 16, 16), dtype=F32)   # NCHW
    params, cfg = init_custom_clip(k_par)

    fwd = jax.jit(lambda img, prm: custom_clip_forward(img, prm, cfg))
    logits = fwd(image, params)
    jax.block_until_ready(logits)

    assert logits.shape == (2, cfg["text"]["n_cls"])
    assert bool(jnp.all(jnp.isfinite(logits)))
    print("KERNEL_OK")
</pallas_src>

<mosaic_0001>
module attributes {stable_mosaic.version = 11 : i64} {
  func.func @_visual_embed_kernel(%arg0: i32, %arg1: memref<1x4x192xf32, #tpu.memory_space<vmem>>, %arg2: memref<192x32xf32, #tpu.memory_space<vmem>>, %arg3: memref<1x32xf32, #tpu.memory_space<vmem>>, %arg4: memref<5x32xf32, #tpu.memory_space<vmem>>, %arg5: memref<1x32xf32, #tpu.memory_space<vmem>>, %arg6: memref<1x32xf32, #tpu.memory_space<vmem>>, %arg7: memref<1x5x32xf32, #tpu.memory_space<vmem>>) attributes {dimension_semantics = [#tpu.dimension_semantics<parallel>], iteration_bounds = array<i64: 2>, scalar_prefetch = 0 : i64, scratch_operands = 0 : i64, tpu.core_type = #tpu.core_type<tc>, window_params = [{transform_indices = @transform_0, window_bounds = array<i64: 1, 4, 192>}, {pipeline_mode = #tpu.pipeline_mode<synchronous>, transform_indices = @transform_1, window_bounds = array<i64: 192, 32>}, {pipeline_mode = #tpu.pipeline_mode<synchronous>, transform_indices = @transform_2, window_bounds = array<i64: 1, 32>}, {pipeline_mode = #tpu.pipeline_mode<synchronous>, transform_indices = @transform_3, window_bounds = array<i64: 5, 32>}, {pipeline_mode = #tpu.pipeline_mode<synchronous>, transform_indices = @transform_4, window_bounds = array<i64: 1, 32>}, {pipeline_mode = #tpu.pipeline_mode<synchronous>, transform_indices = @transform_5, window_bounds = array<i64: 1, 32>}, {transform_indices = @transform_6, window_bounds = array<i64: 1, 5, 32>}]} {
    %c0 = arith.constant 0 : index
    %c0_0 = arith.constant 0 : index
    %c0_1 = arith.constant 0 : index
    %0 = vector.load %arg1[%c0, %c0_0, %c0_1] : memref<1x4x192xf32, #tpu.memory_space<vmem>>, vector<1x4x192xf32>
    %1 = vector.shape_cast %0 : vector<1x4x192xf32> to vector<4x192xf32>
    %2 = arith.truncf %1 : vector<4x192xf32> to vector<4x192xbf16>
    %c0_2 = arith.constant 0 : index
    %c0_3 = arith.constant 0 : index
    %3 = vector.load %arg2[%c0_2, %c0_3] : memref<192x32xf32, #tpu.memory_space<vmem>>, vector<192x32xf32>
    %4 = arith.truncf %3 : vector<192x32xf32> to vector<192x32xbf16>
    %cst = arith.constant dense<0.000000e+00> : vector<4x32xf32>
    %5 = tpu.matmul %2, %4, %cst {dimension_numbers = #tpu.dot_dimension_numbers<[1], [0], [0], [1], [0, 0, 1, 1], [], []>} : vector<4x192xbf16>, vector<192x32xbf16>, vector<4x32xf32> -> vector<4x32xf32>
    %c0_4 = arith.constant 0 : index
    %c0_5 = arith.constant 0 : index
    %6 = vector.load %arg4[%c0_4, %c0_5] : memref<5x32xf32, #tpu.memory_space<vmem>>, vector<5x32xf32>
    %c0_6 = arith.constant 0 : index
    %c0_7 = arith.constant 0 : index
    %7 = vector.load %arg5[%c0_6, %c0_7] : memref<1x32xf32, #tpu.memory_space<vmem>>, vector<1x32xf32>
    %c0_8 = arith.constant 0 : index
    %c0_9 = arith.constant 0 : index
    %8 = vector.load %arg6[%c0_8, %c0_9] : memref<1x32xf32, #tpu.memory_space<vmem>>, vector<1x32xf32>
    %c0_10 = arith.constant 0 : index
    %c0_11 = arith.constant 0 : index
    %9 = vector.load %arg3[%c0_10, %c0_11] : memref<1x32xf32, #tpu.memory_space<vmem>>, vector<1x32xf32>
    %10 = vector.extract_strided_slice %6 {offsets = [0, 0], sizes = [1, 32], strides = [1, 1]} : vector<5x32xf32> to vector<1x32xf32>
    %11 = arith.addf %9, %10 : vector<1x32xf32>
    %12 = vector.extract_strided_slice %6 {offsets = [1, 0], sizes = [4, 32], strides = [1, 1]} : vector<5x32xf32> to vector<4x32xf32>
    %13 = arith.addf %5, %12 : vector<4x32xf32>
    %cst_12 = arith.constant dense<0.000000e+00> : vector<1xf32>
    %14 = vector.multi_reduction <add>, %11, %cst_12 [1] : vector<1x32xf32> to vector<1xf32>
    %15 = vector.shape_cast %14 : vector<1xf32> to vector<1x1xf32>
    %cst_13 = arith.constant 3.200000e+01 : f32
    %16 = vector.broadcast %cst_13 : f32 to vector<1x1xf32>
    %17 = arith.divf %15, %16 : vector<1x1xf32>
    %18 = vector.broadcast %17 : vector<1x1xf32> to vector<1x32xf32>
    %19 = arith.subf %11, %18 : vector<1x32xf32>
    %20 = arith.mulf %19, %19 : vector<1x32xf32>
    %cst_14 = arith.constant dense<0.000000e+00> : vector<1xf32>
    %21 = vector.multi_reduction <add>, %20, %cst_14 [1] : vector<1x32xf32> to vector<1xf32>
    %22 = vector.shape_cast %21 : vector<1xf32> to vector<1x1xf32>
    %cst_15 = arith.constant 3.200000e+01 : f32
    %23 = vector.broadcast %cst_15 : f32 to vector<1x1xf32>
    %24 = arith.divf %22, %23 : vector<1x1xf32>
    %25 = vector.broadcast %17 : vector<1x1xf32> to vector<1x32xf32>
    %26 = arith.subf %11, %25 : vector<1x32xf32>
    %cst_16 = arith.constant 9.99999974E-6 : f32
    %27 = vector.broadcast %cst_16 : f32 to vector<1x1xf32>
    %28 = arith.addf %24, %27 : vector<1x1xf32>
    %29 = math.rsqrt %28 : vector<1x1xf32>
    %30 = vector.broadcast %29 : vector<1x1xf32> to vector<1x32xf32>
    %31 = arith.mulf %26, %30 : vector<1x32xf32>
    %32 = arith.mulf %31, %7 : vector<1x32xf32>
    %33 = arith.addf %32, %8 : vector<1x32xf32>
    %c0_17 = arith.constant 0 : index
    %c0_18 = arith.constant 0 : index
    %c0_19 = arith.constant 0 : index
    %34 = vector.load %arg7[%c0_17, %c0_18, %c0_19] : memref<1x5x32xf32, #tpu.memory_space<vmem>>, vector<1x1x32xf32>
    %35 = vector.shape_cast %34 : vector<1x1x32xf32> to vector<1x32xf32>
    %36 = vector.shape_cast %33 : vector<1x32xf32> to vector<1x1x32xf32>
    tpu.vector_store %arg7[%c0_17, %c0_18, %c0_19], %36 {strides = array<i32>} : memref<1x5x32xf32, #tpu.memory_space<vmem>>, vector<1x1x32xf32>,
    %cst_20 = arith.constant dense<0.000000e+00> : vector<4xf32>
    %37 = vector.multi_reduction <add>, %13, %cst_20 [1] : vector<4x32xf32> to vector<4xf32>
    %38 = vector.shape_cast %37 : vector<4xf32> to vector<4x1xf32>
    %cst_21 = arith.constant 3.200000e+01 : f32
    %39 = vector.broadcast %cst_21 : f32 to vector<4x1xf32>
    %40 = arith.divf %38, %39 : vector<4x1xf32>
    %41 = vector.broadcast %40 : vector<4x1xf32> to vector<4x32xf32>
    %42 = arith.subf %13, %41 : vector<4x32xf32>
    %43 = arith.mulf %42, %42 : vector<4x32xf32>
    %cst_22 = arith.constant dense<0.000000e+00> : vector<4xf32>
    %44 = vector.multi_reduction <add>, %43, %cst_22 [1] : vector<4x32xf32> to vector<4xf32>
    %45 = vector.shape_cast %44 : vector<4xf32> to vector<4x1xf32>
    %cst_23 = arith.constant 3.200000e+01 : f32
    %46 = vector.broadcast %cst_23 : f32 to vector<4x1xf32>
    %47 = arith.divf %45, %46 : vector<4x1xf32>
    %48 = vector.broadcast %40 : vector<4x1xf32> to vector<4x32xf32>
    %49 = arith.subf %13, %48 : vector<4x32xf32>
    %cst_24 = arith.constant 9.99999974E-6 : f32
    %50 = vector.broadcast %cst_24 : f32 to vector<4x1xf32>
    %51 = arith.addf %47, %50 : vector<4x1xf32>
    %52 = math.rsqrt %51 : vector<4x1xf32>
    %53 = vector.broadcast %52 : vector<4x1xf32> to vector<4x32xf32>
    %54 = arith.mulf %49, %53 : vector<4x32xf32>
    %55 = vector.broadcast %7 : vector<1x32xf32> to vector<4x32xf32>
    %56 = arith.mulf %54, %55 : vector<4x32xf32>
    %57 = vector.broadcast %8 : vector<1x32xf32> to vector<4x32xf32>
    %58 = arith.addf %56, %57 : vector<4x32xf32>
    %c0_25 = arith.constant 0 : index
    %c1 = arith.constant 1 : index
    %c0_26 = arith.constant 0 : index
    %59 = vector.load %arg7[%c0_25, %c1, %c0_26] : memref<1x5x32xf32, #tpu.memory_space<vmem>>, vector<1x4x32xf32>
    %60 = vector.shape_cast %59 : vector<1x4x32xf32> to vector<4x32xf32>
    %61 = vector.shape_cast %58 : vector<4x32xf32> to vector<1x4x32xf32>
    tpu.vector_store %arg7[%c0_25, %c1, %c0_26], %61 {strides = array<i32>} : memref<1x5x32xf32, #tpu.memory_space<vmem>>, vector<1x4x32xf32>,
    return
  }
  func.func @transform_0(%arg0: i32) -> (i32, i32, i32) {
    %c0_i32 = arith.constant 0 : i32
    %c0_i32_0 = arith.constant 0 : i32
    %c0_i32_1 = arith.constant 0 : i32
    return %arg0, %c0_i32, %c0_i32_0 : i32, i32, i32
  }
  func.func @transform_1(%arg0: i32) -> (i32, i32) {
    %c0_i32 = arith.constant 0 : i32
    %c0_i32_0 = arith.constant 0 : i32
    %c0_i32_1 = arith.constant 0 : i32
    return %c0_i32, %c0_i32_0 : i32, i32
  }
  func.func @transform_2(%arg0: i32) -> (i32, i32) {
    %c0_i32 = arith.constant 0 : i32
    %c0_i32_0 = arith.constant 0 : i32
    %c0_i32_1 = arith.constant 0 : i32
    return %c0_i32, %c0_i32_0 : i32, i32
  }
  func.func @transform_3(%arg0: i32) -> (i32, i32) {
    %c0_i32 = arith.constant 0 : i32
    %c0_i32_0 = arith.constant 0 : i32
    %c0_i32_1 = arith.constant 0 : i32
    return %c0_i32, %c0_i32_0 : i32, i32
  }
  func.func @transform_4(%arg0: i32) -> (i32, i32) {
    %c0_i32 = arith.constant 0 : i32
    %c0_i32_0 = arith.constant 0 : i32
    %c0_i32_1 = arith.constant 0 : i32
    return %c0_i32, %c0_i32_0 : i32, i32
  }
  func.func @transform_5(%arg0: i32) -> (i32, i32) {
    %c0_i32 = arith.constant 0 : i32
    %c0_i32_0 = arith.constant 0 : i32
    %c0_i32_1 = arith.constant 0 : i32
    return %c0_i32, %c0_i32_0 : i32, i32
  }
  func.func @transform_6(%arg0: i32) -> (i32, i32, i32) {
    %c0_i32 = arith.constant 0 : i32
    %c0_i32_0 = arith.constant 0 : i32
    %c0_i32_1 = arith.constant 0 : i32
    return %arg0, %c0_i32, %c0_i32_0 : i32, i32, i32
  }
}

module attributes {stable_mosaic.version = 11 : i64} {
  func.func @_mlp_block_kernel(%arg0: i32, %arg1: memref<10x32xf32, #tpu.memory_space<vmem>>, %arg2: memref<1x32xf32, #tpu.memory_space<vmem>>, %arg3: memref<1x32xf32, #tpu.memory_space<vmem>>, %arg4: memref<32x128xf32, #tpu.memory_space<vmem>>, %arg5: memref<1x128xf32, #tpu.memory_space<vmem>>, %arg6: memref<128x32xf32, #tpu.memory_space<vmem>>, %arg7: memref<1x32xf32, #tpu.memory_space<vmem>>, %arg8: memref<10x32xf32, #tpu.memory_space<vmem>>) attributes {dimension_semantics = [#tpu.dimension_semantics<parallel>], iteration_bounds = array<i64: 1>, scalar_prefetch = 0 : i64, scratch_operands = 0 : i64, tpu.core_type = #tpu.core_type<tc>, window_params = [{transform_indices = @transform_0, window_bounds = array<i64: 10, 32>}, {pipeline_mode = #tpu.pipeline_mode<synchronous>, transform_indices = @transform_1, window_bounds = array<i64: 1, 32>}, {pipeline_mode = #tpu.pipeline_mode<synchronous>, transform_indices = @transform_2, window_bounds = array<i64: 1, 32>}, {pipeline_mode = #tpu.pipeline_mode<synchronous>, transform_indices = @transform_3, window_bounds = array<i64: 32, 128>}, {pipeline_mode = #tpu.pipeline_mode<synchronous>, transform_indices = @transform_4, window_bounds = array<i64: 1, 128>}, {pipeline_mode = #tpu.pipeline_mode<synchronous>, transform_indices = @transform_5, window_bounds = array<i64: 128, 32>}, {pipeline_mode = #tpu.pipeline_mode<synchronous>, transform_indices = @transform_6, window_bounds = array<i64: 1, 32>}, {transform_indices = @transform_7, window_bounds = array<i64: 10, 32>}]} {
    %c0 = arith.constant 0 : index
    %c0_0 = arith.constant 0 : index
    %0 = vector.load %arg1[%c0, %c0_0] : memref<10x32xf32, #tpu.memory_space<vmem>>, vector<10x32xf32>
    %c0_1 = arith.constant 0 : index
    %c0_2 = arith.constant 0 : index
    %1 = vector.load %arg2[%c0_1, %c0_2] : memref<1x32xf32, #tpu.memory_space<vmem>>, vector<1x32xf32>
    %c0_3 = arith.constant 0 : index
    %c0_4 = arith.constant 0 : index
    %2 = vector.load %arg3[%c0_3, %c0_4] : memref<1x32xf32, #tpu.memory_space<vmem>>, vector<1x32xf32>
    %cst = arith.constant dense<0.000000e+00> : vector<10xf32>
    %3 = vector.multi_reduction <add>, %0, %cst [1] : vector<10x32xf32> to vector<10xf32>
    %4 = vector.shape_cast %3 : vector<10xf32> to vector<10x1xf32>
    %cst_5 = arith.constant 3.200000e+01 : f32
    %5 = vector.broadcast %cst_5 : f32 to vector<10x1xf32>
    %6 = arith.divf %4, %5 : vector<10x1xf32>
    %7 = vector.broadcast %6 : vector<10x1xf32> to vector<10x32xf32>
    %8 = arith.subf %0, %7 : vector<10x32xf32>
    %9 = arith.mulf %8, %8 : vector<10x32xf32>
    %cst_6 = arith.constant dense<0.000000e+00> : vector<10xf32>
    %10 = vector.multi_reduction <add>, %9, %cst_6 [1] : vector<10x32xf32> to vector<10xf32>
    %11 = vector.shape_cast %10 : vector<10xf32> to vector<10x1xf32>
    %cst_7 = arith.constant 3.200000e+01 : f32
    %12 = vector.broadcast %cst_7 : f32 to vector<10x1xf32>
    %13 = arith.divf %11, %12 : vector<10x1xf32>
    %14 = vector.broadcast %6 : vector<10x1xf32> to vector<10x32xf32>
    %15 = arith.subf %0, %14 : vector<10x32xf32>
    %cst_8 = arith.constant 9.99999974E-6 : f32
    %16 = vector.broadcast %cst_8 : f32 to vector<10x1xf32>
    %17 = arith.addf %13, %16 : vector<10x1xf32>
    %18 = math.rsqrt %17 : vector<10x1xf32>
    %19 = vector.broadcast %18 : vector<10x1xf32> to vector<10x32xf32>
    %20 = arith.mulf %15, %19 : vector<10x32xf32>
    %21 = vector.broadcast %1 : vector<1x32xf32> to vector<10x32xf32>
    %22 = arith.mulf %20, %21 : vector<10x32xf32>
    %23 = vector.broadcast %2 : vector<1x32xf32> to vector<10x32xf32>
    %24 = arith.addf %22, %23 : vector<10x32xf32>
    %25 = arith.truncf %24 : vector<10x32xf32> to vector<10x32xbf16>
    %c0_9 = arith.constant 0 : index
    %c0_10 = arith.constant 0 : index
    %26 = vector.load %arg4[%c0_9, %c0_10] : memref<32x128xf32, #tpu.memory_space<vmem>>, vector<32x128xf32>
    %27 = arith.truncf %26 : vector<32x128xf32> to vector<32x128xbf16>
    %cst_11 = arith.constant dense<0.000000e+00> : vector<10x128xf32>
    %28 = tpu.matmul %25, %27, %cst_11 {dimension_numbers = #tpu.dot_dimension_numbers<[1], [0], [0], [1], [0, 0, 1, 1], [], []>} : vector<10x32xbf16>, vector<32x128xbf16>, vector<10x128xf32> -> vector<10x128xf32>
    %c0_12 = arith.constant 0 : index
    %c0_13 = arith.constant 0 : index
    %29 = vector.load %arg5[%c0_12, %c0_13] : memref<1x128xf32, #tpu.memory_space<vmem>>, vector<1x128xf32>
    %30 = vector.broadcast %29 : vector<1x128xf32> to vector<10x128xf32>
    %31 = arith.addf %28, %30 : vector<10x128xf32>
    %cst_14 = arith.constant 1.702000e+00 : f32
    %32 = vector.broadcast %cst_14 : f32 to vector<10x128xf32>
    %33 = arith.mulf %32, %31 : vector<10x128xf32>
    %34 = arith.negf %33 : vector<10x128xf32>
    %35 = math.exp %34 : vector<10x128xf32>
    %cst_15 = arith.constant 1.000000e+00 : f32
    %36 = vector.broadcast %cst_15 : f32 to vector<10x128xf32>
    %37 = arith.addf %36, %35 : vector<10x128xf32>
    %38 = arith.divf %36, %37 : vector<10x128xf32>
    %39 = arith.mulf %31, %38 : vector<10x128xf32>
    %40 = arith.truncf %39 : vector<10x128xf32> to vector<10x128xbf16>
    %c0_16 = arith.constant 0 : index
    %c0_17 = arith.constant 0 : index
    %41 = vector.load %arg6[%c0_16, %c0_17] : memref<128x32xf32, #tpu.memory_space<vmem>>, vector<128x32xf32>
    %42 = arith.truncf %41 : vector<128x32xf32> to vector<128x32xbf16>
    %cst_18 = arith.constant dense<0.000000e+00> : vector<10x32xf32>
    %43 = tpu.matmul %40, %42, %cst_18 {dimension_numbers = #tpu.dot_dimension_numbers<[1], [0], [0], [1], [0, 0, 1, 1], [], []>} : vector<10x128xbf16>, vector<128x32xbf16>, vector<10x32xf32> -> vector<10x32xf32>
    %c0_19 = arith.constant 0 : index
    %c0_20 = arith.constant 0 : index
    %44 = vector.load %arg7[%c0_19, %c0_20] : memref<1x32xf32, #tpu.memory_space<vmem>>, vector<1x32xf32>
    %45 = vector.broadcast %44 : vector<1x32xf32> to vector<10x32xf32>
    %46 = arith.addf %43, %45 : vector<10x32xf32>
    %47 = arith.addf %0, %46 : vector<10x32xf32>
    %c0_21 = arith.constant 0 : index
    %c0_22 = arith.constant 0 : index
    %48 = vector.load %arg8[%c0_21, %c0_22] : memref<10x32xf32, #tpu.memory_space<vmem>>, vector<10x32xf32>
    tpu.vector_store %arg8[%c0_21, %c0_22], %47 {strides = array<i32>} : memref<10x32xf32, #tpu.memory_space<vmem>>, vector<10x32xf32>,
    return
  }
  func.func @transform_0(%arg0: i32) -> (i32, i32) {
    %c0_i32 = arith.constant 0 : i32
    %c0_i32_0 = arith.constant 0 : i32
    return %arg0, %c0_i32 : i32, i32
  }
  func.func @transform_1(%arg0: i32) -> (i32, i32) {
    %c0_i32 = arith.constant 0 : i32
    %c0_i32_0 = arith.constant 0 : i32
    %c0_i32_1 = arith.constant 0 : i32
    return %c0_i32, %c0_i32_0 : i32, i32
  }
  func.func @transform_2(%arg0: i32) -> (i32, i32) {
    %c0_i32 = arith.constant 0 : i32
    %c0_i32_0 = arith.constant 0 : i32
    %c0_i32_1 = arith.constant 0 : i32
    return %c0_i32, %c0_i32_0 : i32, i32
  }
  func.func @transform_3(%arg0: i32) -> (i32, i32) {
    %c0_i32 = arith.constant 0 : i32
    %c0_i32_0 = arith.constant 0 : i32
    %c0_i32_1 = arith.constant 0 : i32
    return %c0_i32, %c0_i32_0 : i32, i32
  }
  func.func @transform_4(%arg0: i32) -> (i32, i32) {
    %c0_i32 = arith.constant 0 : i32
    %c0_i32_0 = arith.constant 0 : i32
    %c0_i32_1 = arith.constant 0 : i32
    return %c0_i32, %c0_i32_0 : i32, i32
  }
  func.func @transform_5(%arg0: i32) -> (i32, i32) {
    %c0_i32 = arith.constant 0 : i32
    %c0_i32_0 = arith.constant 0 : i32
    %c0_i32_1 = arith.constant 0 : i32
    return %c0_i32, %c0_i32_0 : i32, i32
  }
  func.func @transform_6(%arg0: i32) -> (i32, i32) {
    %c0_i32 = arith.constant 0 : i32
    %c0_i32_0 = arith.constant 0 : i32
    %c0_i32_1 = arith.constant 0 : i32
    return %c0_i32, %c0_i32_0 : i32, i32
  }
  func.func @transform_7(%arg0: i32) -> (i32, i32) {
    %c0_i32 = arith.constant 0 : i32
    %c0_i32_0 = arith.constant 0 : i32
    return %arg0, %c0_i32 : i32, i32
  }
}

module attributes {stable_mosaic.version = 11 : i64} {
  func.func @_ln_linear_kernel(%arg0: memref<2x32xf32, #tpu.memory_space<vmem>>, %arg1: memref<1x32xf32, #tpu.memory_space<vmem>>, %arg2: memref<1x32xf32, #tpu.memory_space<vmem>>, %arg3: memref<32x32xf32, #tpu.memory_space<vmem>>, %arg4: memref<2x32xf32, #tpu.memory_space<vmem>>) attributes {dimension_semantics = [], scalar_prefetch = 0 : i64, scratch_operands = 0 : i64, tpu.core_type = #tpu.core_type<tc>} {
    %c0 = arith.constant 0 : index
    %c0_0 = arith.constant 0 : index
    %0 = vector.load %arg0[%c0, %c0_0] : memref<2x32xf32, #tpu.memory_space<vmem>>, vector<2x32xf32>
    %c0_1 = arith.constant 0 : index
    %c0_2 = arith.constant 0 : index
    %1 = vector.load %arg1[%c0_1, %c0_2] : memref<1x32xf32, #tpu.memory_space<vmem>>, vector<1x32xf32>
    %c0_3 = arith.constant 0 : index
    %c0_4 = arith.constant 0 : index
    %2 = vector.load %arg2[%c0_3, %c0_4] : memref<1x32xf32, #tpu.memory_space<vmem>>, vector<1x32xf32>
    %cst = arith.constant dense<0.000000e+00> : vector<2xf32>
    %3 = vector.multi_reduction <add>, %0, %cst [1] : vector<2x32xf32> to vector<2xf32>
    %4 = vector.shape_cast %3 : vector<2xf32> to vector<2x1xf32>
    %cst_5 = arith.constant 3.200000e+01 : f32
    %5 = vector.broadcast %cst_5 : f32 to vector<2x1xf32>
    %6 = arith.divf %4, %5 : vector<2x1xf32>
    %7 = vector.broadcast %6 : vector<2x1xf32> to vector<2x32xf32>
    %8 = arith.subf %0, %7 : vector<2x32xf32>
    %9 = arith.mulf %8, %8 : vector<2x32xf32>
    %cst_6 = arith.constant dense<0.000000e+00> : vector<2xf32>
    %10 = vector.multi_reduction <add>, %9, %cst_6 [1] : vector<2x32xf32> to vector<2xf32>
    %11 = vector.shape_cast %10 : vector<2xf32> to vector<2x1xf32>
    %cst_7 = arith.constant 3.200000e+01 : f32
    %12 = vector.broadcast %cst_7 : f32 to vector<2x1xf32>
    %13 = arith.divf %11, %12 : vector<2x1xf32>
    %14 = vector.broadcast %6 : vector<2x1xf32> to vector<2x32xf32>
    %15 = arith.subf %0, %14 : vector<2x32xf32>
    %cst_8 = arith.constant 9.99999974E-6 : f32
    %16 = vector.broadcast %cst_8 : f32 to vector<2x1xf32>
    %17 = arith.addf %13, %16 : vector<2x1xf32>
    %18 = math.rsqrt %17 : vector<2x1xf32>
    %19 = vector.broadcast %18 : vector<2x1xf32> to vector<2x32xf32>
    %20 = arith.mulf %15, %19 : vector<2x32xf32>
    %21 = vector.broadcast %1 : vector<1x32xf32> to vector<2x32xf32>
    %22 = arith.mulf %20, %21 : vector<2x32xf32>
    %23 = vector.broadcast %2 : vector<1x32xf32> to vector<2x32xf32>
    %24 = arith.addf %22, %23 : vector<2x32xf32>
    %25 = arith.truncf %24 : vector<2x32xf32> to vector<2x32xbf16>
    %c0_9 = arith.constant 0 : index
    %c0_10 = arith.constant 0 : index
    %26 = vector.load %arg3[%c0_9, %c0_10] : memref<32x32xf32, #tpu.memory_space<vmem>>, vector<32x32xf32>
    %27 = arith.truncf %26 : vector<32x32xf32> to vector<32x32xbf16>
    %cst_11 = arith.constant dense<0.000000e+00> : vector<2x32xf32>
    %28 = tpu.matmul %25, %27, %cst_11 {dimension_numbers = #tpu.dot_dimension_numbers<[1], [0], [0], [1], [0, 0, 1, 1], [], []>} : vector<2x32xbf16>, vector<32x32xbf16>, vector<2x32xf32> -> vector<2x32xf32>
    %c0_12 = arith.constant 0 : index
    %c0_13 = arith.constant 0 : index
    %29 = vector.load %arg4[%c0_12, %c0_13] : memref<2x32xf32, #tpu.memory_space<vmem>>, vector<2x32xf32>
    tpu.vector_store %arg4[%c0_12, %c0_13], %28 {strides = array<i32>} : memref<2x32xf32, #tpu.memory_space<vmem>>, vector<2x32xf32>,
    return
  }
}

module attributes {stable_mosaic.version = 11 : i64} {
  func.func @_attn_block_kernel(%arg0: i32, %arg1: memref<1x5x32xf32, #tpu.memory_space<vmem>>, %arg2: memref<1x32xf32, #tpu.memory_space<vmem>>, %arg3: memref<1x32xf32, #tpu.memory_space<vmem>>, %arg4: memref<32x96xf32, #tpu.memory_space<vmem>>, %arg5: memref<1x96xf32, #tpu.memory_space<vmem>>, %arg6: memref<32x32xf32, #tpu.memory_space<vmem>>, %arg7: memref<1x32xf32, #tpu.memory_space<vmem>>, %arg8: memref<1x5x32xf32, #tpu.memory_space<vmem>>) attributes {dimension_semantics = [#tpu.dimension_semantics<parallel>], iteration_bounds = array<i64: 2>, scalar_prefetch = 0 : i64, scratch_operands = 0 : i64, tpu.core_type = #tpu.core_type<tc>, window_params = [{transform_indices = @transform_0, window_bounds = array<i64: 1, 5, 32>}, {pipeline_mode = #tpu.pipeline_mode<synchronous>, transform_indices = @transform_1, window_bounds = array<i64: 1, 32>}, {pipeline_mode = #tpu.pipeline_mode<synchronous>, transform_indices = @transform_2, window_bounds = array<i64: 1, 32>}, {pipeline_mode = #tpu.pipeline_mode<synchronous>, transform_indices = @transform_3, window_bounds = array<i64: 32, 96>}, {pipeline_mode = #tpu.pipeline_mode<synchronous>, transform_indices = @transform_4, window_bounds = array<i64: 1, 96>}, {pipeline_mode = #tpu.pipeline_mode<synchronous>, transform_indices = @transform_5, window_bounds = array<i64: 32, 32>}, {pipeline_mode = #tpu.pipeline_mode<synchronous>, transform_indices = @transform_6, window_bounds = array<i64: 1, 32>}, {transform_indices = @transform_7, window_bounds = array<i64: 1, 5, 32>}]} {
    %c0 = arith.constant 0 : index
    %c0_0 = arith.constant 0 : index
    %c0_1 = arith.constant 0 : index
    %0 = vector.load %arg1[%c0, %c0_0, %c0_1] : memref<1x5x32xf32, #tpu.memory_space<vmem>>, vector<1x5x32xf32>
    %1 = vector.shape_cast %0 : vector<1x5x32xf32> to vector<5x32xf32>
    %c0_2 = arith.constant 0 : index
    %c0_3 = arith.constant 0 : index
    %2 = vector.load %arg2[%c0_2, %c0_3] : memref<1x32xf32, #tpu.memory_space<vmem>>, vector<1x32xf32>
    %c0_4 = arith.constant 0 : index
    %c0_5 = arith.constant 0 : index
    %3 = vector.load %arg3[%c0_4, %c0_5] : memref<1x32xf32, #tpu.memory_space<vmem>>, vector<1x32xf32>
    %cst = arith.constant dense<0.000000e+00> : vector<5xf32>
    %4 = vector.multi_reduction <add>, %1, %cst [1] : vector<5x32xf32> to vector<5xf32>
    %5 = vector.shape_cast %4 : vector<5xf32> to vector<5x1xf32>
    %cst_6 = arith.constant 3.200000e+01 : f32
    %6 = vector.broadcast %cst_6 : f32 to vector<5x1xf32>
    %7 = arith.divf %5, %6 : vector<5x1xf32>
    %8 = vector.broadcast %7 : vector<5x1xf32> to vector<5x32xf32>
    %9 = arith.subf %1, %8 : vector<5x32xf32>
    %10 = arith.mulf %9, %9 : vector<5x32xf32>
    %cst_7 = arith.constant dense<0.000000e+00> : vector<5xf32>
    %11 = vector.multi_reduction <add>, %10, %cst_7 [1] : vector<5x32xf32> to vector<5xf32>
    %12 = vector.shape_cast %11 : vector<5xf32> to vector<5x1xf32>
    %cst_8 = arith.constant 3.200000e+01 : f32
    %13 = vector.broadcast %cst_8 : f32 to vector<5x1xf32>
    %14 = arith.divf %12, %13 : vector<5x1xf32>
    %15 = vector.broadcast %7 : vector<5x1xf32> to vector<5x32xf32>
    %16 = arith.subf %1, %15 : vector<5x32xf32>
    %cst_9 = arith.constant 9.99999974E-6 : f32
    %17 = vector.broadcast %cst_9 : f32 to vector<5x1xf32>
    %18 = arith.addf %14, %17 : vector<5x1xf32>
    %19 = math.rsqrt %18 : vector<5x1xf32>
    %20 = vector.broadcast %19 : vector<5x1xf32> to vector<5x32xf32>
    %21 = arith.mulf %16, %20 : vector<5x32xf32>
    %22 = vector.broadcast %2 : vector<1x32xf32> to vector<5x32xf32>
    %23 = arith.mulf %21, %22 : vector<5x32xf32>
    %24 = vector.broadcast %3 : vector<1x32xf32> to vector<5x32xf32>
    %25 = arith.addf %23, %24 : vector<5x32xf32>
    %26 = arith.truncf %25 : vector<5x32xf32> to vector<5x32xbf16>
    %c0_10 = arith.constant 0 : index
    %c0_11 = arith.constant 0 : index
    %27 = vector.load %arg4[%c0_10, %c0_11] : memref<32x96xf32, #tpu.memory_space<vmem>>, vector<32x96xf32>
    %28 = arith.truncf %27 : vector<32x96xf32> to vector<32x96xbf16>
    %cst_12 = arith.constant dense<0.000000e+00> : vector<5x96xf32>
    %29 = tpu.matmul %26, %28, %cst_12 {dimension_numbers = #tpu.dot_dimension_numbers<[1], [0], [0], [1], [0, 0, 1, 1], [], []>} : vector<5x32xbf16>, vector<32x96xbf16>, vector<5x96xf32> -> vector<5x96xf32>
    %c0_13 = arith.constant 0 : index
    %c0_14 = arith.constant 0 : index
    %30 = vector.load %arg5[%c0_13, %c0_14] : memref<1x96xf32, #tpu.memory_space<vmem>>, vector<1x96xf32>
    %31 = vector.broadcast %30 : vector<1x96xf32> to vector<5x96xf32>
    %32 = arith.addf %29, %31 : vector<5x96xf32>
    %cst_15 = arith.constant 0.000000e+00 : f32
    %33 = vector.broadcast %cst_15 : f32 to vector<5x32xf32>
    %34 = vector.extract_strided_slice %32 {offsets = [0, 0], sizes = [5, 8], strides = [1, 1]} : vector<5x96xf32> to vector<5x8xf32>
    %cst_16 = arith.constant 0.353553385 : f32
    %35 = vector.broadcast %cst_16 : f32 to vector<5x8xf32>
    %36 = arith.mulf %34, %35 : vector<5x8xf32>
    %37 = vector.extract_strided_slice %32 {offsets = [0, 32], sizes = [5, 8], strides = [1, 1]} : vector<5x96xf32> to vector<5x8xf32>
    %38 = vector.extract_strided_slice %32 {offsets = [0, 64], sizes = [5, 8], strides = [1, 1]} : vector<5x96xf32> to vector<5x8xf32>
    %39 = arith.truncf %36 : vector<5x8xf32> to vector<5x8xbf16>
    %40 = arith.truncf %37 : vector<5x8xf32> to vector<5x8xbf16>
    %cst_17 = arith.constant dense<0.000000e+00> : vector<5x5xf32>
    %41 = tpu.matmul %39, %40, %cst_17 {dimension_numbers = #tpu.dot_dimension_numbers<[1], [1], [0], [0], [0, 0, 1, 0], [], []>} : vector<5x8xbf16>, vector<5x8xbf16>, vector<5x5xf32> -> vector<5x5xf32>
    %cst_18 = arith.constant dense<0xFF800000> : vector<5xf32>
    %42 = vector.multi_reduction <maximumf>, %41, %cst_18 [1] : vector<5x5xf32> to vector<5xf32>
    %43 = vector.shape_cast %42 : vector<5xf32> to vector<5x1xf32>
    %44 = vector.broadcast %43 : vector<5x1xf32> to vector<5x5xf32>
    %45 = arith.subf %41, %44 : vector<5x5xf32>
    %46 = math.exp %45 : vector<5x5xf32>
    %cst_19 = arith.constant dense<0.000000e+00> : vector<5xf32>
    %47 = vector.multi_reduction <add>, %46, %cst_19 [1] : vector<5x5xf32> to vector<5xf32>
    %48 = vector.shape_cast %47 : vector<5xf32> to vector<5x1xf32>
    %49 = tpu.reciprocal %48 {approx = true} : vector<5x1xf32> -> vector<5x1xf32>
    %50 = arith.truncf %46 : vector<5x5xf32> to vector<5x5xbf16>
    %51 = arith.truncf %38 : vector<5x8xf32> to vector<5x8xbf16>
    %cst_20 = arith.constant dense<0.000000e+00> : vector<5x8xf32>
    %52 = tpu.matmul %50, %51, %cst_20 {dimension_numbers = #tpu.dot_dimension_numbers<[1], [0], [0], [1], [0, 0, 1, 1], [], []>} : vector<5x5xbf16>, vector<5x8xbf16>, vector<5x8xf32> -> vector<5x8xf32>
    %53 = vector.broadcast %49 : vector<5x1xf32> to vector<5x8xf32>
    %54 = arith.mulf %52, %53 : vector<5x8xf32>
    %c0_21 = arith.constant 0 : index
    %c0_22 = arith.constant 0 : index
    %55 = vector.load %arg6[%c0_21, %c0_22] : memref<32x32xf32, #tpu.memory_space<vmem>>, vector<8x32xf32>
    %56 = arith.truncf %54 : vector<5x8xf32> to vector<5x8xbf16>
    %57 = arith.truncf %55 : vector<8x32xf32> to vector<8x32xbf16>
    %cst_23 = arith.constant dense<0.000000e+00> : vector<5x32xf32>
    %58 = tpu.matmul %56, %57, %cst_23 {dimension_numbers = #tpu.dot_dimension_numbers<[1], [0], [0], [1], [0, 0, 1, 1], [], []>} : vector<5x8xbf16>, vector<8x32xbf16>, vector<5x32xf32> -> vector<5x32xf32>
    %59 = arith.addf %33, %58 : vector<5x32xf32>
    %60 = vector.extract_strided_slice %32 {offsets = [0, 8], sizes = [5, 8], strides = [1, 1]} : vector<5x96xf32> to vector<5x8xf32>
    %cst_24 = arith.constant 0.353553385 : f32
    %61 = vector.broadcast %cst_24 : f32 to vector<5x8xf32>
    %62 = arith.mulf %60, %61 : vector<5x8xf32>
    %63 = vector.extract_strided_slice %32 {offsets = [0, 40], sizes = [5, 8], strides = [1, 1]} : vector<5x96xf32> to vector<5x8xf32>
    %64 = vector.extract_strided_slice %32 {offsets = [0, 72], sizes = [5, 8], strides = [1, 1]} : vector<5x96xf32> to vector<5x8xf32>
    %65 = arith.truncf %62 : vector<5x8xf32> to vector<5x8xbf16>
    %66 = arith.truncf %63 : vector<5x8xf32> to vector<5x8xbf16>
    %cst_25 = arith.constant dense<0.000000e+00> : vector<5x5xf32>
    %67 = tpu.matmul %65, %66, %cst_25 {dimension_numbers = #tpu.dot_dimension_numbers<[1], [1], [0], [0], [0, 0, 1, 0], [], []>} : vector<5x8xbf16>, vector<5x8xbf16>, vector<5x5xf32> -> vector<5x5xf32>
    %cst_26 = arith.constant dense<0xFF800000> : vector<5xf32>
    %68 = vector.multi_reduction <maximumf>, %67, %cst_26 [1] : vector<5x5xf32> to vector<5xf32>
    %69 = vector.shape_cast %68 : vector<5xf32> to vector<5x1xf32>
    %70 = vector.broadcast %69 : vector<5x1xf32> to vector<5x5xf32>
    %71 = arith.subf %67, %70 : vector<5x5xf32>
    %72 = math.exp %71 : vector<5x5xf32>
    %cst_27 = arith.constant dense<0.000000e+00> : vector<5xf32>
    %73 = vector.multi_reduction <add>, %72, %cst_27 [1] : vector<5x5xf32> to vector<5xf32>
    %74 = vector.shape_cast %73 : vector<5xf32> to vector<5x1xf32>
    %75 = tpu.reciprocal %74 {approx = true} : vector<5x1xf32> -> vector<5x1xf32>
    %76 = arith.truncf %72 : vector<5x5xf32> to vector<5x5xbf16>
    %77 = arith.truncf %64 : vector<5x8xf32> to vector<5x8xbf16>
    %cst_28 = arith.constant dense<0.000000e+00> : vector<5x8xf32>
    %78 = tpu.matmul %76, %77, %cst_28 {dimension_numbers = #tpu.dot_dimension_numbers<[1], [0], [0], [1], [0, 0, 1, 1], [], []>} : vector<5x5xbf16>, vector<5x8xbf16>, vector<5x8xf32> -> vector<5x8xf32>
    %79 = vector.broadcast %75 : vector<5x1xf32> to vector<5x8xf32>
    %80 = arith.mulf %78, %79 : vector<5x8xf32>
    %c8 = arith.constant 8 : index
    %c0_29 = arith.constant 0 : index
    %81 = vector.load %arg6[%c8, %c0_29] : memref<32x32xf32, #tpu.memory_space<vmem>>, vector<8x32xf32>
    %82 = arith.truncf %80 : vector<5x8xf32> to vector<5x8xbf16>
    %83 = arith.truncf %81 : vector<8x32xf32> to vector<8x32xbf16>
    %cst_30 = arith.constant dense<0.000000e+00> : vector<5x32xf32>
    %84 = tpu.matmul %82, %83, %cst_30 {dimension_numbers = #tpu.dot_dimension_numbers<[1], [0], [0], [1], [0, 0, 1, 1], [], []>} : vector<5x8xbf16>, vector<8x32xbf16>, vector<5x32xf32> -> vector<5x32xf32>
    %85 = arith.addf %59, %84 : vector<5x32xf32>
    %86 = vector.extract_strided_slice %32 {offsets = [0, 16], sizes = [5, 8], strides = [1, 1]} : vector<5x96xf32> to vector<5x8xf32>
    %cst_31 = arith.constant 0.353553385 : f32
    %87 = vector.broadcast %cst_31 : f32 to vector<5x8xf32>
    %88 = arith.mulf %86, %87 : vector<5x8xf32>
    %89 = vector.extract_strided_slice %32 {offsets = [0, 48], sizes = [5, 8], strides = [1, 1]} : vector<5x96xf32> to vector<5x8xf32>
    %90 = vector.extract_strided_slice %32 {offsets = [0, 80], sizes = [5, 8], strides = [1, 1]} : vector<5x96xf32> to vector<5x8xf32>
    %91 = arith.truncf %88 : vector<5x8xf32> to vector<5x8xbf16>
    %92 = arith.truncf %89 : vector<5x8xf32> to vector<5x8xbf16>
    %cst_32 = arith.constant dense<0.000000e+00> : vector<5x5xf32>
    %93 = tpu.matmul %91, %92, %cst_32 {dimension_numbers = #tpu.dot_dimension_numbers<[1], [1], [0], [0], [0, 0, 1, 0], [], []>} : vector<5x8xbf16>, vector<5x8xbf16>, vector<5x5xf32> -> vector<5x5xf32>
    %cst_33 = arith.constant dense<0xFF800000> : vector<5xf32>
    %94 = vector.multi_reduction <maximumf>, %93, %cst_33 [1] : vector<5x5xf32> to vector<5xf32>
    %95 = vector.shape_cast %94 : vector<5xf32> to vector<5x1xf32>
    %96 = vector.broadcast %95 : vector<5x1xf32> to vector<5x5xf32>
    %97 = arith.subf %93, %96 : vector<5x5xf32>
    %98 = math.exp %97 : vector<5x5xf32>
    %cst_34 = arith.constant dense<0.000000e+00> : vector<5xf32>
    %99 = vector.multi_reduction <add>, %98, %cst_34 [1] : vector<5x5xf32> to vector<5xf32>
    %100 = vector.shape_cast %99 : vector<5xf32> to vector<5x1xf32>
    %101 = tpu.reciprocal %100 {approx = true} : vector<5x1xf32> -> vector<5x1xf32>
    %102 = arith.truncf %98 : vector<5x5xf32> to vector<5x5xbf16>
    %103 = arith.truncf %90 : vector<5x8xf32> to vector<5x8xbf16>
    %cst_35 = arith.constant dense<0.000000e+00> : vector<5x8xf32>
    %104 = tpu.matmul %102, %103, %cst_35 {dimension_numbers = #tpu.dot_dimension_numbers<[1], [0], [0], [1], [0, 0, 1, 1], [], []>} : vector<5x5xbf16>, vector<5x8xbf16>, vector<5x8xf32> -> vector<5x8xf32>
    %105 = vector.broadcast %101 : vector<5x1xf32> to vector<5x8xf32>
    %106 = arith.mulf %104, %105 : vector<5x8xf32>
    %c16 = arith.constant 16 : index
    %c0_36 = arith.constant 0 : index
    %107 = vector.load %arg6[%c16, %c0_36] : memref<32x32xf32, #tpu.memory_space<vmem>>, vector<8x32xf32>
    %108 = arith.truncf %106 : vector<5x8xf32> to vector<5x8xbf16>
    %109 = arith.truncf %107 : vector<8x32xf32> to vector<8x32xbf16>
    %cst_37 = arith.constant dense<0.000000e+00> : vector<5x32xf32>
    %110 = tpu.matmul %108, %109, %cst_37 {dimension_numbers = #tpu.dot_dimension_numbers<[1], [0], [0], [1], [0, 0, 1, 1], [], []>} : vector<5x8xbf16>, vector<8x32xbf16>, vector<5x32xf32> -> vector<5x32xf32>
    %111 = arith.addf %85, %110 : vector<5x32xf32>
    %112 = vector.extract_strided_slice %32 {offsets = [0, 24], sizes = [5, 8], strides = [1, 1]} : vector<5x96xf32> to vector<5x8xf32>
    %cst_38 = arith.constant 0.353553385 : f32
    %113 = vector.broadcast %cst_38 : f32 to vector<5x8xf32>
    %114 = arith.mulf %112, %113 : vector<5x8xf32>
    %115 = vector.extract_strided_slice %32 {offsets = [0, 56], sizes = [5, 8], strides = [1, 1]} : vector<5x96xf32> to vector<5x8xf32>
    %116 = vector.extract_strided_slice %32 {offsets = [0, 88], sizes = [5, 8], strides = [1, 1]} : vector<5x96xf32> to vector<5x8xf32>
    %117 = arith.truncf %114 : vector<5x8xf32> to vector<5x8xbf16>
    %118 = arith.truncf %115 : vector<5x8xf32> to vector<5x8xbf16>
    %cst_39 = arith.constant dense<0.000000e+00> : vector<5x5xf32>
    %119 = tpu.matmul %117, %118, %cst_39 {dimension_numbers = #tpu.dot_dimension_numbers<[1], [1], [0], [0], [0, 0, 1, 0], [], []>} : vector<5x8xbf16>, vector<5x8xbf16>, vector<5x5xf32> -> vector<5x5xf32>
    %cst_40 = arith.constant dense<0xFF800000> : vector<5xf32>
    %120 = vector.multi_reduction <maximumf>, %119, %cst_40 [1] : vector<5x5xf32> to vector<5xf32>
    %121 = vector.shape_cast %120 : vector<5xf32> to vector<5x1xf32>
    %122 = vector.broadcast %121 : vector<5x1xf32> to vector<5x5xf32>
    %123 = arith.subf %119, %122 : vector<5x5xf32>
    %124 = math.exp %123 : vector<5x5xf32>
    %cst_41 = arith.constant dense<0.000000e+00> : vector<5xf32>
    %125 = vector.multi_reduction <add>, %124, %cst_41 [1] : vector<5x5xf32> to vector<5xf32>
    %126 = vector.shape_cast %125 : vector<5xf32> to vector<5x1xf32>
    %127 = tpu.reciprocal %126 {approx = true} : vector<5x1xf32> -> vector<5x1xf32>
    %128 = arith.truncf %124 : vector<5x5xf32> to vector<5x5xbf16>
    %129 = arith.truncf %116 : vector<5x8xf32> to vector<5x8xbf16>
    %cst_42 = arith.constant dense<0.000000e+00> : vector<5x8xf32>
    %130 = tpu.matmul %128, %129, %cst_42 {dimension_numbers = #tpu.dot_dimension_numbers<[1], [0], [0], [1], [0, 0, 1, 1], [], []>} : vector<5x5xbf16>, vector<5x8xbf16>, vector<5x8xf32> -> vector<5x8xf32>
    %131 = vector.broadcast %127 : vector<5x1xf32> to vector<5x8xf32>
    %132 = arith.mulf %130, %131 : vector<5x8xf32>
    %c24 = arith.constant 24 : index
    %c0_43 = arith.constant 0 : index
    %133 = vector.load %arg6[%c24, %c0_43] : memref<32x32xf32, #tpu.memory_space<vmem>>, vector<8x32xf32>
    %134 = arith.truncf %132 : vector<5x8xf32> to vector<5x8xbf16>
    %135 = arith.truncf %133 : vector<8x32xf32> to vector<8x32xbf16>
    %cst_44 = arith.constant dense<0.000000e+00> : vector<5x32xf32>
    %136 = tpu.matmul %134, %135, %cst_44 {dimension_numbers = #tpu.dot_dimension_numbers<[1], [0], [0], [1], [0, 0, 1, 1], [], []>} : vector<5x8xbf16>, vector<8x32xbf16>, vector<5x32xf32> -> vector<5x32xf32>
    %137 = arith.addf %111, %136 : vector<5x32xf32>
    %138 = arith.addf %1, %137 : vector<5x32xf32>
    %c0_45 = arith.constant 0 : index
    %c0_46 = arith.constant 0 : index
    %139 = vector.load %arg7[%c0_45, %c0_46] : memref<1x32xf32, #tpu.memory_space<vmem>>, vector<1x32xf32>
    %140 = vector.broadcast %139 : vector<1x32xf32> to vector<5x32xf32>
    %141 = arith.addf %138, %140 : vector<5x32xf32>
    %c0_47 = arith.constant 0 : index
    %c0_48 = arith.constant 0 : index
    %c0_49 = arith.constant 0 : index
    %142 = vector.load %arg8[%c0_47, %c0_48, %c0_49] : memref<1x5x32xf32, #tpu.memory_space<vmem>>, vector<1x5x32xf32>
    %143 = vector.shape_cast %142 : vector<1x5x32xf32> to vector<5x32xf32>
    %144 = vector.shape_cast %141 : vector<5x32xf32> to vector<1x5x32xf32>
    tpu.vector_store %arg8[%c0_47, %c0_48, %c0_49], %144 {strides = array<i32>} : memref<1x5x32xf32, #tpu.memory_space<vmem>>, vector<1x5x32xf32>,
    return
  }
  func.func @transform_0(%arg0: i32) -> (i32, i32, i32) {
    %c0_i32 = arith.constant 0 : i32
    %c0_i32_0 = arith.constant 0 : i32
    %c0_i32_1 = arith.constant 0 : i32
    return %arg0, %c0_i32, %c0_i32_0 : i32, i32, i32
  }
  func.func @transform_1(%arg0: i32) -> (i32, i32) {
    %c0_i32 = arith.constant 0 : i32
    %c0_i32_0 = arith.constant 0 : i32
    %c0_i32_1 = arith.constant 0 : i32
    return %c0_i32, %c0_i32_0 : i32, i32
  }
  func.func @transform_2(%arg0: i32) -> (i32, i32) {
    %c0_i32 = arith.constant 0 : i32
    %c0_i32_0 = arith.constant 0 : i32
    %c0_i32_1 = arith.constant 0 : i32
    return %c0_i32, %c0_i32_0 : i32, i32
  }
  func.func @transform_3(%arg0: i32) -> (i32, i32) {
    %c0_i32 = arith.constant 0 : i32
    %c0_i32_0 = arith.constant 0 : i32
    %c0_i32_1 = arith.constant 0 : i32
    return %c0_i32, %c0_i32_0 : i32, i32
  }
  func.func @transform_4(%arg0: i32) -> (i32, i32) {
    %c0_i32 = arith.constant 0 : i32
    %c0_i32_0 = arith.constant 0 : i32
    %c0_i32_1 = arith.constant 0 : i32
    return %c0_i32, %c0_i32_0 : i32, i32
  }
  func.func @transform_5(%arg0: i32) -> (i32, i32) {
    %c0_i32 = arith.constant 0 : i32
    %c0_i32_0 = arith.constant 0 : i32
    %c0_i32_1 = arith.constant 0 : i32
    return %c0_i32, %c0_i32_0 : i32, i32
  }
  func.func @transform_6(%arg0: i32) -> (i32, i32) {
    %c0_i32 = arith.constant 0 : i32
    %c0_i32_0 = arith.constant 0 : i32
    %c0_i32_1 = arith.constant 0 : i32
    return %c0_i32, %c0_i32_0 : i32, i32
  }
  func.func @transform_7(%arg0: i32) -> (i32, i32, i32) {
    %c0_i32 = arith.constant 0 : i32
    %c0_i32_0 = arith.constant 0 : i32
    %c0_i32_1 = arith.constant 0 : i32
    return %arg0, %c0_i32, %c0_i32_0 : i32, i32, i32
  }
}

module attributes {stable_mosaic.version = 11 : i64} {
  func.func @_mlp_block_kernel(%arg0: i32, %arg1: memref<24x32xf32, #tpu.memory_space<vmem>>, %arg2: memref<1x32xf32, #tpu.memory_space<vmem>>, %arg3: memref<1x32xf32, #tpu.memory_space<vmem>>, %arg4: memref<32x128xf32, #tpu.memory_space<vmem>>, %arg5: memref<1x128xf32, #tpu.memory_space<vmem>>, %arg6: memref<128x32xf32, #tpu.memory_space<vmem>>, %arg7: memref<1x32xf32, #tpu.memory_space<vmem>>, %arg8: memref<24x32xf32, #tpu.memory_space<vmem>>) attributes {dimension_semantics = [#tpu.dimension_semantics<parallel>], iteration_bounds = array<i64: 1>, scalar_prefetch = 0 : i64, scratch_operands = 0 : i64, tpu.core_type = #tpu.core_type<tc>, window_params = [{transform_indices = @transform_0, window_bounds = array<i64: 24, 32>}, {pipeline_mode = #tpu.pipeline_mode<synchronous>, transform_indices = @transform_1, window_bounds = array<i64: 1, 32>}, {pipeline_mode = #tpu.pipeline_mode<synchronous>, transform_indices = @transform_2, window_bounds = array<i64: 1, 32>}, {pipeline_mode = #tpu.pipeline_mode<synchronous>, transform_indices = @transform_3, window_bounds = array<i64: 32, 128>}, {pipeline_mode = #tpu.pipeline_mode<synchronous>, transform_indices = @transform_4, window_bounds = array<i64: 1, 128>}, {pipeline_mode = #tpu.pipeline_mode<synchronous>, transform_indices = @transform_5, window_bounds = array<i64: 128, 32>}, {pipeline_mode = #tpu.pipeline_mode<synchronous>, transform_indices = @transform_6, window_bounds = array<i64: 1, 32>}, {transform_indices = @transform_7, window_bounds = array<i64: 24, 32>}]} {
    %c0 = arith.constant 0 : index
    %c0_0 = arith.constant 0 : index
    %0 = vector.load %arg1[%c0, %c0_0] : memref<24x32xf32, #tpu.memory_space<vmem>>, vector<24x32xf32>
    %c0_1 = arith.constant 0 : index
    %c0_2 = arith.constant 0 : index
    %1 = vector.load %arg2[%c0_1, %c0_2] : memref<1x32xf32, #tpu.memory_space<vmem>>, vector<1x32xf32>
    %c0_3 = arith.constant 0 : index
    %c0_4 = arith.constant 0 : index
    %2 = vector.load %arg3[%c0_3, %c0_4] : memref<1x32xf32, #tpu.memory_space<vmem>>, vector<1x32xf32>
    %cst = arith.constant dense<0.000000e+00> : vector<24xf32>
    %3 = vector.multi_reduction <add>, %0, %cst [1] : vector<24x32xf32> to vector<24xf32>
    %4 = vector.shape_cast %3 : vector<24xf32> to vector<24x1xf32>
    %cst_5 = arith.constant 3.200000e+01 : f32
    %5 = vector.broadcast %cst_5 : f32 to vector<24x1xf32>
    %6 = arith.divf %4, %5 : vector<24x1xf32>
    %7 = vector.broadcast %6 : vector<24x1xf32> to vector<24x32xf32>
    %8 = arith.subf %0, %7 : vector<24x32xf32>
    %9 = arith.mulf %8, %8 : vector<24x32xf32>
    %cst_6 = arith.constant dense<0.000000e+00> : vector<24xf32>
    %10 = vector.multi_reduction <add>, %9, %cst_6 [1] : vector<24x32xf32> to vector<24xf32>
    %11 = vector.shape_cast %10 : vector<24xf32> to vector<24x1xf32>
    %cst_7 = arith.constant 3.200000e+01 : f32
    %12 = vector.broadcast %cst_7 : f32 to vector<24x1xf32>
    %13 = arith.divf %11, %12 : vector<24x1xf32>
    %14 = vector.broadcast %6 : vector<24x1xf32> to vector<24x32xf32>
    %15 = arith.subf %0, %14 : vector<24x32xf32>
    %cst_8 = arith.constant 9.99999974E-6 : f32
    %16 = vector.broadcast %cst_8 : f32 to vector<24x1xf32>
    %17 = arith.addf %13, %16 : vector<24x1xf32>
    %18 = math.rsqrt %17 : vector<24x1xf32>
    %19 = vector.broadcast %18 : vector<24x1xf32> to vector<24x32xf32>
    %20 = arith.mulf %15, %19 : vector<24x32xf32>
    %21 = vector.broadcast %1 : vector<1x32xf32> to vector<24x32xf32>
    %22 = arith.mulf %20, %21 : vector<24x32xf32>
    %23 = vector.broadcast %2 : vector<1x32xf32> to vector<24x32xf32>
    %24 = arith.addf %22, %23 : vector<24x32xf32>
    %25 = arith.truncf %24 : vector<24x32xf32> to vector<24x32xbf16>
    %c0_9 = arith.constant 0 : index
    %c0_10 = arith.constant 0 : index
    %26 = vector.load %arg4[%c0_9, %c0_10] : memref<32x128xf32, #tpu.memory_space<vmem>>, vector<32x128xf32>
    %27 = arith.truncf %26 : vector<32x128xf32> to vector<32x128xbf16>
    %cst_11 = arith.constant dense<0.000000e+00> : vector<24x128xf32>
    %28 = tpu.matmul %25, %27, %cst_11 {dimension_numbers = #tpu.dot_dimension_numbers<[1], [0], [0], [1], [0, 0, 1, 1], [], []>} : vector<24x32xbf16>, vector<32x128xbf16>, vector<24x128xf32> -> vector<24x128xf32>
    %c0_12 = arith.constant 0 : index
    %c0_13 = arith.constant 0 : index
    %29 = vector.load %arg5[%c0_12, %c0_13] : memref<1x128xf32, #tpu.memory_space<vmem>>, vector<1x128xf32>
    %30 = vector.broadcast %29 : vector<1x128xf32> to vector<24x128xf32>
    %31 = arith.addf %28, %30 : vector<24x128xf32>
    %cst_14 = arith.constant 1.702000e+00 : f32
    %32 = vector.broadcast %cst_14 : f32 to vector<24x128xf32>
    %33 = arith.mulf %32, %31 : vector<24x128xf32>
    %34 = arith.negf %33 : vector<24x128xf32>
    %35 = math.exp %34 : vector<24x128xf32>
    %cst_15 = arith.constant 1.000000e+00 : f32
    %36 = vector.broadcast %cst_15 : f32 to vector<24x128xf32>
    %37 = arith.addf %36, %35 : vector<24x128xf32>
    %38 = arith.divf %36, %37 : vector<24x128xf32>
    %39 = arith.mulf %31, %38 : vector<24x128xf32>
    %40 = arith.truncf %39 : vector<24x128xf32> to vector<24x128xbf16>
    %c0_16 = arith.constant 0 : index
    %c0_17 = arith.constant 0 : index
    %41 = vector.load %arg6[%c0_16, %c0_17] : memref<128x32xf32, #tpu.memory_space<vmem>>, vector<128x32xf32>
    %42 = arith.truncf %41 : vector<128x32xf32> to vector<128x32xbf16>
    %cst_18 = arith.constant dense<0.000000e+00> : vector<24x32xf32>
    %43 = tpu.matmul %40, %42, %cst_18 {dimension_numbers = #tpu.dot_dimension_numbers<[1], [0], [0], [1], [0, 0, 1, 1], [], []>} : vector<24x128xbf16>, vector<128x32xbf16>, vector<24x32xf32> -> vector<24x32xf32>
    %c0_19 = arith.constant 0 : index
    %c0_20 = arith.constant 0 : index
    %44 = vector.load %arg7[%c0_19, %c0_20] : memref<1x32xf32, #tpu.memory_space<vmem>>, vector<1x32xf32>
    %45 = vector.broadcast %44 : vector<1x32xf32> to vector<24x32xf32>
    %46 = arith.addf %43, %45 : vector<24x32xf32>
    %47 = arith.addf %0, %46 : vector<24x32xf32>
    %c0_21 = arith.constant 0 : index
    %c0_22 = arith.constant 0 : index
    %48 = vector.load %arg8[%c0_21, %c0_22] : memref<24x32xf32, #tpu.memory_space<vmem>>, vector<24x32xf32>
    tpu.vector_store %arg8[%c0_21, %c0_22], %47 {strides = array<i32>} : memref<24x32xf32, #tpu.memory_space<vmem>>, vector<24x32xf32>,
    return
  }
  func.func @transform_0(%arg0: i32) -> (i32, i32) {
    %c0_i32 = arith.constant 0 : i32
    %c0_i32_0 = arith.constant 0 : i32
    return %arg0, %c0_i32 : i32, i32
  }
  func.func @transform_1(%arg0: i32) -> (i32, i32) {
    %c0_i32 = arith.constant 0 : i32
    %c0_i32_0 = arith.constant 0 : i32
    %c0_i32_1 = arith.constant 0 : i32
    return %c0_i32, %c0_i32_0 : i32, i32
  }
  func.func @transform_2(%arg0: i32) -> (i32, i32) {
    %c0_i32 = arith.constant 0 : i32
    %c0_i32_0 = arith.constant 0 : i32
    %c0_i32_1 = arith.constant 0 : i32
    return %c0_i32, %c0_i32_0 : i32, i32
  }
  func.func @transform_3(%arg0: i32) -> (i32, i32) {
    %c0_i32 = arith.constant 0 : i32
    %c0_i32_0 = arith.constant 0 : i32
    %c0_i32_1 = arith.constant 0 : i32
    return %c0_i32, %c0_i32_0 : i32, i32
  }
  func.func @transform_4(%arg0: i32) -> (i32, i32) {
    %c0_i32 = arith.constant 0 : i32
    %c0_i32_0 = arith.constant 0 : i32
    %c0_i32_1 = arith.constant 0 : i32
    return %c0_i32, %c0_i32_0 : i32, i32
  }
  func.func @transform_5(%arg0: i32) -> (i32, i32) {
    %c0_i32 = arith.constant 0 : i32
    %c0_i32_0 = arith.constant 0 : i32
    %c0_i32_1 = arith.constant 0 : i32
    return %c0_i32, %c0_i32_0 : i32, i32
  }
  func.func @transform_6(%arg0: i32) -> (i32, i32) {
    %c0_i32 = arith.constant 0 : i32
    %c0_i32_0 = arith.constant 0 : i32
    %c0_i32_1 = arith.constant 0 : i32
    return %c0_i32, %c0_i32_0 : i32, i32
  }
  func.func @transform_7(%arg0: i32) -> (i32, i32) {
    %c0_i32 = arith.constant 0 : i32
    %c0_i32_0 = arith.constant 0 : i32
    return %arg0, %c0_i32 : i32, i32
  }
}

module attributes {stable_mosaic.version = 11 : i64} {
  func.func @_attn_block_kernel(%arg0: i32, %arg1: memref<1x8x32xf32, #tpu.memory_space<vmem>>, %arg2: memref<1x32xf32, #tpu.memory_space<vmem>>, %arg3: memref<1x32xf32, #tpu.memory_space<vmem>>, %arg4: memref<32x96xf32, #tpu.memory_space<vmem>>, %arg5: memref<1x96xf32, #tpu.memory_space<vmem>>, %arg6: memref<32x32xf32, #tpu.memory_space<vmem>>, %arg7: memref<1x32xf32, #tpu.memory_space<vmem>>, %arg8: memref<1x8x32xf32, #tpu.memory_space<vmem>>) attributes {dimension_semantics = [#tpu.dimension_semantics<parallel>], iteration_bounds = array<i64: 3>, scalar_prefetch = 0 : i64, scratch_operands = 0 : i64, tpu.core_type = #tpu.core_type<tc>, window_params = [{transform_indices = @transform_0, window_bounds = array<i64: 1, 8, 32>}, {pipeline_mode = #tpu.pipeline_mode<synchronous>, transform_indices = @transform_1, window_bounds = array<i64: 1, 32>}, {pipeline_mode = #tpu.pipeline_mode<synchronous>, transform_indices = @transform_2, window_bounds = array<i64: 1, 32>}, {pipeline_mode = #tpu.pipeline_mode<synchronous>, transform_indices = @transform_3, window_bounds = array<i64: 32, 96>}, {pipeline_mode = #tpu.pipeline_mode<synchronous>, transform_indices = @transform_4, window_bounds = array<i64: 1, 96>}, {pipeline_mode = #tpu.pipeline_mode<synchronous>, transform_indices = @transform_5, window_bounds = array<i64: 32, 32>}, {pipeline_mode = #tpu.pipeline_mode<synchronous>, transform_indices = @transform_6, window_bounds = array<i64: 1, 32>}, {transform_indices = @transform_7, window_bounds = array<i64: 1, 8, 32>}]} {
    %c0 = arith.constant 0 : index
    %c0_0 = arith.constant 0 : index
    %c0_1 = arith.constant 0 : index
    %0 = vector.load %arg1[%c0, %c0_0, %c0_1] : memref<1x8x32xf32, #tpu.memory_space<vmem>>, vector<1x8x32xf32>
    %1 = vector.shape_cast %0 : vector<1x8x32xf32> to vector<8x32xf32>
    %c0_2 = arith.constant 0 : index
    %c0_3 = arith.constant 0 : index
    %2 = vector.load %arg2[%c0_2, %c0_3] : memref<1x32xf32, #tpu.memory_space<vmem>>, vector<1x32xf32>
    %c0_4 = arith.constant 0 : index
    %c0_5 = arith.constant 0 : index
    %3 = vector.load %arg3[%c0_4, %c0_5] : memref<1x32xf32, #tpu.memory_space<vmem>>, vector<1x32xf32>
    %cst = arith.constant dense<0.000000e+00> : vector<8xf32>
    %4 = vector.multi_reduction <add>, %1, %cst [1] : vector<8x32xf32> to vector<8xf32>
    %5 = vector.shape_cast %4 : vector<8xf32> to vector<8x1xf32>
    %cst_6 = arith.constant 3.200000e+01 : f32
    %6 = vector.broadcast %cst_6 : f32 to vector<8x1xf32>
    %7 = arith.divf %5, %6 : vector<8x1xf32>
    %8 = vector.broadcast %7 : vector<8x1xf32> to vector<8x32xf32>
    %9 = arith.subf %1, %8 : vector<8x32xf32>
    %10 = arith.mulf %9, %9 : vector<8x32xf32>
    %cst_7 = arith.constant dense<0.000000e+00> : vector<8xf32>
    %11 = vector.multi_reduction <add>, %10, %cst_7 [1] : vector<8x32xf32> to vector<8xf32>
    %12 = vector.shape_cast %11 : vector<8xf32> to vector<8x1xf32>
    %cst_8 = arith.constant 3.200000e+01 : f32
    %13 = vector.broadcast %cst_8 : f32 to vector<8x1xf32>
    %14 = arith.divf %12, %13 : vector<8x1xf32>
    %15 = vector.broadcast %7 : vector<8x1xf32> to vector<8x32xf32>
    %16 = arith.subf %1, %15 : vector<8x32xf32>
    %cst_9 = arith.constant 9.99999974E-6 : f32
    %17 = vector.broadcast %cst_9 : f32 to vector<8x1xf32>
    %18 = arith.addf %14, %17 : vector<8x1xf32>
    %19 = math.rsqrt %18 : vector<8x1xf32>
    %20 = vector.broadcast %19 : vector<8x1xf32> to vector<8x32xf32>
    %21 = arith.mulf %16, %20 : vector<8x32xf32>
    %22 = vector.broadcast %2 : vector<1x32xf32> to vector<8x32xf32>
    %23 = arith.mulf %21, %22 : vector<8x32xf32>
    %24 = vector.broadcast %3 : vector<1x32xf32> to vector<8x32xf32>
    %25 = arith.addf %23, %24 : vector<8x32xf32>
    %26 = arith.truncf %25 : vector<8x32xf32> to vector<8x32xbf16>
    %c0_10 = arith.constant 0 : index
    %c0_11 = arith.constant 0 : index
    %27 = vector.load %arg4[%c0_10, %c0_11] : memref<32x96xf32, #tpu.memory_space<vmem>>, vector<32x96xf32>
    %28 = arith.truncf %27 : vector<32x96xf32> to vector<32x96xbf16>
    %cst_12 = arith.constant dense<0.000000e+00> : vector<8x96xf32>
    %29 = tpu.matmul %26, %28, %cst_12 {dimension_numbers = #tpu.dot_dimension_numbers<[1], [0], [0], [1], [0, 0, 1, 1], [], []>} : vector<8x32xbf16>, vector<32x96xbf16>, vector<8x96xf32> -> vector<8x96xf32>
    %c0_13 = arith.constant 0 : index
    %c0_14 = arith.constant 0 : index
    %30 = vector.load %arg5[%c0_13, %c0_14] : memref<1x96xf32, #tpu.memory_space<vmem>>, vector<1x96xf32>
    %31 = vector.broadcast %30 : vector<1x96xf32> to vector<8x96xf32>
    %32 = arith.addf %29, %31 : vector<8x96xf32>
    %33 = tpu.iota {dimensions = array<i32: 0>} : vector<8x8xi32>
    %34 = tpu.iota {dimensions = array<i32: 1>} : vector<8x8xi32>
    %35 = arith.cmpi sle, %34, %33 : vector<8x8xi32>
    %cst_15 = arith.constant 0.000000e+00 : f32
    %36 = vector.broadcast %cst_15 : f32 to vector<8x32xf32>
    %37 = vector.extract_strided_slice %32 {offsets = [0, 0], sizes = [8, 8], strides = [1, 1]} : vector<8x96xf32> to vector<8x8xf32>
    %cst_16 = arith.constant 0.353553385 : f32
    %38 = vector.broadcast %cst_16 : f32 to vector<8x8xf32>
    %39 = arith.mulf %37, %38 : vector<8x8xf32>
    %40 = vector.extract_strided_slice %32 {offsets = [0, 32], sizes = [8, 8], strides = [1, 1]} : vector<8x96xf32> to vector<8x8xf32>
    %41 = vector.extract_strided_slice %32 {offsets = [0, 64], sizes = [8, 8], strides = [1, 1]} : vector<8x96xf32> to vector<8x8xf32>
    %42 = arith.truncf %39 : vector<8x8xf32> to vector<8x8xbf16>
    %43 = arith.truncf %40 : vector<8x8xf32> to vector<8x8xbf16>
    %cst_17 = arith.constant dense<0.000000e+00> : vector<8x8xf32>
    %44 = tpu.matmul %42, %43, %cst_17 {dimension_numbers = #tpu.dot_dimension_numbers<[1], [1], [0], [0], [0, 0, 1, 0], [], []>} : vector<8x8xbf16>, vector<8x8xbf16>, vector<8x8xf32> -> vector<8x8xf32>
    %cst_18 = arith.constant -3.40282347E+38 : f32
    %45 = vector.broadcast %cst_18 : f32 to vector<8x8xf32>
    %46 = arith.select %35, %44, %45 : vector<8x8xi1>, vector<8x8xf32>
    %cst_19 = arith.constant dense<0xFF800000> : vector<8xf32>
    %47 = vector.multi_reduction <maximumf>, %46, %cst_19 [1] : vector<8x8xf32> to vector<8xf32>
    %48 = vector.shape_cast %47 : vector<8xf32> to vector<8x1xf32>
    %49 = vector.broadcast %48 : vector<8x1xf32> to vector<8x8xf32>
    %50 = arith.subf %46, %49 : vector<8x8xf32>
    %51 = math.exp %50 : vector<8x8xf32>
    %cst_20 = arith.constant dense<0.000000e+00> : vector<8xf32>
    %52 = vector.multi_reduction <add>, %51, %cst_20 [1] : vector<8x8xf32> to vector<8xf32>
    %53 = vector.shape_cast %52 : vector<8xf32> to vector<8x1xf32>
    %54 = tpu.reciprocal %53 {approx = true} : vector<8x1xf32> -> vector<8x1xf32>
    %55 = arith.truncf %51 : vector<8x8xf32> to vector<8x8xbf16>
    %56 = arith.truncf %41 : vector<8x8xf32> to vector<8x8xbf16>
    %cst_21 = arith.constant dense<0.000000e+00> : vector<8x8xf32>
    %57 = tpu.matmul %55, %56, %cst_21 {dimension_numbers = #tpu.dot_dimension_numbers<[1], [0], [0], [1], [0, 0, 1, 1], [], []>} : vector<8x8xbf16>, vector<8x8xbf16>, vector<8x8xf32> -> vector<8x8xf32>
    %58 = vector.broadcast %54 : vector<8x1xf32> to vector<8x8xf32>
    %59 = arith.mulf %57, %58 : vector<8x8xf32>
    %c0_22 = arith.constant 0 : index
    %c0_23 = arith.constant 0 : index
    %60 = vector.load %arg6[%c0_22, %c0_23] : memref<32x32xf32, #tpu.memory_space<vmem>>, vector<8x32xf32>
    %61 = arith.truncf %59 : vector<8x8xf32> to vector<8x8xbf16>
    %62 = arith.truncf %60 : vector<8x32xf32> to vector<8x32xbf16>
    %cst_24 = arith.constant dense<0.000000e+00> : vector<8x32xf32>
    %63 = tpu.matmul %61, %62, %cst_24 {dimension_numbers = #tpu.dot_dimension_numbers<[1], [0], [0], [1], [0, 0, 1, 1], [], []>} : vector<8x8xbf16>, vector<8x32xbf16>, vector<8x32xf32> -> vector<8x32xf32>
    %64 = arith.addf %36, %63 : vector<8x32xf32>
    %65 = vector.extract_strided_slice %32 {offsets = [0, 8], sizes = [8, 8], strides = [1, 1]} : vector<8x96xf32> to vector<8x8xf32>
    %cst_25 = arith.constant 0.353553385 : f32
    %66 = vector.broadcast %cst_25 : f32 to vector<8x8xf32>
    %67 = arith.mulf %65, %66 : vector<8x8xf32>
    %68 = vector.extract_strided_slice %32 {offsets = [0, 40], sizes = [8, 8], strides = [1, 1]} : vector<8x96xf32> to vector<8x8xf32>
    %69 = vector.extract_strided_slice %32 {offsets = [0, 72], sizes = [8, 8], strides = [1, 1]} : vector<8x96xf32> to vector<8x8xf32>
    %70 = arith.truncf %67 : vector<8x8xf32> to vector<8x8xbf16>
    %71 = arith.truncf %68 : vector<8x8xf32> to vector<8x8xbf16>
    %cst_26 = arith.constant dense<0.000000e+00> : vector<8x8xf32>
    %72 = tpu.matmul %70, %71, %cst_26 {dimension_numbers = #tpu.dot_dimension_numbers<[1], [1], [0], [0], [0, 0, 1, 0], [], []>} : vector<8x8xbf16>, vector<8x8xbf16>, vector<8x8xf32> -> vector<8x8xf32>
    %cst_27 = arith.constant -3.40282347E+38 : f32
    %73 = vector.broadcast %cst_27 : f32 to vector<8x8xf32>
    %74 = arith.select %35, %72, %73 : vector<8x8xi1>, vector<8x8xf32>
    %cst_28 = arith.constant dense<0xFF800000> : vector<8xf32>
    %75 = vector.multi_reduction <maximumf>, %74, %cst_28 [1] : vector<8x8xf32> to vector<8xf32>
    %76 = vector.shape_cast %75 : vector<8xf32> to vector<8x1xf32>
    %77 = vector.broadcast %76 : vector<8x1xf32> to vector<8x8xf32>
    %78 = arith.subf %74, %77 : vector<8x8xf32>
    %79 = math.exp %78 : vector<8x8xf32>
    %cst_29 = arith.constant dense<0.000000e+00> : vector<8xf32>
    %80 = vector.multi_reduction <add>, %79, %cst_29 [1] : vector<8x8xf32> to vector<8xf32>
    %81 = vector.shape_cast %80 : vector<8xf32> to vector<8x1xf32>
    %82 = tpu.reciprocal %81 {approx = true} : vector<8x1xf32> -> vector<8x1xf32>
    %83 = arith.truncf %79 : vector<8x8xf32> to vector<8x8xbf16>
    %84 = arith.truncf %69 : vector<8x8xf32> to vector<8x8xbf16>
    %cst_30 = arith.constant dense<0.000000e+00> : vector<8x8xf32>
    %85 = tpu.matmul %83, %84, %cst_30 {dimension_numbers = #tpu.dot_dimension_numbers<[1], [0], [0], [1], [0, 0, 1, 1], [], []>} : vector<8x8xbf16>, vector<8x8xbf16>, vector<8x8xf32> -> vector<8x8xf32>
    %86 = vector.broadcast %82 : vector<8x1xf32> to vector<8x8xf32>
    %87 = arith.mulf %85, %86 : vector<8x8xf32>
    %c8 = arith.constant 8 : index
    %c0_31 = arith.constant 0 : index
    %88 = vector.load %arg6[%c8, %c0_31] : memref<32x32xf32, #tpu.memory_space<vmem>>, vector<8x32xf32>
    %89 = arith.truncf %87 : vector<8x8xf32> to vector<8x8xbf16>
    %90 = arith.truncf %88 : vector<8x32xf32> to vector<8x32xbf16>
    %cst_32 = arith.constant dense<0.000000e+00> : vector<8x32xf32>
    %91 = tpu.matmul %89, %90, %cst_32 {dimension_numbers = #tpu.dot_dimension_numbers<[1], [0], [0], [1], [0, 0, 1, 1], [], []>} : vector<8x8xbf16>, vector<8x32xbf16>, vector<8x32xf32> -> vector<8x32xf32>
    %92 = arith.addf %64, %91 : vector<8x32xf32>
    %93 = vector.extract_strided_slice %32 {offsets = [0, 16], sizes = [8, 8], strides = [1, 1]} : vector<8x96xf32> to vector<8x8xf32>
    %cst_33 = arith.constant 0.353553385 : f32
    %94 = vector.broadcast %cst_33 : f32 to vector<8x8xf32>
    %95 = arith.mulf %93, %94 : vector<8x8xf32>
    %96 = vector.extract_strided_slice %32 {offsets = [0, 48], sizes = [8, 8], strides = [1, 1]} : vector<8x96xf32> to vector<8x8xf32>
    %97 = vector.extract_strided_slice %32 {offsets = [0, 80], sizes = [8, 8], strides = [1, 1]} : vector<8x96xf32> to vector<8x8xf32>
    %98 = arith.truncf %95 : vector<8x8xf32> to vector<8x8xbf16>
    %99 = arith.truncf %96 : vector<8x8xf32> to vector<8x8xbf16>
    %cst_34 = arith.constant dense<0.000000e+00> : vector<8x8xf32>
    %100 = tpu.matmul %98, %99, %cst_34 {dimension_numbers = #tpu.dot_dimension_numbers<[1], [1], [0], [0], [0, 0, 1, 0], [], []>} : vector<8x8xbf16>, vector<8x8xbf16>, vector<8x8xf32> -> vector<8x8xf32>
    %cst_35 = arith.constant -3.40282347E+38 : f32
    %101 = vector.broadcast %cst_35 : f32 to vector<8x8xf32>
    %102 = arith.select %35, %100, %101 : vector<8x8xi1>, vector<8x8xf32>
    %cst_36 = arith.constant dense<0xFF800000> : vector<8xf32>
    %103 = vector.multi_reduction <maximumf>, %102, %cst_36 [1] : vector<8x8xf32> to vector<8xf32>
    %104 = vector.shape_cast %103 : vector<8xf32> to vector<8x1xf32>
    %105 = vector.broadcast %104 : vector<8x1xf32> to vector<8x8xf32>
    %106 = arith.subf %102, %105 : vector<8x8xf32>
    %107 = math.exp %106 : vector<8x8xf32>
    %cst_37 = arith.constant dense<0.000000e+00> : vector<8xf32>
    %108 = vector.multi_reduction <add>, %107, %cst_37 [1] : vector<8x8xf32> to vector<8xf32>
    %109 = vector.shape_cast %108 : vector<8xf32> to vector<8x1xf32>
    %110 = tpu.reciprocal %109 {approx = true} : vector<8x1xf32> -> vector<8x1xf32>
    %111 = arith.truncf %107 : vector<8x8xf32> to vector<8x8xbf16>
    %112 = arith.truncf %97 : vector<8x8xf32> to vector<8x8xbf16>
    %cst_38 = arith.constant dense<0.000000e+00> : vector<8x8xf32>
    %113 = tpu.matmul %111, %112, %cst_38 {dimension_numbers = #tpu.dot_dimension_numbers<[1], [0], [0], [1], [0, 0, 1, 1], [], []>} : vector<8x8xbf16>, vector<8x8xbf16>, vector<8x8xf32> -> vector<8x8xf32>
    %114 = vector.broadcast %110 : vector<8x1xf32> to vector<8x8xf32>
    %115 = arith.mulf %113, %114 : vector<8x8xf32>
    %c16 = arith.constant 16 : index
    %c0_39 = arith.constant 0 : index
    %116 = vector.load %arg6[%c16, %c0_39] : memref<32x32xf32, #tpu.memory_space<vmem>>, vector<8x32xf32>
    %117 = arith.truncf %115 : vector<8x8xf32> to vector<8x8xbf16>
    %118 = arith.truncf %116 : vector<8x32xf32> to vector<8x32xbf16>
    %cst_40 = arith.constant dense<0.000000e+00> : vector<8x32xf32>
    %119 = tpu.matmul %117, %118, %cst_40 {dimension_numbers = #tpu.dot_dimension_numbers<[1], [0], [0], [1], [0, 0, 1, 1], [], []>} : vector<8x8xbf16>, vector<8x32xbf16>, vector<8x32xf32> -> vector<8x32xf32>
    %120 = arith.addf %92, %119 : vector<8x32xf32>
    %121 = vector.extract_strided_slice %32 {offsets = [0, 24], sizes = [8, 8], strides = [1, 1]} : vector<8x96xf32> to vector<8x8xf32>
    %cst_41 = arith.constant 0.353553385 : f32
    %122 = vector.broadcast %cst_41 : f32 to vector<8x8xf32>
    %123 = arith.mulf %121, %122 : vector<8x8xf32>
    %124 = vector.extract_strided_slice %32 {offsets = [0, 56], sizes = [8, 8], strides = [1, 1]} : vector<8x96xf32> to vector<8x8xf32>
    %125 = vector.extract_strided_slice %32 {offsets = [0, 88], sizes = [8, 8], strides = [1, 1]} : vector<8x96xf32> to vector<8x8xf32>
    %126 = arith.truncf %123 : vector<8x8xf32> to vector<8x8xbf16>
    %127 = arith.truncf %124 : vector<8x8xf32> to vector<8x8xbf16>
    %cst_42 = arith.constant dense<0.000000e+00> : vector<8x8xf32>
    %128 = tpu.matmul %126, %127, %cst_42 {dimension_numbers = #tpu.dot_dimension_numbers<[1], [1], [0], [0], [0, 0, 1, 0], [], []>} : vector<8x8xbf16>, vector<8x8xbf16>, vector<8x8xf32> -> vector<8x8xf32>
    %cst_43 = arith.constant -3.40282347E+38 : f32
    %129 = vector.broadcast %cst_43 : f32 to vector<8x8xf32>
    %130 = arith.select %35, %128, %129 : vector<8x8xi1>, vector<8x8xf32>
    %cst_44 = arith.constant dense<0xFF800000> : vector<8xf32>
    %131 = vector.multi_reduction <maximumf>, %130, %cst_44 [1] : vector<8x8xf32> to vector<8xf32>
    %132 = vector.shape_cast %131 : vector<8xf32> to vector<8x1xf32>
    %133 = vector.broadcast %132 : vector<8x1xf32> to vector<8x8xf32>
    %134 = arith.subf %130, %133 : vector<8x8xf32>
    %135 = math.exp %134 : vector<8x8xf32>
    %cst_45 = arith.constant dense<0.000000e+00> : vector<8xf32>
    %136 = vector.multi_reduction <add>, %135, %cst_45 [1] : vector<8x8xf32> to vector<8xf32>
    %137 = vector.shape_cast %136 : vector<8xf32> to vector<8x1xf32>
    %138 = tpu.reciprocal %137 {approx = true} : vector<8x1xf32> -> vector<8x1xf32>
    %139 = arith.truncf %135 : vector<8x8xf32> to vector<8x8xbf16>
    %140 = arith.truncf %125 : vector<8x8xf32> to vector<8x8xbf16>
    %cst_46 = arith.constant dense<0.000000e+00> : vector<8x8xf32>
    %141 = tpu.matmul %139, %140, %cst_46 {dimension_numbers = #tpu.dot_dimension_numbers<[1], [0], [0], [1], [0, 0, 1, 1], [], []>} : vector<8x8xbf16>, vector<8x8xbf16>, vector<8x8xf32> -> vector<8x8xf32>
    %142 = vector.broadcast %138 : vector<8x1xf32> to vector<8x8xf32>
    %143 = arith.mulf %141, %142 : vector<8x8xf32>
    %c24 = arith.constant 24 : index
    %c0_47 = arith.constant 0 : index
    %144 = vector.load %arg6[%c24, %c0_47] : memref<32x32xf32, #tpu.memory_space<vmem>>, vector<8x32xf32>
    %145 = arith.truncf %143 : vector<8x8xf32> to vector<8x8xbf16>
    %146 = arith.truncf %144 : vector<8x32xf32> to vector<8x32xbf16>
    %cst_48 = arith.constant dense<0.000000e+00> : vector<8x32xf32>
    %147 = tpu.matmul %145, %146, %cst_48 {dimension_numbers = #tpu.dot_dimension_numbers<[1], [0], [0], [1], [0, 0, 1, 1], [], []>} : vector<8x8xbf16>, vector<8x32xbf16>, vector<8x32xf32> -> vector<8x32xf32>
    %148 = arith.addf %120, %147 : vector<8x32xf32>
    %149 = arith.addf %1, %148 : vector<8x32xf32>
    %c0_49 = arith.constant 0 : index
    %c0_50 = arith.constant 0 : index
    %150 = vector.load %arg7[%c0_49, %c0_50] : memref<1x32xf32, #tpu.memory_space<vmem>>, vector<1x32xf32>
    %151 = vector.broadcast %150 : vector<1x32xf32> to vector<8x32xf32>
    %152 = arith.addf %149, %151 : vector<8x32xf32>
    %c0_51 = arith.constant 0 : index
    %c0_52 = arith.constant 0 : index
    %c0_53 = arith.constant 0 : index
    %153 = vector.load %arg8[%c0_51, %c0_52, %c0_53] : memref<1x8x32xf32, #tpu.memory_space<vmem>>, vector<1x8x32xf32>
    %154 = vector.shape_cast %153 : vector<1x8x32xf32> to vector<8x32xf32>
    %155 = vector.shape_cast %152 : vector<8x32xf32> to vector<1x8x32xf32>
    tpu.vector_store %arg8[%c0_51, %c0_52, %c0_53], %155 {strides = array<i32>} : memref<1x8x32xf32, #tpu.memory_space<vmem>>, vector<1x8x32xf32>,
    return
  }
  func.func @transform_0(%arg0: i32) -> (i32, i32, i32) {
    %c0_i32 = arith.constant 0 : i32
    %c0_i32_0 = arith.constant 0 : i32
    %c0_i32_1 = arith.constant 0 : i32
    return %arg0, %c0_i32, %c0_i32_0 : i32, i32, i32
  }
  func.func @transform_1(%arg0: i32) -> (i32, i32) {
    %c0_i32 = arith.constant 0 : i32
    %c0_i32_0 = arith.constant 0 : i32
    %c0_i32_1 = arith.constant 0 : i32
    return %c0_i32, %c0_i32_0 : i32, i32
  }
  func.func @transform_2(%arg0: i32) -> (i32, i32) {
    %c0_i32 = arith.constant 0 : i32
    %c0_i32_0 = arith.constant 0 : i32
    %c0_i32_1 = arith.constant 0 : i32
    return %c0_i32, %c0_i32_0 : i32, i32
  }
  func.func @transform_3(%arg0: i32) -> (i32, i32) {
    %c0_i32 = arith.constant 0 : i32
    %c0_i32_0 = arith.constant 0 : i32
    %c0_i32_1 = arith.constant 0 : i32
    return %c0_i32, %c0_i32_0 : i32, i32
  }
  func.func @transform_4(%arg0: i32) -> (i32, i32) {
    %c0_i32 = arith.constant 0 : i32
    %c0_i32_0 = arith.constant 0 : i32
    %c0_i32_1 = arith.constant 0 : i32
    return %c0_i32, %c0_i32_0 : i32, i32
  }
  func.func @transform_5(%arg0: i32) -> (i32, i32) {
    %c0_i32 = arith.constant 0 : i32
    %c0_i32_0 = arith.constant 0 : i32
    %c0_i32_1 = arith.constant 0 : i32
    return %c0_i32, %c0_i32_0 : i32, i32
  }
  func.func @transform_6(%arg0: i32) -> (i32, i32) {
    %c0_i32 = arith.constant 0 : i32
    %c0_i32_0 = arith.constant 0 : i32
    %c0_i32_1 = arith.constant 0 : i32
    return %c0_i32, %c0_i32_0 : i32, i32
  }
  func.func @transform_7(%arg0: i32) -> (i32, i32, i32) {
    %c0_i32 = arith.constant 0 : i32
    %c0_i32_0 = arith.constant 0 : i32
    %c0_i32_1 = arith.constant 0 : i32
    return %arg0, %c0_i32, %c0_i32_0 : i32, i32, i32
  }
}

module attributes {stable_mosaic.version = 11 : i64} {
  func.func @_attn_block_kernel(%arg0: i32, %arg1: memref<1x8x32xf32, #tpu.memory_space<vmem>>, %arg2: memref<8x32xf32, #tpu.memory_space<vmem>>, %arg3: memref<1x32xf32, #tpu.memory_space<vmem>>, %arg4: memref<1x32xf32, #tpu.memory_space<vmem>>, %arg5: memref<32x96xf32, #tpu.memory_space<vmem>>, %arg6: memref<1x96xf32, #tpu.memory_space<vmem>>, %arg7: memref<32x32xf32, #tpu.memory_space<vmem>>, %arg8: memref<1x32xf32, #tpu.memory_space<vmem>>, %arg9: memref<1x8x32xf32, #tpu.memory_space<vmem>>) attributes {dimension_semantics = [#tpu.dimension_semantics<parallel>], iteration_bounds = array<i64: 3>, scalar_prefetch = 0 : i64, scratch_operands = 0 : i64, tpu.core_type = #tpu.core_type<tc>, window_params = [{transform_indices = @transform_0, window_bounds = array<i64: 1, 8, 32>}, {pipeline_mode = #tpu.pipeline_mode<synchronous>, transform_indices = @transform_1, window_bounds = array<i64: 8, 32>}, {pipeline_mode = #tpu.pipeline_mode<synchronous>, transform_indices = @transform_2, window_bounds = array<i64: 1, 32>}, {pipeline_mode = #tpu.pipeline_mode<synchronous>, transform_indices = @transform_3, window_bounds = array<i64: 1, 32>}, {pipeline_mode = #tpu.pipeline_mode<synchronous>, transform_indices = @transform_4, window_bounds = array<i64: 32, 96>}, {pipeline_mode = #tpu.pipeline_mode<synchronous>, transform_indices = @transform_5, window_bounds = array<i64: 1, 96>}, {pipeline_mode = #tpu.pipeline_mode<synchronous>, transform_indices = @transform_6, window_bounds = array<i64: 32, 32>}, {pipeline_mode = #tpu.pipeline_mode<synchronous>, transform_indices = @transform_7, window_bounds = array<i64: 1, 32>}, {transform_indices = @transform_8, window_bounds = array<i64: 1, 8, 32>}]} {
    %c0 = arith.constant 0 : index
    %c0_0 = arith.constant 0 : index
    %c0_1 = arith.constant 0 : index
    %0 = vector.load %arg1[%c0, %c0_0, %c0_1] : memref<1x8x32xf32, #tpu.memory_space<vmem>>, vector<1x8x32xf32>
    %1 = vector.shape_cast %0 : vector<1x8x32xf32> to vector<8x32xf32>
    %c0_2 = arith.constant 0 : index
    %c0_3 = arith.constant 0 : index
    %2 = vector.load %arg2[%c0_2, %c0_3] : memref<8x32xf32, #tpu.memory_space<vmem>>, vector<8x32xf32>
    %3 = arith.addf %1, %2 : vector<8x32xf32>
    %c0_4 = arith.constant 0 : index
    %c0_5 = arith.constant 0 : index
    %4 = vector.load %arg3[%c0_4, %c0_5] : memref<1x32xf32, #tpu.memory_space<vmem>>, vector<1x32xf32>
    %c0_6 = arith.constant 0 : index
    %c0_7 = arith.constant 0 : index
    %5 = vector.load %arg4[%c0_6, %c0_7] : memref<1x32xf32, #tpu.memory_space<vmem>>, vector<1x32xf32>
    %cst = arith.constant dense<0.000000e+00> : vector<8xf32>
    %6 = vector.multi_reduction <add>, %3, %cst [1] : vector<8x32xf32> to vector<8xf32>
    %7 = vector.shape_cast %6 : vector<8xf32> to vector<8x1xf32>
    %cst_8 = arith.constant 3.200000e+01 : f32
    %8 = vector.broadcast %cst_8 : f32 to vector<8x1xf32>
    %9 = arith.divf %7, %8 : vector<8x1xf32>
    %10 = vector.broadcast %9 : vector<8x1xf32> to vector<8x32xf32>
    %11 = arith.subf %3, %10 : vector<8x32xf32>
    %12 = arith.mulf %11, %11 : vector<8x32xf32>
    %cst_9 = arith.constant dense<0.000000e+00> : vector<8xf32>
    %13 = vector.multi_reduction <add>, %12, %cst_9 [1] : vector<8x32xf32> to vector<8xf32>
    %14 = vector.shape_cast %13 : vector<8xf32> to vector<8x1xf32>
    %cst_10 = arith.constant 3.200000e+01 : f32
    %15 = vector.broadcast %cst_10 : f32 to vector<8x1xf32>
    %16 = arith.divf %14, %15 : vector<8x1xf32>
    %17 = vector.broadcast %9 : vector<8x1xf32> to vector<8x32xf32>
    %18 = arith.subf %3, %17 : vector<8x32xf32>
    %cst_11 = arith.constant 9.99999974E-6 : f32
    %19 = vector.broadcast %cst_11 : f32 to vector<8x1xf32>
    %20 = arith.addf %16, %19 : vector<8x1xf32>
    %21 = math.rsqrt %20 : vector<8x1xf32>
    %22 = vector.broadcast %21 : vector<8x1xf32> to vector<8x32xf32>
    %23 = arith.mulf %18, %22 : vector<8x32xf32>
    %24 = vector.broadcast %4 : vector<1x32xf32> to vector<8x32xf32>
    %25 = arith.mulf %23, %24 : vector<8x32xf32>
    %26 = vector.broadcast %5 : vector<1x32xf32> to vector<8x32xf32>
    %27 = arith.addf %25, %26 : vector<8x32xf32>
    %28 = arith.truncf %27 : vector<8x32xf32> to vector<8x32xbf16>
    %c0_12 = arith.constant 0 : index
    %c0_13 = arith.constant 0 : index
    %29 = vector.load %arg5[%c0_12, %c0_13] : memref<32x96xf32, #tpu.memory_space<vmem>>, vector<32x96xf32>
    %30 = arith.truncf %29 : vector<32x96xf32> to vector<32x96xbf16>
    %cst_14 = arith.constant dense<0.000000e+00> : vector<8x96xf32>
    %31 = tpu.matmul %28, %30, %cst_14 {dimension_numbers = #tpu.dot_dimension_numbers<[1], [0], [0], [1], [0, 0, 1, 1], [], []>} : vector<8x32xbf16>, vector<32x96xbf16>, vector<8x96xf32> -> vector<8x96xf32>
    %c0_15 = arith.constant 0 : index
    %c0_16 = arith.constant 0 : index
    %32 = vector.load %arg6[%c0_15, %c0_16] : memref<1x96xf32, #tpu.memory_space<vmem>>, vector<1x96xf32>
    %33 = vector.broadcast %32 : vector<1x96xf32> to vector<8x96xf32>
    %34 = arith.addf %31, %33 : vector<8x96xf32>
    %35 = tpu.iota {dimensions = array<i32: 0>} : vector<8x8xi32>
    %36 = tpu.iota {dimensions = array<i32: 1>} : vector<8x8xi32>
    %37 = arith.cmpi sle, %36, %35 : vector<8x8xi32>
    %cst_17 = arith.constant 0.000000e+00 : f32
    %38 = vector.broadcast %cst_17 : f32 to vector<8x32xf32>
    %39 = vector.extract_strided_slice %34 {offsets = [0, 0], sizes = [8, 8], strides = [1, 1]} : vector<8x96xf32> to vector<8x8xf32>
    %cst_18 = arith.constant 0.353553385 : f32
    %40 = vector.broadcast %cst_18 : f32 to vector<8x8xf32>
    %41 = arith.mulf %39, %40 : vector<8x8xf32>
    %42 = vector.extract_strided_slice %34 {offsets = [0, 32], sizes = [8, 8], strides = [1, 1]} : vector<8x96xf32> to vector<8x8xf32>
    %43 = vector.extract_strided_slice %34 {offsets = [0, 64], sizes = [8, 8], strides = [1, 1]} : vector<8x96xf32> to vector<8x8xf32>
    %44 = arith.truncf %41 : vector<8x8xf32> to vector<8x8xbf16>
    %45 = arith.truncf %42 : vector<8x8xf32> to vector<8x8xbf16>
    %cst_19 = arith.constant dense<0.000000e+00> : vector<8x8xf32>
    %46 = tpu.matmul %44, %45, %cst_19 {dimension_numbers = #tpu.dot_dimension_numbers<[1], [1], [0], [0], [0, 0, 1, 0], [], []>} : vector<8x8xbf16>, vector<8x8xbf16>, vector<8x8xf32> -> vector<8x8xf32>
    %cst_20 = arith.constant -3.40282347E+38 : f32
    %47 = vector.broadcast %cst_20 : f32 to vector<8x8xf32>
    %48 = arith.select %37, %46, %47 : vector<8x8xi1>, vector<8x8xf32>
    %cst_21 = arith.constant dense<0xFF800000> : vector<8xf32>
    %49 = vector.multi_reduction <maximumf>, %48, %cst_21 [1] : vector<8x8xf32> to vector<8xf32>
    %50 = vector.shape_cast %49 : vector<8xf32> to vector<8x1xf32>
    %51 = vector.broadcast %50 : vector<8x1xf32> to vector<8x8xf32>
    %52 = arith.subf %48, %51 : vector<8x8xf32>
    %53 = math.exp %52 : vector<8x8xf32>
    %cst_22 = arith.constant dense<0.000000e+00> : vector<8xf32>
    %54 = vector.multi_reduction <add>, %53, %cst_22 [1] : vector<8x8xf32> to vector<8xf32>
    %55 = vector.shape_cast %54 : vector<8xf32> to vector<8x1xf32>
    %56 = tpu.reciprocal %55 {approx = true} : vector<8x1xf32> -> vector<8x1xf32>
    %57 = arith.truncf %53 : vector<8x8xf32> to vector<8x8xbf16>
    %58 = arith.truncf %43 : vector<8x8xf32> to vector<8x8xbf16>
    %cst_23 = arith.constant dense<0.000000e+00> : vector<8x8xf32>
    %59 = tpu.matmul %57, %58, %cst_23 {dimension_numbers = #tpu.dot_dimension_numbers<[1], [0], [0], [1], [0, 0, 1, 1], [], []>} : vector<8x8xbf16>, vector<8x8xbf16>, vector<8x8xf32> -> vector<8x8xf32>
    %60 = vector.broadcast %56 : vector<8x1xf32> to vector<8x8xf32>
    %61 = arith.mulf %59, %60 : vector<8x8xf32>
    %c0_24 = arith.constant 0 : index
    %c0_25 = arith.constant 0 : index
    %62 = vector.load %arg7[%c0_24, %c0_25] : memref<32x32xf32, #tpu.memory_space<vmem>>, vector<8x32xf32>
    %63 = arith.truncf %61 : vector<8x8xf32> to vector<8x8xbf16>
    %64 = arith.truncf %62 : vector<8x32xf32> to vector<8x32xbf16>
    %cst_26 = arith.constant dense<0.000000e+00> : vector<8x32xf32>
    %65 = tpu.matmul %63, %64, %cst_26 {dimension_numbers = #tpu.dot_dimension_numbers<[1], [0], [0], [1], [0, 0, 1, 1], [], []>} : vector<8x8xbf16>, vector<8x32xbf16>, vector<8x32xf32> -> vector<8x32xf32>
    %66 = arith.addf %38, %65 : vector<8x32xf32>
    %67 = vector.extract_strided_slice %34 {offsets = [0, 8], sizes = [8, 8], strides = [1, 1]} : vector<8x96xf32> to vector<8x8xf32>
    %cst_27 = arith.constant 0.353553385 : f32
    %68 = vector.broadcast %cst_27 : f32 to vector<8x8xf32>
    %69 = arith.mulf %67, %68 : vector<8x8xf32>
    %70 = vector.extract_strided_slice %34 {offsets = [0, 40], sizes = [8, 8], strides = [1, 1]} : vector<8x96xf32> to vector<8x8xf32>
    %71 = vector.extract_strided_slice %34 {offsets = [0, 72], sizes = [8, 8], strides = [1, 1]} : vector<8x96xf32> to vector<8x8xf32>
    %72 = arith.truncf %69 : vector<8x8xf32> to vector<8x8xbf16>
    %73 = arith.truncf %70 : vector<8x8xf32> to vector<8x8xbf16>
    %cst_28 = arith.constant dense<0.000000e+00> : vector<8x8xf32>
    %74 = tpu.matmul %72, %73, %cst_28 {dimension_numbers = #tpu.dot_dimension_numbers<[1], [1], [0], [0], [0, 0, 1, 0], [], []>} : vector<8x8xbf16>, vector<8x8xbf16>, vector<8x8xf32> -> vector<8x8xf32>
    %cst_29 = arith.constant -3.40282347E+38 : f32
    %75 = vector.broadcast %cst_29 : f32 to vector<8x8xf32>
    %76 = arith.select %37, %74, %75 : vector<8x8xi1>, vector<8x8xf32>
    %cst_30 = arith.constant dense<0xFF800000> : vector<8xf32>
    %77 = vector.multi_reduction <maximumf>, %76, %cst_30 [1] : vector<8x8xf32> to vector<8xf32>
    %78 = vector.shape_cast %77 : vector<8xf32> to vector<8x1xf32>
    %79 = vector.broadcast %78 : vector<8x1xf32> to vector<8x8xf32>
    %80 = arith.subf %76, %79 : vector<8x8xf32>
    %81 = math.exp %80 : vector<8x8xf32>
    %cst_31 = arith.constant dense<0.000000e+00> : vector<8xf32>
    %82 = vector.multi_reduction <add>, %81, %cst_31 [1] : vector<8x8xf32> to vector<8xf32>
    %83 = vector.shape_cast %82 : vector<8xf32> to vector<8x1xf32>
    %84 = tpu.reciprocal %83 {approx = true} : vector<8x1xf32> -> vector<8x1xf32>
    %85 = arith.truncf %81 : vector<8x8xf32> to vector<8x8xbf16>
    %86 = arith.truncf %71 : vector<8x8xf32> to vector<8x8xbf16>
    %cst_32 = arith.constant dense<0.000000e+00> : vector<8x8xf32>
    %87 = tpu.matmul %85, %86, %cst_32 {dimension_numbers = #tpu.dot_dimension_numbers<[1], [0], [0], [1], [0, 0, 1, 1], [], []>} : vector<8x8xbf16>, vector<8x8xbf16>, vector<8x8xf32> -> vector<8x8xf32>
    %88 = vector.broadcast %84 : vector<8x1xf32> to vector<8x8xf32>
    %89 = arith.mulf %87, %88 : vector<8x8xf32>
    %c8 = arith.constant 8 : index
    %c0_33 = arith.constant 0 : index
    %90 = vector.load %arg7[%c8, %c0_33] : memref<32x32xf32, #tpu.memory_space<vmem>>, vector<8x32xf32>
    %91 = arith.truncf %89 : vector<8x8xf32> to vector<8x8xbf16>
    %92 = arith.truncf %90 : vector<8x32xf32> to vector<8x32xbf16>
    %cst_34 = arith.constant dense<0.000000e+00> : vector<8x32xf32>
    %93 = tpu.matmul %91, %92, %cst_34 {dimension_numbers = #tpu.dot_dimension_numbers<[1], [0], [0], [1], [0, 0, 1, 1], [], []>} : vector<8x8xbf16>, vector<8x32xbf16>, vector<8x32xf32> -> vector<8x32xf32>
    %94 = arith.addf %66, %93 : vector<8x32xf32>
    %95 = vector.extract_strided_slice %34 {offsets = [0, 16], sizes = [8, 8], strides = [1, 1]} : vector<8x96xf32> to vector<8x8xf32>
    %cst_35 = arith.constant 0.353553385 : f32
    %96 = vector.broadcast %cst_35 : f32 to vector<8x8xf32>
    %97 = arith.mulf %95, %96 : vector<8x8xf32>
    %98 = vector.extract_strided_slice %34 {offsets = [0, 48], sizes = [8, 8], strides = [1, 1]} : vector<8x96xf32> to vector<8x8xf32>
    %99 = vector.extract_strided_slice %34 {offsets = [0, 80], sizes = [8, 8], strides = [1, 1]} : vector<8x96xf32> to vector<8x8xf32>
    %100 = arith.truncf %97 : vector<8x8xf32> to vector<8x8xbf16>
    %101 = arith.truncf %98 : vector<8x8xf32> to vector<8x8xbf16>
    %cst_36 = arith.constant dense<0.000000e+00> : vector<8x8xf32>
    %102 = tpu.matmul %100, %101, %cst_36 {dimension_numbers = #tpu.dot_dimension_numbers<[1], [1], [0], [0], [0, 0, 1, 0], [], []>} : vector<8x8xbf16>, vector<8x8xbf16>, vector<8x8xf32> -> vector<8x8xf32>
    %cst_37 = arith.constant -3.40282347E+38 : f32
    %103 = vector.broadcast %cst_37 : f32 to vector<8x8xf32>
    %104 = arith.select %37, %102, %103 : vector<8x8xi1>, vector<8x8xf32>
    %cst_38 = arith.constant dense<0xFF800000> : vector<8xf32>
    %105 = vector.multi_reduction <maximumf>, %104, %cst_38 [1] : vector<8x8xf32> to vector<8xf32>
    %106 = vector.shape_cast %105 : vector<8xf32> to vector<8x1xf32>
    %107 = vector.broadcast %106 : vector<8x1xf32> to vector<8x8xf32>
    %108 = arith.subf %104, %107 : vector<8x8xf32>
    %109 = math.exp %108 : vector<8x8xf32>
    %cst_39 = arith.constant dense<0.000000e+00> : vector<8xf32>
    %110 = vector.multi_reduction <add>, %109, %cst_39 [1] : vector<8x8xf32> to vector<8xf32>
    %111 = vector.shape_cast %110 : vector<8xf32> to vector<8x1xf32>
    %112 = tpu.reciprocal %111 {approx = true} : vector<8x1xf32> -> vector<8x1xf32>
    %113 = arith.truncf %109 : vector<8x8xf32> to vector<8x8xbf16>
    %114 = arith.truncf %99 : vector<8x8xf32> to vector<8x8xbf16>
    %cst_40 = arith.constant dense<0.000000e+00> : vector<8x8xf32>
    %115 = tpu.matmul %113, %114, %cst_40 {dimension_numbers = #tpu.dot_dimension_numbers<[1], [0], [0], [1], [0, 0, 1, 1], [], []>} : vector<8x8xbf16>, vector<8x8xbf16>, vector<8x8xf32> -> vector<8x8xf32>
    %116 = vector.broadcast %112 : vector<8x1xf32> to vector<8x8xf32>
    %117 = arith.mulf %115, %116 : vector<8x8xf32>
    %c16 = arith.constant 16 : index
    %c0_41 = arith.constant 0 : index
    %118 = vector.load %arg7[%c16, %c0_41] : memref<32x32xf32, #tpu.memory_space<vmem>>, vector<8x32xf32>
    %119 = arith.truncf %117 : vector<8x8xf32> to vector<8x8xbf16>
    %120 = arith.truncf %118 : vector<8x32xf32> to vector<8x32xbf16>
    %cst_42 = arith.constant dense<0.000000e+00> : vector<8x32xf32>
    %121 = tpu.matmul %119, %120, %cst_42 {dimension_numbers = #tpu.dot_dimension_numbers<[1], [0], [0], [1], [0, 0, 1, 1], [], []>} : vector<8x8xbf16>, vector<8x32xbf16>, vector<8x32xf32> -> vector<8x32xf32>
    %122 = arith.addf %94, %121 : vector<8x32xf32>
    %123 = vector.extract_strided_slice %34 {offsets = [0, 24], sizes = [8, 8], strides = [1, 1]} : vector<8x96xf32> to vector<8x8xf32>
    %cst_43 = arith.constant 0.353553385 : f32
    %124 = vector.broadcast %cst_43 : f32 to vector<8x8xf32>
    %125 = arith.mulf %123, %124 : vector<8x8xf32>
    %126 = vector.extract_strided_slice %34 {offsets = [0, 56], sizes = [8, 8], strides = [1, 1]} : vector<8x96xf32> to vector<8x8xf32>
    %127 = vector.extract_strided_slice %34 {offsets = [0, 88], sizes = [8, 8], strides = [1, 1]} : vector<8x96xf32> to vector<8x8xf32>
    %128 = arith.truncf %125 : vector<8x8xf32> to vector<8x8xbf16>
    %129 = arith.truncf %126 : vector<8x8xf32> to vector<8x8xbf16>
    %cst_44 = arith.constant dense<0.000000e+00> : vector<8x8xf32>
    %130 = tpu.matmul %128, %129, %cst_44 {dimension_numbers = #tpu.dot_dimension_numbers<[1], [1], [0], [0], [0, 0, 1, 0], [], []>} : vector<8x8xbf16>, vector<8x8xbf16>, vector<8x8xf32> -> vector<8x8xf32>
    %cst_45 = arith.constant -3.40282347E+38 : f32
    %131 = vector.broadcast %cst_45 : f32 to vector<8x8xf32>
    %132 = arith.select %37, %130, %131 : vector<8x8xi1>, vector<8x8xf32>
    %cst_46 = arith.constant dense<0xFF800000> : vector<8xf32>
    %133 = vector.multi_reduction <maximumf>, %132, %cst_46 [1] : vector<8x8xf32> to vector<8xf32>
    %134 = vector.shape_cast %133 : vector<8xf32> to vector<8x1xf32>
    %135 = vector.broadcast %134 : vector<8x1xf32> to vector<8x8xf32>
    %136 = arith.subf %132, %135 : vector<8x8xf32>
    %137 = math.exp %136 : vector<8x8xf32>
    %cst_47 = arith.constant dense<0.000000e+00> : vector<8xf32>
    %138 = vector.multi_reduction <add>, %137, %cst_47 [1] : vector<8x8xf32> to vector<8xf32>
    %139 = vector.shape_cast %138 : vector<8xf32> to vector<8x1xf32>
    %140 = tpu.reciprocal %139 {approx = true} : vector<8x1xf32> -> vector<8x1xf32>
    %141 = arith.truncf %137 : vector<8x8xf32> to vector<8x8xbf16>
    %142 = arith.truncf %127 : vector<8x8xf32> to vector<8x8xbf16>
    %cst_48 = arith.constant dense<0.000000e+00> : vector<8x8xf32>
    %143 = tpu.matmul %141, %142, %cst_48 {dimension_numbers = #tpu.dot_dimension_numbers<[1], [0], [0], [1], [0, 0, 1, 1], [], []>} : vector<8x8xbf16>, vector<8x8xbf16>, vector<8x8xf32> -> vector<8x8xf32>
    %144 = vector.broadcast %140 : vector<8x1xf32> to vector<8x8xf32>
    %145 = arith.mulf %143, %144 : vector<8x8xf32>
    %c24 = arith.constant 24 : index
    %c0_49 = arith.constant 0 : index
    %146 = vector.load %arg7[%c24, %c0_49] : memref<32x32xf32, #tpu.memory_space<vmem>>, vector<8x32xf32>
    %147 = arith.truncf %145 : vector<8x8xf32> to vector<8x8xbf16>
    %148 = arith.truncf %146 : vector<8x32xf32> to vector<8x32xbf16>
    %cst_50 = arith.constant dense<0.000000e+00> : vector<8x32xf32>
    %149 = tpu.matmul %147, %148, %cst_50 {dimension_numbers = #tpu.dot_dimension_numbers<[1], [0], [0], [1], [0, 0, 1, 1], [], []>} : vector<8x8xbf16>, vector<8x32xbf16>, vector<8x32xf32> -> vector<8x32xf32>
    %150 = arith.addf %122, %149 : vector<8x32xf32>
    %151 = arith.addf %3, %150 : vector<8x32xf32>
    %c0_51 = arith.constant 0 : index
    %c0_52 = arith.constant 0 : index
    %152 = vector.load %arg8[%c0_51, %c0_52] : memref<1x32xf32, #tpu.memory_space<vmem>>, vector<1x32xf32>
    %153 = vector.broadcast %152 : vector<1x32xf32> to vector<8x32xf32>
    %154 = arith.addf %151, %153 : vector<8x32xf32>
    %c0_53 = arith.constant 0 : index
    %c0_54 = arith.constant 0 : index
    %c0_55 = arith.constant 0 : index
    %155 = vector.load %arg9[%c0_53, %c0_54, %c0_55] : memref<1x8x32xf32, #tpu.memory_space<vmem>>, vector<1x8x32xf32>
    %156 = vector.shape_cast %155 : vector<1x8x32xf32> to vector<8x32xf32>
    %157 = vector.shape_cast %154 : vector<8x32xf32> to vector<1x8x32xf32>
    tpu.vector_store %arg9[%c0_53, %c0_54, %c0_55], %157 {strides = array<i32>} : memref<1x8x32xf32, #tpu.memory_space<vmem>>, vector<1x8x32xf32>,
    return
  }
  func.func @transform_0(%arg0: i32) -> (i32, i32, i32) {
    %c0_i32 = arith.constant 0 : i32
    %c0_i32_0 = arith.constant 0 : i32
    %c0_i32_1 = arith.constant 0 : i32
    return %arg0, %c0_i32, %c0_i32_0 : i32, i32, i32
  }
  func.func @transform_1(%arg0: i32) -> (i32, i32) {
    %c0_i32 = arith.constant 0 : i32
    %c0_i32_0 = arith.constant 0 : i32
    %c0_i32_1 = arith.constant 0 : i32
    return %c0_i32, %c0_i32_0 : i32, i32
  }
  func.func @transform_2(%arg0: i32) -> (i32, i32) {
    %c0_i32 = arith.constant 0 : i32
    %c0_i32_0 = arith.constant 0 : i32
    %c0_i32_1 = arith.constant 0 : i32
    return %c0_i32, %c0_i32_0 : i32, i32
  }
  func.func @transform_3(%arg0: i32) -> (i32, i32) {
    %c0_i32 = arith.constant 0 : i32
    %c0_i32_0 = arith.constant 0 : i32
    %c0_i32_1 = arith.constant 0 : i32
    return %c0_i32, %c0_i32_0 : i32, i32
  }
  func.func @transform_4(%arg0: i32) -> (i32, i32) {
    %c0_i32 = arith.constant 0 : i32
    %c0_i32_0 = arith.constant 0 : i32
    %c0_i32_1 = arith.constant 0 : i32
    return %c0_i32, %c0_i32_0 : i32, i32
  }
  func.func @transform_5(%arg0: i32) -> (i32, i32) {
    %c0_i32 = arith.constant 0 : i32
    %c0_i32_0 = arith.constant 0 : i32
    %c0_i32_1 = arith.constant 0 : i32
    return %c0_i32, %c0_i32_0 : i32, i32
  }
  func.func @transform_6(%arg0: i32) -> (i32, i32) {
    %c0_i32 = arith.constant 0 : i32
    %c0_i32_0 = arith.constant 0 : i32
    %c0_i32_1 = arith.constant 0 : i32
    return %c0_i32, %c0_i32_0 : i32, i32
  }
  func.func @transform_7(%arg0: i32) -> (i32, i32) {
    %c0_i32 = arith.constant 0 : i32
    %c0_i32_0 = arith.constant 0 : i32
    %c0_i32_1 = arith.constant 0 : i32
    return %c0_i32, %c0_i32_0 : i32, i32
  }
  func.func @transform_8(%arg0: i32) -> (i32, i32, i32) {
    %c0_i32 = arith.constant 0 : i32
    %c0_i32_0 = arith.constant 0 : i32
    %c0_i32_1 = arith.constant 0 : i32
    return %arg0, %c0_i32, %c0_i32_0 : i32, i32, i32
  }
}

module attributes {stable_mosaic.version = 11 : i64} {
  func.func @_logits_kernel(%arg0: memref<2x32xf32, #tpu.memory_space<vmem>>, %arg1: memref<3x32xf32, #tpu.memory_space<vmem>>, %arg2: memref<1x1xf32, #tpu.memory_space<smem>>, %arg3: memref<2x3xf32, #tpu.memory_space<vmem>>) attributes {dimension_semantics = [], scalar_prefetch = 0 : i64, scratch_operands = 0 : i64, tpu.core_type = #tpu.core_type<tc>} {
    %c0 = arith.constant 0 : index
    %c0_0 = arith.constant 0 : index
    %0 = vector.load %arg0[%c0, %c0_0] : memref<2x32xf32, #tpu.memory_space<vmem>>, vector<2x32xf32>
    %c0_1 = arith.constant 0 : index
    %c0_2 = arith.constant 0 : index
    %1 = vector.load %arg1[%c0_1, %c0_2] : memref<3x32xf32, #tpu.memory_space<vmem>>, vector<3x32xf32>
    %2 = arith.mulf %0, %0 : vector<2x32xf32>
    %cst = arith.constant dense<0.000000e+00> : vector<2xf32>
    %3 = vector.multi_reduction <add>, %2, %cst [1] : vector<2x32xf32> to vector<2xf32>
    %4 = vector.shape_cast %3 : vector<2xf32> to vector<2x1xf32>
    %5 = math.rsqrt %4 : vector<2x1xf32>
    %6 = vector.broadcast %5 : vector<2x1xf32> to vector<2x32xf32>
    %7 = arith.mulf %0, %6 : vector<2x32xf32>
    %8 = arith.mulf %1, %1 : vector<3x32xf32>
    %cst_3 = arith.constant dense<0.000000e+00> : vector<3xf32>
    %9 = vector.multi_reduction <add>, %8, %cst_3 [1] : vector<3x32xf32> to vector<3xf32>
    %10 = vector.shape_cast %9 : vector<3xf32> to vector<3x1xf32>
    %11 = math.rsqrt %10 : vector<3x1xf32>
    %12 = vector.broadcast %11 : vector<3x1xf32> to vector<3x32xf32>
    %13 = arith.mulf %1, %12 : vector<3x32xf32>
    %c0_4 = arith.constant 0 : index
    %c0_5 = arith.constant 0 : index
    %14 = memref.load %arg2[%c0_4, %c0_5] : memref<1x1xf32, #tpu.memory_space<smem>>
    %15 = math.exp %14 : f32
    %cst_6 = arith.constant dense<0.000000e+00> : vector<2x3xf32>
    %16 = tpu.matmul %7, %13, %cst_6 {dimension_numbers = #tpu.dot_dimension_numbers<[1], [1], [0], [0], [0, 0, 1, 0], [], []>} : vector<2x32xf32>, vector<3x32xf32>, vector<2x3xf32> -> vector<2x3xf32>
    %17 = vector.broadcast %15 : f32 to vector<2x3xf32>
    %18 = arith.mulf %17, %16 : vector<2x3xf32>
    %c0_7 = arith.constant 0 : index
    %c0_8 = arith.constant 0 : index
    %19 = vector.load %arg3[%c0_7, %c0_8] : memref<2x3xf32, #tpu.memory_space<vmem>>, vector<2x3xf32>
    tpu.vector_store %arg3[%c0_7, %c0_8], %18 {strides = array<i32>} : memref<2x3xf32, #tpu.memory_space<vmem>>, vector<2x3xf32>,
    return
  }
}

module attributes {stable_mosaic.version = 11 : i64} {
  func.func @_ln_linear_kernel(%arg0: memref<3x32xf32, #tpu.memory_space<vmem>>, %arg1: memref<1x32xf32, #tpu.memory_space<vmem>>, %arg2: memref<1x32xf32, #tpu.memory_space<vmem>>, %arg3: memref<32x32xf32, #tpu.memory_space<vmem>>, %arg4: memref<3x32xf32, #tpu.memory_space<vmem>>) attributes {dimension_semantics = [], scalar_prefetch = 0 : i64, scratch_operands = 0 : i64, tpu.core_type = #tpu.core_type<tc>} {
    %c0 = arith.constant 0 : index
    %c0_0 = arith.constant 0 : index
    %0 = vector.load %arg0[%c0, %c0_0] : memref<3x32xf32, #tpu.memory_space<vmem>>, vector<3x32xf32>
    %c0_1 = arith.constant 0 : index
    %c0_2 = arith.constant 0 : index
    %1 = vector.load %arg1[%c0_1, %c0_2] : memref<1x32xf32, #tpu.memory_space<vmem>>, vector<1x32xf32>
    %c0_3 = arith.constant 0 : index
    %c0_4 = arith.constant 0 : index
    %2 = vector.load %arg2[%c0_3, %c0_4] : memref<1x32xf32, #tpu.memory_space<vmem>>, vector<1x32xf32>
    %cst = arith.constant dense<0.000000e+00> : vector<3xf32>
    %3 = vector.multi_reduction <add>, %0, %cst [1] : vector<3x32xf32> to vector<3xf32>
    %4 = vector.shape_cast %3 : vector<3xf32> to vector<3x1xf32>
    %cst_5 = arith.constant 3.200000e+01 : f32
    %5 = vector.broadcast %cst_5 : f32 to vector<3x1xf32>
    %6 = arith.divf %4, %5 : vector<3x1xf32>
    %7 = vector.broadcast %6 : vector<3x1xf32> to vector<3x32xf32>
    %8 = arith.subf %0, %7 : vector<3x32xf32>
    %9 = arith.mulf %8, %8 : vector<3x32xf32>
    %cst_6 = arith.constant dense<0.000000e+00> : vector<3xf32>
    %10 = vector.multi_reduction <add>, %9, %cst_6 [1] : vector<3x32xf32> to vector<3xf32>
    %11 = vector.shape_cast %10 : vector<3xf32> to vector<3x1xf32>
    %cst_7 = arith.constant 3.200000e+01 : f32
    %12 = vector.broadcast %cst_7 : f32 to vector<3x1xf32>
    %13 = arith.divf %11, %12 : vector<3x1xf32>
    %14 = vector.broadcast %6 : vector<3x1xf32> to vector<3x32xf32>
    %15 = arith.subf %0, %14 : vector<3x32xf32>
    %cst_8 = arith.constant 9.99999974E-6 : f32
    %16 = vector.broadcast %cst_8 : f32 to vector<3x1xf32>
    %17 = arith.addf %13, %16 : vector<3x1xf32>
    %18 = math.rsqrt %17 : vector<3x1xf32>
    %19 = vector.broadcast %18 : vector<3x1xf32> to vector<3x32xf32>
    %20 = arith.mulf %15, %19 : vector<3x32xf32>
    %21 = vector.broadcast %1 : vector<1x32xf32> to vector<3x32xf32>
    %22 = arith.mulf %20, %21 : vector<3x32xf32>
    %23 = vector.broadcast %2 : vector<1x32xf32> to vector<3x32xf32>
    %24 = arith.addf %22, %23 : vector<3x32xf32>
    %25 = arith.truncf %24 : vector<3x32xf32> to vector<3x32xbf16>
    %c0_9 = arith.constant 0 : index
    %c0_10 = arith.constant 0 : index
    %26 = vector.load %arg3[%c0_9, %c0_10] : memref<32x32xf32, #tpu.memory_space<vmem>>, vector<32x32xf32>
    %27 = arith.truncf %26 : vector<32x32xf32> to vector<32x32xbf16>
    %cst_11 = arith.constant dense<0.000000e+00> : vector<3x32xf32>
    %28 = tpu.matmul %25, %27, %cst_11 {dimension_numbers = #tpu.dot_dimension_numbers<[1], [0], [0], [1], [0, 0, 1, 1], [], []>} : vector<3x32xbf16>, vector<32x32xbf16>, vector<3x32xf32> -> vector<3x32xf32>
    %c0_12 = arith.constant 0 : index
    %c0_13 = arith.constant 0 : index
    %29 = vector.load %arg4[%c0_12, %c0_13] : memref<3x32xf32, #tpu.memory_space<vmem>>, vector<3x32xf32>
    tpu.vector_store %arg4[%c0_12, %c0_13], %28 {strides = array<i32>} : memref<3x32xf32, #tpu.memory_space<vmem>>, vector<3x32xf32>,
    return
  }
}

</mosaic_0001>

<llo_original>
// kernel: _lambda_.17
$region0: #{_lambda_.17}
  #allocation0 [shape = 'u32[]', space=smem, size = 0x4, offset = 0x4, fixed_abs, tag = 'smem constant byte address 0x4 - core index']
  #allocation1 [shape = 'u32[144,128]{1,0:T(1,128)}', space=vmem, size = 0x12000, scoped, tag = 'internal scratch']
  %s0 = inlined_call_operand.vmem [shape: f32[2,32], index: 0, kind: input, shape index: {}]
  %s1 = inlined_call_operand.vmem [shape: f32[1,32], index: 1, kind: input, shape index: {}]
  %s2 = inlined_call_operand.vmem [shape: f32[1,32], index: 2, kind: input, shape index: {}]
  %s3 = inlined_call_operand.vmem [shape: f32[32,32], index: 3, kind: input, shape index: {}]
  %s4 = inlined_call_operand.vmem [shape: f32[2,32], index: 4, kind: output, shape index: {}]
  %s5 = sld [smem:[#allocation0]]
  $region26: #{_lambda_.17} parent=0
    _
  %s7 = ssub.s32 1, %s5
  %s8 = scalar_select 0, %s7, %s5
  // Predicated region
  $region2: #{_lambda_.17} parent=0 // pred_check
    _
  $region3: #{_lambda_.17} parent=0 // pred_check_branch
    %10 = sbr.rel (0) target = $region5
  $region4: #{_lambda_.17} parent=0 // pred_region
    _
  $region5: #{_lambda_.17} parent=0 // pred_fallthru
    _
  // Predicated region
  $region6: #{_lambda_.17} parent=0 // pred_check
    _
  $region7: #{_lambda_.17} parent=0 // pred_check_branch
    %12 = sbr.rel (0) target = $region9
  $region8: #{_lambda_.17} parent=0 // pred_region
    _
  $region9: #{_lambda_.17} parent=0 // pred_fallthru
    _
  // Predicated region
  $region10: #{_lambda_.17} parent=0 // pred_check
    _
  $region11: #{_lambda_.17} parent=0 // pred_check_branch
    %14 = sbr.rel (0) target = $region13
  $region12: #{_lambda_.17} parent=0 // pred_region
    _
  $region13: #{_lambda_.17} parent=0 // pred_fallthru
    _
  // Predicated region
  $region14: #{_lambda_.17} parent=0 // pred_check
    _
  $region15: #{_lambda_.17} parent=0 // pred_check_branch
    %16 = sbr.rel (0) target = $region17
  $region16: #{_lambda_.17} parent=0 // pred_region
    _
  $region17: #{_lambda_.17} parent=0 // pred_fallthru
    _
  %v18 = vld [vmem:[%s0] sm:$0x3]
  %v19 = vld [vmem:[%s1] sm:$0x1]
  %v20 = vld [vmem:[%s2] sm:$0x1]
  %vm21 = vcmask 254976
  %v22 = vsel %vm21, %v18, 0.0
  %23 = vadd.xlane.f32.xlu0 %v22
  %v24 = vpop.xlane.xlu0 %23
  %v25 = vrcp.pop 32.0
  %v26 = vmul.f32 %v24, %v25
  %v27 = vsub.f32 %v18, %v26
  %v28 = vmul.f32 %v27, %v27
  %v29 = vsel %vm21, %v28, 0.0
  %30 = vadd.xlane.f32.xlu0 %v29
  %v31 = vpop.xlane.xlu0 %30
  %v32 = vmul.f32 %v31, %v25
  %v33 = vadd.f32 %v32, 1e-05
  %v34 = vrsqrt.pop %v33
  %v35 = vmul.f32 %v27, %v34
  %v37 = vlaneseq
  %v38 = vshrl.u32 %v37, 7
  %v39 = vsub.s32 0, %v38
  %v40 = vrot.slane %v19, %v39
  %v42 = vmul.f32 %v35, %v40
  %v44 = vlaneseq
  %v45 = vshrl.u32 %v44, 7
  %v46 = vsub.s32 0, %v45
  %v47 = vrot.slane %v20, %v46
  %v49 = vadd.f32 %v42, %v47
  %v50 = vpack.c.bf16 %v49, %v49
  %v51 = vld [vmem:[%s3] sm:$0xff]
  %v52 = vld [vmem:[%s3 + $0x8] sm:$0xff]
  %v53 = vld [vmem:[%s3 + $0x10] sm:$0xff]
  %v54 = vld [vmem:[%s3 + $0x18] sm:$0xff]
  %v55 = vpack.c.bf16 %v52, %v51
  %v56 = vpack.c.bf16 %v54, %v53
  %vm57 = vcmask 261120
  %v59 = vsel %vm57, %v50, 0
  %61 = vmatprep.subr.bf16.mxu0 0
  %62 = vmatpush1.bf16.msra.mxu0 0
  %63 = vmatprep.subr.bf16.mxu0 0
  %64 = vmatpush1.bf16.msra.mxu0 0
  %65 = vmatprep.subr.bf16.mxu0 0
  %66 = vmatpush1.bf16.msra.mxu0 0
  %67 = vmatprep.subr.bf16.mxu0 0
  %68 = vmatpush1.bf16.msra.mxu0 0
  %69 = vmatprep.subr.bf16.mxu0 0
  %70 = vmatpush1.bf16.msra.mxu0 0
  %71 = vmatprep.subr.bf16.mxu0 0
  %72 = vmatpush1.bf16.msra.mxu0 0
  %73 = vmatprep.subr.bf16.mxu0 0
  %74 = vmatpush1.bf16.msra.mxu0 %v56
  %75 = vmatprep.subr.bf16.mxu0 0
  %76 = vmatpush1.bf16.msra.mxu0 %v55
  %77 = vmatprep.subr.bf16.mxu0 0
  %78 = vmatpush2.bf16.msra.mxu0 0
  %79 = vmatprep.subr.bf16.mxu0 0
  %80 = vmatpush2.bf16.msra.mxu0 0
  %81 = vmatprep.subr.bf16.mxu0 0
  %82 = vmatpush2.bf16.msra.mxu0 0
  %83 = vmatprep.subr.bf16.mxu0 0
  %84 = vmatpush2.bf16.msra.mxu0 0
  %85 = vmatprep.subr.bf16.mxu0 0
  %86 = vmatpush2.bf16.msra.mxu0 0
  %87 = vmatprep.subr.bf16.mxu0 0
  %88 = vmatpush2.bf16.msra.mxu0 0
  %89 = vmatprep.subr.bf16.mxu0 0
  %90 = vmatpush2.bf16.msra.mxu0 0
  %91 = vmatprep.subr.bf16.mxu0 0
  %92 = vmatpush2.bf16.msra.mxu0 0
  %93 = vmatprep.mubr.bf16.mxu0 0
  %94 = vmatmul.mubr.bf16.gmra.mxu0 %v59
  %v95 = vpop.f32.mrf.mxu0
  %v96 = vadd.f32 0.0, %v95
  %v97 = vpop.f32.mrf.mxu0
  %v98 = vpop.f32.mrf.mxu0
  %v99 = vpop.f32.mrf.mxu0
  %100 = vdwg.mxu0
  %101 = vst.msk [vmem:[%s4] sm:$0x3] %vm21, %v96
  // Predicated region
  $region18: #{_lambda_.17} parent=0 // pred_check
    _
  $region19: #{_lambda_.17} parent=0 // pred_check_branch
    %103 = sbr.rel (0) target = $region21
  $region20: #{_lambda_.17} parent=0 // pred_region
    _
  $region21: #{_lambda_.17} parent=0 // pred_fallthru
    _
  // Predicated region
  $region22: #{_lambda_.17} parent=0 // pred_check
    _
  $region23: #{_lambda_.17} parent=0 // pred_check_branch
    %105 = sbr.rel (0) target = $region25
  $region24: #{_lambda_.17} parent=0 // pred_region
    _
  $region25: #{_lambda_.17} parent=0 // pred_fallthru
    _

// kernel: _lambda_.14
$region0: #{_lambda_.14}
  #allocation0 [shape = 'u32[]', space=smem, size = 0x4, offset = 0x4, fixed_abs, tag = 'smem constant byte address 0x4 - core index']
  #allocation1 [shape = 'u32[144,128]{1,0:T(1,128)}', space=vmem, size = 0x12000, scoped, tag = 'internal scratch']
  %s0 = inlined_call_operand.vmem [shape: f32[10,32], index: 0, kind: input, shape index: {}]
  %s1 = inlined_call_operand.vmem [shape: f32[1,32], index: 1, kind: input, shape index: {}]
  %s2 = inlined_call_operand.vmem [shape: f32[1,32], index: 2, kind: input, shape index: {}]
  %s3 = inlined_call_operand.vmem [shape: f32[32,128], index: 3, kind: input, shape index: {}]
  %s4 = inlined_call_operand.vmem [shape: f32[1,128], index: 4, kind: input, shape index: {}]
  %s5 = inlined_call_operand.vmem [shape: f32[128,32], index: 5, kind: input, shape index: {}]
  %s6 = inlined_call_operand.vmem [shape: f32[1,32], index: 6, kind: input, shape index: {}]
  %s7 = inlined_call_operand.vmem [shape: f32[10,32], index: 7, kind: output, shape index: {}]
  %s8 = sld [smem:[#allocation0]]
  $region38: #{_lambda_.14} parent=0
    _
  %s10 = ssub.s32 1, %s8
  %s11 = scalar_select 0, %s10, %s8
  // Predicated region
  $region2: #{_lambda_.14} parent=0 // pred_check
    _
  $region3: #{_lambda_.14} parent=0 // pred_check_branch
    %13 = sbr.rel (0) target = $region5
  $region4: #{_lambda_.14} parent=0 // pred_region
    _
  $region5: #{_lambda_.14} parent=0 // pred_fallthru
    _
  // Predicated region
  $region6: #{_lambda_.14} parent=0 // pred_check
    _
  $region7: #{_lambda_.14} parent=0 // pred_check_branch
    %15 = sbr.rel (0) target = $region9
  $region8: #{_lambda_.14} parent=0 // pred_region
    _
  $region9: #{_lambda_.14} parent=0 // pred_fallthru
    _
  // Predicated region
  $region10: #{_lambda_.14} parent=0 // pred_check
    _
  $region11: #{_lambda_.14} parent=0 // pred_check_branch
    %17 = sbr.rel (0) target = $region13
  $region12: #{_lambda_.14} parent=0 // pred_region
    _
  $region13: #{_lambda_.14} parent=0 // pred_fallthru
    _
  // Predicated region
  $region14: #{_lambda_.14} parent=0 // pred_check
    _
  $region15: #{_lambda_.14} parent=0 // pred_check_branch
    %19 = sbr.rel (0) target = $region17
  $region16: #{_lambda_.14} parent=0 // pred_region
    _
  $region17: #{_lambda_.14} parent=0 // pred_fallthru
    _
  // Predicated region
  $region18: #{_lambda_.14} parent=0 // pred_check
    _
  $region19: #{_lambda_.14} parent=0 // pred_check_branch
    %21 = sbr.rel (0) target = $region21
  $region20: #{_lambda_.14} parent=0 // pred_region
    _
  $region21: #{_lambda_.14} parent=0 // pred_fallthru
    _
  // Predicated region
  $region22: #{_lambda_.14} parent=0 // pred_check
    _
  $region23: #{_lambda_.14} parent=0 // pred_check_branch
    %23 = sbr.rel (0) target = $region25
  $region24: #{_lambda_.14} parent=0 // pred_region
    _
  $region25: #{_lambda_.14} parent=0 // pred_fallthru
    _
  // Predicated region
  $region26: #{_lambda_.14} parent=0 // pred_check
    _
  $region27: #{_lambda_.14} parent=0 // pred_check_branch
    %25 = sbr.rel (0) target = $region29
  $region28: #{_lambda_.14} parent=0 // pred_region
    _
  $region29: #{_lambda_.14} parent=0 // pred_fallthru
    _
  %v27 = vld [vmem:[%s0] sm:$0xff]
  %v28 = vld [vmem:[%s0 + $0x8] sm:$0x3]
  %v29 = vld [vmem:[%s1] sm:$0x1]
  %v30 = vld [vmem:[%s2] sm:$0x1]
  %vm31 = vcmask 261120
  %v32 = vsel %vm31, %v27, 0.0
  %33 = vadd.xlane.f32.xlu0 %v32
  %v34 = vpop.xlane.xlu0 %33
  %vm35 = vcmask 254976
  %v36 = vsel %vm35, %v28, 0.0
  %37 = vadd.xlane.f32.xlu0 %v36
  %v38 = vpop.xlane.xlu0 %37
  %v39 = vrcp.pop 32.0
  %v40 = vmul.f32 %v34, %v39
  %v41 = vmul.f32 %v38, %v39
  %v42 = vsub.f32 %v27, %v40
  %v43 = vsub.f32 %v28, %v41
  %v44 = vmul.f32 %v42, %v42
  %v45 = vmul.f32 %v43, %v43
  %v46 = vsel %vm31, %v44, 0.0
  %47 = vadd.xlane.f32.xlu0 %v46
  %v48 = vpop.xlane.xlu0 %47
  %v49 = vsel %vm35, %v45, 0.0
  %50 = vadd.xlane.f32.xlu0 %v49
  %v51 = vpop.xlane.xlu0 %50
  %v52 = vmul.f32 %v48, %v39
  %v53 = vmul.f32 %v51, %v39
  %v54 = vadd.f32 %v52, 1e-05
  %v55 = vadd.f32 %v53, 1e-05
  %v56 = vrsqrt.pop %v54
  %v57 = vrsqrt.pop %v55
  %v58 = vmul.f32 %v42, %v56
  %v59 = vmul.f32 %v43, %v57
  %v61 = vlaneseq
  %v62 = vshrl.u32 %v61, 7
  %v63 = vsub.s32 0, %v62
  %v64 = vrot.slane %v29, %v63
  %v66 = vmul.f32 %v58, %v64
  %v67 = vmul.f32 %v59, %v64
  %v69 = vlaneseq
  %v70 = vshrl.u32 %v69, 7
  %v71 = vsub.s32 0, %v70
  %v72 = vrot.slane %v30, %v71
  %v74 = vadd.f32 %v66, %v72
  %v75 = vadd.f32 %v67, %v72
  %v76 = vpack.c.bf16 %v75, %v74
  %v77 = vld [vmem:[%s3] sm:$0xff]
  %v78 = vld [vmem:[%s3 + $0x8] sm:$0xff]
  %v79 = vld [vmem:[%s3 + $0x10] sm:$0xff]
  %v80 = vld [vmem:[%s3 + $0x18] sm:$0xff]
  %v81 = vpack.c.bf16 %v78, %v77
  %v82 = vpack.c.bf16 %v80, %v79
  %v83 = vld [vmem:[%s4] sm:$0x1]
  %v85 = vlaneseq
  %v86 = vshrl.u32 %v85, 7
  %v87 = vsub.s32 0, %v86
  %v88 = vrot.slane %v83, %v87
  %v91 = vsel %vm31, %v76, 0
  %93 = vmatprep.subr.bf16.mxu0 0
  %94 = vmatpush1.bf16.msra.mxu0 0
  %95 = vmatprep.subr.bf16.mxu0 0
  %96 = vmatpush1.bf16.msra.mxu0 0
  %97 = vmatprep.subr.bf16.mxu0 0
  %98 = vmatpush1.bf16.msra.mxu0 0
  %99 = vmatprep.subr.bf16.mxu0 0
  %100 = vmatpush1.bf16.msra.mxu0 0
  %101 = vmatprep.subr.bf16.mxu0 0
  %102 = vmatpush1.bf16.msra.mxu0 0
  %103 = vmatprep.subr.bf16.mxu0 0
  %104 = vmatpush1.bf16.msra.mxu0 0
  %105 = vmatprep.subr.bf16.mxu0 0
  %106 = vmatpush1.bf16.msra.mxu0 %v82
  %107 = vmatprep.subr.bf16.mxu0 0
  %108 = vmatpush1.bf16.msra.mxu0 %v81
  %109 = vmatprep.subr.bf16.mxu0 0
  %110 = vmatpush2.bf16.msra.mxu0 0
  %111 = vmatprep.subr.bf16.mxu0 0
  %112 = vmatpush2.bf16.msra.mxu0 0
  %113 = vmatprep.subr.bf16.mxu0 0
  %114 = vmatpush2.bf16.msra.mxu0 0
  %115 = vmatprep.subr.bf16.mxu0 0
  %116 = vmatpush2.bf16.msra.mxu0 0
  %117 = vmatprep.subr.bf16.mxu0 0
  %118 = vmatpush2.bf16.msra.mxu0 0
  %119 = vmatprep.subr.bf16.mxu0 0
  %120 = vmatpush2.bf16.msra.mxu0 0
  %121 = vmatprep.subr.bf16.mxu0 0
  %122 = vmatpush2.bf16.msra.mxu0 0
  %123 = vmatprep.subr.bf16.mxu0 0
  %124 = vmatpush2.bf16.msra.mxu0 0
  %125 = vmatprep.mubr.bf16.mxu0 0
  %126 = vmatmul.mubr.bf16.gmra.mxu0 %v91
  %v127 = vpop.f32.mrf.mxu0
  %v128 = vadd.f32 %v88, %v127
  %v129 = vpop.f32.mrf.mxu0
  %v130 = vpop.f32.mrf.mxu0
  %v131 = vadd.f32 %v88, %v130
  %v132 = vpop.f32.mrf.mxu0
  %133 = vdwg.mxu0
  %v134 = vmul.f32 %v128, 1.702
  %v135 = vmul.f32 %v131, 1.702
  %v136 = vxor.u32 %v134, 2147483648
  %v137 = vxor.u32 %v135, 2147483648
  %v138 = vmul.f32 %v136, 1.442695
  %v139 = vpow.pop %v138
  %v140 = vmul.f32 %v137, 1.442695
  %v141 = vpow.pop %v140
  %v142 = vadd.f32 %v139, 1.0
  %v143 = vadd.f32 %v141, 1.0
  %v144 = vrcp.pop %v142
  %v145 = vmul.f32 1.0, %v144
  %v146 = vrcp.pop %v143
  %v147 = vmul.f32 1.0, %v146
  %v148 = vmul.f32 %v128, %v145
  %v149 = vmul.f32 %v131, %v147
  %v150 = vpack.c.bf16 %v149, %v148
  %v151 = vld [vmem:[%s5] sm:$0xff]
  %v152 = vld [vmem:[%s5 + $0x8] sm:$0xff]
  %v153 = vld [vmem:[%s5 + $0x10] sm:$0xff]
  %v154 = vld [vmem:[%s5 + $0x18] sm:$0xff]
  %v155 = vld [vmem:[%s5 + $0x20] sm:$0xff]
  %v156 = vld [vmem:[%s5 + $0x28] sm:$0xff]
  %v157 = vld [vmem:[%s5 + $0x30] sm:$0xff]
  %v158 = vld [vmem:[%s5 + $0x38] sm:$0xff]
  %v159 = vld [vmem:[%s5 + $0x40] sm:$0xff]
  %v160 = vld [vmem:[%s5 + $0x48] sm:$0xff]
  %v161 = vld [vmem:[%s5 + $0x50] sm:$0xff]
  %v162 = vld [vmem:[%s5 + $0x58] sm:$0xff]
  %v163 = vld [vmem:[%s5 + $0x60] sm:$0xff]
  %v164 = vld [vmem:[%s5 + $0x68] sm:$0xff]
  %v165 = vld [vmem:[%s5 + $0x70] sm:$0xff]
  %v166 = vld [vmem:[%s5 + $0x78] sm:$0xff]
  %v167 = vpack.c.bf16 %v152, %v151
  %v168 = vpack.c.bf16 %v154, %v153
  %v169 = vpack.c.bf16 %v156, %v155
  %v170 = vpack.c.bf16 %v158, %v157
  %v171 = vpack.c.bf16 %v160, %v159
  %v172 = vpack.c.bf16 %v162, %v161
  %v173 = vpack.c.bf16 %v164, %v163
  %v174 = vpack.c.bf16 %v166, %v165
  %v175 = vld [vmem:[%s6] sm:$0x1]
  %v177 = vlaneseq
  %v178 = vshrl.u32 %v177, 7
  %v179 = vsub.s32 0, %v178
  %v180 = vrot.slane %v175, %v179
  %182 = vmatprep.subr.bf16.mxu0 0
  %183 = vmatpush1.bf16.msra.mxu0 %v174
  %184 = vmatprep.subr.bf16.mxu0 0
  %185 = vmatpush1.bf16.msra.mxu0 %v173
  %186 = vmatprep.subr.bf16.mxu0 0
  %187 = vmatpush1.bf16.msra.mxu0 %v172
  %188 = vmatprep.subr.bf16.mxu0 0
  %189 = vmatpush1.bf16.msra.mxu0 %v171
  %190 = vmatprep.subr.bf16.mxu0 0
  %191 = vmatpush1.bf16.msra.mxu0 %v170
  %192 = vmatprep.subr.bf16.mxu0 0
  %193 = vmatpush1.bf16.msra.mxu0 %v169
  %194 = vmatprep.subr.bf16.mxu0 0
  %195 = vmatpush1.bf16.msra.mxu0 %v168
  %196 = vmatprep.subr.bf16.mxu0 0
  %197 = vmatpush1.bf16.msra.mxu0 %v167
  %198 = vmatprep.subr.bf16.mxu0 0
  %199 = vmatpush2.bf16.msra.mxu0 0
  %200 = vmatprep.subr.bf16.mxu0 0
  %201 = vmatpush2.bf16.msra.mxu0 0
  %202 = vmatprep.subr.bf16.mxu0 0
  %203 = vmatpush2.bf16.msra.mxu0 0
  %204 = vmatprep.subr.bf16.mxu0 0
  %205 = vmatpush2.bf16.msra.mxu0 0
  %206 = vmatprep.subr.bf16.mxu0 0
  %207 = vmatpush2.bf16.msra.mxu0 0
  %208 = vmatprep.subr.bf16.mxu0 0
  %209 = vmatpush2.bf16.msra.mxu0 0
  %210 = vmatprep.subr.bf16.mxu0 0
  %211 = vmatpush2.bf16.msra.mxu0 0
  %212 = vmatprep.subr.bf16.mxu0 0
  %213 = vmatpush2.bf16.msra.mxu0 0
  %214 = vmatprep.mubr.bf16.mxu0 0
  %215 = vmatmul.mubr.bf16.gmra.mxu0 %v150
  %v216 = vpop.f32.mrf.mxu0
  %v217 = vadd.f32 %v180, %v216
  %v218 = vpop.f32.mrf.mxu0
  %v219 = vpop.f32.mrf.mxu0
  %v220 = vadd.f32 %v180, %v219
  %v221 = vpop.f32.mrf.mxu0
  %222 = vdwg.mxu0
  %v223 = vadd.f32 %v27, %v217
  %v224 = vadd.f32 %v28, %v220
  %225 = vst.msk [vmem:[%s7] sm:$0xff] %vm31, %v223
  %226 = vst.msk [vmem:[%s7 + $0x8] sm:$0x3] %vm35, %v224
  // Predicated region
  $region30: #{_lambda_.14} parent=0 // pred_check
    _
  $region31: #{_lambda_.14} parent=0 // pred_check_branch
    %228 = sbr.rel (0) target = $region33
  $region32: #{_lambda_.14} parent=0 // pred_region
    _
  $region33: #{_lambda_.14} parent=0 // pred_fallthru
    _
  // Predicated region
  $region34: #{_lambda_.14} parent=0 // pred_check
    _
  $region35: #{_lambda_.14} parent=0 // pred_check_branch
    %230 = sbr.rel (0) target = $region37
  $region36: #{_lambda_.14} parent=0 // pred_region
    _
  $region37: #{_lambda_.14} parent=0 // pred_fallthru
    _

// kernel: _lambda_.12
$region0: #{_lambda_.12}
  #allocation0 [shape = 'u32[]', space=smem, size = 0x4, offset = 0x4, fixed_abs, tag = 'smem constant byte address 0x4 - core index']
  #allocation1 [shape = 'u32[144,128]{1,0:T(1,128)}', space=vmem, size = 0x12000, scoped, tag = 'internal scratch']
  %s0 = inlined_call_operand.vmem [shape: f32[2,4,192], index: 0, kind: input, shape index: {}]
  %s1 = inlined_call_operand.vmem [shape: f32[192,32], index: 1, kind: input, shape index: {}]
  %s2 = inlined_call_operand.vmem [shape: f32[1,32], index: 2, kind: input, shape index: {}]
  %s3 = inlined_call_operand.vmem [shape: f32[5,32], index: 3, kind: input, shape index: {}]
  %s4 = inlined_call_operand.vmem [shape: f32[1,32], index: 4, kind: input, shape index: {}]
  %s5 = inlined_call_operand.vmem [shape: f32[1,32], index: 5, kind: input, shape index: {}]
  %s6 = inlined_call_operand.vmem [shape: f32[2,5,32], index: 6, kind: output, shape index: {}]
  %s7 = sld [smem:[#allocation0]]
  $region57: #{_lambda_.12} parent=0
    _
  %s9 = ssub.s32 1, %s7
  %s10 = scalar_select 0, %s9, %s7
  loop: start=0, step=1, limit=4
  $region2: #{_lambda_.12} parent=0 // loop_pre_header
    _
  $region3: #{_lambda_.12} parent=0 // loop_header
    %s12 = sphi 0, %s16
    %p13 = scmp.ge.s32.totalorder %s12, 4
    %s22 = sphi 0, %s24
    %s25 = sphi 0, %s22
    %s26 = sphi 0, %s25
    %s42 = sphi 0, %s26
    %s46 = sphi 0, %s46
    %s48 = sphi 0, %s46
    %s49 = sphi 0, %s48
    %s63 = sphi 0, %s49
    %s67 = sphi 0, %s67
    %s69 = sphi 0, %s67
    %s70 = sphi 0, %s69
    %s84 = sphi 0, %s70
    %s88 = sphi 0, %s88
    %s90 = sphi 0, %s88
    %s91 = sphi 0, %s90
    %s105 = sphi 0, %s91
    %s109 = sphi 0, %s109
    %s111 = sphi 0, %s109
    %s112 = sphi 0, %s111
    %s126 = sphi 0, %s112
    %s130 = sphi 0, %s130
    %s132 = sphi 0, %s130
    %s133 = sphi 0, %s132
    %s147 = sphi 0, %s133
    %s153 = sphi 0, %s155
    %s156 = sphi 0, %s153
    %s157 = sphi 0, %s156
    %s173 = sphi 0, %s157
  $region4: #{_lambda_.12} parent=0 // loop_header_branch
    %15 = sbr.rel (%p13) target = $region8
  $region5: #{_lambda_.12} parent=0 // loop_body
    %s17 = ssub.s32 %s12, 1
    %s18 = ssub.s32 %s12, 2
    %s19 = sadd.s32 %s12, 1
    %s20 = ssub.s32 %s12, %s19
    %p21 = scmp.eq.s32.totalorder %s20, 0
    %s23 = sadd.s32 %s22, 1
    %s24 = scalar_select %p21, %s22, %s23
    %p27 = pneg %p21
    %p28 = scmp.eq.s32.totalorder %s12, 1
    %p29 = por %p27, %p28
    %p30 = scmp.ne.s32.totalorder %s22, %s25
    %p31 = scmp.eq.s32.totalorder %s12, 0
    %p32 = por %p30, %p31
    %p33 = scmp.ne.s32.totalorder %s22, %s25
    %p34 = scmp.eq.s32.totalorder %s17, 1
    %p35 = por %p33, %p34
    %p36 = scmp.ne.s32.totalorder %s25, %s26
    %p37 = scmp.eq.s32.totalorder %s17, 0
    %p38 = por %p36, %p37
    %p39 = scmp.ne.s32.totalorder %s25, %s26
    %p40 = scmp.eq.s32.totalorder %s18, 1
    %p41 = por %p39, %p40
    %p43 = scmp.ne.s32.totalorder %s26, %s42
    %p44 = scmp.eq.s32.totalorder %s18, 0
    %p45 = por %p43, %p44
    %s47 = sadd.s32 %s46, 1
    %p50 = scmp.eq.s32.totalorder %s12, 1
    %p51 = scmp.ne.s32.totalorder %s46, %s48
    %p52 = scmp.eq.s32.totalorder %s12, 0
    %p53 = por %p51, %p52
    %p54 = scmp.ne.s32.totalorder %s46, %s48
    %p55 = scmp.eq.s32.totalorder %s17, 1
    %p56 = por %p54, %p55
    %p57 = scmp.ne.s32.totalorder %s48, %s49
    %p58 = scmp.eq.s32.totalorder %s17, 0
    %p59 = por %p57, %p58
    %p60 = scmp.ne.s32.totalorder %s48, %s49
    %p61 = scmp.eq.s32.totalorder %s18, 1
    %p62 = por %p60, %p61
    %p64 = scmp.ne.s32.totalorder %s49, %s63
    %p65 = scmp.eq.s32.totalorder %s18, 0
    %p66 = por %p64, %p65
    %s68 = sadd.s32 %s67, 1
    %p71 = scmp.eq.s32.totalorder %s12, 1
    %p72 = scmp.ne.s32.totalorder %s67, %s69
    %p73 = scmp.eq.s32.totalorder %s12, 0
    %p74 = por %p72, %p73
    %p75 = scmp.ne.s32.totalorder %s67, %s69
    %p76 = scmp.eq.s32.totalorder %s17, 1
    %p77 = por %p75, %p76
    %p78 = scmp.ne.s32.totalorder %s69, %s70
    %p79 = scmp.eq.s32.totalorder %s17, 0
    %p80 = por %p78, %p79
    %p81 = scmp.ne.s32.totalorder %s69, %s70
    %p82 = scmp.eq.s32.totalorder %s18, 1
    %p83 = por %p81, %p82
    %p85 = scmp.ne.s32.totalorder %s70, %s84
    %p86 = scmp.eq.s32.totalorder %s18, 0
    %p87 = por %p85, %p86
    %s89 = sadd.s32 %s88, 1
    %p92 = scmp.eq.s32.totalorder %s12, 1
    %p93 = scmp.ne.s32.totalorder %s88, %s90
    %p94 = scmp.eq.s32.totalorder %s12, 0
    %p95 = por %p93, %p94
    %p96 = scmp.ne.s32.totalorder %s88, %s90
    %p97 = scmp.eq.s32.totalorder %s17, 1
    %p98 = por %p96, %p97
    %p99 = scmp.ne.s32.totalorder %s90, %s91
    %p100 = scmp.eq.s32.totalorder %s17, 0
    %p101 = por %p99, %p100
    %p102 = scmp.ne.s32.totalorder %s90, %s91
    %p103 = scmp.eq.s32.totalorder %s18, 1
    %p104 = por %p102, %p103
    %p106 = scmp.ne.s32.totalorder %s91, %s105
    %p107 = scmp.eq.s32.totalorder %s18, 0
    %p108 = por %p106, %p107
    %s110 = sadd.s32 %s109, 1
    %p113 = scmp.eq.s32.totalorder %s12, 1
    %p114 = scmp.ne.s32.totalorder %s109, %s111
    %p115 = scmp.eq.s32.totalorder %s12, 0
    %p116 = por %p114, %p115
    %p117 = scmp.ne.s32.totalorder %s109, %s111
    %p118 = scmp.eq.s32.totalorder %s17, 1
    %p119 = por %p117, %p118
    %p120 = scmp.ne.s32.totalorder %s111, %s112
    %p121 = scmp.eq.s32.totalorder %s17, 0
    %p122 = por %p120, %p121
    %p123 = scmp.ne.s32.totalorder %s111, %s112
    %p124 = scmp.eq.s32.totalorder %s18, 1
    %p125 = por %p123, %p124
    %p127 = scmp.ne.s32.totalorder %s112, %s126
    %p128 = scmp.eq.s32.totalorder %s18, 0
    %p129 = por %p127, %p128
    %s131 = sadd.s32 %s130, 1
    %p134 = scmp.eq.s32.totalorder %s12, 1
    %p135 = scmp.ne.s32.totalorder %s130, %s132
    %p136 = scmp.eq.s32.totalorder %s12, 0
    %p137 = por %p135, %p136
    %p138 = scmp.ne.s32.totalorder %s130, %s132
    %p139 = scmp.eq.s32.totalorder %s17, 1
    %p140 = por %p138, %p139
    %p141 = scmp.ne.s32.totalorder %s132, %s133
    %p142 = scmp.eq.s32.totalorder %s17, 0
    %p143 = por %p141, %p142
    %p144 = scmp.ne.s32.totalorder %s132, %s133
    %p145 = scmp.eq.s32.totalorder %s18, 1
    %p146 = por %p144, %p145
    %p148 = scmp.ne.s32.totalorder %s133, %s147
    %p149 = scmp.eq.s32.totalorder %s18, 0
    %p150 = por %p148, %p149
    %s151 = ssub.s32 %s12, %s19
    %p152 = scmp.eq.s32.totalorder %s151, 0
    %s154 = sadd.s32 %s153, 1
    %s155 = scalar_select %p152, %s153, %s154
    %p158 = pneg %p152
    %p159 = scmp.eq.s32.totalorder %s12, 1
    %p160 = por %p158, %p159
    %p161 = scmp.ne.s32.totalorder %s153, %s156
    %p162 = scmp.eq.s32.totalorder %s12, 0
    %p163 = por %p161, %p162
    %p164 = scmp.ne.s32.totalorder %s153, %s156
    %p165 = scmp.eq.s32.totalorder %s17, 1
    %p166 = por %p164, %p165
    %p167 = scmp.ne.s32.totalorder %s156, %s157
    %p168 = scmp.eq.s32.totalorder %s17, 0
    %p169 = por %p167, %p168
    %p170 = scmp.ne.s32.totalorder %s156, %s157
    %p171 = scmp.eq.s32.totalorder %s18, 1
    %p172 = por %p170, %p171
    %p174 = scmp.ne.s32.totalorder %s157, %s173
    %p175 = scmp.eq.s32.totalorder %s18, 0
    %p176 = por %p174, %p175
    %p177 = scmp.le.s32.totalorder 1, %s12
    %p178 = scmp.lt.s32.totalorder %s12, 3
    %p179 = pnand %p177, %p178
    %p180 = pneg %p179
    // Predicated region
    $region9: #{_lambda_.12} parent=5 // pred_check
      _
    $region10: #{_lambda_.12} parent=5 // pred_check_branch
      %182 = sbr.rel (%p179) target = $region12
    $region11: #{_lambda_.12} parent=5 // pred_region
      %s183 = ssub.s32 %s12, 1
      // Predicated region
      $region13: #{_lambda_.12} parent=11 // pred_check
        %p184 = pneg %p59
      $region14: #{_lambda_.12} parent=11 // pred_check_branch
        %186 = sbr.rel (%p184) target = $region16
      $region15: #{_lambda_.12} parent=11 // pred_region
        _
      $region16: #{_lambda_.12} parent=11 // pred_fallthru
        _
      // Predicated region
      $region17: #{_lambda_.12} parent=11 // pred_check
        %p187 = pneg %p80
      $region18: #{_lambda_.12} parent=11 // pred_check_branch
        %189 = sbr.rel (%p187) target = $region20
      $region19: #{_lambda_.12} parent=11 // pred_region
        _
      $region20: #{_lambda_.12} parent=11 // pred_fallthru
        _
      // Predicated region
      $region21: #{_lambda_.12} parent=11 // pred_check
        %p190 = pneg %p101
      $region22: #{_lambda_.12} parent=11 // pred_check_branch
        %192 = sbr.rel (%p190) target = $region24
      $region23: #{_lambda_.12} parent=11 // pred_region
        _
      $region24: #{_lambda_.12} parent=11 // pred_fallthru
        _
      // Predicated region
      $region25: #{_lambda_.12} parent=11 // pred_check
        %p193 = pneg %p122
      $region26: #{_lambda_.12} parent=11 // pred_check_branch
        %195 = sbr.rel (%p193) target = $region28
      $region27: #{_lambda_.12} parent=11 // pred_region
        _
      $region28: #{_lambda_.12} parent=11 // pred_fallthru
        _
      // Predicated region
      $region29: #{_lambda_.12} parent=11 // pred_check
        %p196 = pneg %p143
      $region30: #{_lambda_.12} parent=11 // pred_check_branch
        %198 = sbr.rel (%p196) target = $region32
      $region31: #{_lambda_.12} parent=11 // pred_region
        _
      $region32: #{_lambda_.12} parent=11 // pred_fallthru
        _
    $region12: #{_lambda_.12} parent=5 // pred_fallthru
      _
    %p199 = scmp.lt.s32.totalorder %s12, 2
    // Predicated region
    $region33: #{_lambda_.12} parent=5 // pred_check
      %p200 = pneg %p199
    $region34: #{_lambda_.12} parent=5 // pred_check_branch
      %202 = sbr.rel (%p200) target = $region36
    $region35: #{_lambda_.12} parent=5 // pred_region
      // Predicated region
      $region37: #{_lambda_.12} parent=35 // pred_check
        %p203 = pneg %p32
      $region38: #{_lambda_.12} parent=35 // pred_check_branch
        %205 = sbr.rel (%p203) target = $region40
      $region39: #{_lambda_.12} parent=35 // pred_region
        %p206 = scmp.lt.s32.totalorder %s12, 1
        %s207 = scalar_select %p206, %s12, 1
        %s208 = smul.addr %s207, 2
        %s209 = smul.addr %s208, 4
        %s210 = scalar_lea.vmem %s0, %s209
      $region40: #{_lambda_.12} parent=35 // pred_fallthru
        _
    $region36: #{_lambda_.12} parent=5 // pred_fallthru
      _
    %p211 = scmp.le.s32.totalorder 1, %s12
    %p212 = scmp.lt.s32.totalorder %s12, 3
    %p213 = pnand %p211, %p212
    %p214 = pneg %p213
    // Predicated region
    $region41: #{_lambda_.12} parent=5 // pred_check
      _
    $region42: #{_lambda_.12} parent=5 // pred_check_branch
      %216 = sbr.rel (%p213) target = $region44
    $region43: #{_lambda_.12} parent=5 // pred_region
      %s217 = ssub.s32 %s12, 1
      %p218 = scmp.lt.s32.totalorder %s17, 1
      %s219 = scalar_select %p218, %s17, 1
      %s220 = smul.addr %s219, 2
      %s221 = smul.addr %s220, 4
      %s222 = scalar_lea.vmem %s0, %s221
      %p223 = pneg %p38
      %p224 = pneg %p35
      %p225 = pneg %p59
      %p226 = pneg %p56
      %p227 = pneg %p80
      %p228 = pneg %p77
      %p229 = pneg %p101
      %p230 = pneg %p98
      %p231 = pneg %p122
      %p232 = pneg %p119
      %p233 = pneg %p143
      %p234 = pneg %p140
      %p235 = pneg %p169
      %p236 = pneg %p166
      %p237 = scmp.lt.s32.totalorder %s17, 1
      %s238 = scalar_select %p237, %s17, 1
      %s239 = smul.addr %s238, 8
      %s240 = scalar_lea.vmem %s6, %s239
      %p241 = scmp.lt.s32.totalorder %s17, 1
      %s242 = scalar_select %p241, %s17, 1
      %s243 = smul.addr %s242, 2
      %s244 = smul.addr %s243, 4
      %s245 = scalar_lea.vmem %s0, %s244
      %p246 = scmp.lt.s32.totalorder %s17, 1
      %s247 = scalar_select %p246, %s17, 1
      %s248 = smul.addr %s247, 8
      %s249 = scalar_lea.vmem %s6, %s248
      %v251 = vld [vmem:[%s245] sm:$0xff]
      %v253 = vcombine.high %v251, %v251
      %v255 = vpack.c.bf16 %v251, %v251
      %v256 = vpack.c.bf16 %v253, %v253
      %v257 = vld [vmem:[%s1] sm:$0xff]
      %v258 = vld [vmem:[%s1 + $0x8] sm:$0xff]
      %v259 = vld [vmem:[%s1 + $0x10] sm:$0xff]
      %v260 = vld [vmem:[%s1 + $0x18] sm:$0xff]
      %v261 = vld [vmem:[%s1 + $0x20] sm:$0xff]
      %v262 = vld [vmem:[%s1 + $0x28] sm:$0xff]
      %v263 = vld [vmem:[%s1 + $0x30] sm:$0xff]
      %v264 = vld [vmem:[%s1 + $0x38] sm:$0xff]
      %v265 = vld [vmem:[%s1 + $0x40] sm:$0xff]
      %v266 = vld [vmem:[%s1 + $0x48] sm:$0xff]
      %v267 = vld [vmem:[%s1 + $0x50] sm:$0xff]
      %v268 = vld [vmem:[%s1 + $0x58] sm:$0xff]
      %v269 = vld [vmem:[%s1 + $0x60] sm:$0xff]
      %v270 = vld [vmem:[%s1 + $0x68] sm:$0xff]
      %v271 = vld [vmem:[%s1 + $0x70] sm:$0xff]
      %v272 = vld [vmem:[%s1 + $0x78] sm:$0xff]
      %v273 = vld [vmem:[%s1 + $0x80] sm:$0xff]
      %v274 = vld [vmem:[%s1 + $0x88] sm:$0xff]
      %v275 = vld [vmem:[%s1 + $0x90] sm:$0xff]
      %v276 = vld [vmem:[%s1 + $0x98] sm:$0xff]
      %v277 = vld [vmem:[%s1 + $0xa0] sm:$0xff]
      %v278 = vld [vmem:[%s1 + $0xa8] sm:$0xff]
      %v279 = vld [vmem:[%s1 + $0xb0] sm:$0xff]
      %v280 = vld [vmem:[%s1 + $0xb8] sm:$0xff]
      %v281 = vpack.c.bf16 %v258, %v257
      %v282 = vpack.c.bf16 %v260, %v259
      %v283 = vpack.c.bf16 %v262, %v261
      %v284 = vpack.c.bf16 %v264, %v263
      %v285 = vpack.c.bf16 %v266, %v265
      %v286 = vpack.c.bf16 %v268, %v267
      %v287 = vpack.c.bf16 %v270, %v269
      %v288 = vpack.c.bf16 %v272, %v271
      %v289 = vpack.c.bf16 %v274, %v273
      %v290 = vpack.c.bf16 %v276, %v275
      %v291 = vpack.c.bf16 %v278, %v277
      %v292 = vpack.c.bf16 %v280, %v279
      %v293 = vld [vmem:[%s3] sm:$0x1f]
      %v294 = vld [vmem:[%s4] sm:$0x1]
      %v295 = vld [vmem:[%s5] sm:$0x1]
      %v296 = vld [vmem:[%s2] sm:$0x1]
      %v297 = vadd.f32 %v296, %v293
      %v299 = vrot.slane %v293, 1
      %vm301 = vcmask 523264
      %v303 = vsel %vm301, %v256, 0
      %305 = vmatprep.subr.bf16.mxu0 0
      %306 = vmatpush1.bf16.msra.mxu0 %v288
      %307 = vmatprep.subr.bf16.mxu0 0
      %308 = vmatpush1.bf16.msra.mxu0 %v287
      %309 = vmatprep.subr.bf16.mxu0 0
      %310 = vmatpush1.bf16.msra.mxu0 %v286
      %311 = vmatprep.subr.bf16.mxu0 0
      %312 = vmatpush1.bf16.msra.mxu0 %v285
      %313 = vmatprep.subr.bf16.mxu0 0
      %314 = vmatpush1.bf16.msra.mxu0 %v284
      %315 = vmatprep.subr.bf16.mxu0 0
      %316 = vmatpush1.bf16.msra.mxu0 %v283
      %317 = vmatprep.subr.bf16.mxu0 0
      %318 = vmatpush1.bf16.msra.mxu0 %v282
      %319 = vmatprep.subr.bf16.mxu0 0
      %320 = vmatpush1.bf16.msra.mxu0 %v281
      %321 = vmatprep.subr.bf16.mxu0 0
      %322 = vmatpush2.bf16.msra.mxu0 0
      %323 = vmatprep.subr.bf16.mxu0 0
      %324 = vmatpush2.bf16.msra.mxu0 0
      %325 = vmatprep.subr.bf16.mxu0 0
      %326 = vmatpush2.bf16.msra.mxu0 0
      %327 = vmatprep.subr.bf16.mxu0 0
      %328 = vmatpush2.bf16.msra.mxu0 0
      %329 = vmatprep.subr.bf16.mxu0 0
      %330 = vmatpush2.bf16.msra.mxu0 %v292
      %331 = vmatprep.subr.bf16.mxu0 0
      %332 = vmatpush2.bf16.msra.mxu0 %v291
      %333 = vmatprep.subr.bf16.mxu0 0
      %334 = vmatpush2.bf16.msra.mxu0 %v290
      %335 = vmatprep.subr.bf16.mxu0 0
      %336 = vmatpush2.bf16.msra.mxu0 %v289
      %337 = vmatprep.mubr.bf16.mxu0 %v303
      %338 = vmatmul.mubr.bf16.gmra.mxu0 %v255
      %v339 = vpop.f32.mrf.mxu0
      %v340 = vadd.f32 %v299, %v339
      %v341 = vpop.f32.mrf.mxu0
      %v342 = vpop.f32.mrf.mxu0
      %v343 = vpop.f32.mrf.mxu0
      %344 = vdwg.mxu0
      %vm345 = vcmask 253952
      %v346 = vsel %vm345, %v297, 0.0
      %347 = vadd.xlane.f32.xlu0 %v346
      %v348 = vpop.xlane.xlu0 %347
      %v349 = vrcp.pop 32.0
      %v350 = vmul.f32 %v348, %v349
      %v351 = vsub.f32 %v297, %v350
      %v352 = vmul.f32 %v351, %v351
      %v353 = vsel %vm345, %v352, 0.0
      %354 = vadd.xlane.f32.xlu0 %v353
      %v355 = vpop.xlane.xlu0 %354
      %v356 = vmul.f32 %v355, %v349
      %v357 = vadd.f32 %v356, 1e-05
      %v358 = vrsqrt.pop %v357
      %v359 = vmul.f32 %v351, %v358
      %v360 = vmul.f32 %v359, %v294
      %v361 = vadd.f32 %v360, %v295
      %362 = vst.msk [vmem:[%s249] sm:$0x1] %vm345, %v361
      %vm363 = vcmask 257024
      %v364 = vsel %vm363, %v340, 0.0
      %365 = vadd.xlane.f32.xlu0 %v364
      %v366 = vpop.xlane.xlu0 %365
      %v367 = vmul.f32 %v366, %v349
      %v368 = vsub.f32 %v340, %v367
      %v369 = vmul.f32 %v368, %v368
      %v370 = vsel %vm363, %v369, 0.0
      %371 = vadd.xlane.f32.xlu0 %v370
      %v372 = vpop.xlane.xlu0 %371
      %v373 = vmul.f32 %v372, %v349
      %v374 = vadd.f32 %v373, 1e-05
      %v375 = vrsqrt.pop %v374
      %v376 = vmul.f32 %v368, %v375
      %v378 = vlaneseq
      %v379 = vshrl.u32 %v378, 7
      %v380 = vsub.s32 0, %v379
      %v381 = vrot.slane %v294, %v380
      %v383 = vmul.f32 %v376, %v381
      %v385 = vlaneseq
      %v386 = vshrl.u32 %v385, 7
      %v387 = vsub.s32 0, %v386
      %v388 = vrot.slane %v295, %v387
      %v390 = vadd.f32 %v383, %v388
      %391 = vst.msk [vmem:[%s249 + $0x1] sm:$0xf] %vm363, %v390
      %p392 = scmp.lt.s32.totalorder %s17, 1
      %s393 = scalar_select %p392, %s17, 1
      %s394 = smul.addr %s393, 8
      %s395 = scalar_lea.vmem %s6, %s394
      // Predicated region
      $region45: #{_lambda_.12} parent=43 // pred_check
        %p396 = pneg %p166
      $region46: #{_lambda_.12} parent=43 // pred_check_branch
        %398 = sbr.rel (%p396) target = $region48
      $region47: #{_lambda_.12} parent=43 // pred_region
        _
      $region48: #{_lambda_.12} parent=43 // pred_fallthru
        _
    $region44: #{_lambda_.12} parent=5 // pred_fallthru
      _
    %p399 = scmp.le.s32.totalorder 2, %s12
    // Predicated region
    $region49: #{_lambda_.12} parent=5 // pred_check
      %p400 = pneg %p399
    $region50: #{_lambda_.12} parent=5 // pred_check_branch
      %402 = sbr.rel (%p400) target = $region52
    $region51: #{_lambda_.12} parent=5 // pred_region
      %s403 = ssub.s32 %s12, 2
      // Predicated region
      $region53: #{_lambda_.12} parent=51 // pred_check
        %p404 = pneg %p172
      $region54: #{_lambda_.12} parent=51 // pred_check_branch
        %406 = sbr.rel (%p404) target = $region56
      $region55: #{_lambda_.12} parent=51 // pred_region
        %p407 = scmp.lt.s32.totalorder %s18, 1
        %s408 = scalar_select %p407, %s18, 1
        %s409 = smul.addr %s408, 8
        %s410 = scalar_lea.vmem %s6, %s409
      $region56: #{_lambda_.12} parent=51 // pred_fallthru
        _
    $region52: #{_lambda_.12} parent=5 // pred_fallthru
      _
  $region6: #{_lambda_.12} parent=0 // loop_footer
    %s16 = sadd.s32 1, %s12
  $region7: #{_lambda_.12} parent=0 // loop_footer_branch
    %11 = sbr.rel target = $region3
  $region8: #{_lambda_.12} parent=0 // loop_exit
    _

// kernel: _lambda_.13
$region0: #{_lambda_.13}
  #allocation0 [shape = 'u32[]', space=smem, size = 0x4, offset = 0x4, fixed_abs, tag = 'smem constant byte address 0x4 - core index']
  #allocation1 [shape = 'u32[144,128]{1,0:T(1,128)}', space=vmem, size = 0x12000, scoped, tag = 'internal scratch']
  %s0 = inlined_call_operand.vmem [shape: f32[2,5,32], index: 0, kind: input, shape index: {}]
  %s1 = inlined_call_operand.vmem [shape: f32[1,32], index: 1, kind: input, shape index: {}]
  %s2 = inlined_call_operand.vmem [shape: f32[1,32], index: 2, kind: input, shape index: {}]
  %s3 = inlined_call_operand.vmem [shape: f32[32,96], index: 3, kind: input, shape index: {}]
  %s4 = inlined_call_operand.vmem [shape: f32[1,96], index: 4, kind: input, shape index: {}]
  %s5 = inlined_call_operand.vmem [shape: f32[32,32], index: 5, kind: input, shape index: {}]
  %s6 = inlined_call_operand.vmem [shape: f32[1,32], index: 6, kind: input, shape index: {}]
  %s7 = inlined_call_operand.vmem [shape: f32[2,5,32], index: 7, kind: output, shape index: {}]
  %s8 = sld [smem:[#allocation0]]
  $region61: #{_lambda_.13} parent=0
    _
  %s10 = ssub.s32 1, %s8
  %s11 = scalar_select 0, %s10, %s8
  loop: start=0, step=1, limit=4
  $region2: #{_lambda_.13} parent=0 // loop_pre_header
    _
  $region3: #{_lambda_.13} parent=0 // loop_header
    %s13 = sphi 0, %s17
    %p14 = scmp.ge.s32.totalorder %s13, 4
    %s23 = sphi 0, %s25
    %s26 = sphi 0, %s23
    %s27 = sphi 0, %s26
    %s43 = sphi 0, %s27
    %s47 = sphi 0, %s47
    %s49 = sphi 0, %s47
    %s50 = sphi 0, %s49
    %s64 = sphi 0, %s50
    %s68 = sphi 0, %s68
    %s70 = sphi 0, %s68
    %s71 = sphi 0, %s70
    %s85 = sphi 0, %s71
    %s89 = sphi 0, %s89
    %s91 = sphi 0, %s89
    %s92 = sphi 0, %s91
    %s106 = sphi 0, %s92
    %s110 = sphi 0, %s110
    %s112 = sphi 0, %s110
    %s113 = sphi 0, %s112
    %s127 = sphi 0, %s113
    %s131 = sphi 0, %s131
    %s133 = sphi 0, %s131
    %s134 = sphi 0, %s133
    %s148 = sphi 0, %s134
    %s152 = sphi 0, %s152
    %s154 = sphi 0, %s152
    %s155 = sphi 0, %s154
    %s169 = sphi 0, %s155
    %s175 = sphi 0, %s177
    %s178 = sphi 0, %s175
    %s179 = sphi 0, %s178
    %s195 = sphi 0, %s179
  $region4: #{_lambda_.13} parent=0 // loop_header_branch
    %16 = sbr.rel (%p14) target = $region8
  $region5: #{_lambda_.13} parent=0 // loop_body
    %s18 = ssub.s32 %s13, 1
    %s19 = ssub.s32 %s13, 2
    %s20 = sadd.s32 %s13, 1
    %s21 = ssub.s32 %s13, %s20
    %p22 = scmp.eq.s32.totalorder %s21, 0
    %s24 = sadd.s32 %s23, 1
    %s25 = scalar_select %p22, %s23, %s24
    %p28 = pneg %p22
    %p29 = scmp.eq.s32.totalorder %s13, 1
    %p30 = por %p28, %p29
    %p31 = scmp.ne.s32.totalorder %s23, %s26
    %p32 = scmp.eq.s32.totalorder %s13, 0
    %p33 = por %p31, %p32
    %p34 = scmp.ne.s32.totalorder %s23, %s26
    %p35 = scmp.eq.s32.totalorder %s18, 1
    %p36 = por %p34, %p35
    %p37 = scmp.ne.s32.totalorder %s26, %s27
    %p38 = scmp.eq.s32.totalorder %s18, 0
    %p39 = por %p37, %p38
    %p40 = scmp.ne.s32.totalorder %s26, %s27
    %p41 = scmp.eq.s32.totalorder %s19, 1
    %p42 = por %p40, %p41
    %p44 = scmp.ne.s32.totalorder %s27, %s43
    %p45 = scmp.eq.s32.totalorder %s19, 0
    %p46 = por %p44, %p45
    %s48 = sadd.s32 %s47, 1
    %p51 = scmp.eq.s32.totalorder %s13, 1
    %p52 = scmp.ne.s32.totalorder %s47, %s49
    %p53 = scmp.eq.s32.totalorder %s13, 0
    %p54 = por %p52, %p53
    %p55 = scmp.ne.s32.totalorder %s47, %s49
    %p56 = scmp.eq.s32.totalorder %s18, 1
    %p57 = por %p55, %p56
    %p58 = scmp.ne.s32.totalorder %s49, %s50
    %p59 = scmp.eq.s32.totalorder %s18, 0
    %p60 = por %p58, %p59
    %p61 = scmp.ne.s32.totalorder %s49, %s50
    %p62 = scmp.eq.s32.totalorder %s19, 1
    %p63 = por %p61, %p62
    %p65 = scmp.ne.s32.totalorder %s50, %s64
    %p66 = scmp.eq.s32.totalorder %s19, 0
    %p67 = por %p65, %p66
    %s69 = sadd.s32 %s68, 1
    %p72 = scmp.eq.s32.totalorder %s13, 1
    %p73 = scmp.ne.s32.totalorder %s68, %s70
    %p74 = scmp.eq.s32.totalorder %s13, 0
    %p75 = por %p73, %p74
    %p76 = scmp.ne.s32.totalorder %s68, %s70
    %p77 = scmp.eq.s32.totalorder %s18, 1
    %p78 = por %p76, %p77
    %p79 = scmp.ne.s32.totalorder %s70, %s71
    %p80 = scmp.eq.s32.totalorder %s18, 0
    %p81 = por %p79, %p80
    %p82 = scmp.ne.s32.totalorder %s70, %s71
    %p83 = scmp.eq.s32.totalorder %s19, 1
    %p84 = por %p82, %p83
    %p86 = scmp.ne.s32.totalorder %s71, %s85
    %p87 = scmp.eq.s32.totalorder %s19, 0
    %p88 = por %p86, %p87
    %s90 = sadd.s32 %s89, 1
    %p93 = scmp.eq.s32.totalorder %s13, 1
    %p94 = scmp.ne.s32.totalorder %s89, %s91
    %p95 = scmp.eq.s32.totalorder %s13, 0
    %p96 = por %p94, %p95
    %p97 = scmp.ne.s32.totalorder %s89, %s91
    %p98 = scmp.eq.s32.totalorder %s18, 1
    %p99 = por %p97, %p98
    %p100 = scmp.ne.s32.totalorder %s91, %s92
    %p101 = scmp.eq.s32.totalorder %s18, 0
    %p102 = por %p100, %p101
    %p103 = scmp.ne.s32.totalorder %s91, %s92
    %p104 = scmp.eq.s32.totalorder %s19, 1
    %p105 = por %p103, %p104
    %p107 = scmp.ne.s32.totalorder %s92, %s106
    %p108 = scmp.eq.s32.totalorder %s19, 0
    %p109 = por %p107, %p108
    %s111 = sadd.s32 %s110, 1
    %p114 = scmp.eq.s32.totalorder %s13, 1
    %p115 = scmp.ne.s32.totalorder %s110, %s112
    %p116 = scmp.eq.s32.totalorder %s13, 0
    %p117 = por %p115, %p116
    %p118 = scmp.ne.s32.totalorder %s110, %s112
    %p119 = scmp.eq.s32.totalorder %s18, 1
    %p120 = por %p118, %p119
    %p121 = scmp.ne.s32.totalorder %s112, %s113
    %p122 = scmp.eq.s32.totalorder %s18, 0
    %p123 = por %p121, %p122
    %p124 = scmp.ne.s32.totalorder %s112, %s113
    %p125 = scmp.eq.s32.totalorder %s19, 1
    %p126 = por %p124, %p125
    %p128 = scmp.ne.s32.totalorder %s113, %s127
    %p129 = scmp.eq.s32.totalorder %s19, 0
    %p130 = por %p128, %p129
    %s132 = sadd.s32 %s131, 1
    %p135 = scmp.eq.s32.totalorder %s13, 1
    %p136 = scmp.ne.s32.totalorder %s131, %s133
    %p137 = scmp.eq.s32.totalorder %s13, 0
    %p138 = por %p136, %p137
    %p139 = scmp.ne.s32.totalorder %s131, %s133
    %p140 = scmp.eq.s32.totalorder %s18, 1
    %p141 = por %p139, %p140
    %p142 = scmp.ne.s32.totalorder %s133, %s134
    %p143 = scmp.eq.s32.totalorder %s18, 0
    %p144 = por %p142, %p143
    %p145 = scmp.ne.s32.totalorder %s133, %s134
    %p146 = scmp.eq.s32.totalorder %s19, 1
    %p147 = por %p145, %p146
    %p149 = scmp.ne.s32.totalorder %s134, %s148
    %p150 = scmp.eq.s32.totalorder %s19, 0
    %p151 = por %p149, %p150
    %s153 = sadd.s32 %s152, 1
    %p156 = scmp.eq.s32.totalorder %s13, 1
    %p157 = scmp.ne.s32.totalorder %s152, %s154
    %p158 = scmp.eq.s32.totalorder %s13, 0
    %p159 = por %p157, %p158
    %p160 = scmp.ne.s32.totalorder %s152, %s154
    %p161 = scmp.eq.s32.totalorder %s18, 1
    %p162 = por %p160, %p161
    %p163 = scmp.ne.s32.totalorder %s154, %s155
    %p164 = scmp.eq.s32.totalorder %s18, 0
    %p165 = por %p163, %p164
    %p166 = scmp.ne.s32.totalorder %s154, %s155
    %p167 = scmp.eq.s32.totalorder %s19, 1
    %p168 = por %p166, %p167
    %p170 = scmp.ne.s32.totalorder %s155, %s169
    %p171 = scmp.eq.s32.totalorder %s19, 0
    %p172 = por %p170, %p171
    %s173 = ssub.s32 %s13, %s20
    %p174 = scmp.eq.s32.totalorder %s173, 0
    %s176 = sadd.s32 %s175, 1
    %s177 = scalar_select %p174, %s175, %s176
    %p180 = pneg %p174
    %p181 = scmp.eq.s32.totalorder %s13, 1
    %p182 = por %p180, %p181
    %p183 = scmp.ne.s32.totalorder %s175, %s178
    %p184 = scmp.eq.s32.totalorder %s13, 0
    %p185 = por %p183, %p184
    %p186 = scmp.ne.s32.totalorder %s175, %s178
    %p187 = scmp.eq.s32.totalorder %s18, 1
    %p188 = por %p186, %p187
    %p189 = scmp.ne.s32.totalorder %s178, %s179
    %p190 = scmp.eq.s32.totalorder %s18, 0
    %p191 = por %p189, %p190
    %p192 = scmp.ne.s32.totalorder %s178, %s179
    %p193 = scmp.eq.s32.totalorder %s19, 1
    %p194 = por %p192, %p193
    %p196 = scmp.ne.s32.totalorder %s179, %s195
    %p197 = scmp.eq.s32.totalorder %s19, 0
    %p198 = por %p196, %p197
    %p199 = scmp.le.s32.totalorder 1, %s13
    %p200 = scmp.lt.s32.totalorder %s13, 3
    %p201 = pnand %p199, %p200
    %p202 = pneg %p201
    // Predicated region
    $region9: #{_lambda_.13} parent=5 // pred_check
      _
    $region10: #{_lambda_.13} parent=5 // pred_check_branch
      %204 = sbr.rel (%p201) target = $region12
    $region11: #{_lambda_.13} parent=5 // pred_region
      %s205 = ssub.s32 %s13, 1
      // Predicated region
      $region13: #{_lambda_.13} parent=11 // pred_check
        %p206 = pneg %p60
      $region14: #{_lambda_.13} parent=11 // pred_check_branch
        %208 = sbr.rel (%p206) target = $region16
      $region15: #{_lambda_.13} parent=11 // pred_region
        _
      $region16: #{_lambda_.13} parent=11 // pred_fallthru
        _
      // Predicated region
      $region17: #{_lambda_.13} parent=11 // pred_check
        %p209 = pneg %p81
      $region18: #{_lambda_.13} parent=11 // pred_check_branch
        %211 = sbr.rel (%p209) target = $region20
      $region19: #{_lambda_.13} parent=11 // pred_region
        _
      $region20: #{_lambda_.13} parent=11 // pred_fallthru
        _
      // Predicated region
      $region21: #{_lambda_.13} parent=11 // pred_check
        %p212 = pneg %p102
      $region22: #{_lambda_.13} parent=11 // pred_check_branch
        %214 = sbr.rel (%p212) target = $region24
      $region23: #{_lambda_.13} parent=11 // pred_region
        _
      $region24: #{_lambda_.13} parent=11 // pred_fallthru
        _
      // Predicated region
      $region25: #{_lambda_.13} parent=11 // pred_check
        %p215 = pneg %p123
      $region26: #{_lambda_.13} parent=11 // pred_check_branch
        %217 = sbr.rel (%p215) target = $region28
      $region27: #{_lambda_.13} parent=11 // pred_region
        _
      $region28: #{_lambda_.13} parent=11 // pred_fallthru
        _
      // Predicated region
      $region29: #{_lambda_.13} parent=11 // pred_check
        %p218 = pneg %p144
      $region30: #{_lambda_.13} parent=11 // pred_check_branch
        %220 = sbr.rel (%p218) target = $region32
      $region31: #{_lambda_.13} parent=11 // pred_region
        _
      $region32: #{_lambda_.13} parent=11 // pred_fallthru
        _
      // Predicated region
      $region33: #{_lambda_.13} parent=11 // pred_check
        %p221 = pneg %p165
      $region34: #{_lambda_.13} parent=11 // pred_check_branch
        %223 = sbr.rel (%p221) target = $region36
      $region35: #{_lambda_.13} parent=11 // pred_region
        _
      $region36: #{_lambda_.13} parent=11 // pred_fallthru
        _
    $region12: #{_lambda_.13} parent=5 // pred_fallthru
      _
    %p224 = scmp.lt.s32.totalorder %s13, 2
    // Predicated region
    $region37: #{_lambda_.13} parent=5 // pred_check
      %p225 = pneg %p224
    $region38: #{_lambda_.13} parent=5 // pred_check_branch
      %227 = sbr.rel (%p225) target = $region40
    $region39: #{_lambda_.13} parent=5 // pred_region
      // Predicated region
      $region41: #{_lambda_.13} parent=39 // pred_check
        %p228 = pneg %p33
      $region42: #{_lambda_.13} parent=39 // pred_check_branch
        %230 = sbr.rel (%p228) target = $region44
      $region43: #{_lambda_.13} parent=39 // pred_region
        %p231 = scmp.lt.s32.totalorder %s13, 1
        %s232 = scalar_select %p231, %s13, 1
        %s233 = smul.addr %s232, 8
        %s234 = scalar_lea.vmem %s0, %s233
      $region44: #{_lambda_.13} parent=39 // pred_fallthru
        _
    $region40: #{_lambda_.13} parent=5 // pred_fallthru
      _
    %p235 = scmp.le.s32.totalorder 1, %s13
    %p236 = scmp.lt.s32.totalorder %s13, 3
    %p237 = pnand %p235, %p236
    %p238 = pneg %p237
    // Predicated region
    $region45: #{_lambda_.13} parent=5 // pred_check
      _
    $region46: #{_lambda_.13} parent=5 // pred_check_branch
      %240 = sbr.rel (%p237) target = $region48
    $region47: #{_lambda_.13} parent=5 // pred_region
      %s241 = ssub.s32 %s13, 1
      %p242 = scmp.lt.s32.totalorder %s18, 1
      %s243 = scalar_select %p242, %s18, 1
      %s244 = smul.addr %s243, 8
      %s245 = scalar_lea.vmem %s0, %s244
      %p246 = pneg %p39
      %p247 = pneg %p36
      %p248 = pneg %p60
      %p249 = pneg %p57
      %p250 = pneg %p81
      %p251 = pneg %p78
      %p252 = pneg %p102
      %p253 = pneg %p99
      %p254 = pneg %p123
      %p255 = pneg %p120
      %p256 = pneg %p144
      %p257 = pneg %p141
      %p258 = pneg %p165
      %p259 = pneg %p162
      %p260 = pneg %p191
      %p261 = pneg %p188
      %p262 = scmp.lt.s32.totalorder %s18, 1
      %s263 = scalar_select %p262, %s18, 1
      %s264 = smul.addr %s263, 8
      %s265 = scalar_lea.vmem %s7, %s264
      %p266 = scmp.lt.s32.totalorder %s18, 1
      %s267 = scalar_select %p266, %s18, 1
      %s268 = smul.addr %s267, 8
      %s269 = scalar_lea.vmem %s0, %s268
      %p270 = scmp.lt.s32.totalorder %s18, 1
      %s271 = scalar_select %p270, %s18, 1
      %s272 = smul.addr %s271, 8
      %s273 = scalar_lea.vmem %s7, %s272
      %v275 = vld [vmem:[%s269] sm:$0x1f]
      %v276 = vld [vmem:[%s1] sm:$0x1]
      %v277 = vld [vmem:[%s2] sm:$0x1]
      %vm278 = vcmask 258048
      %v279 = vsel %vm278, %v275, 0.0
      %280 = vadd.xlane.f32.xlu0 %v279
      %v281 = vpop.xlane.xlu0 %280
      %v282 = vrcp.pop 32.0
      %v283 = vmul.f32 %v281, %v282
      %v284 = vsub.f32 %v275, %v283
      %v285 = vmul.f32 %v284, %v284
      %v286 = vsel %vm278, %v285, 0.0
      %287 = vadd.xlane.f32.xlu0 %v286
      %v288 = vpop.xlane.xlu0 %287
      %v289 = vmul.f32 %v288, %v282
      %v290 = vadd.f32 %v289, 1e-05
      %v291 = vrsqrt.pop %v290
      %v292 = vmul.f32 %v284, %v291
      %v294 = vlaneseq
      %v295 = vshrl.u32 %v294, 7
      %v296 = vsub.s32 0, %v295
      %v297 = vrot.slane %v276, %v296
      %v299 = vmul.f32 %v292, %v297
      %v301 = vlaneseq
      %v302 = vshrl.u32 %v301, 7
      %v303 = vsub.s32 0, %v302
      %v304 = vrot.slane %v277, %v303
      %v306 = vadd.f32 %v299, %v304
      %v307 = vpack.c.bf16 %v306, %v306
      %v308 = vld [vmem:[%s3] sm:$0xff]
      %v309 = vld [vmem:[%s3 + $0x8] sm:$0xff]
      %v310 = vld [vmem:[%s3 + $0x10] sm:$0xff]
      %v311 = vld [vmem:[%s3 + $0x18] sm:$0xff]
      %v312 = vpack.c.bf16 %v309, %v308
      %v313 = vpack.c.bf16 %v311, %v310
      %v314 = vld [vmem:[%s4] sm:$0x1]
      %v316 = vlaneseq
      %v317 = vshrl.u32 %v316, 7
      %v318 = vsub.s32 0, %v317
      %v319 = vrot.slane %v314, %v318
      %vm321 = vcmask 261120
      %v323 = vsel %vm321, %v307, 0
      %325 = vmatprep.subr.bf16.mxu0 0
      %326 = vmatpush1.bf16.msra.mxu0 0
      %327 = vmatprep.subr.bf16.mxu0 0
      %328 = vmatpush1.bf16.msra.mxu0 0
      %329 = vmatprep.subr.bf16.mxu0 0
      %330 = vmatpush1.bf16.msra.mxu0 0
      %331 = vmatprep.subr.bf16.mxu0 0
      %332 = vmatpush1.bf16.msra.mxu0 0
      %333 = vmatprep.subr.bf16.mxu0 0
      %334 = vmatpush1.bf16.msra.mxu0 0
      %335 = vmatprep.subr.bf16.mxu0 0
      %336 = vmatpush1.bf16.msra.mxu0 0
      %337 = vmatprep.subr.bf16.mxu0 0
      %338 = vmatpush1.bf16.msra.mxu0 %v313
      %339 = vmatprep.subr.bf16.mxu0 0
      %340 = vmatpush1.bf16.msra.mxu0 %v312
      %341 = vmatprep.subr.bf16.mxu0 0
      %342 = vmatpush2.bf16.msra.mxu0 0
      %343 = vmatprep.subr.bf16.mxu0 0
      %344 = vmatpush2.bf16.msra.mxu0 0
      %345 = vmatprep.subr.bf16.mxu0 0
      %346 = vmatpush2.bf16.msra.mxu0 0
      %347 = vmatprep.subr.bf16.mxu0 0
      %348 = vmatpush2.bf16.msra.mxu0 0
      %349 = vmatprep.subr.bf16.mxu0 0
      %350 = vmatpush2.bf16.msra.mxu0 0
      %351 = vmatprep.subr.bf16.mxu0 0
      %352 = vmatpush2.bf16.msra.mxu0 0
      %353 = vmatprep.subr.bf16.mxu0 0
      %354 = vmatpush2.bf16.msra.mxu0 0
      %355 = vmatprep.subr.bf16.mxu0 0
      %356 = vmatpush2.bf16.msra.mxu0 0
      %357 = vmatprep.mubr.bf16.mxu0 0
      %358 = vmatmul.mubr.bf16.gmra.mxu0 %v323
      %v359 = vpop.f32.mrf.mxu0
      %v360 = vadd.f32 %v319, %v359
      %v361 = vpop.f32.mrf.mxu0
      %v362 = vpop.f32.mrf.mxu0
      %v363 = vpop.f32.mrf.mxu0
      %364 = vdwg.mxu0
      %v365 = vmul.f32 %v360, 0.35355338
      %v366 = vpack.c.bf16 %v365, %v365
      %v367 = vpack.c.bf16 %v360, %v360
      %369 = vrot.lane.b32.xlu0 %v367, 96
      %v370 = vpop.permute.xlu0 %369
      %vm371 = vcmask 64512
      %v373 = vsel %vm371, %v366, 0
      %v376 = vsel %vm371, %v370, 0
      %378 = vmatprep.subr.bf16.mxu0 0
      %379 = vmatpush1.bf16.xpose.msra.mxu0 0
      %380 = vmatprep.subr.bf16.mxu0 0
      %381 = vmatpush1.bf16.xpose.msra.mxu0 0
      %382 = vmatprep.subr.bf16.mxu0 0
      %383 = vmatpush1.bf16.xpose.msra.mxu0 0
      %384 = vmatprep.subr.bf16.mxu0 0
      %385 = vmatpush1.bf16.xpose.msra.mxu0 0
      %386 = vmatprep.subr.bf16.mxu0 0
      %387 = vmatpush1.bf16.xpose.msra.mxu0 0
      %388 = vmatprep.subr.bf16.mxu0 0
      %389 = vmatpush1.bf16.xpose.msra.mxu0 0
      %390 = vmatprep.subr.bf16.mxu0 0
      %391 = vmatpush1.bf16.xpose.msra.mxu0 0
      %392 = vmatprep.subr.bf16.mxu0 0
      %393 = vmatpush1.bf16.xpose.msra.mxu0 %v376
      %394 = vmatprep.subr.bf16.mxu0 0
      %395 = vmatpush2.bf16.xpose.msra.mxu0 0
      %396 = vmatprep.subr.bf16.mxu0 0
      %397 = vmatpush2.bf16.xpose.msra.mxu0 0
      %398 = vmatprep.subr.bf16.mxu0 0
      %399 = vmatpush2.bf16.xpose.msra.mxu0 0
      %400 = vmatprep.subr.bf16.mxu0 0
      %401 = vmatpush2.bf16.xpose.msra.mxu0 0
      %402 = vmatprep.subr.bf16.mxu0 0
      %403 = vmatpush2.bf16.xpose.msra.mxu0 0
      %404 = vmatprep.subr.bf16.mxu0 0
      %405 = vmatpush2.bf16.xpose.msra.mxu0 0
      %406 = vmatprep.subr.bf16.mxu0 0
      %407 = vmatpush2.bf16.xpose.msra.mxu0 0
      %408 = vmatprep.subr.bf16.mxu0 0
      %409 = vmatpush2.bf16.xpose.msra.mxu0 0
      %410 = vmatprep.mubr.bf16.mxu0 0
      %411 = vmatmul.mubr.bf16.gmra.mxu0 %v373
      %v412 = vpop.f32.mrf.mxu0
      %v413 = vadd.f32 0.0, %v412
      %v414 = vpop.f32.mrf.mxu0
      %v415 = vpop.f32.mrf.mxu0
      %v416 = vpop.f32.mrf.mxu0
      %417 = vdwg.mxu0
      %vm418 = vcmask 36864
      %v419 = vsel %vm418, %v413, -inf
      %420 = vmax.xlane.f32.xlu0 %v419
      %v421 = vpop.xlane.xlu0 %420
      %v422 = vsub.f32 %v413, %v421
      %v423 = vmul.f32 %v422, 1.442695
      %v424 = vpow.pop %v423
      %v425 = vsel %vm418, %v424, 0.0
      %426 = vadd.xlane.f32.xlu0 %v425
      %v427 = vpop.xlane.xlu0 %426
      %v428 = vrcp.pop %v427
      %v429 = vpack.c.bf16 %v424, %v424
      %430 = vrot.lane.b32.xlu0 %v367, 64
      %v431 = vpop.permute.xlu0 %430
      %vm432 = vcmask 39936
      %v434 = vsel %vm432, %v429, 0
      %vm436 = vcmask 1041408
      %vm437 = vcmask 1042432
      %v438 = vsel %vm436, 4294967295, 65535
      %v439 = vsel %vm437, %v438, 0
      %v441 = vand.u32 %v431, %v439
      %443 = vmatprep.subr.bf16.mxu0 0
      %444 = vmatpush1.bf16.msra.mxu0 0
      %445 = vmatprep.subr.bf16.mxu0 0
      %446 = vmatpush1.bf16.msra.mxu0 0
      %447 = vmatprep.subr.bf16.mxu0 0
      %448 = vmatpush1.bf16.msra.mxu0 0
      %449 = vmatprep.subr.bf16.mxu0 0
      %450 = vmatpush1.bf16.msra.mxu0 0
      %451 = vmatprep.subr.bf16.mxu0 0
      %452 = vmatpush1.bf16.msra.mxu0 0
      %453 = vmatprep.subr.bf16.mxu0 0
      %454 = vmatpush1.bf16.msra.mxu0 0
      %455 = vmatprep.subr.bf16.mxu0 0
      %456 = vmatpush1.bf16.msra.mxu0 0
      %457 = vmatprep.subr.bf16.mxu0 0
      %458 = vmatpush1.bf16.msra.mxu0 %v441
      %459 = vmatprep.subr.bf16.mxu0 0
      %460 = vmatpush2.bf16.msra.mxu0 0
      %461 = vmatprep.subr.bf16.mxu0 0
      %462 = vmatpush2.bf16.msra.mxu0 0
      %463 = vmatprep.subr.bf16.mxu0 0
      %464 = vmatpush2.bf16.msra.mxu0 0
      %465 = vmatprep.subr.bf16.mxu0 0
      %466 = vmatpush2.bf16.msra.mxu0 0
      %467 = vmatprep.subr.bf16.mxu0 0
      %468 = vmatpush2.bf16.msra.mxu0 0
      %469 = vmatprep.subr.bf16.mxu0 0
      %470 = vmatpush2.bf16.msra.mxu0 0
      %471 = vmatprep.subr.bf16.mxu0 0
      %472 = vmatpush2.bf16.msra.mxu0 0
      %473 = vmatprep.subr.bf16.mxu0 0
      %474 = vmatpush2.bf16.msra.mxu0 0
      %475 = vmatprep.mubr.bf16.mxu0 0
      %476 = vmatmul.mubr.bf16.gmra.mxu0 %v434
      %v477 = vpop.f32.mrf.mxu0
      %v478 = vadd.f32 0.0, %v477
      %v479 = vpop.f32.mrf.mxu0
      %v480 = vpop.f32.mrf.mxu0
      %v481 = vpop.f32.mrf.mxu0
      %482 = vdwg.mxu0
      %v483 = vmul.f32 %v478, %v428
      %v484 = vld [vmem:[%s5] sm:$0xff]
      %v485 = vpack.c.bf16 %v483, %v483
      %v486 = vpack.c.bf16 %v484, %v484
      %488 = vrot.lane.b32.xlu0 %v366, 120
      %v489 = vpop.permute.xlu0 %488
      %490 = vrot.lane.b32.xlu0 %v367, 88
      %v491 = vpop.permute.xlu0 %490
      %v493 = vsel %vm371, %v489, 0
      %v496 = vsel %vm371, %v491, 0
      %498 = vmatprep.subr.bf16.mxu0 0
      %499 = vmatpush1.bf16.xpose.msra.mxu0 0
      %500 = vmatprep.subr.bf16.mxu0 0
      %501 = vmatpush1.bf16.xpose.msra.mxu0 0
      %502 = vmatprep.subr.bf16.mxu0 0
      %503 = vmatpush1.bf16.xpose.msra.mxu0 0
      %504 = vmatprep.subr.bf16.mxu0 0
      %505 = vmatpush1.bf16.xpose.msra.mxu0 0
      %506 = vmatprep.subr.bf16.mxu0 0
      %507 = vmatpush1.bf16.xpose.msra.mxu0 0
      %508 = vmatprep.subr.bf16.mxu0 0
      %509 = vmatpush1.bf16.xpose.msra.mxu0 0
      %510 = vmatprep.subr.bf16.mxu0 0
      %511 = vmatpush1.bf16.xpose.msra.mxu0 0
      %512 = vmatprep.subr.bf16.mxu0 0
      %513 = vmatpush1.bf16.xpose.msra.mxu0 %v496
      %514 = vmatprep.subr.bf16.mxu0 0
      %515 = vmatpush2.bf16.xpose.msra.mxu0 0
      %516 = vmatprep.subr.bf16.mxu0 0
      %517 = vmatpush2.bf16.xpose.msra.mxu0 0
      %518 = vmatprep.subr.bf16.mxu0 0
      %519 = vmatpush2.bf16.xpose.msra.mxu0 0
      %520 = vmatprep.subr.bf16.mxu0 0
      %521 = vmatpush2.bf16.xpose.msra.mxu0 0
      %522 = vmatprep.subr.bf16.mxu0 0
      %523 = vmatpush2.bf16.xpose.msra.mxu0 0
      %524 = vmatprep.subr.bf16.mxu0 0
      %525 = vmatpush2.bf16.xpose.msra.mxu0 0
      %526 = vmatprep.subr.bf16.mxu0 0
      %527 = vmatpush2.bf16.xpose.msra.mxu0 0
      %528 = vmatprep.subr.bf16.mxu0 0
      %529 = vmatpush2.bf16.xpose.msra.mxu0 0
      %530 = vmatprep.mubr.bf16.mxu0 0
      %531 = vmatmul.mubr.bf16.gmra.mxu0 %v493
      %v532 = vpop.f32.mrf.mxu0
      %v533 = vadd.f32 0.0, %v532
      %v534 = vpop.f32.mrf.mxu0
      %v535 = vpop.f32.mrf.mxu0
      %v536 = vpop.f32.mrf.mxu0
      %537 = vdwg.mxu0
      %v538 = vsel %vm418, %v533, -inf
      %539 = vmax.xlane.f32.xlu0 %v538
      %v540 = vpop.xlane.xlu0 %539
      %v541 = vsub.f32 %v533, %v540
      %v542 = vmul.f32 %v541, 1.442695
      %v543 = vpow.pop %v542
      %v544 = vsel %vm418, %v543, 0.0
      %545 = vadd.xlane.f32.xlu0 %v544
      %v546 = vpop.xlane.xlu0 %545
      %v547 = vrcp.pop %v546
      %v548 = vpack.c.bf16 %v543, %v543
      %549 = vrot.lane.b32.xlu0 %v367, 56
      %v550 = vpop.permute.xlu0 %549
      %v552 = vsel %vm432, %v548, 0
      %v555 = vand.u32 %v550, %v439
      %557 = vmatprep.subr.bf16.mxu0 0
      %558 = vmatpush1.bf16.msra.mxu0 0
      %559 = vmatprep.subr.bf16.mxu0 0
      %560 = vmatpush1.bf16.msra.mxu0 0
      %561 = vmatprep.subr.bf16.mxu0 0
      %562 = vmatpush1.bf16.msra.mxu0 0
      %563 = vmatprep.subr.bf16.mxu0 0
      %564 = vmatpush1.bf16.msra.mxu0 0
      %565 = vmatprep.subr.bf16.mxu0 0
      %566 = vmatpush1.bf16.msra.mxu0 0
      %567 = vmatprep.subr.bf16.mxu0 0
      %568 = vmatpush1.bf16.msra.mxu0 0
      %569 = vmatprep.subr.bf16.mxu0 0
      %570 = vmatpush1.bf16.msra.mxu0 0
      %571 = vmatprep.subr.bf16.mxu0 0
      %572 = vmatpush1.bf16.msra.mxu0 %v555
      %573 = vmatprep.subr.bf16.mxu0 0
      %574 = vmatpush2.bf16.msra.mxu0 0
      %575 = vmatprep.subr.bf16.mxu0 0
      %576 = vmatpush2.bf16.msra.mxu0 0
      %577 = vmatprep.subr.bf16.mxu0 0
      %578 = vmatpush2.bf16.msra.mxu0 0
      %579 = vmatprep.subr.bf16.mxu0 0
      %580 = vmatpush2.bf16.msra.mxu0 0
      %581 = vmatprep.subr.bf16.mxu0 0
      %582 = vmatpush2.bf16.msra.mxu0 0
      %583 = vmatprep.subr.bf16.mxu0 0
      %584 = vmatpush2.bf16.msra.mxu0 0
      %585 = vmatprep.subr.bf16.mxu0 0
      %586 = vmatpush2.bf16.msra.mxu0 0
      %587 = vmatprep.subr.bf16.mxu0 0
      %588 = vmatpush2.bf16.msra.mxu0 0
      %589 = vmatprep.mubr.bf16.mxu0 0
      %590 = vmatmul.mubr.bf16.gmra.mxu0 %v552
      %v591 = vpop.f32.mrf.mxu0
      %v592 = vadd.f32 0.0, %v591
      %v593 = vpop.f32.mrf.mxu0
      %v594 = vpop.f32.mrf.mxu0
      %v595 = vpop.f32.mrf.mxu0
      %596 = vdwg.mxu0
      %v597 = vmul.f32 %v592, %v547
      %v598 = vld [vmem:[%s5 + $0x8] sm:$0xff]
      %v599 = vpack.c.bf16 %v597, %v597
      %v600 = vpack.c.bf16 %v598, %v598
      %v602 = vsel %vm371, %v599, 0
      %vm604 = vcmask 1043456
      %v606 = vsel %vm604, %v600, 0
      %608 = vmatprep.subr.bf16.mxu0 0
      %609 = vmatpush1.bf16.msra.mxu0 0
      %610 = vmatprep.subr.bf16.mxu0 0
      %611 = vmatpush1.bf16.msra.mxu0 0
      %612 = vmatprep.subr.bf16.mxu0 0
      %613 = vmatpush1.bf16.msra.mxu0 0
      %614 = vmatprep.subr.bf16.mxu0 0
      %615 = vmatpush1.bf16.msra.mxu0 0
      %616 = vmatprep.subr.bf16.mxu0 0
      %617 = vmatpush1.bf16.msra.mxu0 0
      %618 = vmatprep.subr.bf16.mxu0 0
      %619 = vmatpush1.bf16.msra.mxu0 0
      %620 = vmatprep.subr.bf16.mxu0 0
      %621 = vmatpush1.bf16.msra.mxu0 0
      %622 = vmatprep.subr.bf16.mxu0 0
      %623 = vmatpush1.bf16.msra.mxu0 %v606
      %624 = vmatprep.subr.bf16.mxu0 0
      %625 = vmatpush2.bf16.msra.mxu0 0
      %626 = vmatprep.subr.bf16.mxu0 0
      %627 = vmatpush2.bf16.msra.mxu0 0
      %628 = vmatprep.subr.bf16.mxu0 0
      %629 = vmatpush2.bf16.msra.mxu0 0
      %630 = vmatprep.subr.bf16.mxu0 0
      %631 = vmatpush2.bf16.msra.mxu0 0
      %632 = vmatprep.subr.bf16.mxu0 0
      %633 = vmatpush2.bf16.msra.mxu0 0
      %634 = vmatprep.subr.bf16.mxu0 0
      %635 = vmatpush2.bf16.msra.mxu0 0
      %636 = vmatprep.subr.bf16.mxu0 0
      %637 = vmatpush2.bf16.msra.mxu0 0
      %638 = vmatprep.subr.bf16.mxu0 0
      %639 = vmatpush2.bf16.msra.mxu0 0
      %640 = vmatprep.mubr.bf16.mxu0 0
      %641 = vmatmul.mubr.bf16.gmra.mxu0 %v602
      %v642 = vpop.f32.mrf.mxu0
      %v643 = vadd.f32 0.0, %v642
      %v644 = vpop.f32.mrf.mxu0
      %v645 = vpop.f32.mrf.mxu0
      %v646 = vpop.f32.mrf.mxu0
      %647 = vdwg.mxu0
      %v649 = vsel %vm371, %v485, 0
      %v652 = vsel %vm604, %v486, 0
      %654 = vmatprep.subr.bf16.mxu0 0
      %655 = vmatpush1.bf16.msra.mxu0 0
      %656 = vmatprep.subr.bf16.mxu0 0
      %657 = vmatpush1.bf16.msra.mxu0 0
      %658 = vmatprep.subr.bf16.mxu0 0
      %659 = vmatpush1.bf16.msra.mxu0 0
      %660 = vmatprep.subr.bf16.mxu0 0
      %661 = vmatpush1.bf16.msra.mxu0 0
      %662 = vmatprep.subr.bf16.mxu0 0
      %663 = vmatpush1.bf16.msra.mxu0 0
      %664 = vmatprep.subr.bf16.mxu0 0
      %665 = vmatpush1.bf16.msra.mxu0 0
      %666 = vmatprep.subr.bf16.mxu0 0
      %667 = vmatpush1.bf16.msra.mxu0 0
      %668 = vmatprep.subr.bf16.mxu0 0
      %669 = vmatpush1.bf16.msra.mxu0 %v652
      %670 = vmatprep.subr.bf16.mxu0 0
      %671 = vmatpush2.bf16.msra.mxu0 0
      %672 = vmatprep.subr.bf16.mxu0 0
      %673 = vmatpush2.bf16.msra.mxu0 0
      %674 = vmatprep.subr.bf16.mxu0 0
      %675 = vmatpush2.bf16.msra.mxu0 0
      %676 = vmatprep.subr.bf16.mxu0 0
      %677 = vmatpush2.bf16.msra.mxu0 0
      %678 = vmatprep.subr.bf16.mxu0 0
      %679 = vmatpush2.bf16.msra.mxu0 0
      %680 = vmatprep.subr.bf16.mxu0 0
      %681 = vmatpush2.bf16.msra.mxu0 0
      %682 = vmatprep.subr.bf16.mxu0 0
      %683 = vmatpush2.bf16.msra.mxu0 0
      %684 = vmatprep.subr.bf16.mxu0 0
      %685 = vmatpush2.bf16.msra.mxu0 0
      %686 = vmatprep.mubr.bf16.mxu0 0
      %687 = vmatmul.mubr.bf16.gmra.mxu0 %v649
      %v688 = vpop.f32.mrf.mxu0
      %v689 = vadd.f32 %v643, %v688
      %v690 = vpop.f32.mrf.mxu0
      %v691 = vpop.f32.mrf.mxu0
      %v692 = vpop.f32.mrf.mxu0
      %693 = vdwg.mxu0
      %694 = vrot.lane.b32.xlu0 %v366, 112
      %v695 = vpop.permute.xlu0 %694
      %696 = vrot.lane.b32.xlu0 %v367, 80
      %v697 = vpop.permute.xlu0 %696
      %v699 = vsel %vm371, %v695, 0
      %v702 = vsel %vm371, %v697, 0
      %704 = vmatprep.subr.bf16.mxu0 0
      %705 = vmatpush1.bf16.xpose.msra.mxu0 0
      %706 = vmatprep.subr.bf16.mxu0 0
      %707 = vmatpush1.bf16.xpose.msra.mxu0 0
      %708 = vmatprep.subr.bf16.mxu0 0
      %709 = vmatpush1.bf16.xpose.msra.mxu0 0
      %710 = vmatprep.subr.bf16.mxu0 0
      %711 = vmatpush1.bf16.xpose.msra.mxu0 0
      %712 = vmatprep.subr.bf16.mxu0 0
      %713 = vmatpush1.bf16.xpose.msra.mxu0 0
      %714 = vmatprep.subr.bf16.mxu0 0
      %715 = vmatpush1.bf16.xpose.msra.mxu0 0
      %716 = vmatprep.subr.bf16.mxu0 0
      %717 = vmatpush1.bf16.xpose.msra.mxu0 0
      %718 = vmatprep.subr.bf16.mxu0 0
      %719 = vmatpush1.bf16.xpose.msra.mxu0 %v702
      %720 = vmatprep.subr.bf16.mxu0 0
      %721 = vmatpush2.bf16.xpose.msra.mxu0 0
      %722 = vmatprep.subr.bf16.mxu0 0
      %723 = vmatpush2.bf16.xpose.msra.mxu0 0
      %724 = vmatprep.subr.bf16.mxu0 0
      %725 = vmatpush2.bf16.xpose.msra.mxu0 0
      %726 = vmatprep.subr.bf16.mxu0 0
      %727 = vmatpush2.bf16.xpose.msra.mxu0 0
      %728 = vmatprep.subr.bf16.mxu0 0
      %729 = vmatpush2.bf16.xpose.msra.mxu0 0
      %730 = vmatprep.subr.bf16.mxu0 0
      %731 = vmatpush2.bf16.xpose.msra.mxu0 0
      %732 = vmatprep.subr.bf16.mxu0 0
      %733 = vmatpush2.bf16.xpose.msra.mxu0 0
      %734 = vmatprep.subr.bf16.mxu0 0
      %735 = vmatpush2.bf16.xpose.msra.mxu0 0
      %736 = vmatprep.mubr.bf16.mxu0 0
      %737 = vmatmul.mubr.bf16.gmra.mxu0 %v699
      %v738 = vpop.f32.mrf.mxu0
      %v739 = vadd.f32 0.0, %v738
      %v740 = vpop.f32.mrf.mxu0
      %v741 = vpop.f32.mrf.mxu0
      %v742 = vpop.f32.mrf.mxu0
      %743 = vdwg.mxu0
      %v744 = vsel %vm418, %v739, -inf
      %745 = vmax.xlane.f32.xlu0 %v744
      %v746 = vpop.xlane.xlu0 %745
      %v747 = vsub.f32 %v739, %v746
      %v748 = vmul.f32 %v747, 1.442695
      %v749 = vpow.pop %v748
      %v750 = vsel %vm418, %v749, 0.0
      %751 = vadd.xlane.f32.xlu0 %v750
      %v752 = vpop.xlane.xlu0 %751
      %v753 = vrcp.pop %v752
      %v754 = vpack.c.bf16 %v749, %v749
      %755 = vrot.lane.b32.xlu0 %v367, 48
      %v756 = vpop.permute.xlu0 %755
      %v758 = vsel %vm432, %v754, 0
      %v761 = vand.u32 %v756, %v439
      %763 = vmatprep.subr.bf16.mxu0 0
      %764 = vmatpush1.bf16.msra.mxu0 0
      %765 = vmatprep.subr.bf16.mxu0 0
      %766 = vmatpush1.bf16.msra.mxu0 0
      %767 = vmatprep.subr.bf16.mxu0 0
      %768 = vmatpush1.bf16.msra.mxu0 0
      %769 = vmatprep.subr.bf16.mxu0 0
      %770 = vmatpush1.bf16.msra.mxu0 0
      %771 = vmatprep.subr.bf16.mxu0 0
      %772 = vmatpush1.bf16.msra.mxu0 0
      %773 = vmatprep.subr.bf16.mxu0 0
      %774 = vmatpush1.bf16.msra.mxu0 0
      %775 = vmatprep.subr.bf16.mxu0 0
      %776 = vmatpush1.bf16.msra.mxu0 0
      %777 = vmatprep.subr.bf16.mxu0 0
      %778 = vmatpush1.bf16.msra.mxu0 %v761
      %779 = vmatprep.subr.bf16.mxu0 0
      %780 = vmatpush2.bf16.msra.mxu0 0
      %781 = vmatprep.subr.bf16.mxu0 0
      %782 = vmatpush2.bf16.msra.mxu0 0
      %783 = vmatprep.subr.bf16.mxu0 0
      %784 = vmatpush2.bf16.msra.mxu0 0
      %785 = vmatprep.subr.bf16.mxu0 0
      %786 = vmatpush2.bf16.msra.mxu0 0
      %787 = vmatprep.subr.bf16.mxu0 0
      %788 = vmatpush2.bf16.msra.mxu0 0
      %789 = vmatprep.subr.bf16.mxu0 0
      %790 = vmatpush2.bf16.msra.mxu0 0
      %791 = vmatprep.subr.bf16.mxu0 0
      %792 = vmatpush2.bf16.msra.mxu0 0
      %793 = vmatprep.subr.bf16.mxu0 0
      %794 = vmatpush2.bf16.msra.mxu0 0
      %795 = vmatprep.mubr.bf16.mxu0 0
      %796 = vmatmul.mubr.bf16.gmra.mxu0 %v758
      %v797 = vpop.f32.mrf.mxu0
      %v798 = vadd.f32 0.0, %v797
      %v799 = vpop.f32.mrf.mxu0
      %v800 = vpop.f32.mrf.mxu0
      %v801 = vpop.f32.mrf.mxu0
      %802 = vdwg.mxu0
      %v803 = vmul.f32 %v798, %v753
      %v804 = vld [vmem:[%s5 + $0x10] sm:$0xff]
      %v805 = vpack.c.bf16 %v803, %v803
      %v806 = vpack.c.bf16 %v804, %v804
      %v808 = vsel %vm371, %v805, 0
      %v811 = vsel %vm604, %v806, 0
      %813 = vmatprep.subr.bf16.mxu0 0
      %814 = vmatpush1.bf16.msra.mxu0 0
      %815 = vmatprep.subr.bf16.mxu0 0
      %816 = vmatpush1.bf16.msra.mxu0 0
      %817 = vmatprep.subr.bf16.mxu0 0
      %818 = vmatpush1.bf16.msra.mxu0 0
      %819 = vmatprep.subr.bf16.mxu0 0
      %820 = vmatpush1.bf16.msra.mxu0 0
      %821 = vmatprep.subr.bf16.mxu0 0
      %822 = vmatpush1.bf16.msra.mxu0 0
      %823 = vmatprep.subr.bf16.mxu0 0
      %824 = vmatpush1.bf16.msra.mxu0 0
      %825 = vmatprep.subr.bf16.mxu0 0
      %826 = vmatpush1.bf16.msra.mxu0 0
      %827 = vmatprep.subr.bf16.mxu0 0
      %828 = vmatpush1.bf16.msra.mxu0 %v811
      %829 = vmatprep.subr.bf16.mxu0 0
      %830 = vmatpush2.bf16.msra.mxu0 0
      %831 = vmatprep.subr.bf16.mxu0 0
      %832 = vmatpush2.bf16.msra.mxu0 0
      %833 = vmatprep.subr.bf16.mxu0 0
      %834 = vmatpush2.bf16.msra.mxu0 0
      %835 = vmatprep.subr.bf16.mxu0 0
      %836 = vmatpush2.bf16.msra.mxu0 0
      %837 = vmatprep.subr.bf16.mxu0 0
      %838 = vmatpush2.bf16.msra.mxu0 0
      %839 = vmatprep.subr.bf16.mxu0 0
      %840 = vmatpush2.bf16.msra.mxu0 0
      %841 = vmatprep.subr.bf16.mxu0 0
      %842 = vmatpush2.bf16.msra.mxu0 0
      %843 = vmatprep.subr.bf16.mxu0 0
      %844 = vmatpush2.bf16.msra.mxu0 0
      %845 = vmatprep.mubr.bf16.mxu0 0
      %846 = vmatmul.mubr.bf16.gmra.mxu0 %v808
      %v847 = vpop.f32.mrf.mxu0
      %v848 = vadd.f32 0.0, %v847
      %v849 = vpop.f32.mrf.mxu0
      %v850 = vpop.f32.mrf.mxu0
      %v851 = vpop.f32.mrf.mxu0
      %852 = vdwg.mxu0
      %v853 = vadd.f32 %v689, %v848
      %854 = vrot.lane.b32.xlu0 %v366, 104
      %v855 = vpop.permute.xlu0 %854
      %856 = vrot.lane.b32.xlu0 %v367, 72
      %v857 = vpop.permute.xlu0 %856
      %v859 = vsel %vm371, %v855, 0
      %v862 = vsel %vm371, %v857, 0
      %864 = vmatprep.subr.bf16.mxu0 0
      %865 = vmatpush1.bf16.xpose.msra.mxu0 0
      %866 = vmatprep.subr.bf16.mxu0 0
      %867 = vmatpush1.bf16.xpose.msra.mxu0 0
      %868 = vmatprep.subr.bf16.mxu0 0
      %869 = vmatpush1.bf16.xpose.msra.mxu0 0
      %870 = vmatprep.subr.bf16.mxu0 0
      %871 = vmatpush1.bf16.xpose.msra.mxu0 0
      %872 = vmatprep.subr.bf16.mxu0 0
      %873 = vmatpush1.bf16.xpose.msra.mxu0 0
      %874 = vmatprep.subr.bf16.mxu0 0
      %875 = vmatpush1.bf16.xpose.msra.mxu0 0
      %876 = vmatprep.subr.bf16.mxu0 0
      %877 = vmatpush1.bf16.xpose.msra.mxu0 0
      %878 = vmatprep.subr.bf16.mxu0 0
      %879 = vmatpush1.bf16.xpose.msra.mxu0 %v862
      %880 = vmatprep.subr.bf16.mxu0 0
      %881 = vmatpush2.bf16.xpose.msra.mxu0 0
      %882 = vmatprep.subr.bf16.mxu0 0
      %883 = vmatpush2.bf16.xpose.msra.mxu0 0
      %884 = vmatprep.subr.bf16.mxu0 0
      %885 = vmatpush2.bf16.xpose.msra.mxu0 0
      %886 = vmatprep.subr.bf16.mxu0 0
      %887 = vmatpush2.bf16.xpose.msra.mxu0 0
      %888 = vmatprep.subr.bf16.mxu0 0
      %889 = vmatpush2.bf16.xpose.msra.mxu0 0
      %890 = vmatprep.subr.bf16.mxu0 0
      %891 = vmatpush2.bf16.xpose.msra.mxu0 0
      %892 = vmatprep.subr.bf16.mxu0 0
      %893 = vmatpush2.bf16.xpose.msra.mxu0 0
      %894 = vmatprep.subr.bf16.mxu0 0
      %895 = vmatpush2.bf16.xpose.msra.mxu0 0
      %896 = vmatprep.mubr.bf16.mxu0 0
      %897 = vmatmul.mubr.bf16.gmra.mxu0 %v859
      %v898 = vpop.f32.mrf.mxu0
      %v899 = vadd.f32 0.0, %v898
      %v900 = vpop.f32.mrf.mxu0
      %v901 = vpop.f32.mrf.mxu0
      %v902 = vpop.f32.mrf.mxu0
      %903 = vdwg.mxu0
      %v904 = vsel %vm418, %v899, -inf
      %905 = vmax.xlane.f32.xlu0 %v904
      %v906 = vpop.xlane.xlu0 %905
      %v907 = vsub.f32 %v899, %v906
      %v908 = vmul.f32 %v907, 1.442695
      %v909 = vpow.pop %v908
      %v910 = vsel %vm418, %v909, 0.0
      %911 = vadd.xlane.f32.xlu0 %v910
      %v912 = vpop.xlane.xlu0 %911
      %v913 = vrcp.pop %v912
      %v914 = vpack.c.bf16 %v909, %v909
      %915 = vrot.lane.b32.xlu0 %v367, 40
      %v916 = vpop.permute.xlu0 %915
      %v918 = vsel %vm432, %v914, 0
      %v921 = vand.u32 %v916, %v439
      %923 = vmatprep.subr.bf16.mxu0 0
      %924 = vmatpush1.bf16.msra.mxu0 0
      %925 = vmatprep.subr.bf16.mxu0 0
      %926 = vmatpush1.bf16.msra.mxu0 0
      %927 = vmatprep.subr.bf16.mxu0 0
      %928 = vmatpush1.bf16.msra.mxu0 0
      %929 = vmatprep.subr.bf16.mxu0 0
      %930 = vmatpush1.bf16.msra.mxu0 0
      %931 = vmatprep.subr.bf16.mxu0 0
      %932 = vmatpush1.bf16.msra.mxu0 0
      %933 = vmatprep.subr.bf16.mxu0 0
      %934 = vmatpush1.bf16.msra.mxu0 0
      %935 = vmatprep.subr.bf16.mxu0 0
      %936 = vmatpush1.bf16.msra.mxu0 0
      %937 = vmatprep.subr.bf16.mxu0 0
      %938 = vmatpush1.bf16.msra.mxu0 %v921
      %939 = vmatprep.subr.bf16.mxu0 0
      %940 = vmatpush2.bf16.msra.mxu0 0
      %941 = vmatprep.subr.bf16.mxu0 0
      %942 = vmatpush2.bf16.msra.mxu0 0
      %943 = vmatprep.subr.bf16.mxu0 0
      %944 = vmatpush2.bf16.msra.mxu0 0
      %945 = vmatprep.subr.bf16.mxu0 0
      %946 = vmatpush2.bf16.msra.mxu0 0
      %947 = vmatprep.subr.bf16.mxu0 0
      %948 = vmatpush2.bf16.msra.mxu0 0
      %949 = vmatprep.subr.bf16.mxu0 0
      %950 = vmatpush2.bf16.msra.mxu0 0
      %951 = vmatprep.subr.bf16.mxu0 0
      %952 = vmatpush2.bf16.msra.mxu0 0
      %953 = vmatprep.subr.bf16.mxu0 0
      %954 = vmatpush2.bf16.msra.mxu0 0
      %955 = vmatprep.mubr.bf16.mxu0 0
      %956 = vmatmul.mubr.bf16.gmra.mxu0 %v918
      %v957 = vpop.f32.mrf.mxu0
      %v958 = vadd.f32 0.0, %v957
      %v959 = vpop.f32.mrf.mxu0
      %v960 = vpop.f32.mrf.mxu0
      %v961 = vpop.f32.mrf.mxu0
      %962 = vdwg.mxu0
      %v963 = vmul.f32 %v958, %v913
      %v964 = vld [vmem:[%s5 + $0x18] sm:$0xff]
      %v965 = vpack.c.bf16 %v963, %v963
      %v966 = vpack.c.bf16 %v964, %v964
      %v968 = vsel %vm371, %v965, 0
      %v971 = vsel %vm604, %v966, 0
      %973 = vmatprep.subr.bf16.mxu0 0
      %974 = vmatpush1.bf16.msra.mxu0 0
      %975 = vmatprep.subr.bf16.mxu0 0
      %976 = vmatpush1.bf16.msra.mxu0 0
      %977 = vmatprep.subr.bf16.mxu0 0
      %978 = vmatpush1.bf16.msra.mxu0 0
      %979 = vmatprep.subr.bf16.mxu0 0
      %980 = vmatpush1.bf16.msra.mxu0 0
      %981 = vmatprep.subr.bf16.mxu0 0
      %982 = vmatpush1.bf16.msra.mxu0 0
      %983 = vmatprep.subr.bf16.mxu0 0
      %984 = vmatpush1.bf16.msra.mxu0 0
      %985 = vmatprep.subr.bf16.mxu0 0
      %986 = vmatpush1.bf16.msra.mxu0 0
      %987 = vmatprep.subr.bf16.mxu0 0
      %988 = vmatpush1.bf16.msra.mxu0 %v971
      %989 = vmatprep.subr.bf16.mxu0 0
      %990 = vmatpush2.bf16.msra.mxu0 0
      %991 = vmatprep.subr.bf16.mxu0 0
      %992 = vmatpush2.bf16.msra.mxu0 0
      %993 = vmatprep.subr.bf16.mxu0 0
      %994 = vmatpush2.bf16.msra.mxu0 0
      %995 = vmatprep.subr.bf16.mxu0 0
      %996 = vmatpush2.bf16.msra.mxu0 0
      %997 = vmatprep.subr.bf16.mxu0 0
      %998 = vmatpush2.bf16.msra.mxu0 0
      %999 = vmatprep.subr.bf16.mxu0 0
      %1000 = vmatpush2.bf16.msra.mxu0 0
      %1001 = vmatprep.subr.bf16.mxu0 0
      %1002 = vmatpush2.bf16.msra.mxu0 0
      %1003 = vmatprep.subr.bf16.mxu0 0
      %1004 = vmatpush2.bf16.msra.mxu0 0
      %1005 = vmatprep.mubr.bf16.mxu0 0
      %1006 = vmatmul.mubr.bf16.gmra.mxu0 %v968
      %v1007 = vpop.f32.mrf.mxu0
      %v1008 = vadd.f32 0.0, %v1007
      %v1009 = vpop.f32.mrf.mxu0
      %v1010 = vpop.f32.mrf.mxu0
      %v1011 = vpop.f32.mrf.mxu0
      %1012 = vdwg.mxu0
      %v1013 = vadd.f32 %v853, %v1008
      %v1014 = vadd.f32 %v275, %v1013
      %v1015 = vld [vmem:[%s6] sm:$0x1]
      %v1017 = vlaneseq
      %v1018 = vshrl.u32 %v1017, 7
      %v1019 = vsub.s32 0, %v1018
      %v1020 = vrot.slane %v1015, %v1019
      %v1022 = vadd.f32 %v1014, %v1020
      %1023 = vst.msk [vmem:[%s273] sm:$0x1f] %vm278, %v1022
      %p1024 = scmp.lt.s32.totalorder %s18, 1
      %s1025 = scalar_select %p1024, %s18, 1
      %s1026 = smul.addr %s1025, 8
      %s1027 = scalar_lea.vmem %s7, %s1026
      // Predicated region
      $region49: #{_lambda_.13} parent=47 // pred_check
        %p1028 = pneg %p188
      $region50: #{_lambda_.13} parent=47 // pred_check_branch
        %1030 = sbr.rel (%p1028) target = $region52
      $region51: #{_lambda_.13} parent=47 // pred_region
        _
      $region52: #{_lambda_.13} parent=47 // pred_fallthru
        _
    $region48: #{_lambda_.13} parent=5 // pred_fallthru
      _
    %p1031 = scmp.le.s32.totalorder 2, %s13
    // Predicated region
    $region53: #{_lambda_.13} parent=5 // pred_check
      %p1032 = pneg %p1031
    $region54: #{_lambda_.13} parent=5 // pred_check_branch
      %1034 = sbr.rel (%p1032) target = $region56
    $region55: #{_lambda_.13} parent=5 // pred_region
      %s1035 = ssub.s32 %s13, 2
      // Predicated region
      $region57: #{_lambda_.13} parent=55 // pred_check
        %p1036 = pneg %p194
      $region58: #{_lambda_.13} parent=55 // pred_check_branch
        %1038 = sbr.rel (%p1036) target = $region60
      $region59: #{_lambda_.13} parent=55 // pred_region
        %p1039 = scmp.lt.s32.totalorder %s19, 1
        %s1040 = scalar_select %p1039, %s19, 1
        %s1041 = smul.addr %s1040, 8
        %s1042 = scalar_lea.vmem %s7, %s1041
      $region60: #{_lambda_.13} parent=55 // pred_fallthru
        _
    $region56: #{_lambda_.13} parent=5 // pred_fallthru
      _
  $region6: #{_lambda_.13} parent=0 // loop_footer
    %s17 = sadd.s32 1, %s13
  $region7: #{_lambda_.13} parent=0 // loop_footer_branch
    %12 = sbr.rel target = $region3
  $region8: #{_lambda_.13} parent=0 // loop_exit
    _

// kernel: _lambda_.19
$region0: #{_lambda_.19}
  #allocation0 [shape = 'u32[]', space=smem, size = 0x4, offset = 0x4, fixed_abs, tag = 'smem constant byte address 0x4 - core index']
  #allocation1 [shape = 'u32[144,128]{1,0:T(1,128)}', space=vmem, size = 0x12000, scoped, tag = 'internal scratch']
  %s0 = inlined_call_operand.vmem [shape: f32[24,32], index: 0, kind: input, shape index: {}]
  %s1 = inlined_call_operand.vmem [shape: f32[1,32], index: 1, kind: input, shape index: {}]
  %s2 = inlined_call_operand.vmem [shape: f32[1,32], index: 2, kind: input, shape index: {}]
  %s3 = inlined_call_operand.vmem [shape: f32[32,128], index: 3, kind: input, shape index: {}]
  %s4 = inlined_call_operand.vmem [shape: f32[1,128], index: 4, kind: input, shape index: {}]
  %s5 = inlined_call_operand.vmem [shape: f32[128,32], index: 5, kind: input, shape index: {}]
  %s6 = inlined_call_operand.vmem [shape: f32[1,32], index: 6, kind: input, shape index: {}]
  %s7 = inlined_call_operand.vmem [shape: f32[24,32], index: 7, kind: output, shape index: {}]
  %s8 = sld [smem:[#allocation0]]
  $region38: #{_lambda_.19} parent=0
    _
  %s10 = ssub.s32 1, %s8
  %s11 = scalar_select 0, %s10, %s8
  // Predicated region
  $region2: #{_lambda_.19} parent=0 // pred_check
    _
  $region3: #{_lambda_.19} parent=0 // pred_check_branch
    %13 = sbr.rel (0) target = $region5
  $region4: #{_lambda_.19} parent=0 // pred_region
    _
  $region5: #{_lambda_.19} parent=0 // pred_fallthru
    _
  // Predicated region
  $region6: #{_lambda_.19} parent=0 // pred_check
    _
  $region7: #{_lambda_.19} parent=0 // pred_check_branch
    %15 = sbr.rel (0) target = $region9
  $region8: #{_lambda_.19} parent=0 // pred_region
    _
  $region9: #{_lambda_.19} parent=0 // pred_fallthru
    _
  // Predicated region
  $region10: #{_lambda_.19} parent=0 // pred_check
    _
  $region11: #{_lambda_.19} parent=0 // pred_check_branch
    %17 = sbr.rel (0) target = $region13
  $region12: #{_lambda_.19} parent=0 // pred_region
    _
  $region13: #{_lambda_.19} parent=0 // pred_fallthru
    _
  // Predicated region
  $region14: #{_lambda_.19} parent=0 // pred_check
    _
  $region15: #{_lambda_.19} parent=0 // pred_check_branch
    %19 = sbr.rel (0) target = $region17
  $region16: #{_lambda_.19} parent=0 // pred_region
    _
  $region17: #{_lambda_.19} parent=0 // pred_fallthru
    _
  // Predicated region
  $region18: #{_lambda_.19} parent=0 // pred_check
    _
  $region19: #{_lambda_.19} parent=0 // pred_check_branch
    %21 = sbr.rel (0) target = $region21
  $region20: #{_lambda_.19} parent=0 // pred_region
    _
  $region21: #{_lambda_.19} parent=0 // pred_fallthru
    _
  // Predicated region
  $region22: #{_lambda_.19} parent=0 // pred_check
    _
  $region23: #{_lambda_.19} parent=0 // pred_check_branch
    %23 = sbr.rel (0) target = $region25
  $region24: #{_lambda_.19} parent=0 // pred_region
    _
  $region25: #{_lambda_.19} parent=0 // pred_fallthru
    _
  // Predicated region
  $region26: #{_lambda_.19} parent=0 // pred_check
    _
  $region27: #{_lambda_.19} parent=0 // pred_check_branch
    %25 = sbr.rel (0) target = $region29
  $region28: #{_lambda_.19} parent=0 // pred_region
    _
  $region29: #{_lambda_.19} parent=0 // pred_fallthru
    _
  %v27 = vld [vmem:[%s0] sm:$0xff]
  %v28 = vld [vmem:[%s0 + $0x8] sm:$0xff]
  %v29 = vld [vmem:[%s0 + $0x10] sm:$0xff]
  %v30 = vld [vmem:[%s1] sm:$0x1]
  %v31 = vld [vmem:[%s2] sm:$0x1]
  %vm32 = vcmask 261120
  %v33 = vsel %vm32, %v27, 0.0
  %34 = vadd.xlane.f32.xlu0 %v33
  %v35 = vpop.xlane.xlu0 %34
  %v36 = vsel %vm32, %v28, 0.0
  %37 = vadd.xlane.f32.xlu0 %v36
  %v38 = vpop.xlane.xlu0 %37
  %v39 = vsel %vm32, %v29, 0.0
  %40 = vadd.xlane.f32.xlu0 %v39
  %v41 = vpop.xlane.xlu0 %40
  %v42 = vrcp.pop 32.0
  %v43 = vmul.f32 %v35, %v42
  %v44 = vmul.f32 %v38, %v42
  %v45 = vmul.f32 %v41, %v42
  %v46 = vsub.f32 %v27, %v43
  %v47 = vsub.f32 %v28, %v44
  %v48 = vsub.f32 %v29, %v45
  %v49 = vmul.f32 %v46, %v46
  %v50 = vmul.f32 %v47, %v47
  %v51 = vmul.f32 %v48, %v48
  %v52 = vsel %vm32, %v49, 0.0
  %53 = vadd.xlane.f32.xlu0 %v52
  %v54 = vpop.xlane.xlu0 %53
  %v55 = vsel %vm32, %v50, 0.0
  %56 = vadd.xlane.f32.xlu0 %v55
  %v57 = vpop.xlane.xlu0 %56
  %v58 = vsel %vm32, %v51, 0.0
  %59 = vadd.xlane.f32.xlu0 %v58
  %v60 = vpop.xlane.xlu0 %59
  %v61 = vmul.f32 %v54, %v42
  %v62 = vmul.f32 %v57, %v42
  %v63 = vmul.f32 %v60, %v42
  %v64 = vadd.f32 %v61, 1e-05
  %v65 = vadd.f32 %v62, 1e-05
  %v66 = vadd.f32 %v63, 1e-05
  %v67 = vrsqrt.pop %v64
  %v68 = vrsqrt.pop %v65
  %v69 = vrsqrt.pop %v66
  %v70 = vmul.f32 %v46, %v67
  %v71 = vmul.f32 %v47, %v68
  %v72 = vmul.f32 %v48, %v69
  %v74 = vlaneseq
  %v75 = vshrl.u32 %v74, 7
  %v76 = vsub.s32 0, %v75
  %v77 = vrot.slane %v30, %v76
  %v79 = vmul.f32 %v70, %v77
  %v80 = vmul.f32 %v71, %v77
  %v81 = vmul.f32 %v72, %v77
  %v83 = vlaneseq
  %v84 = vshrl.u32 %v83, 7
  %v85 = vsub.s32 0, %v84
  %v86 = vrot.slane %v31, %v85
  %v88 = vadd.f32 %v79, %v86
  %v89 = vadd.f32 %v80, %v86
  %v90 = vadd.f32 %v81, %v86
  %v91 = vpack.c.bf16 %v89, %v88
  %v92 = vpack.c.bf16 %v90, %v90
  %v93 = vld [vmem:[%s3] sm:$0xff]
  %v94 = vld [vmem:[%s3 + $0x8] sm:$0xff]
  %v95 = vld [vmem:[%s3 + $0x10] sm:$0xff]
  %v96 = vld [vmem:[%s3 + $0x18] sm:$0xff]
  %v97 = vpack.c.bf16 %v94, %v93
  %v98 = vpack.c.bf16 %v96, %v95
  %v99 = vld [vmem:[%s4] sm:$0x1]
  %v101 = vlaneseq
  %v102 = vshrl.u32 %v101, 7
  %v103 = vsub.s32 0, %v102
  %v104 = vrot.slane %v99, %v103
  %v107 = vsel %vm32, %v91, 0
  %v110 = vsel %vm32, %v92, 0
  %112 = vmatprep.subr.bf16.mxu0 0
  %113 = vmatpush1.bf16.msra.mxu0 0
  %114 = vmatprep.subr.bf16.mxu0 0
  %115 = vmatpush1.bf16.msra.mxu0 0
  %116 = vmatprep.subr.bf16.mxu0 0
  %117 = vmatpush1.bf16.msra.mxu0 0
  %118 = vmatprep.subr.bf16.mxu0 0
  %119 = vmatpush1.bf16.msra.mxu0 0
  %120 = vmatprep.subr.bf16.mxu0 0
  %121 = vmatpush1.bf16.msra.mxu0 0
  %122 = vmatprep.subr.bf16.mxu0 0
  %123 = vmatpush1.bf16.msra.mxu0 0
  %124 = vmatprep.subr.bf16.mxu0 0
  %125 = vmatpush1.bf16.msra.mxu0 %v98
  %126 = vmatprep.subr.bf16.mxu0 0
  %127 = vmatpush1.bf16.msra.mxu0 %v97
  %128 = vmatprep.subr.bf16.mxu0 0
  %129 = vmatpush2.bf16.msra.mxu0 0
  %130 = vmatprep.subr.bf16.mxu0 0
  %131 = vmatpush2.bf16.msra.mxu0 0
  %132 = vmatprep.subr.bf16.mxu0 0
  %133 = vmatpush2.bf16.msra.mxu0 0
  %134 = vmatprep.subr.bf16.mxu0 0
  %135 = vmatpush2.bf16.msra.mxu0 0
  %136 = vmatprep.subr.bf16.mxu0 0
  %137 = vmatpush2.bf16.msra.mxu0 0
  %138 = vmatprep.subr.bf16.mxu0 0
  %139 = vmatpush2.bf16.msra.mxu0 0
  %140 = vmatprep.subr.bf16.mxu0 0
  %141 = vmatpush2.bf16.msra.mxu0 0
  %142 = vmatprep.subr.bf16.mxu0 0
  %143 = vmatpush2.bf16.msra.mxu0 0
  %144 = vmatprep.mubr.bf16.mxu0 0
  %145 = vmatmul.mubr.bf16.gmra.mxu0 %v107
  %v146 = vpop.f32.mrf.mxu0
  %v147 = vadd.f32 %v104, %v146
  %v148 = vpop.f32.mrf.mxu0
  %v149 = vpop.f32.mrf.mxu0
  %v150 = vadd.f32 %v104, %v149
  %v151 = vpop.f32.mrf.mxu0
  %152 = vmatprep.mubr.bf16.mxu0 0
  %153 = vmatmul.mubr.bf16.gmra.mxu0 %v110
  %v154 = vpop.f32.mrf.mxu0
  %v155 = vadd.f32 %v104, %v154
  %v156 = vpop.f32.mrf.mxu0
  %v157 = vpop.f32.mrf.mxu0
  %v158 = vpop.f32.mrf.mxu0
  %159 = vdwg.mxu0
  %v160 = vmul.f32 %v147, 1.702
  %v161 = vmul.f32 %v150, 1.702
  %v162 = vmul.f32 %v155, 1.702
  %v163 = vxor.u32 %v160, 2147483648
  %v164 = vxor.u32 %v161, 2147483648
  %v165 = vxor.u32 %v162, 2147483648
  %v166 = vmul.f32 %v163, 1.442695
  %v167 = vpow.pop %v166
  %v168 = vmul.f32 %v164, 1.442695
  %v169 = vpow.pop %v168
  %v170 = vmul.f32 %v165, 1.442695
  %v171 = vpow.pop %v170
  %v172 = vadd.f32 %v167, 1.0
  %v173 = vadd.f32 %v169, 1.0
  %v174 = vadd.f32 %v171, 1.0
  %v175 = vrcp.pop %v172
  %v176 = vmul.f32 1.0, %v175
  %v177 = vrcp.pop %v173
  %v178 = vmul.f32 1.0, %v177
  %v179 = vrcp.pop %v174
  %v180 = vmul.f32 1.0, %v179
  %v181 = vmul.f32 %v147, %v176
  %v182 = vmul.f32 %v150, %v178
  %v183 = vmul.f32 %v155, %v180
  %v184 = vpack.c.bf16 %v182, %v181
  %v185 = vpack.c.bf16 %v183, %v183
  %v186 = vld [vmem:[%s5] sm:$0xff]
  %v187 = vld [vmem:[%s5 + $0x8] sm:$0xff]
  %v188 = vld [vmem:[%s5 + $0x10] sm:$0xff]
  %v189 = vld [vmem:[%s5 + $0x18] sm:$0xff]
  %v190 = vld [vmem:[%s5 + $0x20] sm:$0xff]
  %v191 = vld [vmem:[%s5 + $0x28] sm:$0xff]
  %v192 = vld [vmem:[%s5 + $0x30] sm:$0xff]
  %v193 = vld [vmem:[%s5 + $0x38] sm:$0xff]
  %v194 = vld [vmem:[%s5 + $0x40] sm:$0xff]
  %v195 = vld [vmem:[%s5 + $0x48] sm:$0xff]
  %v196 = vld [vmem:[%s5 + $0x50] sm:$0xff]
  %v197 = vld [vmem:[%s5 + $0x58] sm:$0xff]
  %v198 = vld [vmem:[%s5 + $0x60] sm:$0xff]
  %v199 = vld [vmem:[%s5 + $0x68] sm:$0xff]
  %v200 = vld [vmem:[%s5 + $0x70] sm:$0xff]
  %v201 = vld [vmem:[%s5 + $0x78] sm:$0xff]
  %v202 = vpack.c.bf16 %v187, %v186
  %v203 = vpack.c.bf16 %v189, %v188
  %v204 = vpack.c.bf16 %v191, %v190
  %v205 = vpack.c.bf16 %v193, %v192
  %v206 = vpack.c.bf16 %v195, %v194
  %v207 = vpack.c.bf16 %v197, %v196
  %v208 = vpack.c.bf16 %v199, %v198
  %v209 = vpack.c.bf16 %v201, %v200
  %v210 = vld [vmem:[%s6] sm:$0x1]
  %v212 = vlaneseq
  %v213 = vshrl.u32 %v212, 7
  %v214 = vsub.s32 0, %v213
  %v215 = vrot.slane %v210, %v214
  %217 = vmatprep.subr.bf16.mxu0 0
  %218 = vmatpush1.bf16.msra.mxu0 %v209
  %219 = vmatprep.subr.bf16.mxu0 0
  %220 = vmatpush1.bf16.msra.mxu0 %v208
  %221 = vmatprep.subr.bf16.mxu0 0
  %222 = vmatpush1.bf16.msra.mxu0 %v207
  %223 = vmatprep.subr.bf16.mxu0 0
  %224 = vmatpush1.bf16.msra.mxu0 %v206
  %225 = vmatprep.subr.bf16.mxu0 0
  %226 = vmatpush1.bf16.msra.mxu0 %v205
  %227 = vmatprep.subr.bf16.mxu0 0
  %228 = vmatpush1.bf16.msra.mxu0 %v204
  %229 = vmatprep.subr.bf16.mxu0 0
  %230 = vmatpush1.bf16.msra.mxu0 %v203
  %231 = vmatprep.subr.bf16.mxu0 0
  %232 = vmatpush1.bf16.msra.mxu0 %v202
  %233 = vmatprep.subr.bf16.mxu0 0
  %234 = vmatpush2.bf16.msra.mxu0 0
  %235 = vmatprep.subr.bf16.mxu0 0
  %236 = vmatpush2.bf16.msra.mxu0 0
  %237 = vmatprep.subr.bf16.mxu0 0
  %238 = vmatpush2.bf16.msra.mxu0 0
  %239 = vmatprep.subr.bf16.mxu0 0
  %240 = vmatpush2.bf16.msra.mxu0 0
  %241 = vmatprep.subr.bf16.mxu0 0
  %242 = vmatpush2.bf16.msra.mxu0 0
  %243 = vmatprep.subr.bf16.mxu0 0
  %244 = vmatpush2.bf16.msra.mxu0 0
  %245 = vmatprep.subr.bf16.mxu0 0
  %246 = vmatpush2.bf16.msra.mxu0 0
  %247 = vmatprep.subr.bf16.mxu0 0
  %248 = vmatpush2.bf16.msra.mxu0 0
  %249 = vmatprep.mubr.bf16.mxu0 0
  %250 = vmatmul.mubr.bf16.gmra.mxu0 %v184
  %v251 = vpop.f32.mrf.mxu0
  %v252 = vadd.f32 %v215, %v251
  %v253 = vpop.f32.mrf.mxu0
  %v254 = vpop.f32.mrf.mxu0
  %v255 = vadd.f32 %v215, %v254
  %v256 = vpop.f32.mrf.mxu0
  %257 = vmatprep.mubr.bf16.mxu0 0
  %258 = vmatmul.mubr.bf16.gmra.mxu0 %v185
  %v259 = vpop.f32.mrf.mxu0
  %v260 = vadd.f32 %v215, %v259
  %v261 = vpop.f32.mrf.mxu0
  %v262 = vpop.f32.mrf.mxu0
  %v263 = vpop.f32.mrf.mxu0
  %264 = vdwg.mxu0
  %v265 = vadd.f32 %v27, %v252
  %v266 = vadd.f32 %v28, %v255
  %v267 = vadd.f32 %v29, %v260
  %268 = vst.msk [vmem:[%s7] sm:$0xff] %vm32, %v265
  %269 = vst.msk [vmem:[%s7 + $0x8] sm:$0xff] %vm32, %v266
  %270 = vst.msk [vmem:[%s7 + $0x10] sm:$0xff] %vm32, %v267
  // Predicated region
  $region30: #{_lambda_.19} parent=0 // pred_check
    _
  $region31: #{_lambda_.19} parent=0 // pred_check_branch
    %272 = sbr.rel (0) target = $region33
  $region32: #{_lambda_.19} parent=0 // pred_region
    _
  $region33: #{_lambda_.19} parent=0 // pred_fallthru
    _
  // Predicated region
  $region34: #{_lambda_.19} parent=0 // pred_check
    _
  $region35: #{_lambda_.19} parent=0 // pred_check_branch
    %274 = sbr.rel (0) target = $region37
  $region36: #{_lambda_.19} parent=0 // pred_region
    _
  $region37: #{_lambda_.19} parent=0 // pred_fallthru
    _

// kernel: _lambda_.18
$region0: #{_lambda_.18}
  #allocation0 [shape = 'u32[]', space=smem, size = 0x4, offset = 0x4, fixed_abs, tag = 'smem constant byte address 0x4 - core index']
  #allocation1 [shape = 'u32[144,128]{1,0:T(1,128)}', space=vmem, size = 0x12000, scoped, tag = 'internal scratch']
  %s0 = inlined_call_operand.vmem [shape: f32[3,8,32], index: 0, kind: input, shape index: {}]
  %s1 = inlined_call_operand.vmem [shape: f32[8,32], index: 1, kind: input, shape index: {}]
  %s2 = inlined_call_operand.vmem [shape: f32[1,32], index: 2, kind: input, shape index: {}]
  %s3 = inlined_call_operand.vmem [shape: f32[1,32], index: 3, kind: input, shape index: {}]
  %s4 = inlined_call_operand.vmem [shape: f32[32,96], index: 4, kind: input, shape index: {}]
  %s5 = inlined_call_operand.vmem [shape: f32[1,96], index: 5, kind: input, shape index: {}]
  %s6 = inlined_call_operand.vmem [shape: f32[32,32], index: 6, kind: input, shape index: {}]
  %s7 = inlined_call_operand.vmem [shape: f32[1,32], index: 7, kind: input, shape index: {}]
  %s8 = inlined_call_operand.vmem [shape: f32[3,8,32], index: 8, kind: output, shape index: {}]
  %s9 = sld [smem:[#allocation0]]
  $region65: #{_lambda_.18} parent=0
    _
  %s11 = ssub.s32 1, %s9
  %s12 = scalar_select 0, %s11, %s9
  loop: start=0, step=1, limit=5
  $region2: #{_lambda_.18} parent=0 // loop_pre_header
    _
  $region3: #{_lambda_.18} parent=0 // loop_header
    %s14 = sphi 0, %s18
    %p15 = scmp.ge.s32.totalorder %s14, 5
    %s24 = sphi 0, %s26
    %s27 = sphi 0, %s24
    %s28 = sphi 0, %s27
    %s44 = sphi 0, %s28
    %s48 = sphi 0, %s48
    %s50 = sphi 0, %s48
    %s51 = sphi 0, %s50
    %s65 = sphi 0, %s51
    %s69 = sphi 0, %s69
    %s71 = sphi 0, %s69
    %s72 = sphi 0, %s71
    %s86 = sphi 0, %s72
    %s90 = sphi 0, %s90
    %s92 = sphi 0, %s90
    %s93 = sphi 0, %s92
    %s107 = sphi 0, %s93
    %s111 = sphi 0, %s111
    %s113 = sphi 0, %s111
    %s114 = sphi 0, %s113
    %s128 = sphi 0, %s114
    %s132 = sphi 0, %s132
    %s134 = sphi 0, %s132
    %s135 = sphi 0, %s134
    %s149 = sphi 0, %s135
    %s153 = sphi 0, %s153
    %s155 = sphi 0, %s153
    %s156 = sphi 0, %s155
    %s170 = sphi 0, %s156
    %s174 = sphi 0, %s174
    %s176 = sphi 0, %s174
    %s177 = sphi 0, %s176
    %s191 = sphi 0, %s177
    %s197 = sphi 0, %s199
    %s200 = sphi 0, %s197
    %s201 = sphi 0, %s200
    %s217 = sphi 0, %s201
  $region4: #{_lambda_.18} parent=0 // loop_header_branch
    %17 = sbr.rel (%p15) target = $region8
  $region5: #{_lambda_.18} parent=0 // loop_body
    %s19 = ssub.s32 %s14, 1
    %s20 = ssub.s32 %s14, 2
    %s21 = sadd.s32 %s14, 1
    %s22 = ssub.s32 %s14, %s21
    %p23 = scmp.eq.s32.totalorder %s22, 0
    %s25 = sadd.s32 %s24, 1
    %s26 = scalar_select %p23, %s24, %s25
    %p29 = pneg %p23
    %p30 = scmp.eq.s32.totalorder %s14, 2
    %p31 = por %p29, %p30
    %p32 = scmp.ne.s32.totalorder %s24, %s27
    %p33 = scmp.eq.s32.totalorder %s14, 0
    %p34 = por %p32, %p33
    %p35 = scmp.ne.s32.totalorder %s24, %s27
    %p36 = scmp.eq.s32.totalorder %s19, 2
    %p37 = por %p35, %p36
    %p38 = scmp.ne.s32.totalorder %s27, %s28
    %p39 = scmp.eq.s32.totalorder %s19, 0
    %p40 = por %p38, %p39
    %p41 = scmp.ne.s32.totalorder %s27, %s28
    %p42 = scmp.eq.s32.totalorder %s20, 2
    %p43 = por %p41, %p42
    %p45 = scmp.ne.s32.totalorder %s28, %s44
    %p46 = scmp.eq.s32.totalorder %s20, 0
    %p47 = por %p45, %p46
    %s49 = sadd.s32 %s48, 1
    %p52 = scmp.eq.s32.totalorder %s14, 2
    %p53 = scmp.ne.s32.totalorder %s48, %s50
    %p54 = scmp.eq.s32.totalorder %s14, 0
    %p55 = por %p53, %p54
    %p56 = scmp.ne.s32.totalorder %s48, %s50
    %p57 = scmp.eq.s32.totalorder %s19, 2
    %p58 = por %p56, %p57
    %p59 = scmp.ne.s32.totalorder %s50, %s51
    %p60 = scmp.eq.s32.totalorder %s19, 0
    %p61 = por %p59, %p60
    %p62 = scmp.ne.s32.totalorder %s50, %s51
    %p63 = scmp.eq.s32.totalorder %s20, 2
    %p64 = por %p62, %p63
    %p66 = scmp.ne.s32.totalorder %s51, %s65
    %p67 = scmp.eq.s32.totalorder %s20, 0
    %p68 = por %p66, %p67
    %s70 = sadd.s32 %s69, 1
    %p73 = scmp.eq.s32.totalorder %s14, 2
    %p74 = scmp.ne.s32.totalorder %s69, %s71
    %p75 = scmp.eq.s32.totalorder %s14, 0
    %p76 = por %p74, %p75
    %p77 = scmp.ne.s32.totalorder %s69, %s71
    %p78 = scmp.eq.s32.totalorder %s19, 2
    %p79 = por %p77, %p78
    %p80 = scmp.ne.s32.totalorder %s71, %s72
    %p81 = scmp.eq.s32.totalorder %s19, 0
    %p82 = por %p80, %p81
    %p83 = scmp.ne.s32.totalorder %s71, %s72
    %p84 = scmp.eq.s32.totalorder %s20, 2
    %p85 = por %p83, %p84
    %p87 = scmp.ne.s32.totalorder %s72, %s86
    %p88 = scmp.eq.s32.totalorder %s20, 0
    %p89 = por %p87, %p88
    %s91 = sadd.s32 %s90, 1
    %p94 = scmp.eq.s32.totalorder %s14, 2
    %p95 = scmp.ne.s32.totalorder %s90, %s92
    %p96 = scmp.eq.s32.totalorder %s14, 0
    %p97 = por %p95, %p96
    %p98 = scmp.ne.s32.totalorder %s90, %s92
    %p99 = scmp.eq.s32.totalorder %s19, 2
    %p100 = por %p98, %p99
    %p101 = scmp.ne.s32.totalorder %s92, %s93
    %p102 = scmp.eq.s32.totalorder %s19, 0
    %p103 = por %p101, %p102
    %p104 = scmp.ne.s32.totalorder %s92, %s93
    %p105 = scmp.eq.s32.totalorder %s20, 2
    %p106 = por %p104, %p105
    %p108 = scmp.ne.s32.totalorder %s93, %s107
    %p109 = scmp.eq.s32.totalorder %s20, 0
    %p110 = por %p108, %p109
    %s112 = sadd.s32 %s111, 1
    %p115 = scmp.eq.s32.totalorder %s14, 2
    %p116 = scmp.ne.s32.totalorder %s111, %s113
    %p117 = scmp.eq.s32.totalorder %s14, 0
    %p118 = por %p116, %p117
    %p119 = scmp.ne.s32.totalorder %s111, %s113
    %p120 = scmp.eq.s32.totalorder %s19, 2
    %p121 = por %p119, %p120
    %p122 = scmp.ne.s32.totalorder %s113, %s114
    %p123 = scmp.eq.s32.totalorder %s19, 0
    %p124 = por %p122, %p123
    %p125 = scmp.ne.s32.totalorder %s113, %s114
    %p126 = scmp.eq.s32.totalorder %s20, 2
    %p127 = por %p125, %p126
    %p129 = scmp.ne.s32.totalorder %s114, %s128
    %p130 = scmp.eq.s32.totalorder %s20, 0
    %p131 = por %p129, %p130
    %s133 = sadd.s32 %s132, 1
    %p136 = scmp.eq.s32.totalorder %s14, 2
    %p137 = scmp.ne.s32.totalorder %s132, %s134
    %p138 = scmp.eq.s32.totalorder %s14, 0
    %p139 = por %p137, %p138
    %p140 = scmp.ne.s32.totalorder %s132, %s134
    %p141 = scmp.eq.s32.totalorder %s19, 2
    %p142 = por %p140, %p141
    %p143 = scmp.ne.s32.totalorder %s134, %s135
    %p144 = scmp.eq.s32.totalorder %s19, 0
    %p145 = por %p143, %p144
    %p146 = scmp.ne.s32.totalorder %s134, %s135
    %p147 = scmp.eq.s32.totalorder %s20, 2
    %p148 = por %p146, %p147
    %p150 = scmp.ne.s32.totalorder %s135, %s149
    %p151 = scmp.eq.s32.totalorder %s20, 0
    %p152 = por %p150, %p151
    %s154 = sadd.s32 %s153, 1
    %p157 = scmp.eq.s32.totalorder %s14, 2
    %p158 = scmp.ne.s32.totalorder %s153, %s155
    %p159 = scmp.eq.s32.totalorder %s14, 0
    %p160 = por %p158, %p159
    %p161 = scmp.ne.s32.totalorder %s153, %s155
    %p162 = scmp.eq.s32.totalorder %s19, 2
    %p163 = por %p161, %p162
    %p164 = scmp.ne.s32.totalorder %s155, %s156
    %p165 = scmp.eq.s32.totalorder %s19, 0
    %p166 = por %p164, %p165
    %p167 = scmp.ne.s32.totalorder %s155, %s156
    %p168 = scmp.eq.s32.totalorder %s20, 2
    %p169 = por %p167, %p168
    %p171 = scmp.ne.s32.totalorder %s156, %s170
    %p172 = scmp.eq.s32.totalorder %s20, 0
    %p173 = por %p171, %p172
    %s175 = sadd.s32 %s174, 1
    %p178 = scmp.eq.s32.totalorder %s14, 2
    %p179 = scmp.ne.s32.totalorder %s174, %s176
    %p180 = scmp.eq.s32.totalorder %s14, 0
    %p181 = por %p179, %p180
    %p182 = scmp.ne.s32.totalorder %s174, %s176
    %p183 = scmp.eq.s32.totalorder %s19, 2
    %p184 = por %p182, %p183
    %p185 = scmp.ne.s32.totalorder %s176, %s177
    %p186 = scmp.eq.s32.totalorder %s19, 0
    %p187 = por %p185, %p186
    %p188 = scmp.ne.s32.totalorder %s176, %s177
    %p189 = scmp.eq.s32.totalorder %s20, 2
    %p190 = por %p188, %p189
    %p192 = scmp.ne.s32.totalorder %s177, %s191
    %p193 = scmp.eq.s32.totalorder %s20, 0
    %p194 = por %p192, %p193
    %s195 = ssub.s32 %s14, %s21
    %p196 = scmp.eq.s32.totalorder %s195, 0
    %s198 = sadd.s32 %s197, 1
    %s199 = scalar_select %p196, %s197, %s198
    %p202 = pneg %p196
    %p203 = scmp.eq.s32.totalorder %s14, 2
    %p204 = por %p202, %p203
    %p205 = scmp.ne.s32.totalorder %s197, %s200
    %p206 = scmp.eq.s32.totalorder %s14, 0
    %p207 = por %p205, %p206
    %p208 = scmp.ne.s32.totalorder %s197, %s200
    %p209 = scmp.eq.s32.totalorder %s19, 2
    %p210 = por %p208, %p209
    %p211 = scmp.ne.s32.totalorder %s200, %s201
    %p212 = scmp.eq.s32.totalorder %s19, 0
    %p213 = por %p211, %p212
    %p214 = scmp.ne.s32.totalorder %s200, %s201
    %p215 = scmp.eq.s32.totalorder %s20, 2
    %p216 = por %p214, %p215
    %p218 = scmp.ne.s32.totalorder %s201, %s217
    %p219 = scmp.eq.s32.totalorder %s20, 0
    %p220 = por %p218, %p219
    %p221 = scmp.le.s32.totalorder 1, %s14
    %p222 = scmp.lt.s32.totalorder %s14, 4
    %p223 = pnand %p221, %p222
    %p224 = pneg %p223
    // Predicated region
    $region9: #{_lambda_.18} parent=5 // pred_check
      _
    $region10: #{_lambda_.18} parent=5 // pred_check_branch
      %226 = sbr.rel (%p223) target = $region12
    $region11: #{_lambda_.18} parent=5 // pred_region
      %s227 = ssub.s32 %s14, 1
      // Predicated region
      $region13: #{_lambda_.18} parent=11 // pred_check
        %p228 = pneg %p61
      $region14: #{_lambda_.18} parent=11 // pred_check_branch
        %230 = sbr.rel (%p228) target = $region16
      $region15: #{_lambda_.18} parent=11 // pred_region
        _
      $region16: #{_lambda_.18} parent=11 // pred_fallthru
        _
      // Predicated region
      $region17: #{_lambda_.18} parent=11 // pred_check
        %p231 = pneg %p82
      $region18: #{_lambda_.18} parent=11 // pred_check_branch
        %233 = sbr.rel (%p231) target = $region20
      $region19: #{_lambda_.18} parent=11 // pred_region
        _
      $region20: #{_lambda_.18} parent=11 // pred_fallthru
        _
      // Predicated region
      $region21: #{_lambda_.18} parent=11 // pred_check
        %p234 = pneg %p103
      $region22: #{_lambda_.18} parent=11 // pred_check_branch
        %236 = sbr.rel (%p234) target = $region24
      $region23: #{_lambda_.18} parent=11 // pred_region
        _
      $region24: #{_lambda_.18} parent=11 // pred_fallthru
        _
      // Predicated region
      $region25: #{_lambda_.18} parent=11 // pred_check
        %p237 = pneg %p124
      $region26: #{_lambda_.18} parent=11 // pred_check_branch
        %239 = sbr.rel (%p237) target = $region28
      $region27: #{_lambda_.18} parent=11 // pred_region
        _
      $region28: #{_lambda_.18} parent=11 // pred_fallthru
        _
      // Predicated region
      $region29: #{_lambda_.18} parent=11 // pred_check
        %p240 = pneg %p145
      $region30: #{_lambda_.18} parent=11 // pred_check_branch
        %242 = sbr.rel (%p240) target = $region32
      $region31: #{_lambda_.18} parent=11 // pred_region
        _
      $region32: #{_lambda_.18} parent=11 // pred_fallthru
        _
      // Predicated region
      $region33: #{_lambda_.18} parent=11 // pred_check
        %p243 = pneg %p166
      $region34: #{_lambda_.18} parent=11 // pred_check_branch
        %245 = sbr.rel (%p243) target = $region36
      $region35: #{_lambda_.18} parent=11 // pred_region
        _
      $region36: #{_lambda_.18} parent=11 // pred_fallthru
        _
      // Predicated region
      $region37: #{_lambda_.18} parent=11 // pred_check
        %p246 = pneg %p187
      $region38: #{_lambda_.18} parent=11 // pred_check_branch
        %248 = sbr.rel (%p246) target = $region40
      $region39: #{_lambda_.18} parent=11 // pred_region
        _
      $region40: #{_lambda_.18} parent=11 // pred_fallthru
        _
    $region12: #{_lambda_.18} parent=5 // pred_fallthru
      _
    %p249 = scmp.lt.s32.totalorder %s14, 3
    // Predicated region
    $region41: #{_lambda_.18} parent=5 // pred_check
      %p250 = pneg %p249
    $region42: #{_lambda_.18} parent=5 // pred_check_branch
      %252 = sbr.rel (%p250) target = $region44
    $region43: #{_lambda_.18} parent=5 // pred_region
      // Predicated region
      $region45: #{_lambda_.18} parent=43 // pred_check
        %p253 = pneg %p34
      $region46: #{_lambda_.18} parent=43 // pred_check_branch
        %255 = sbr.rel (%p253) target = $region48
      $region47: #{_lambda_.18} parent=43 // pred_region
        %p256 = scmp.lt.s32.totalorder %s14, 2
        %s257 = scalar_select %p256, %s14, 2
        %s258 = smul.addr %s257, 8
        %s259 = scalar_lea.vmem %s0, %s258
      $region48: #{_lambda_.18} parent=43 // pred_fallthru
        _
    $region44: #{_lambda_.18} parent=5 // pred_fallthru
      _
    %p260 = scmp.le.s32.totalorder 1, %s14
    %p261 = scmp.lt.s32.totalorder %s14, 4
    %p262 = pnand %p260, %p261
    %p263 = pneg %p262
    // Predicated region
    $region49: #{_lambda_.18} parent=5 // pred_check
      _
    $region50: #{_lambda_.18} parent=5 // pred_check_branch
      %265 = sbr.rel (%p262) target = $region52
    $region51: #{_lambda_.18} parent=5 // pred_region
      %s266 = ssub.s32 %s14, 1
      %p267 = scmp.lt.s32.totalorder %s19, 2
      %s268 = scalar_select %p267, %s19, 2
      %s269 = smul.addr %s268, 8
      %s270 = scalar_lea.vmem %s0, %s269
      %p271 = pneg %p40
      %p272 = pneg %p37
      %p273 = pneg %p61
      %p274 = pneg %p58
      %p275 = pneg %p82
      %p276 = pneg %p79
      %p277 = pneg %p103
      %p278 = pneg %p100
      %p279 = pneg %p124
      %p280 = pneg %p121
      %p281 = pneg %p145
      %p282 = pneg %p142
      %p283 = pneg %p166
      %p284 = pneg %p163
      %p285 = pneg %p187
      %p286 = pneg %p184
      %p287 = pneg %p213
      %p288 = pneg %p210
      %p289 = scmp.lt.s32.totalorder %s19, 2
      %s290 = scalar_select %p289, %s19, 2
      %s291 = smul.addr %s290, 8
      %s292 = scalar_lea.vmem %s8, %s291
      %p293 = scmp.lt.s32.totalorder %s19, 2
      %s294 = scalar_select %p293, %s19, 2
      %s295 = smul.addr %s294, 8
      %s296 = scalar_lea.vmem %s0, %s295
      %p297 = scmp.lt.s32.totalorder %s19, 2
      %s298 = scalar_select %p297, %s19, 2
      %s299 = smul.addr %s298, 8
      %s300 = scalar_lea.vmem %s8, %s299
      %v302 = vld [vmem:[%s296] sm:$0xff]
      %v303 = vld [vmem:[%s1] sm:$0xff]
      %v304 = vadd.f32 %v302, %v303
      %v305 = vld [vmem:[%s2] sm:$0x1]
      %v306 = vld [vmem:[%s3] sm:$0x1]
      %vm307 = vcmask 261120
      %v308 = vsel %vm307, %v304, 0.0
      %309 = vadd.xlane.f32.xlu0 %v308
      %v310 = vpop.xlane.xlu0 %309
      %v311 = vrcp.pop 32.0
      %v312 = vmul.f32 %v310, %v311
      %v313 = vsub.f32 %v304, %v312
      %v314 = vmul.f32 %v313, %v313
      %v315 = vsel %vm307, %v314, 0.0
      %316 = vadd.xlane.f32.xlu0 %v315
      %v317 = vpop.xlane.xlu0 %316
      %v318 = vmul.f32 %v317, %v311
      %v319 = vadd.f32 %v318, 1e-05
      %v320 = vrsqrt.pop %v319
      %v321 = vmul.f32 %v313, %v320
      %v323 = vlaneseq
      %v324 = vshrl.u32 %v323, 7
      %v325 = vsub.s32 0, %v324
      %v326 = vrot.slane %v305, %v325
      %v328 = vmul.f32 %v321, %v326
      %v330 = vlaneseq
      %v331 = vshrl.u32 %v330, 7
      %v332 = vsub.s32 0, %v331
      %v333 = vrot.slane %v306, %v332
      %v335 = vadd.f32 %v328, %v333
      %v336 = vpack.c.bf16 %v335, %v335
      %v337 = vld [vmem:[%s4] sm:$0xff]
      %v338 = vld [vmem:[%s4 + $0x8] sm:$0xff]
      %v339 = vld [vmem:[%s4 + $0x10] sm:$0xff]
      %v340 = vld [vmem:[%s4 + $0x18] sm:$0xff]
      %v341 = vpack.c.bf16 %v338, %v337
      %v342 = vpack.c.bf16 %v340, %v339
      %v343 = vld [vmem:[%s5] sm:$0x1]
      %v345 = vlaneseq
      %v346 = vshrl.u32 %v345, 7
      %v347 = vsub.s32 0, %v346
      %v348 = vrot.slane %v343, %v347
      %v351 = vsel %vm307, %v336, 0
      %353 = vmatprep.subr.bf16.mxu0 0
      %354 = vmatpush1.bf16.msra.mxu0 0
      %355 = vmatprep.subr.bf16.mxu0 0
      %356 = vmatpush1.bf16.msra.mxu0 0
      %357 = vmatprep.subr.bf16.mxu0 0
      %358 = vmatpush1.bf16.msra.mxu0 0
      %359 = vmatprep.subr.bf16.mxu0 0
      %360 = vmatpush1.bf16.msra.mxu0 0
      %361 = vmatprep.subr.bf16.mxu0 0
      %362 = vmatpush1.bf16.msra.mxu0 0
      %363 = vmatprep.subr.bf16.mxu0 0
      %364 = vmatpush1.bf16.msra.mxu0 0
      %365 = vmatprep.subr.bf16.mxu0 0
      %366 = vmatpush1.bf16.msra.mxu0 %v342
      %367 = vmatprep.subr.bf16.mxu0 0
      %368 = vmatpush1.bf16.msra.mxu0 %v341
      %369 = vmatprep.subr.bf16.mxu0 0
      %370 = vmatpush2.bf16.msra.mxu0 0
      %371 = vmatprep.subr.bf16.mxu0 0
      %372 = vmatpush2.bf16.msra.mxu0 0
      %373 = vmatprep.subr.bf16.mxu0 0
      %374 = vmatpush2.bf16.msra.mxu0 0
      %375 = vmatprep.subr.bf16.mxu0 0
      %376 = vmatpush2.bf16.msra.mxu0 0
      %377 = vmatprep.subr.bf16.mxu0 0
      %378 = vmatpush2.bf16.msra.mxu0 0
      %379 = vmatprep.subr.bf16.mxu0 0
      %380 = vmatpush2.bf16.msra.mxu0 0
      %381 = vmatprep.subr.bf16.mxu0 0
      %382 = vmatpush2.bf16.msra.mxu0 0
      %383 = vmatprep.subr.bf16.mxu0 0
      %384 = vmatpush2.bf16.msra.mxu0 0
      %385 = vmatprep.mubr.bf16.mxu0 0
      %386 = vmatmul.mubr.bf16.gmra.mxu0 %v351
      %v387 = vpop.f32.mrf.mxu0
      %v388 = vadd.f32 %v348, %v387
      %v389 = vpop.f32.mrf.mxu0
      %v390 = vpop.f32.mrf.mxu0
      %v391 = vpop.f32.mrf.mxu0
      %392 = vdwg.mxu0
      %v393 = vlaneseq
      %v394 = vshrl.u32 %v393, 7
      %v395 = vlaneseq
      %v396 = vand.u32 %v395, 127
      %vm397 = vcmp.le.s32.totalorder %v396, %v394
      %v398 = vmul.f32 %v388, 0.35355338
      %v399 = vpack.c.bf16 %v398, %v398
      %v400 = vpack.c.bf16 %v388, %v388
      %402 = vrot.lane.b32.xlu0 %v400, 96
      %v403 = vpop.permute.xlu0 %402
      %vm404 = vcmask 64512
      %v406 = vsel %vm404, %v399, 0
      %v409 = vsel %vm404, %v403, 0
      %411 = vmatprep.subr.bf16.mxu0 0
      %412 = vmatpush1.bf16.xpose.msra.mxu0 0
      %413 = vmatprep.subr.bf16.mxu0 0
      %414 = vmatpush1.bf16.xpose.msra.mxu0 0
      %415 = vmatprep.subr.bf16.mxu0 0
      %416 = vmatpush1.bf16.xpose.msra.mxu0 0
      %417 = vmatprep.subr.bf16.mxu0 0
      %418 = vmatpush1.bf16.xpose.msra.mxu0 0
      %419 = vmatprep.subr.bf16.mxu0 0
      %420 = vmatpush1.bf16.xpose.msra.mxu0 0
      %421 = vmatprep.subr.bf16.mxu0 0
      %422 = vmatpush1.bf16.xpose.msra.mxu0 0
      %423 = vmatprep.subr.bf16.mxu0 0
      %424 = vmatpush1.bf16.xpose.msra.mxu0 0
      %425 = vmatprep.subr.bf16.mxu0 0
      %426 = vmatpush1.bf16.xpose.msra.mxu0 %v409
      %427 = vmatprep.subr.bf16.mxu0 0
      %428 = vmatpush2.bf16.xpose.msra.mxu0 0
      %429 = vmatprep.subr.bf16.mxu0 0
      %430 = vmatpush2.bf16.xpose.msra.mxu0 0
      %431 = vmatprep.subr.bf16.mxu0 0
      %432 = vmatpush2.bf16.xpose.msra.mxu0 0
      %433 = vmatprep.subr.bf16.mxu0 0
      %434 = vmatpush2.bf16.xpose.msra.mxu0 0
      %435 = vmatprep.subr.bf16.mxu0 0
      %436 = vmatpush2.bf16.xpose.msra.mxu0 0
      %437 = vmatprep.subr.bf16.mxu0 0
      %438 = vmatpush2.bf16.xpose.msra.mxu0 0
      %439 = vmatprep.subr.bf16.mxu0 0
      %440 = vmatpush2.bf16.xpose.msra.mxu0 0
      %441 = vmatprep.subr.bf16.mxu0 0
      %442 = vmatpush2.bf16.xpose.msra.mxu0 0
      %443 = vmatprep.mubr.bf16.mxu0 0
      %444 = vmatmul.mubr.bf16.gmra.mxu0 %v406
      %v445 = vpop.f32.mrf.mxu0
      %v446 = vadd.f32 0.0, %v445
      %v447 = vpop.f32.mrf.mxu0
      %v448 = vpop.f32.mrf.mxu0
      %v449 = vpop.f32.mrf.mxu0
      %450 = vdwg.mxu0
      %v451 = vsel %vm397, %v446, -3.4028235e+38
      %v452 = vsel %vm404, %v451, -inf
      %453 = vmax.xlane.f32.xlu0 %v452
      %v454 = vpop.xlane.xlu0 %453
      %v455 = vsub.f32 %v451, %v454
      %v456 = vmul.f32 %v455, 1.442695
      %v457 = vpow.pop %v456
      %v458 = vsel %vm404, %v457, 0.0
      %459 = vadd.xlane.f32.xlu0 %v458
      %v460 = vpop.xlane.xlu0 %459
      %v461 = vrcp.pop %v460
      %v462 = vpack.c.bf16 %v457, %v457
      %463 = vrot.lane.b32.xlu0 %v400, 64
      %v464 = vpop.permute.xlu0 %463
      %v466 = vsel %vm404, %v462, 0
      %vm468 = vcmask 1043456
      %v470 = vsel %vm468, %v464, 0
      %472 = vmatprep.subr.bf16.mxu0 0
      %473 = vmatpush1.bf16.msra.mxu0 0
      %474 = vmatprep.subr.bf16.mxu0 0
      %475 = vmatpush1.bf16.msra.mxu0 0
      %476 = vmatprep.subr.bf16.mxu0 0
      %477 = vmatpush1.bf16.msra.mxu0 0
      %478 = vmatprep.subr.bf16.mxu0 0
      %479 = vmatpush1.bf16.msra.mxu0 0
      %480 = vmatprep.subr.bf16.mxu0 0
      %481 = vmatpush1.bf16.msra.mxu0 0
      %482 = vmatprep.subr.bf16.mxu0 0
      %483 = vmatpush1.bf16.msra.mxu0 0
      %484 = vmatprep.subr.bf16.mxu0 0
      %485 = vmatpush1.bf16.msra.mxu0 0
      %486 = vmatprep.subr.bf16.mxu0 0
      %487 = vmatpush1.bf16.msra.mxu0 %v470
      %488 = vmatprep.subr.bf16.mxu0 0
      %489 = vmatpush2.bf16.msra.mxu0 0
      %490 = vmatprep.subr.bf16.mxu0 0
      %491 = vmatpush2.bf16.msra.mxu0 0
      %492 = vmatprep.subr.bf16.mxu0 0
      %493 = vmatpush2.bf16.msra.mxu0 0
      %494 = vmatprep.subr.bf16.mxu0 0
      %495 = vmatpush2.bf16.msra.mxu0 0
      %496 = vmatprep.subr.bf16.mxu0 0
      %497 = vmatpush2.bf16.msra.mxu0 0
      %498 = vmatprep.subr.bf16.mxu0 0
      %499 = vmatpush2.bf16.msra.mxu0 0
      %500 = vmatprep.subr.bf16.mxu0 0
      %501 = vmatpush2.bf16.msra.mxu0 0
      %502 = vmatprep.subr.bf16.mxu0 0
      %503 = vmatpush2.bf16.msra.mxu0 0
      %504 = vmatprep.mubr.bf16.mxu0 0
      %505 = vmatmul.mubr.bf16.gmra.mxu0 %v466
      %v506 = vpop.f32.mrf.mxu0
      %v507 = vadd.f32 0.0, %v506
      %v508 = vpop.f32.mrf.mxu0
      %v509 = vpop.f32.mrf.mxu0
      %v510 = vpop.f32.mrf.mxu0
      %511 = vdwg.mxu0
      %v512 = vmul.f32 %v507, %v461
      %v513 = vld [vmem:[%s6] sm:$0xff]
      %v514 = vpack.c.bf16 %v512, %v512
      %v515 = vpack.c.bf16 %v513, %v513
      %517 = vrot.lane.b32.xlu0 %v399, 120
      %v518 = vpop.permute.xlu0 %517
      %519 = vrot.lane.b32.xlu0 %v400, 88
      %v520 = vpop.permute.xlu0 %519
      %v522 = vsel %vm404, %v518, 0
      %v525 = vsel %vm404, %v520, 0
      %527 = vmatprep.subr.bf16.mxu0 0
      %528 = vmatpush1.bf16.xpose.msra.mxu0 0
      %529 = vmatprep.subr.bf16.mxu0 0
      %530 = vmatpush1.bf16.xpose.msra.mxu0 0
      %531 = vmatprep.subr.bf16.mxu0 0
      %532 = vmatpush1.bf16.xpose.msra.mxu0 0
      %533 = vmatprep.subr.bf16.mxu0 0
      %534 = vmatpush1.bf16.xpose.msra.mxu0 0
      %535 = vmatprep.subr.bf16.mxu0 0
      %536 = vmatpush1.bf16.xpose.msra.mxu0 0
      %537 = vmatprep.subr.bf16.mxu0 0
      %538 = vmatpush1.bf16.xpose.msra.mxu0 0
      %539 = vmatprep.subr.bf16.mxu0 0
      %540 = vmatpush1.bf16.xpose.msra.mxu0 0
      %541 = vmatprep.subr.bf16.mxu0 0
      %542 = vmatpush1.bf16.xpose.msra.mxu0 %v525
      %543 = vmatprep.subr.bf16.mxu0 0
      %544 = vmatpush2.bf16.xpose.msra.mxu0 0
      %545 = vmatprep.subr.bf16.mxu0 0
      %546 = vmatpush2.bf16.xpose.msra.mxu0 0
      %547 = vmatprep.subr.bf16.mxu0 0
      %548 = vmatpush2.bf16.xpose.msra.mxu0 0
      %549 = vmatprep.subr.bf16.mxu0 0
      %550 = vmatpush2.bf16.xpose.msra.mxu0 0
      %551 = vmatprep.subr.bf16.mxu0 0
      %552 = vmatpush2.bf16.xpose.msra.mxu0 0
      %553 = vmatprep.subr.bf16.mxu0 0
      %554 = vmatpush2.bf16.xpose.msra.mxu0 0
      %555 = vmatprep.subr.bf16.mxu0 0
      %556 = vmatpush2.bf16.xpose.msra.mxu0 0
      %557 = vmatprep.subr.bf16.mxu0 0
      %558 = vmatpush2.bf16.xpose.msra.mxu0 0
      %559 = vmatprep.mubr.bf16.mxu0 0
      %560 = vmatmul.mubr.bf16.gmra.mxu0 %v522
      %v561 = vpop.f32.mrf.mxu0
      %v562 = vadd.f32 0.0, %v561
      %v563 = vpop.f32.mrf.mxu0
      %v564 = vpop.f32.mrf.mxu0
      %v565 = vpop.f32.mrf.mxu0
      %566 = vdwg.mxu0
      %v567 = vsel %vm397, %v562, -3.4028235e+38
      %v568 = vsel %vm404, %v567, -inf
      %569 = vmax.xlane.f32.xlu0 %v568
      %v570 = vpop.xlane.xlu0 %569
      %v571 = vsub.f32 %v567, %v570
      %v572 = vmul.f32 %v571, 1.442695
      %v573 = vpow.pop %v572
      %v574 = vsel %vm404, %v573, 0.0
      %575 = vadd.xlane.f32.xlu0 %v574
      %v576 = vpop.xlane.xlu0 %575
      %v577 = vrcp.pop %v576
      %v578 = vpack.c.bf16 %v573, %v573
      %579 = vrot.lane.b32.xlu0 %v400, 56
      %v580 = vpop.permute.xlu0 %579
      %v582 = vsel %vm404, %v578, 0
      %v585 = vsel %vm468, %v580, 0
      %587 = vmatprep.subr.bf16.mxu0 0
      %588 = vmatpush1.bf16.msra.mxu0 0
      %589 = vmatprep.subr.bf16.mxu0 0
      %590 = vmatpush1.bf16.msra.mxu0 0
      %591 = vmatprep.subr.bf16.mxu0 0
      %592 = vmatpush1.bf16.msra.mxu0 0
      %593 = vmatprep.subr.bf16.mxu0 0
      %594 = vmatpush1.bf16.msra.mxu0 0
      %595 = vmatprep.subr.bf16.mxu0 0
      %596 = vmatpush1.bf16.msra.mxu0 0
      %597 = vmatprep.subr.bf16.mxu0 0
      %598 = vmatpush1.bf16.msra.mxu0 0
      %599 = vmatprep.subr.bf16.mxu0 0
      %600 = vmatpush1.bf16.msra.mxu0 0
      %601 = vmatprep.subr.bf16.mxu0 0
      %602 = vmatpush1.bf16.msra.mxu0 %v585
      %603 = vmatprep.subr.bf16.mxu0 0
      %604 = vmatpush2.bf16.msra.mxu0 0
      %605 = vmatprep.subr.bf16.mxu0 0
      %606 = vmatpush2.bf16.msra.mxu0 0
      %607 = vmatprep.subr.bf16.mxu0 0
      %608 = vmatpush2.bf16.msra.mxu0 0
      %609 = vmatprep.subr.bf16.mxu0 0
      %610 = vmatpush2.bf16.msra.mxu0 0
      %611 = vmatprep.subr.bf16.mxu0 0
      %612 = vmatpush2.bf16.msra.mxu0 0
      %613 = vmatprep.subr.bf16.mxu0 0
      %614 = vmatpush2.bf16.msra.mxu0 0
      %615 = vmatprep.subr.bf16.mxu0 0
      %616 = vmatpush2.bf16.msra.mxu0 0
      %617 = vmatprep.subr.bf16.mxu0 0
      %618 = vmatpush2.bf16.msra.mxu0 0
      %619 = vmatprep.mubr.bf16.mxu0 0
      %620 = vmatmul.mubr.bf16.gmra.mxu0 %v582
      %v621 = vpop.f32.mrf.mxu0
      %v622 = vadd.f32 0.0, %v621
      %v623 = vpop.f32.mrf.mxu0
      %v624 = vpop.f32.mrf.mxu0
      %v625 = vpop.f32.mrf.mxu0
      %626 = vdwg.mxu0
      %v627 = vmul.f32 %v622, %v577
      %v628 = vld [vmem:[%s6 + $0x8] sm:$0xff]
      %v629 = vpack.c.bf16 %v627, %v627
      %v630 = vpack.c.bf16 %v628, %v628
      %v632 = vsel %vm404, %v629, 0
      %v635 = vsel %vm468, %v630, 0
      %637 = vmatprep.subr.bf16.mxu0 0
      %638 = vmatpush1.bf16.msra.mxu0 0
      %639 = vmatprep.subr.bf16.mxu0 0
      %640 = vmatpush1.bf16.msra.mxu0 0
      %641 = vmatprep.subr.bf16.mxu0 0
      %642 = vmatpush1.bf16.msra.mxu0 0
      %643 = vmatprep.subr.bf16.mxu0 0
      %644 = vmatpush1.bf16.msra.mxu0 0
      %645 = vmatprep.subr.bf16.mxu0 0
      %646 = vmatpush1.bf16.msra.mxu0 0
      %647 = vmatprep.subr.bf16.mxu0 0
      %648 = vmatpush1.bf16.msra.mxu0 0
      %649 = vmatprep.subr.bf16.mxu0 0
      %650 = vmatpush1.bf16.msra.mxu0 0
      %651 = vmatprep.subr.bf16.mxu0 0
      %652 = vmatpush1.bf16.msra.mxu0 %v635
      %653 = vmatprep.subr.bf16.mxu0 0
      %654 = vmatpush2.bf16.msra.mxu0 0
      %655 = vmatprep.subr.bf16.mxu0 0
      %656 = vmatpush2.bf16.msra.mxu0 0
      %657 = vmatprep.subr.bf16.mxu0 0
      %658 = vmatpush2.bf16.msra.mxu0 0
      %659 = vmatprep.subr.bf16.mxu0 0
      %660 = vmatpush2.bf16.msra.mxu0 0
      %661 = vmatprep.subr.bf16.mxu0 0
      %662 = vmatpush2.bf16.msra.mxu0 0
      %663 = vmatprep.subr.bf16.mxu0 0
      %664 = vmatpush2.bf16.msra.mxu0 0
      %665 = vmatprep.subr.bf16.mxu0 0
      %666 = vmatpush2.bf16.msra.mxu0 0
      %667 = vmatprep.subr.bf16.mxu0 0
      %668 = vmatpush2.bf16.msra.mxu0 0
      %669 = vmatprep.mubr.bf16.mxu0 0
      %670 = vmatmul.mubr.bf16.gmra.mxu0 %v632
      %v671 = vpop.f32.mrf.mxu0
      %v672 = vadd.f32 0.0, %v671
      %v673 = vpop.f32.mrf.mxu0
      %v674 = vpop.f32.mrf.mxu0
      %v675 = vpop.f32.mrf.mxu0
      %676 = vdwg.mxu0
      %v678 = vsel %vm404, %v514, 0
      %v681 = vsel %vm468, %v515, 0
      %683 = vmatprep.subr.bf16.mxu0 0
      %684 = vmatpush1.bf16.msra.mxu0 0
      %685 = vmatprep.subr.bf16.mxu0 0
      %686 = vmatpush1.bf16.msra.mxu0 0
      %687 = vmatprep.subr.bf16.mxu0 0
      %688 = vmatpush1.bf16.msra.mxu0 0
      %689 = vmatprep.subr.bf16.mxu0 0
      %690 = vmatpush1.bf16.msra.mxu0 0
      %691 = vmatprep.subr.bf16.mxu0 0
      %692 = vmatpush1.bf16.msra.mxu0 0
      %693 = vmatprep.subr.bf16.mxu0 0
      %694 = vmatpush1.bf16.msra.mxu0 0
      %695 = vmatprep.subr.bf16.mxu0 0
      %696 = vmatpush1.bf16.msra.mxu0 0
      %697 = vmatprep.subr.bf16.mxu0 0
      %698 = vmatpush1.bf16.msra.mxu0 %v681
      %699 = vmatprep.subr.bf16.mxu0 0
      %700 = vmatpush2.bf16.msra.mxu0 0
      %701 = vmatprep.subr.bf16.mxu0 0
      %702 = vmatpush2.bf16.msra.mxu0 0
      %703 = vmatprep.subr.bf16.mxu0 0
      %704 = vmatpush2.bf16.msra.mxu0 0
      %705 = vmatprep.subr.bf16.mxu0 0
      %706 = vmatpush2.bf16.msra.mxu0 0
      %707 = vmatprep.subr.bf16.mxu0 0
      %708 = vmatpush2.bf16.msra.mxu0 0
      %709 = vmatprep.subr.bf16.mxu0 0
      %710 = vmatpush2.bf16.msra.mxu0 0
      %711 = vmatprep.subr.bf16.mxu0 0
      %712 = vmatpush2.bf16.msra.mxu0 0
      %713 = vmatprep.subr.bf16.mxu0 0
      %714 = vmatpush2.bf16.msra.mxu0 0
      %715 = vmatprep.mubr.bf16.mxu0 0
      %716 = vmatmul.mubr.bf16.gmra.mxu0 %v678
      %v717 = vpop.f32.mrf.mxu0
      %v718 = vadd.f32 %v672, %v717
      %v719 = vpop.f32.mrf.mxu0
      %v720 = vpop.f32.mrf.mxu0
      %v721 = vpop.f32.mrf.mxu0
      %722 = vdwg.mxu0
      %723 = vrot.lane.b32.xlu0 %v399, 112
      %v724 = vpop.permute.xlu0 %723
      %725 = vrot.lane.b32.xlu0 %v400, 80
      %v726 = vpop.permute.xlu0 %725
      %v728 = vsel %vm404, %v724, 0
      %v731 = vsel %vm404, %v726, 0
      %733 = vmatprep.subr.bf16.mxu0 0
      %734 = vmatpush1.bf16.xpose.msra.mxu0 0
      %735 = vmatprep.subr.bf16.mxu0 0
      %736 = vmatpush1.bf16.xpose.msra.mxu0 0
      %737 = vmatprep.subr.bf16.mxu0 0
      %738 = vmatpush1.bf16.xpose.msra.mxu0 0
      %739 = vmatprep.subr.bf16.mxu0 0
      %740 = vmatpush1.bf16.xpose.msra.mxu0 0
      %741 = vmatprep.subr.bf16.mxu0 0
      %742 = vmatpush1.bf16.xpose.msra.mxu0 0
      %743 = vmatprep.subr.bf16.mxu0 0
      %744 = vmatpush1.bf16.xpose.msra.mxu0 0
      %745 = vmatprep.subr.bf16.mxu0 0
      %746 = vmatpush1.bf16.xpose.msra.mxu0 0
      %747 = vmatprep.subr.bf16.mxu0 0
      %748 = vmatpush1.bf16.xpose.msra.mxu0 %v731
      %749 = vmatprep.subr.bf16.mxu0 0
      %750 = vmatpush2.bf16.xpose.msra.mxu0 0
      %751 = vmatprep.subr.bf16.mxu0 0
      %752 = vmatpush2.bf16.xpose.msra.mxu0 0
      %753 = vmatprep.subr.bf16.mxu0 0
      %754 = vmatpush2.bf16.xpose.msra.mxu0 0
      %755 = vmatprep.subr.bf16.mxu0 0
      %756 = vmatpush2.bf16.xpose.msra.mxu0 0
      %757 = vmatprep.subr.bf16.mxu0 0
      %758 = vmatpush2.bf16.xpose.msra.mxu0 0
      %759 = vmatprep.subr.bf16.mxu0 0
      %760 = vmatpush2.bf16.xpose.msra.mxu0 0
      %761 = vmatprep.subr.bf16.mxu0 0
      %762 = vmatpush2.bf16.xpose.msra.mxu0 0
      %763 = vmatprep.subr.bf16.mxu0 0
      %764 = vmatpush2.bf16.xpose.msra.mxu0 0
      %765 = vmatprep.mubr.bf16.mxu0 0
      %766 = vmatmul.mubr.bf16.gmra.mxu0 %v728
      %v767 = vpop.f32.mrf.mxu0
      %v768 = vadd.f32 0.0, %v767
      %v769 = vpop.f32.mrf.mxu0
      %v770 = vpop.f32.mrf.mxu0
      %v771 = vpop.f32.mrf.mxu0
      %772 = vdwg.mxu0
      %v773 = vsel %vm397, %v768, -3.4028235e+38
      %v774 = vsel %vm404, %v773, -inf
      %775 = vmax.xlane.f32.xlu0 %v774
      %v776 = vpop.xlane.xlu0 %775
      %v777 = vsub.f32 %v773, %v776
      %v778 = vmul.f32 %v777, 1.442695
      %v779 = vpow.pop %v778
      %v780 = vsel %vm404, %v779, 0.0
      %781 = vadd.xlane.f32.xlu0 %v780
      %v782 = vpop.xlane.xlu0 %781
      %v783 = vrcp.pop %v782
      %v784 = vpack.c.bf16 %v779, %v779
      %785 = vrot.lane.b32.xlu0 %v400, 48
      %v786 = vpop.permute.xlu0 %785
      %v788 = vsel %vm404, %v784, 0
      %v791 = vsel %vm468, %v786, 0
      %793 = vmatprep.subr.bf16.mxu0 0
      %794 = vmatpush1.bf16.msra.mxu0 0
      %795 = vmatprep.subr.bf16.mxu0 0
      %796 = vmatpush1.bf16.msra.mxu0 0
      %797 = vmatprep.subr.bf16.mxu0 0
      %798 = vmatpush1.bf16.msra.mxu0 0
      %799 = vmatprep.subr.bf16.mxu0 0
      %800 = vmatpush1.bf16.msra.mxu0 0
      %801 = vmatprep.subr.bf16.mxu0 0
      %802 = vmatpush1.bf16.msra.mxu0 0
      %803 = vmatprep.subr.bf16.mxu0 0
      %804 = vmatpush1.bf16.msra.mxu0 0
      %805 = vmatprep.subr.bf16.mxu0 0
      %806 = vmatpush1.bf16.msra.mxu0 0
      %807 = vmatprep.subr.bf16.mxu0 0
      %808 = vmatpush1.bf16.msra.mxu0 %v791
      %809 = vmatprep.subr.bf16.mxu0 0
      %810 = vmatpush2.bf16.msra.mxu0 0
      %811 = vmatprep.subr.bf16.mxu0 0
      %812 = vmatpush2.bf16.msra.mxu0 0
      %813 = vmatprep.subr.bf16.mxu0 0
      %814 = vmatpush2.bf16.msra.mxu0 0
      %815 = vmatprep.subr.bf16.mxu0 0
      %816 = vmatpush2.bf16.msra.mxu0 0
      %817 = vmatprep.subr.bf16.mxu0 0
      %818 = vmatpush2.bf16.msra.mxu0 0
      %819 = vmatprep.subr.bf16.mxu0 0
      %820 = vmatpush2.bf16.msra.mxu0 0
      %821 = vmatprep.subr.bf16.mxu0 0
      %822 = vmatpush2.bf16.msra.mxu0 0
      %823 = vmatprep.subr.bf16.mxu0 0
      %824 = vmatpush2.bf16.msra.mxu0 0
      %825 = vmatprep.mubr.bf16.mxu0 0
      %826 = vmatmul.mubr.bf16.gmra.mxu0 %v788
      %v827 = vpop.f32.mrf.mxu0
      %v828 = vadd.f32 0.0, %v827
      %v829 = vpop.f32.mrf.mxu0
      %v830 = vpop.f32.mrf.mxu0
      %v831 = vpop.f32.mrf.mxu0
      %832 = vdwg.mxu0
      %v833 = vmul.f32 %v828, %v783
      %v834 = vld [vmem:[%s6 + $0x10] sm:$0xff]
      %v835 = vpack.c.bf16 %v833, %v833
      %v836 = vpack.c.bf16 %v834, %v834
      %v838 = vsel %vm404, %v835, 0
      %v841 = vsel %vm468, %v836, 0
      %843 = vmatprep.subr.bf16.mxu0 0
      %844 = vmatpush1.bf16.msra.mxu0 0
      %845 = vmatprep.subr.bf16.mxu0 0
      %846 = vmatpush1.bf16.msra.mxu0 0
      %847 = vmatprep.subr.bf16.mxu0 0
      %848 = vmatpush1.bf16.msra.mxu0 0
      %849 = vmatprep.subr.bf16.mxu0 0
      %850 = vmatpush1.bf16.msra.mxu0 0
      %851 = vmatprep.subr.bf16.mxu0 0
      %852 = vmatpush1.bf16.msra.mxu0 0
      %853 = vmatprep.subr.bf16.mxu0 0
      %854 = vmatpush1.bf16.msra.mxu0 0
      %855 = vmatprep.subr.bf16.mxu0 0
      %856 = vmatpush1.bf16.msra.mxu0 0
      %857 = vmatprep.subr.bf16.mxu0 0
      %858 = vmatpush1.bf16.msra.mxu0 %v841
      %859 = vmatprep.subr.bf16.mxu0 0
      %860 = vmatpush2.bf16.msra.mxu0 0
      %861 = vmatprep.subr.bf16.mxu0 0
      %862 = vmatpush2.bf16.msra.mxu0 0
      %863 = vmatprep.subr.bf16.mxu0 0
      %864 = vmatpush2.bf16.msra.mxu0 0
      %865 = vmatprep.subr.bf16.mxu0 0
      %866 = vmatpush2.bf16.msra.mxu0 0
      %867 = vmatprep.subr.bf16.mxu0 0
      %868 = vmatpush2.bf16.msra.mxu0 0
      %869 = vmatprep.subr.bf16.mxu0 0
      %870 = vmatpush2.bf16.msra.mxu0 0
      %871 = vmatprep.subr.bf16.mxu0 0
      %872 = vmatpush2.bf16.msra.mxu0 0
      %873 = vmatprep.subr.bf16.mxu0 0
      %874 = vmatpush2.bf16.msra.mxu0 0
      %875 = vmatprep.mubr.bf16.mxu0 0
      %876 = vmatmul.mubr.bf16.gmra.mxu0 %v838
      %v877 = vpop.f32.mrf.mxu0
      %v878 = vadd.f32 0.0, %v877
      %v879 = vpop.f32.mrf.mxu0
      %v880 = vpop.f32.mrf.mxu0
      %v881 = vpop.f32.mrf.mxu0
      %882 = vdwg.mxu0
      %v883 = vadd.f32 %v718, %v878
      %884 = vrot.lane.b32.xlu0 %v399, 104
      %v885 = vpop.permute.xlu0 %884
      %886 = vrot.lane.b32.xlu0 %v400, 72
      %v887 = vpop.permute.xlu0 %886
      %v889 = vsel %vm404, %v885, 0
      %v892 = vsel %vm404, %v887, 0
      %894 = vmatprep.subr.bf16.mxu0 0
      %895 = vmatpush1.bf16.xpose.msra.mxu0 0
      %896 = vmatprep.subr.bf16.mxu0 0
      %897 = vmatpush1.bf16.xpose.msra.mxu0 0
      %898 = vmatprep.subr.bf16.mxu0 0
      %899 = vmatpush1.bf16.xpose.msra.mxu0 0
      %900 = vmatprep.subr.bf16.mxu0 0
      %901 = vmatpush1.bf16.xpose.msra.mxu0 0
      %902 = vmatprep.subr.bf16.mxu0 0
      %903 = vmatpush1.bf16.xpose.msra.mxu0 0
      %904 = vmatprep.subr.bf16.mxu0 0
      %905 = vmatpush1.bf16.xpose.msra.mxu0 0
      %906 = vmatprep.subr.bf16.mxu0 0
      %907 = vmatpush1.bf16.xpose.msra.mxu0 0
      %908 = vmatprep.subr.bf16.mxu0 0
      %909 = vmatpush1.bf16.xpose.msra.mxu0 %v892
      %910 = vmatprep.subr.bf16.mxu0 0
      %911 = vmatpush2.bf16.xpose.msra.mxu0 0
      %912 = vmatprep.subr.bf16.mxu0 0
      %913 = vmatpush2.bf16.xpose.msra.mxu0 0
      %914 = vmatprep.subr.bf16.mxu0 0
      %915 = vmatpush2.bf16.xpose.msra.mxu0 0
      %916 = vmatprep.subr.bf16.mxu0 0
      %917 = vmatpush2.bf16.xpose.msra.mxu0 0
      %918 = vmatprep.subr.bf16.mxu0 0
      %919 = vmatpush2.bf16.xpose.msra.mxu0 0
      %920 = vmatprep.subr.bf16.mxu0 0
      %921 = vmatpush2.bf16.xpose.msra.mxu0 0
      %922 = vmatprep.subr.bf16.mxu0 0
      %923 = vmatpush2.bf16.xpose.msra.mxu0 0
      %924 = vmatprep.subr.bf16.mxu0 0
      %925 = vmatpush2.bf16.xpose.msra.mxu0 0
      %926 = vmatprep.mubr.bf16.mxu0 0
      %927 = vmatmul.mubr.bf16.gmra.mxu0 %v889
      %v928 = vpop.f32.mrf.mxu0
      %v929 = vadd.f32 0.0, %v928
      %v930 = vpop.f32.mrf.mxu0
      %v931 = vpop.f32.mrf.mxu0
      %v932 = vpop.f32.mrf.mxu0
      %933 = vdwg.mxu0
      %v934 = vsel %vm397, %v929, -3.4028235e+38
      %v935 = vsel %vm404, %v934, -inf
      %936 = vmax.xlane.f32.xlu0 %v935
      %v937 = vpop.xlane.xlu0 %936
      %v938 = vsub.f32 %v934, %v937
      %v939 = vmul.f32 %v938, 1.442695
      %v940 = vpow.pop %v939
      %v941 = vsel %vm404, %v940, 0.0
      %942 = vadd.xlane.f32.xlu0 %v941
      %v943 = vpop.xlane.xlu0 %942
      %v944 = vrcp.pop %v943
      %v945 = vpack.c.bf16 %v940, %v940
      %946 = vrot.lane.b32.xlu0 %v400, 40
      %v947 = vpop.permute.xlu0 %946
      %v949 = vsel %vm404, %v945, 0
      %v952 = vsel %vm468, %v947, 0
      %954 = vmatprep.subr.bf16.mxu0 0
      %955 = vmatpush1.bf16.msra.mxu0 0
      %956 = vmatprep.subr.bf16.mxu0 0
      %957 = vmatpush1.bf16.msra.mxu0 0
      %958 = vmatprep.subr.bf16.mxu0 0
      %959 = vmatpush1.bf16.msra.mxu0 0
      %960 = vmatprep.subr.bf16.mxu0 0
      %961 = vmatpush1.bf16.msra.mxu0 0
      %962 = vmatprep.subr.bf16.mxu0 0
      %963 = vmatpush1.bf16.msra.mxu0 0
      %964 = vmatprep.subr.bf16.mxu0 0
      %965 = vmatpush1.bf16.msra.mxu0 0
      %966 = vmatprep.subr.bf16.mxu0 0
      %967 = vmatpush1.bf16.msra.mxu0 0
      %968 = vmatprep.subr.bf16.mxu0 0
      %969 = vmatpush1.bf16.msra.mxu0 %v952
      %970 = vmatprep.subr.bf16.mxu0 0
      %971 = vmatpush2.bf16.msra.mxu0 0
      %972 = vmatprep.subr.bf16.mxu0 0
      %973 = vmatpush2.bf16.msra.mxu0 0
      %974 = vmatprep.subr.bf16.mxu0 0
      %975 = vmatpush2.bf16.msra.mxu0 0
      %976 = vmatprep.subr.bf16.mxu0 0
      %977 = vmatpush2.bf16.msra.mxu0 0
      %978 = vmatprep.subr.bf16.mxu0 0
      %979 = vmatpush2.bf16.msra.mxu0 0
      %980 = vmatprep.subr.bf16.mxu0 0
      %981 = vmatpush2.bf16.msra.mxu0 0
      %982 = vmatprep.subr.bf16.mxu0 0
      %983 = vmatpush2.bf16.msra.mxu0 0
      %984 = vmatprep.subr.bf16.mxu0 0
      %985 = vmatpush2.bf16.msra.mxu0 0
      %986 = vmatprep.mubr.bf16.mxu0 0
      %987 = vmatmul.mubr.bf16.gmra.mxu0 %v949
      %v988 = vpop.f32.mrf.mxu0
      %v989 = vadd.f32 0.0, %v988
      %v990 = vpop.f32.mrf.mxu0
      %v991 = vpop.f32.mrf.mxu0
      %v992 = vpop.f32.mrf.mxu0
      %993 = vdwg.mxu0
      %v994 = vmul.f32 %v989, %v944
      %v995 = vld [vmem:[%s6 + $0x18] sm:$0xff]
      %v996 = vpack.c.bf16 %v994, %v994
      %v997 = vpack.c.bf16 %v995, %v995
      %v999 = vsel %vm404, %v996, 0
      %v1002 = vsel %vm468, %v997, 0
      %1004 = vmatprep.subr.bf16.mxu0 0
      %1005 = vmatpush1.bf16.msra.mxu0 0
      %1006 = vmatprep.subr.bf16.mxu0 0
      %1007 = vmatpush1.bf16.msra.mxu0 0
      %1008 = vmatprep.subr.bf16.mxu0 0
      %1009 = vmatpush1.bf16.msra.mxu0 0
      %1010 = vmatprep.subr.bf16.mxu0 0
      %1011 = vmatpush1.bf16.msra.mxu0 0
      %1012 = vmatprep.subr.bf16.mxu0 0
      %1013 = vmatpush1.bf16.msra.mxu0 0
      %1014 = vmatprep.subr.bf16.mxu0 0
      %1015 = vmatpush1.bf16.msra.mxu0 0
      %1016 = vmatprep.subr.bf16.mxu0 0
      %1017 = vmatpush1.bf16.msra.mxu0 0
      %1018 = vmatprep.subr.bf16.mxu0 0
      %1019 = vmatpush1.bf16.msra.mxu0 %v1002
      %1020 = vmatprep.subr.bf16.mxu0 0
      %1021 = vmatpush2.bf16.msra.mxu0 0
      %1022 = vmatprep.subr.bf16.mxu0 0
      %1023 = vmatpush2.bf16.msra.mxu0 0
      %1024 = vmatprep.subr.bf16.mxu0 0
      %1025 = vmatpush2.bf16.msra.mxu0 0
      %1026 = vmatprep.subr.bf16.mxu0 0
      %1027 = vmatpush2.bf16.msra.mxu0 0
      %1028 = vmatprep.subr.bf16.mxu0 0
      %1029 = vmatpush2.bf16.msra.mxu0 0
      %1030 = vmatprep.subr.bf16.mxu0 0
      %1031 = vmatpush2.bf16.msra.mxu0 0
      %1032 = vmatprep.subr.bf16.mxu0 0
      %1033 = vmatpush2.bf16.msra.mxu0 0
      %1034 = vmatprep.subr.bf16.mxu0 0
      %1035 = vmatpush2.bf16.msra.mxu0 0
      %1036 = vmatprep.mubr.bf16.mxu0 0
      %1037 = vmatmul.mubr.bf16.gmra.mxu0 %v999
      %v1038 = vpop.f32.mrf.mxu0
      %v1039 = vadd.f32 0.0, %v1038
      %v1040 = vpop.f32.mrf.mxu0
      %v1041 = vpop.f32.mrf.mxu0
      %v1042 = vpop.f32.mrf.mxu0
      %1043 = vdwg.mxu0
      %v1044 = vadd.f32 %v883, %v1039
      %v1045 = vadd.f32 %v304, %v1044
      %v1046 = vld [vmem:[%s7] sm:$0x1]
      %v1048 = vlaneseq
      %v1049 = vshrl.u32 %v1048, 7
      %v1050 = vsub.s32 0, %v1049
      %v1051 = vrot.slane %v1046, %v1050
      %v1053 = vadd.f32 %v1045, %v1051
      %1054 = vst.msk [vmem:[%s300] sm:$0xff] %vm307, %v1053
      %p1055 = scmp.lt.s32.totalorder %s19, 2
      %s1056 = scalar_select %p1055, %s19, 2
      %s1057 = smul.addr %s1056, 8
      %s1058 = scalar_lea.vmem %s8, %s1057
      // Predicated region
      $region53: #{_lambda_.18} parent=51 // pred_check
        %p1059 = pneg %p210
      $region54: #{_lambda_.18} parent=51 // pred_check_branch
        %1061 = sbr.rel (%p1059) target = $region56
      $region55: #{_lambda_.18} parent=51 // pred_region
        _
      $region56: #{_lambda_.18} parent=51 // pred_fallthru
        _
    $region52: #{_lambda_.18} parent=5 // pred_fallthru
      _
    %p1062 = scmp.le.s32.totalorder 2, %s14
    // Predicated region
    $region57: #{_lambda_.18} parent=5 // pred_check
      %p1063 = pneg %p1062
    $region58: #{_lambda_.18} parent=5 // pred_check_branch
      %1065 = sbr.rel (%p1063) target = $region60
    $region59: #{_lambda_.18} parent=5 // pred_region
      %s1066 = ssub.s32 %s14, 2
      // Predicated region
      $region61: #{_lambda_.18} parent=59 // pred_check
        %p1067 = pneg %p216
      $region62: #{_lambda_.18} parent=59 // pred_check_branch
        %1069 = sbr.rel (%p1067) target = $region64
      $region63: #{_lambda_.18} parent=59 // pred_region
        %p1070 = scmp.lt.s32.totalorder %s20, 2
        %s1071 = scalar_select %p1070, %s20, 2
        %s1072 = smul.addr %s1071, 8
        %s1073 = scalar_lea.vmem %s8, %s1072
      $region64: #{_lambda_.18} parent=59 // pred_fallthru
        _
    $region60: #{_lambda_.18} parent=5 // pred_fallthru
      _
  $region6: #{_lambda_.18} parent=0 // loop_footer
    %s18 = sadd.s32 1, %s14
  $region7: #{_lambda_.18} parent=0 // loop_footer_branch
    %13 = sbr.rel target = $region3
  $region8: #{_lambda_.18} parent=0 // loop_exit
    _

// kernel: _lambda_.20
$region0: #{_lambda_.20}
  #allocation0 [shape = 'u32[]', space=smem, size = 0x4, offset = 0x4, fixed_abs, tag = 'smem constant byte address 0x4 - core index']
  #allocation1 [shape = 'u32[144,128]{1,0:T(1,128)}', space=vmem, size = 0x12000, scoped, tag = 'internal scratch']
  %s0 = inlined_call_operand.vmem [shape: f32[3,8,32], index: 0, kind: input, shape index: {}]
  %s1 = inlined_call_operand.vmem [shape: f32[1,32], index: 1, kind: input, shape index: {}]
  %s2 = inlined_call_operand.vmem [shape: f32[1,32], index: 2, kind: input, shape index: {}]
  %s3 = inlined_call_operand.vmem [shape: f32[32,96], index: 3, kind: input, shape index: {}]
  %s4 = inlined_call_operand.vmem [shape: f32[1,96], index: 4, kind: input, shape index: {}]
  %s5 = inlined_call_operand.vmem [shape: f32[32,32], index: 5, kind: input, shape index: {}]
  %s6 = inlined_call_operand.vmem [shape: f32[1,32], index: 6, kind: input, shape index: {}]
  %s7 = inlined_call_operand.vmem [shape: f32[3,8,32], index: 7, kind: output, shape index: {}]
  %s8 = sld [smem:[#allocation0]]
  $region61: #{_lambda_.20} parent=0
    _
  %s10 = ssub.s32 1, %s8
  %s11 = scalar_select 0, %s10, %s8
  loop: start=0, step=1, limit=5
  $region2: #{_lambda_.20} parent=0 // loop_pre_header
    _
  $region3: #{_lambda_.20} parent=0 // loop_header
    %s13 = sphi 0, %s17
    %p14 = scmp.ge.s32.totalorder %s13, 5
    %s23 = sphi 0, %s25
    %s26 = sphi 0, %s23
    %s27 = sphi 0, %s26
    %s43 = sphi 0, %s27
    %s47 = sphi 0, %s47
    %s49 = sphi 0, %s47
    %s50 = sphi 0, %s49
    %s64 = sphi 0, %s50
    %s68 = sphi 0, %s68
    %s70 = sphi 0, %s68
    %s71 = sphi 0, %s70
    %s85 = sphi 0, %s71
    %s89 = sphi 0, %s89
    %s91 = sphi 0, %s89
    %s92 = sphi 0, %s91
    %s106 = sphi 0, %s92
    %s110 = sphi 0, %s110
    %s112 = sphi 0, %s110
    %s113 = sphi 0, %s112
    %s127 = sphi 0, %s113
    %s131 = sphi 0, %s131
    %s133 = sphi 0, %s131
    %s134 = sphi 0, %s133
    %s148 = sphi 0, %s134
    %s152 = sphi 0, %s152
    %s154 = sphi 0, %s152
    %s155 = sphi 0, %s154
    %s169 = sphi 0, %s155
    %s175 = sphi 0, %s177
    %s178 = sphi 0, %s175
    %s179 = sphi 0, %s178
    %s195 = sphi 0, %s179
  $region4: #{_lambda_.20} parent=0 // loop_header_branch
    %16 = sbr.rel (%p14) target = $region8
  $region5: #{_lambda_.20} parent=0 // loop_body
    %s18 = ssub.s32 %s13, 1
    %s19 = ssub.s32 %s13, 2
    %s20 = sadd.s32 %s13, 1
    %s21 = ssub.s32 %s13, %s20
    %p22 = scmp.eq.s32.totalorder %s21, 0
    %s24 = sadd.s32 %s23, 1
    %s25 = scalar_select %p22, %s23, %s24
    %p28 = pneg %p22
    %p29 = scmp.eq.s32.totalorder %s13, 2
    %p30 = por %p28, %p29
    %p31 = scmp.ne.s32.totalorder %s23, %s26
    %p32 = scmp.eq.s32.totalorder %s13, 0
    %p33 = por %p31, %p32
    %p34 = scmp.ne.s32.totalorder %s23, %s26
    %p35 = scmp.eq.s32.totalorder %s18, 2
    %p36 = por %p34, %p35
    %p37 = scmp.ne.s32.totalorder %s26, %s27
    %p38 = scmp.eq.s32.totalorder %s18, 0
    %p39 = por %p37, %p38
    %p40 = scmp.ne.s32.totalorder %s26, %s27
    %p41 = scmp.eq.s32.totalorder %s19, 2
    %p42 = por %p40, %p41
    %p44 = scmp.ne.s32.totalorder %s27, %s43
    %p45 = scmp.eq.s32.totalorder %s19, 0
    %p46 = por %p44, %p45
    %s48 = sadd.s32 %s47, 1
    %p51 = scmp.eq.s32.totalorder %s13, 2
    %p52 = scmp.ne.s32.totalorder %s47, %s49
    %p53 = scmp.eq.s32.totalorder %s13, 0
    %p54 = por %p52, %p53
    %p55 = scmp.ne.s32.totalorder %s47, %s49
    %p56 = scmp.eq.s32.totalorder %s18, 2
    %p57 = por %p55, %p56
    %p58 = scmp.ne.s32.totalorder %s49, %s50
    %p59 = scmp.eq.s32.totalorder %s18, 0
    %p60 = por %p58, %p59
    %p61 = scmp.ne.s32.totalorder %s49, %s50
    %p62 = scmp.eq.s32.totalorder %s19, 2
    %p63 = por %p61, %p62
    %p65 = scmp.ne.s32.totalorder %s50, %s64
    %p66 = scmp.eq.s32.totalorder %s19, 0
    %p67 = por %p65, %p66
    %s69 = sadd.s32 %s68, 1
    %p72 = scmp.eq.s32.totalorder %s13, 2
    %p73 = scmp.ne.s32.totalorder %s68, %s70
    %p74 = scmp.eq.s32.totalorder %s13, 0
    %p75 = por %p73, %p74
    %p76 = scmp.ne.s32.totalorder %s68, %s70
    %p77 = scmp.eq.s32.totalorder %s18, 2
    %p78 = por %p76, %p77
    %p79 = scmp.ne.s32.totalorder %s70, %s71
    %p80 = scmp.eq.s32.totalorder %s18, 0
    %p81 = por %p79, %p80
    %p82 = scmp.ne.s32.totalorder %s70, %s71
    %p83 = scmp.eq.s32.totalorder %s19, 2
    %p84 = por %p82, %p83
    %p86 = scmp.ne.s32.totalorder %s71, %s85
    %p87 = scmp.eq.s32.totalorder %s19, 0
    %p88 = por %p86, %p87
    %s90 = sadd.s32 %s89, 1
    %p93 = scmp.eq.s32.totalorder %s13, 2
    %p94 = scmp.ne.s32.totalorder %s89, %s91
    %p95 = scmp.eq.s32.totalorder %s13, 0
    %p96 = por %p94, %p95
    %p97 = scmp.ne.s32.totalorder %s89, %s91
    %p98 = scmp.eq.s32.totalorder %s18, 2
    %p99 = por %p97, %p98
    %p100 = scmp.ne.s32.totalorder %s91, %s92
    %p101 = scmp.eq.s32.totalorder %s18, 0
    %p102 = por %p100, %p101
    %p103 = scmp.ne.s32.totalorder %s91, %s92
    %p104 = scmp.eq.s32.totalorder %s19, 2
    %p105 = por %p103, %p104
    %p107 = scmp.ne.s32.totalorder %s92, %s106
    %p108 = scmp.eq.s32.totalorder %s19, 0
    %p109 = por %p107, %p108
    %s111 = sadd.s32 %s110, 1
    %p114 = scmp.eq.s32.totalorder %s13, 2
    %p115 = scmp.ne.s32.totalorder %s110, %s112
    %p116 = scmp.eq.s32.totalorder %s13, 0
    %p117 = por %p115, %p116
    %p118 = scmp.ne.s32.totalorder %s110, %s112
    %p119 = scmp.eq.s32.totalorder %s18, 2
    %p120 = por %p118, %p119
    %p121 = scmp.ne.s32.totalorder %s112, %s113
    %p122 = scmp.eq.s32.totalorder %s18, 0
    %p123 = por %p121, %p122
    %p124 = scmp.ne.s32.totalorder %s112, %s113
    %p125 = scmp.eq.s32.totalorder %s19, 2
    %p126 = por %p124, %p125
    %p128 = scmp.ne.s32.totalorder %s113, %s127
    %p129 = scmp.eq.s32.totalorder %s19, 0
    %p130 = por %p128, %p129
    %s132 = sadd.s32 %s131, 1
    %p135 = scmp.eq.s32.totalorder %s13, 2
    %p136 = scmp.ne.s32.totalorder %s131, %s133
    %p137 = scmp.eq.s32.totalorder %s13, 0
    %p138 = por %p136, %p137
    %p139 = scmp.ne.s32.totalorder %s131, %s133
    %p140 = scmp.eq.s32.totalorder %s18, 2
    %p141 = por %p139, %p140
    %p142 = scmp.ne.s32.totalorder %s133, %s134
    %p143 = scmp.eq.s32.totalorder %s18, 0
    %p144 = por %p142, %p143
    %p145 = scmp.ne.s32.totalorder %s133, %s134
    %p146 = scmp.eq.s32.totalorder %s19, 2
    %p147 = por %p145, %p146
    %p149 = scmp.ne.s32.totalorder %s134, %s148
    %p150 = scmp.eq.s32.totalorder %s19, 0
    %p151 = por %p149, %p150
    %s153 = sadd.s32 %s152, 1
    %p156 = scmp.eq.s32.totalorder %s13, 2
    %p157 = scmp.ne.s32.totalorder %s152, %s154
    %p158 = scmp.eq.s32.totalorder %s13, 0
    %p159 = por %p157, %p158
    %p160 = scmp.ne.s32.totalorder %s152, %s154
    %p161 = scmp.eq.s32.totalorder %s18, 2
    %p162 = por %p160, %p161
    %p163 = scmp.ne.s32.totalorder %s154, %s155
    %p164 = scmp.eq.s32.totalorder %s18, 0
    %p165 = por %p163, %p164
    %p166 = scmp.ne.s32.totalorder %s154, %s155
    %p167 = scmp.eq.s32.totalorder %s19, 2
    %p168 = por %p166, %p167
    %p170 = scmp.ne.s32.totalorder %s155, %s169
    %p171 = scmp.eq.s32.totalorder %s19, 0
    %p172 = por %p170, %p171
    %s173 = ssub.s32 %s13, %s20
    %p174 = scmp.eq.s32.totalorder %s173, 0
    %s176 = sadd.s32 %s175, 1
    %s177 = scalar_select %p174, %s175, %s176
    %p180 = pneg %p174
    %p181 = scmp.eq.s32.totalorder %s13, 2
    %p182 = por %p180, %p181
    %p183 = scmp.ne.s32.totalorder %s175, %s178
    %p184 = scmp.eq.s32.totalorder %s13, 0
    %p185 = por %p183, %p184
    %p186 = scmp.ne.s32.totalorder %s175, %s178
    %p187 = scmp.eq.s32.totalorder %s18, 2
    %p188 = por %p186, %p187
    %p189 = scmp.ne.s32.totalorder %s178, %s179
    %p190 = scmp.eq.s32.totalorder %s18, 0
    %p191 = por %p189, %p190
    %p192 = scmp.ne.s32.totalorder %s178, %s179
    %p193 = scmp.eq.s32.totalorder %s19, 2
    %p194 = por %p192, %p193
    %p196 = scmp.ne.s32.totalorder %s179, %s195
    %p197 = scmp.eq.s32.totalorder %s19, 0
    %p198 = por %p196, %p197
    %p199 = scmp.le.s32.totalorder 1, %s13
    %p200 = scmp.lt.s32.totalorder %s13, 4
    %p201 = pnand %p199, %p200
    %p202 = pneg %p201
    // Predicated region
    $region9: #{_lambda_.20} parent=5 // pred_check
      _
    $region10: #{_lambda_.20} parent=5 // pred_check_branch
      %204 = sbr.rel (%p201) target = $region12
    $region11: #{_lambda_.20} parent=5 // pred_region
      %s205 = ssub.s32 %s13, 1
      // Predicated region
      $region13: #{_lambda_.20} parent=11 // pred_check
        %p206 = pneg %p60
      $region14: #{_lambda_.20} parent=11 // pred_check_branch
        %208 = sbr.rel (%p206) target = $region16
      $region15: #{_lambda_.20} parent=11 // pred_region
        _
      $region16: #{_lambda_.20} parent=11 // pred_fallthru
        _
      // Predicated region
      $region17: #{_lambda_.20} parent=11 // pred_check
        %p209 = pneg %p81
      $region18: #{_lambda_.20} parent=11 // pred_check_branch
        %211 = sbr.rel (%p209) target = $region20
      $region19: #{_lambda_.20} parent=11 // pred_region
        _
      $region20: #{_lambda_.20} parent=11 // pred_fallthru
        _
      // Predicated region
      $region21: #{_lambda_.20} parent=11 // pred_check
        %p212 = pneg %p102
      $region22: #{_lambda_.20} parent=11 // pred_check_branch
        %214 = sbr.rel (%p212) target = $region24
      $region23: #{_lambda_.20} parent=11 // pred_region
        _
      $region24: #{_lambda_.20} parent=11 // pred_fallthru
        _
      // Predicated region
      $region25: #{_lambda_.20} parent=11 // pred_check
        %p215 = pneg %p123
      $region26: #{_lambda_.20} parent=11 // pred_check_branch
        %217 = sbr.rel (%p215) target = $region28
      $region27: #{_lambda_.20} parent=11 // pred_region
        _
      $region28: #{_lambda_.20} parent=11 // pred_fallthru
        _
      // Predicated region
      $region29: #{_lambda_.20} parent=11 // pred_check
        %p218 = pneg %p144
      $region30: #{_lambda_.20} parent=11 // pred_check_branch
        %220 = sbr.rel (%p218) target = $region32
      $region31: #{_lambda_.20} parent=11 // pred_region
        _
      $region32: #{_lambda_.20} parent=11 // pred_fallthru
        _
      // Predicated region
      $region33: #{_lambda_.20} parent=11 // pred_check
        %p221 = pneg %p165
      $region34: #{_lambda_.20} parent=11 // pred_check_branch
        %223 = sbr.rel (%p221) target = $region36
      $region35: #{_lambda_.20} parent=11 // pred_region
        _
      $region36: #{_lambda_.20} parent=11 // pred_fallthru
        _
    $region12: #{_lambda_.20} parent=5 // pred_fallthru
      _
    %p224 = scmp.lt.s32.totalorder %s13, 3
    // Predicated region
    $region37: #{_lambda_.20} parent=5 // pred_check
      %p225 = pneg %p224
    $region38: #{_lambda_.20} parent=5 // pred_check_branch
      %227 = sbr.rel (%p225) target = $region40
    $region39: #{_lambda_.20} parent=5 // pred_region
      // Predicated region
      $region41: #{_lambda_.20} parent=39 // pred_check
        %p228 = pneg %p33
      $region42: #{_lambda_.20} parent=39 // pred_check_branch
        %230 = sbr.rel (%p228) target = $region44
      $region43: #{_lambda_.20} parent=39 // pred_region
        %p231 = scmp.lt.s32.totalorder %s13, 2
        %s232 = scalar_select %p231, %s13, 2
        %s233 = smul.addr %s232, 8
        %s234 = scalar_lea.vmem %s0, %s233
      $region44: #{_lambda_.20} parent=39 // pred_fallthru
        _
    $region40: #{_lambda_.20} parent=5 // pred_fallthru
      _
    %p235 = scmp.le.s32.totalorder 1, %s13
    %p236 = scmp.lt.s32.totalorder %s13, 4
    %p237 = pnand %p235, %p236
    %p238 = pneg %p237
    // Predicated region
    $region45: #{_lambda_.20} parent=5 // pred_check
      _
    $region46: #{_lambda_.20} parent=5 // pred_check_branch
      %240 = sbr.rel (%p237) target = $region48
    $region47: #{_lambda_.20} parent=5 // pred_region
      %s241 = ssub.s32 %s13, 1
      %p242 = scmp.lt.s32.totalorder %s18, 2
      %s243 = scalar_select %p242, %s18, 2
      %s244 = smul.addr %s243, 8
      %s245 = scalar_lea.vmem %s0, %s244
      %p246 = pneg %p39
      %p247 = pneg %p36
      %p248 = pneg %p60
      %p249 = pneg %p57
      %p250 = pneg %p81
      %p251 = pneg %p78
      %p252 = pneg %p102
      %p253 = pneg %p99
      %p254 = pneg %p123
      %p255 = pneg %p120
      %p256 = pneg %p144
      %p257 = pneg %p141
      %p258 = pneg %p165
      %p259 = pneg %p162
      %p260 = pneg %p191
      %p261 = pneg %p188
      %p262 = scmp.lt.s32.totalorder %s18, 2
      %s263 = scalar_select %p262, %s18, 2
      %s264 = smul.addr %s263, 8
      %s265 = scalar_lea.vmem %s7, %s264
      %p266 = scmp.lt.s32.totalorder %s18, 2
      %s267 = scalar_select %p266, %s18, 2
      %s268 = smul.addr %s267, 8
      %s269 = scalar_lea.vmem %s0, %s268
      %p270 = scmp.lt.s32.totalorder %s18, 2
      %s271 = scalar_select %p270, %s18, 2
      %s272 = smul.addr %s271, 8
      %s273 = scalar_lea.vmem %s7, %s272
      %v275 = vld [vmem:[%s269] sm:$0xff]
      %v276 = vld [vmem:[%s1] sm:$0x1]
      %v277 = vld [vmem:[%s2] sm:$0x1]
      %vm278 = vcmask 261120
      %v279 = vsel %vm278, %v275, 0.0
      %280 = vadd.xlane.f32.xlu0 %v279
      %v281 = vpop.xlane.xlu0 %280
      %v282 = vrcp.pop 32.0
      %v283 = vmul.f32 %v281, %v282
      %v284 = vsub.f32 %v275, %v283
      %v285 = vmul.f32 %v284, %v284
      %v286 = vsel %vm278, %v285, 0.0
      %287 = vadd.xlane.f32.xlu0 %v286
      %v288 = vpop.xlane.xlu0 %287
      %v289 = vmul.f32 %v288, %v282
      %v290 = vadd.f32 %v289, 1e-05
      %v291 = vrsqrt.pop %v290
      %v292 = vmul.f32 %v284, %v291
      %v294 = vlaneseq
      %v295 = vshrl.u32 %v294, 7
      %v296 = vsub.s32 0, %v295
      %v297 = vrot.slane %v276, %v296
      %v299 = vmul.f32 %v292, %v297
      %v301 = vlaneseq
      %v302 = vshrl.u32 %v301, 7
      %v303 = vsub.s32 0, %v302
      %v304 = vrot.slane %v277, %v303
      %v306 = vadd.f32 %v299, %v304
      %v307 = vpack.c.bf16 %v306, %v306
      %v308 = vld [vmem:[%s3] sm:$0xff]
      %v309 = vld [vmem:[%s3 + $0x8] sm:$0xff]
      %v310 = vld [vmem:[%s3 + $0x10] sm:$0xff]
      %v311 = vld [vmem:[%s3 + $0x18] sm:$0xff]
      %v312 = vpack.c.bf16 %v309, %v308
      %v313 = vpack.c.bf16 %v311, %v310
      %v314 = vld [vmem:[%s4] sm:$0x1]
      %v316 = vlaneseq
      %v317 = vshrl.u32 %v316, 7
      %v318 = vsub.s32 0, %v317
      %v319 = vrot.slane %v314, %v318
      %v322 = vsel %vm278, %v307, 0
      %324 = vmatprep.subr.bf16.mxu0 0
      %325 = vmatpush1.bf16.msra.mxu0 0
      %326 = vmatprep.subr.bf16.mxu0 0
      %327 = vmatpush1.bf16.msra.mxu0 0
      %328 = vmatprep.subr.bf16.mxu0 0
      %329 = vmatpush1.bf16.msra.mxu0 0
      %330 = vmatprep.subr.bf16.mxu0 0
      %331 = vmatpush1.bf16.msra.mxu0 0
      %332 = vmatprep.subr.bf16.mxu0 0
      %333 = vmatpush1.bf16.msra.mxu0 0
      %334 = vmatprep.subr.bf16.mxu0 0
      %335 = vmatpush1.bf16.msra.mxu0 0
      %336 = vmatprep.subr.bf16.mxu0 0
      %337 = vmatpush1.bf16.msra.mxu0 %v313
      %338 = vmatprep.subr.bf16.mxu0 0
      %339 = vmatpush1.bf16.msra.mxu0 %v312
      %340 = vmatprep.subr.bf16.mxu0 0
      %341 = vmatpush2.bf16.msra.mxu0 0
      %342 = vmatprep.subr.bf16.mxu0 0
      %343 = vmatpush2.bf16.msra.mxu0 0
      %344 = vmatprep.subr.bf16.mxu0 0
      %345 = vmatpush2.bf16.msra.mxu0 0
      %346 = vmatprep.subr.bf16.mxu0 0
      %347 = vmatpush2.bf16.msra.mxu0 0
      %348 = vmatprep.subr.bf16.mxu0 0
      %349 = vmatpush2.bf16.msra.mxu0 0
      %350 = vmatprep.subr.bf16.mxu0 0
      %351 = vmatpush2.bf16.msra.mxu0 0
      %352 = vmatprep.subr.bf16.mxu0 0
      %353 = vmatpush2.bf16.msra.mxu0 0
      %354 = vmatprep.subr.bf16.mxu0 0
      %355 = vmatpush2.bf16.msra.mxu0 0
      %356 = vmatprep.mubr.bf16.mxu0 0
      %357 = vmatmul.mubr.bf16.gmra.mxu0 %v322
      %v358 = vpop.f32.mrf.mxu0
      %v359 = vadd.f32 %v319, %v358
      %v360 = vpop.f32.mrf.mxu0
      %v361 = vpop.f32.mrf.mxu0
      %v362 = vpop.f32.mrf.mxu0
      %363 = vdwg.mxu0
      %v364 = vlaneseq
      %v365 = vshrl.u32 %v364, 7
      %v366 = vlaneseq
      %v367 = vand.u32 %v366, 127
      %vm368 = vcmp.le.s32.totalorder %v367, %v365
      %v369 = vmul.f32 %v359, 0.35355338
      %v370 = vpack.c.bf16 %v369, %v369
      %v371 = vpack.c.bf16 %v359, %v359
      %373 = vrot.lane.b32.xlu0 %v371, 96
      %v374 = vpop.permute.xlu0 %373
      %vm375 = vcmask 64512
      %v377 = vsel %vm375, %v370, 0
      %v380 = vsel %vm375, %v374, 0
      %382 = vmatprep.subr.bf16.mxu0 0
      %383 = vmatpush1.bf16.xpose.msra.mxu0 0
      %384 = vmatprep.subr.bf16.mxu0 0
      %385 = vmatpush1.bf16.xpose.msra.mxu0 0
      %386 = vmatprep.subr.bf16.mxu0 0
      %387 = vmatpush1.bf16.xpose.msra.mxu0 0
      %388 = vmatprep.subr.bf16.mxu0 0
      %389 = vmatpush1.bf16.xpose.msra.mxu0 0
      %390 = vmatprep.subr.bf16.mxu0 0
      %391 = vmatpush1.bf16.xpose.msra.mxu0 0
      %392 = vmatprep.subr.bf16.mxu0 0
      %393 = vmatpush1.bf16.xpose.msra.mxu0 0
      %394 = vmatprep.subr.bf16.mxu0 0
      %395 = vmatpush1.bf16.xpose.msra.mxu0 0
      %396 = vmatprep.subr.bf16.mxu0 0
      %397 = vmatpush1.bf16.xpose.msra.mxu0 %v380
      %398 = vmatprep.subr.bf16.mxu0 0
      %399 = vmatpush2.bf16.xpose.msra.mxu0 0
      %400 = vmatprep.subr.bf16.mxu0 0
      %401 = vmatpush2.bf16.xpose.msra.mxu0 0
      %402 = vmatprep.subr.bf16.mxu0 0
      %403 = vmatpush2.bf16.xpose.msra.mxu0 0
      %404 = vmatprep.subr.bf16.mxu0 0
      %405 = vmatpush2.bf16.xpose.msra.mxu0 0
      %406 = vmatprep.subr.bf16.mxu0 0
      %407 = vmatpush2.bf16.xpose.msra.mxu0 0
      %408 = vmatprep.subr.bf16.mxu0 0
      %409 = vmatpush2.bf16.xpose.msra.mxu0 0
      %410 = vmatprep.subr.bf16.mxu0 0
      %411 = vmatpush2.bf16.xpose.msra.mxu0 0
      %412 = vmatprep.subr.bf16.mxu0 0
      %413 = vmatpush2.bf16.xpose.msra.mxu0 0
      %414 = vmatprep.mubr.bf16.mxu0 0
      %415 = vmatmul.mubr.bf16.gmra.mxu0 %v377
      %v416 = vpop.f32.mrf.mxu0
      %v417 = vadd.f32 0.0, %v416
      %v418 = vpop.f32.mrf.mxu0
      %v419 = vpop.f32.mrf.mxu0
      %v420 = vpop.f32.mrf.mxu0
      %421 = vdwg.mxu0
      %v422 = vsel %vm368, %v417, -3.4028235e+38
      %v423 = vsel %vm375, %v422, -inf
      %424 = vmax.xlane.f32.xlu0 %v423
      %v425 = vpop.xlane.xlu0 %424
      %v426 = vsub.f32 %v422, %v425
      %v427 = vmul.f32 %v426, 1.442695
      %v428 = vpow.pop %v427
      %v429 = vsel %vm375, %v428, 0.0
      %430 = vadd.xlane.f32.xlu0 %v429
      %v431 = vpop.xlane.xlu0 %430
      %v432 = vrcp.pop %v431
      %v433 = vpack.c.bf16 %v428, %v428
      %434 = vrot.lane.b32.xlu0 %v371, 64
      %v435 = vpop.permute.xlu0 %434
      %v437 = vsel %vm375, %v433, 0
      %vm439 = vcmask 1043456
      %v441 = vsel %vm439, %v435, 0
      %443 = vmatprep.subr.bf16.mxu0 0
      %444 = vmatpush1.bf16.msra.mxu0 0
      %445 = vmatprep.subr.bf16.mxu0 0
      %446 = vmatpush1.bf16.msra.mxu0 0
      %447 = vmatprep.subr.bf16.mxu0 0
      %448 = vmatpush1.bf16.msra.mxu0 0
      %449 = vmatprep.subr.bf16.mxu0 0
      %450 = vmatpush1.bf16.msra.mxu0 0
      %451 = vmatprep.subr.bf16.mxu0 0
      %452 = vmatpush1.bf16.msra.mxu0 0
      %453 = vmatprep.subr.bf16.mxu0 0
      %454 = vmatpush1.bf16.msra.mxu0 0
      %455 = vmatprep.subr.bf16.mxu0 0
      %456 = vmatpush1.bf16.msra.mxu0 0
      %457 = vmatprep.subr.bf16.mxu0 0
      %458 = vmatpush1.bf16.msra.mxu0 %v441
      %459 = vmatprep.subr.bf16.mxu0 0
      %460 = vmatpush2.bf16.msra.mxu0 0
      %461 = vmatprep.subr.bf16.mxu0 0
      %462 = vmatpush2.bf16.msra.mxu0 0
      %463 = vmatprep.subr.bf16.mxu0 0
      %464 = vmatpush2.bf16.msra.mxu0 0
      %465 = vmatprep.subr.bf16.mxu0 0
      %466 = vmatpush2.bf16.msra.mxu0 0
      %467 = vmatprep.subr.bf16.mxu0 0
      %468 = vmatpush2.bf16.msra.mxu0 0
      %469 = vmatprep.subr.bf16.mxu0 0
      %470 = vmatpush2.bf16.msra.mxu0 0
      %471 = vmatprep.subr.bf16.mxu0 0
      %472 = vmatpush2.bf16.msra.mxu0 0
      %473 = vmatprep.subr.bf16.mxu0 0
      %474 = vmatpush2.bf16.msra.mxu0 0
      %475 = vmatprep.mubr.bf16.mxu0 0
      %476 = vmatmul.mubr.bf16.gmra.mxu0 %v437
      %v477 = vpop.f32.mrf.mxu0
      %v478 = vadd.f32 0.0, %v477
      %v479 = vpop.f32.mrf.mxu0
      %v480 = vpop.f32.mrf.mxu0
      %v481 = vpop.f32.mrf.mxu0
      %482 = vdwg.mxu0
      %v483 = vmul.f32 %v478, %v432
      %v484 = vld [vmem:[%s5] sm:$0xff]
      %v485 = vpack.c.bf16 %v483, %v483
      %v486 = vpack.c.bf16 %v484, %v484
      %488 = vrot.lane.b32.xlu0 %v370, 120
      %v489 = vpop.permute.xlu0 %488
      %490 = vrot.lane.b32.xlu0 %v371, 88
      %v491 = vpop.permute.xlu0 %490
      %v493 = vsel %vm375, %v489, 0
      %v496 = vsel %vm375, %v491, 0
      %498 = vmatprep.subr.bf16.mxu0 0
      %499 = vmatpush1.bf16.xpose.msra.mxu0 0
      %500 = vmatprep.subr.bf16.mxu0 0
      %501 = vmatpush1.bf16.xpose.msra.mxu0 0
      %502 = vmatprep.subr.bf16.mxu0 0
      %503 = vmatpush1.bf16.xpose.msra.mxu0 0
      %504 = vmatprep.subr.bf16.mxu0 0
      %505 = vmatpush1.bf16.xpose.msra.mxu0 0
      %506 = vmatprep.subr.bf16.mxu0 0
      %507 = vmatpush1.bf16.xpose.msra.mxu0 0
      %508 = vmatprep.subr.bf16.mxu0 0
      %509 = vmatpush1.bf16.xpose.msra.mxu0 0
      %510 = vmatprep.subr.bf16.mxu0 0
      %511 = vmatpush1.bf16.xpose.msra.mxu0 0
      %512 = vmatprep.subr.bf16.mxu0 0
      %513 = vmatpush1.bf16.xpose.msra.mxu0 %v496
      %514 = vmatprep.subr.bf16.mxu0 0
      %515 = vmatpush2.bf16.xpose.msra.mxu0 0
      %516 = vmatprep.subr.bf16.mxu0 0
      %517 = vmatpush2.bf16.xpose.msra.mxu0 0
      %518 = vmatprep.subr.bf16.mxu0 0
      %519 = vmatpush2.bf16.xpose.msra.mxu0 0
      %520 = vmatprep.subr.bf16.mxu0 0
      %521 = vmatpush2.bf16.xpose.msra.mxu0 0
      %522 = vmatprep.subr.bf16.mxu0 0
      %523 = vmatpush2.bf16.xpose.msra.mxu0 0
      %524 = vmatprep.subr.bf16.mxu0 0
      %525 = vmatpush2.bf16.xpose.msra.mxu0 0
      %526 = vmatprep.subr.bf16.mxu0 0
      %527 = vmatpush2.bf16.xpose.msra.mxu0 0
      %528 = vmatprep.subr.bf16.mxu0 0
      %529 = vmatpush2.bf16.xpose.msra.mxu0 0
      %530 = vmatprep.mubr.bf16.mxu0 0
      %531 = vmatmul.mubr.bf16.gmra.mxu0 %v493
      %v532 = vpop.f32.mrf.mxu0
      %v533 = vadd.f32 0.0, %v532
      %v534 = vpop.f32.mrf.mxu0
      %v535 = vpop.f32.mrf.mxu0
      %v536 = vpop.f32.mrf.mxu0
      %537 = vdwg.mxu0
      %v538 = vsel %vm368, %v533, -3.4028235e+38
      %v539 = vsel %vm375, %v538, -inf
      %540 = vmax.xlane.f32.xlu0 %v539
      %v541 = vpop.xlane.xlu0 %540
      %v542 = vsub.f32 %v538, %v541
      %v543 = vmul.f32 %v542, 1.442695
      %v544 = vpow.pop %v543
      %v545 = vsel %vm375, %v544, 0.0
      %546 = vadd.xlane.f32.xlu0 %v545
      %v547 = vpop.xlane.xlu0 %546
      %v548 = vrcp.pop %v547
      %v549 = vpack.c.bf16 %v544, %v544
      %550 = vrot.lane.b32.xlu0 %v371, 56
      %v551 = vpop.permute.xlu0 %550
      %v553 = vsel %vm375, %v549, 0
      %v556 = vsel %vm439, %v551, 0
      %558 = vmatprep.subr.bf16.mxu0 0
      %559 = vmatpush1.bf16.msra.mxu0 0
      %560 = vmatprep.subr.bf16.mxu0 0
      %561 = vmatpush1.bf16.msra.mxu0 0
      %562 = vmatprep.subr.bf16.mxu0 0
      %563 = vmatpush1.bf16.msra.mxu0 0
      %564 = vmatprep.subr.bf16.mxu0 0
      %565 = vmatpush1.bf16.msra.mxu0 0
      %566 = vmatprep.subr.bf16.mxu0 0
      %567 = vmatpush1.bf16.msra.mxu0 0
      %568 = vmatprep.subr.bf16.mxu0 0
      %569 = vmatpush1.bf16.msra.mxu0 0
      %570 = vmatprep.subr.bf16.mxu0 0
      %571 = vmatpush1.bf16.msra.mxu0 0
      %572 = vmatprep.subr.bf16.mxu0 0
      %573 = vmatpush1.bf16.msra.mxu0 %v556
      %574 = vmatprep.subr.bf16.mxu0 0
      %575 = vmatpush2.bf16.msra.mxu0 0
      %576 = vmatprep.subr.bf16.mxu0 0
      %577 = vmatpush2.bf16.msra.mxu0 0
      %578 = vmatprep.subr.bf16.mxu0 0
      %579 = vmatpush2.bf16.msra.mxu0 0
      %580 = vmatprep.subr.bf16.mxu0 0
      %581 = vmatpush2.bf16.msra.mxu0 0
      %582 = vmatprep.subr.bf16.mxu0 0
      %583 = vmatpush2.bf16.msra.mxu0 0
      %584 = vmatprep.subr.bf16.mxu0 0
      %585 = vmatpush2.bf16.msra.mxu0 0
      %586 = vmatprep.subr.bf16.mxu0 0
      %587 = vmatpush2.bf16.msra.mxu0 0
      %588 = vmatprep.subr.bf16.mxu0 0
      %589 = vmatpush2.bf16.msra.mxu0 0
      %590 = vmatprep.mubr.bf16.mxu0 0
      %591 = vmatmul.mubr.bf16.gmra.mxu0 %v553
      %v592 = vpop.f32.mrf.mxu0
      %v593 = vadd.f32 0.0, %v592
      %v594 = vpop.f32.mrf.mxu0
      %v595 = vpop.f32.mrf.mxu0
      %v596 = vpop.f32.mrf.mxu0
      %597 = vdwg.mxu0
      %v598 = vmul.f32 %v593, %v548
      %v599 = vld [vmem:[%s5 + $0x8] sm:$0xff]
      %v600 = vpack.c.bf16 %v598, %v598
      %v601 = vpack.c.bf16 %v599, %v599
      %v603 = vsel %vm375, %v600, 0
      %v606 = vsel %vm439, %v601, 0
      %608 = vmatprep.subr.bf16.mxu0 0
      %609 = vmatpush1.bf16.msra.mxu0 0
      %610 = vmatprep.subr.bf16.mxu0 0
      %611 = vmatpush1.bf16.msra.mxu0 0
      %612 = vmatprep.subr.bf16.mxu0 0
      %613 = vmatpush1.bf16.msra.mxu0 0
      %614 = vmatprep.subr.bf16.mxu0 0
      %615 = vmatpush1.bf16.msra.mxu0 0
      %616 = vmatprep.subr.bf16.mxu0 0
      %617 = vmatpush1.bf16.msra.mxu0 0
      %618 = vmatprep.subr.bf16.mxu0 0
      %619 = vmatpush1.bf16.msra.mxu0 0
      %620 = vmatprep.subr.bf16.mxu0 0
      %621 = vmatpush1.bf16.msra.mxu0 0
      %622 = vmatprep.subr.bf16.mxu0 0
      %623 = vmatpush1.bf16.msra.mxu0 %v606
      %624 = vmatprep.subr.bf16.mxu0 0
      %625 = vmatpush2.bf16.msra.mxu0 0
      %626 = vmatprep.subr.bf16.mxu0 0
      %627 = vmatpush2.bf16.msra.mxu0 0
      %628 = vmatprep.subr.bf16.mxu0 0
      %629 = vmatpush2.bf16.msra.mxu0 0
      %630 = vmatprep.subr.bf16.mxu0 0
      %631 = vmatpush2.bf16.msra.mxu0 0
      %632 = vmatprep.subr.bf16.mxu0 0
      %633 = vmatpush2.bf16.msra.mxu0 0
      %634 = vmatprep.subr.bf16.mxu0 0
      %635 = vmatpush2.bf16.msra.mxu0 0
      %636 = vmatprep.subr.bf16.mxu0 0
      %637 = vmatpush2.bf16.msra.mxu0 0
      %638 = vmatprep.subr.bf16.mxu0 0
      %639 = vmatpush2.bf16.msra.mxu0 0
      %640 = vmatprep.mubr.bf16.mxu0 0
      %641 = vmatmul.mubr.bf16.gmra.mxu0 %v603
      %v642 = vpop.f32.mrf.mxu0
      %v643 = vadd.f32 0.0, %v642
      %v644 = vpop.f32.mrf.mxu0
      %v645 = vpop.f32.mrf.mxu0
      %v646 = vpop.f32.mrf.mxu0
      %647 = vdwg.mxu0
      %v649 = vsel %vm375, %v485, 0
      %v652 = vsel %vm439, %v486, 0
      %654 = vmatprep.subr.bf16.mxu0 0
      %655 = vmatpush1.bf16.msra.mxu0 0
      %656 = vmatprep.subr.bf16.mxu0 0
      %657 = vmatpush1.bf16.msra.mxu0 0
      %658 = vmatprep.subr.bf16.mxu0 0
      %659 = vmatpush1.bf16.msra.mxu0 0
      %660 = vmatprep.subr.bf16.mxu0 0
      %661 = vmatpush1.bf16.msra.mxu0 0
      %662 = vmatprep.subr.bf16.mxu0 0
      %663 = vmatpush1.bf16.msra.mxu0 0
      %664 = vmatprep.subr.bf16.mxu0 0
      %665 = vmatpush1.bf16.msra.mxu0 0
      %666 = vmatprep.subr.bf16.mxu0 0
      %667 = vmatpush1.bf16.msra.mxu0 0
      %668 = vmatprep.subr.bf16.mxu0 0
      %669 = vmatpush1.bf16.msra.mxu0 %v652
      %670 = vmatprep.subr.bf16.mxu0 0
      %671 = vmatpush2.bf16.msra.mxu0 0
      %672 = vmatprep.subr.bf16.mxu0 0
      %673 = vmatpush2.bf16.msra.mxu0 0
      %674 = vmatprep.subr.bf16.mxu0 0
      %675 = vmatpush2.bf16.msra.mxu0 0
      %676 = vmatprep.subr.bf16.mxu0 0
      %677 = vmatpush2.bf16.msra.mxu0 0
      %678 = vmatprep.subr.bf16.mxu0 0
      %679 = vmatpush2.bf16.msra.mxu0 0
      %680 = vmatprep.subr.bf16.mxu0 0
      %681 = vmatpush2.bf16.msra.mxu0 0
      %682 = vmatprep.subr.bf16.mxu0 0
      %683 = vmatpush2.bf16.msra.mxu0 0
      %684 = vmatprep.subr.bf16.mxu0 0
      %685 = vmatpush2.bf16.msra.mxu0 0
      %686 = vmatprep.mubr.bf16.mxu0 0
      %687 = vmatmul.mubr.bf16.gmra.mxu0 %v649
      %v688 = vpop.f32.mrf.mxu0
      %v689 = vadd.f32 %v643, %v688
      %v690 = vpop.f32.mrf.mxu0
      %v691 = vpop.f32.mrf.mxu0
      %v692 = vpop.f32.mrf.mxu0
      %693 = vdwg.mxu0
      %694 = vrot.lane.b32.xlu0 %v370, 112
      %v695 = vpop.permute.xlu0 %694
      %696 = vrot.lane.b32.xlu0 %v371, 80
      %v697 = vpop.permute.xlu0 %696
      %v699 = vsel %vm375, %v695, 0
      %v702 = vsel %vm375, %v697, 0
      %704 = vmatprep.subr.bf16.mxu0 0
      %705 = vmatpush1.bf16.xpose.msra.mxu0 0
      %706 = vmatprep.subr.bf16.mxu0 0
      %707 = vmatpush1.bf16.xpose.msra.mxu0 0
      %708 = vmatprep.subr.bf16.mxu0 0
      %709 = vmatpush1.bf16.xpose.msra.mxu0 0
      %710 = vmatprep.subr.bf16.mxu0 0
      %711 = vmatpush1.bf16.xpose.msra.mxu0 0
      %712 = vmatprep.subr.bf16.mxu0 0
      %713 = vmatpush1.bf16.xpose.msra.mxu0 0
      %714 = vmatprep.subr.bf16.mxu0 0
      %715 = vmatpush1.bf16.xpose.msra.mxu0 0
      %716 = vmatprep.subr.bf16.mxu0 0
      %717 = vmatpush1.bf16.xpose.msra.mxu0 0
      %718 = vmatprep.subr.bf16.mxu0 0
      %719 = vmatpush1.bf16.xpose.msra.mxu0 %v702
      %720 = vmatprep.subr.bf16.mxu0 0
      %721 = vmatpush2.bf16.xpose.msra.mxu0 0
      %722 = vmatprep.subr.bf16.mxu0 0
      %723 = vmatpush2.bf16.xpose.msra.mxu0 0
      %724 = vmatprep.subr.bf16.mxu0 0
      %725 = vmatpush2.bf16.xpose.msra.mxu0 0
      %726 = vmatprep.subr.bf16.mxu0 0
      %727 = vmatpush2.bf16.xpose.msra.mxu0 0
      %728 = vmatprep.subr.bf16.mxu0 0
      %729 = vmatpush2.bf16.xpose.msra.mxu0 0
      %730 = vmatprep.subr.bf16.mxu0 0
      %731 = vmatpush2.bf16.xpose.msra.mxu0 0
      %732 = vmatprep.subr.bf16.mxu0 0
      %733 = vmatpush2.bf16.xpose.msra.mxu0 0
      %734 = vmatprep.subr.bf16.mxu0 0
      %735 = vmatpush2.bf16.xpose.msra.mxu0 0
      %736 = vmatprep.mubr.bf16.mxu0 0
      %737 = vmatmul.mubr.bf16.gmra.mxu0 %v699
      %v738 = vpop.f32.mrf.mxu0
      %v739 = vadd.f32 0.0, %v738
      %v740 = vpop.f32.mrf.mxu0
      %v741 = vpop.f32.mrf.mxu0
      %v742 = vpop.f32.mrf.mxu0
      %743 = vdwg.mxu0
      %v744 = vsel %vm368, %v739, -3.4028235e+38
      %v745 = vsel %vm375, %v744, -inf
      %746 = vmax.xlane.f32.xlu0 %v745
      %v747 = vpop.xlane.xlu0 %746
      %v748 = vsub.f32 %v744, %v747
      %v749 = vmul.f32 %v748, 1.442695
      %v750 = vpow.pop %v749
      %v751 = vsel %vm375, %v750, 0.0
      %752 = vadd.xlane.f32.xlu0 %v751
      %v753 = vpop.xlane.xlu0 %752
      %v754 = vrcp.pop %v753
      %v755 = vpack.c.bf16 %v750, %v750
      %756 = vrot.lane.b32.xlu0 %v371, 48
      %v757 = vpop.permute.xlu0 %756
      %v759 = vsel %vm375, %v755, 0
      %v762 = vsel %vm439, %v757, 0
      %764 = vmatprep.subr.bf16.mxu0 0
      %765 = vmatpush1.bf16.msra.mxu0 0
      %766 = vmatprep.subr.bf16.mxu0 0
      %767 = vmatpush1.bf16.msra.mxu0 0
      %768 = vmatprep.subr.bf16.mxu0 0
      %769 = vmatpush1.bf16.msra.mxu0 0
      %770 = vmatprep.subr.bf16.mxu0 0
      %771 = vmatpush1.bf16.msra.mxu0 0
      %772 = vmatprep.subr.bf16.mxu0 0
      %773 = vmatpush1.bf16.msra.mxu0 0
      %774 = vmatprep.subr.bf16.mxu0 0
      %775 = vmatpush1.bf16.msra.mxu0 0
      %776 = vmatprep.subr.bf16.mxu0 0
      %777 = vmatpush1.bf16.msra.mxu0 0
      %778 = vmatprep.subr.bf16.mxu0 0
      %779 = vmatpush1.bf16.msra.mxu0 %v762
      %780 = vmatprep.subr.bf16.mxu0 0
      %781 = vmatpush2.bf16.msra.mxu0 0
      %782 = vmatprep.subr.bf16.mxu0 0
      %783 = vmatpush2.bf16.msra.mxu0 0
      %784 = vmatprep.subr.bf16.mxu0 0
      %785 = vmatpush2.bf16.msra.mxu0 0
      %786 = vmatprep.subr.bf16.mxu0 0
      %787 = vmatpush2.bf16.msra.mxu0 0
      %788 = vmatprep.subr.bf16.mxu0 0
      %789 = vmatpush2.bf16.msra.mxu0 0
      %790 = vmatprep.subr.bf16.mxu0 0
      %791 = vmatpush2.bf16.msra.mxu0 0
      %792 = vmatprep.subr.bf16.mxu0 0
      %793 = vmatpush2.bf16.msra.mxu0 0
      %794 = vmatprep.subr.bf16.mxu0 0
      %795 = vmatpush2.bf16.msra.mxu0 0
      %796 = vmatprep.mubr.bf16.mxu0 0
      %797 = vmatmul.mubr.bf16.gmra.mxu0 %v759
      %v798 = vpop.f32.mrf.mxu0
      %v799 = vadd.f32 0.0, %v798
      %v800 = vpop.f32.mrf.mxu0
      %v801 = vpop.f32.mrf.mxu0
      %v802 = vpop.f32.mrf.mxu0
      %803 = vdwg.mxu0
      %v804 = vmul.f32 %v799, %v754
      %v805 = vld [vmem:[%s5 + $0x10] sm:$0xff]
      %v806 = vpack.c.bf16 %v804, %v804
      %v807 = vpack.c.bf16 %v805, %v805
      %v809 = vsel %vm375, %v806, 0
      %v812 = vsel %vm439, %v807, 0
      %814 = vmatprep.subr.bf16.mxu0 0
      %815 = vmatpush1.bf16.msra.mxu0 0
      %816 = vmatprep.subr.bf16.mxu0 0
      %817 = vmatpush1.bf16.msra.mxu0 0
      %818 = vmatprep.subr.bf16.mxu0 0
      %819 = vmatpush1.bf16.msra.mxu0 0
      %820 = vmatprep.subr.bf16.mxu0 0
      %821 = vmatpush1.bf16.msra.mxu0 0
      %822 = vmatprep.subr.bf16.mxu0 0
      %823 = vmatpush1.bf16.msra.mxu0 0
      %824 = vmatprep.subr.bf16.mxu0 0
      %825 = vmatpush1.bf16.msra.mxu0 0
      %826 = vmatprep.subr.bf16.mxu0 0
      %827 = vmatpush1.bf16.msra.mxu0 0
      %828 = vmatprep.subr.bf16.mxu0 0
      %829 = vmatpush1.bf16.msra.mxu0 %v812
      %830 = vmatprep.subr.bf16.mxu0 0
      %831 = vmatpush2.bf16.msra.mxu0 0
      %832 = vmatprep.subr.bf16.mxu0 0
      %833 = vmatpush2.bf16.msra.mxu0 0
      %834 = vmatprep.subr.bf16.mxu0 0
      %835 = vmatpush2.bf16.msra.mxu0 0
      %836 = vmatprep.subr.bf16.mxu0 0
      %837 = vmatpush2.bf16.msra.mxu0 0
      %838 = vmatprep.subr.bf16.mxu0 0
      %839 = vmatpush2.bf16.msra.mxu0 0
      %840 = vmatprep.subr.bf16.mxu0 0
      %841 = vmatpush2.bf16.msra.mxu0 0
      %842 = vmatprep.subr.bf16.mxu0 0
      %843 = vmatpush2.bf16.msra.mxu0 0
      %844 = vmatprep.subr.bf16.mxu0 0
      %845 = vmatpush2.bf16.msra.mxu0 0
      %846 = vmatprep.mubr.bf16.mxu0 0
      %847 = vmatmul.mubr.bf16.gmra.mxu0 %v809
      %v848 = vpop.f32.mrf.mxu0
      %v849 = vadd.f32 0.0, %v848
      %v850 = vpop.f32.mrf.mxu0
      %v851 = vpop.f32.mrf.mxu0
      %v852 = vpop.f32.mrf.mxu0
      %853 = vdwg.mxu0
      %v854 = vadd.f32 %v689, %v849
      %855 = vrot.lane.b32.xlu0 %v370, 104
      %v856 = vpop.permute.xlu0 %855
      %857 = vrot.lane.b32.xlu0 %v371, 72
      %v858 = vpop.permute.xlu0 %857
      %v860 = vsel %vm375, %v856, 0
      %v863 = vsel %vm375, %v858, 0
      %865 = vmatprep.subr.bf16.mxu0 0
      %866 = vmatpush1.bf16.xpose.msra.mxu0 0
      %867 = vmatprep.subr.bf16.mxu0 0
      %868 = vmatpush1.bf16.xpose.msra.mxu0 0
      %869 = vmatprep.subr.bf16.mxu0 0
      %870 = vmatpush1.bf16.xpose.msra.mxu0 0
      %871 = vmatprep.subr.bf16.mxu0 0
      %872 = vmatpush1.bf16.xpose.msra.mxu0 0
      %873 = vmatprep.subr.bf16.mxu0 0
      %874 = vmatpush1.bf16.xpose.msra.mxu0 0
      %875 = vmatprep.subr.bf16.mxu0 0
      %876 = vmatpush1.bf16.xpose.msra.mxu0 0
      %877 = vmatprep.subr.bf16.mxu0 0
      %878 = vmatpush1.bf16.xpose.msra.mxu0 0
      %879 = vmatprep.subr.bf16.mxu0 0
      %880 = vmatpush1.bf16.xpose.msra.mxu0 %v863
      %881 = vmatprep.subr.bf16.mxu0 0
      %882 = vmatpush2.bf16.xpose.msra.mxu0 0
      %883 = vmatprep.subr.bf16.mxu0 0
      %884 = vmatpush2.bf16.xpose.msra.mxu0 0
      %885 = vmatprep.subr.bf16.mxu0 0
      %886 = vmatpush2.bf16.xpose.msra.mxu0 0
      %887 = vmatprep.subr.bf16.mxu0 0
      %888 = vmatpush2.bf16.xpose.msra.mxu0 0
      %889 = vmatprep.subr.bf16.mxu0 0
      %890 = vmatpush2.bf16.xpose.msra.mxu0 0
      %891 = vmatprep.subr.bf16.mxu0 0
      %892 = vmatpush2.bf16.xpose.msra.mxu0 0
      %893 = vmatprep.subr.bf16.mxu0 0
      %894 = vmatpush2.bf16.xpose.msra.mxu0 0
      %895 = vmatprep.subr.bf16.mxu0 0
      %896 = vmatpush2.bf16.xpose.msra.mxu0 0
      %897 = vmatprep.mubr.bf16.mxu0 0
      %898 = vmatmul.mubr.bf16.gmra.mxu0 %v860
      %v899 = vpop.f32.mrf.mxu0
      %v900 = vadd.f32 0.0, %v899
      %v901 = vpop.f32.mrf.mxu0
      %v902 = vpop.f32.mrf.mxu0
      %v903 = vpop.f32.mrf.mxu0
      %904 = vdwg.mxu0
      %v905 = vsel %vm368, %v900, -3.4028235e+38
      %v906 = vsel %vm375, %v905, -inf
      %907 = vmax.xlane.f32.xlu0 %v906
      %v908 = vpop.xlane.xlu0 %907
      %v909 = vsub.f32 %v905, %v908
      %v910 = vmul.f32 %v909, 1.442695
      %v911 = vpow.pop %v910
      %v912 = vsel %vm375, %v911, 0.0
      %913 = vadd.xlane.f32.xlu0 %v912
      %v914 = vpop.xlane.xlu0 %913
      %v915 = vrcp.pop %v914
      %v916 = vpack.c.bf16 %v911, %v911
      %917 = vrot.lane.b32.xlu0 %v371, 40
      %v918 = vpop.permute.xlu0 %917
      %v920 = vsel %vm375, %v916, 0
      %v923 = vsel %vm439, %v918, 0
      %925 = vmatprep.subr.bf16.mxu0 0
      %926 = vmatpush1.bf16.msra.mxu0 0
      %927 = vmatprep.subr.bf16.mxu0 0
      %928 = vmatpush1.bf16.msra.mxu0 0
      %929 = vmatprep.subr.bf16.mxu0 0
      %930 = vmatpush1.bf16.msra.mxu0 0
      %931 = vmatprep.subr.bf16.mxu0 0
      %932 = vmatpush1.bf16.msra.mxu0 0
      %933 = vmatprep.subr.bf16.mxu0 0
      %934 = vmatpush1.bf16.msra.mxu0 0
      %935 = vmatprep.subr.bf16.mxu0 0
      %936 = vmatpush1.bf16.msra.mxu0 0
      %937 = vmatprep.subr.bf16.mxu0 0
      %938 = vmatpush1.bf16.msra.mxu0 0
      %939 = vmatprep.subr.bf16.mxu0 0
      %940 = vmatpush1.bf16.msra.mxu0 %v923
      %941 = vmatprep.subr.bf16.mxu0 0
      %942 = vmatpush2.bf16.msra.mxu0 0
      %943 = vmatprep.subr.bf16.mxu0 0
      %944 = vmatpush2.bf16.msra.mxu0 0
      %945 = vmatprep.subr.bf16.mxu0 0
      %946 = vmatpush2.bf16.msra.mxu0 0
      %947 = vmatprep.subr.bf16.mxu0 0
      %948 = vmatpush2.bf16.msra.mxu0 0
      %949 = vmatprep.subr.bf16.mxu0 0
      %950 = vmatpush2.bf16.msra.mxu0 0
      %951 = vmatprep.subr.bf16.mxu0 0
      %952 = vmatpush2.bf16.msra.mxu0 0
      %953 = vmatprep.subr.bf16.mxu0 0
      %954 = vmatpush2.bf16.msra.mxu0 0
      %955 = vmatprep.subr.bf16.mxu0 0
      %956 = vmatpush2.bf16.msra.mxu0 0
      %957 = vmatprep.mubr.bf16.mxu0 0
      %958 = vmatmul.mubr.bf16.gmra.mxu0 %v920
      %v959 = vpop.f32.mrf.mxu0
      %v960 = vadd.f32 0.0, %v959
      %v961 = vpop.f32.mrf.mxu0
      %v962 = vpop.f32.mrf.mxu0
      %v963 = vpop.f32.mrf.mxu0
      %964 = vdwg.mxu0
      %v965 = vmul.f32 %v960, %v915
      %v966 = vld [vmem:[%s5 + $0x18] sm:$0xff]
      %v967 = vpack.c.bf16 %v965, %v965
      %v968 = vpack.c.bf16 %v966, %v966
      %v970 = vsel %vm375, %v967, 0
      %v973 = vsel %vm439, %v968, 0
      %975 = vmatprep.subr.bf16.mxu0 0
      %976 = vmatpush1.bf16.msra.mxu0 0
      %977 = vmatprep.subr.bf16.mxu0 0
      %978 = vmatpush1.bf16.msra.mxu0 0
      %979 = vmatprep.subr.bf16.mxu0 0
      %980 = vmatpush1.bf16.msra.mxu0 0
      %981 = vmatprep.subr.bf16.mxu0 0
      %982 = vmatpush1.bf16.msra.mxu0 0
      %983 = vmatprep.subr.bf16.mxu0 0
      %984 = vmatpush1.bf16.msra.mxu0 0
      %985 = vmatprep.subr.bf16.mxu0 0
      %986 = vmatpush1.bf16.msra.mxu0 0
      %987 = vmatprep.subr.bf16.mxu0 0
      %988 = vmatpush1.bf16.msra.mxu0 0
      %989 = vmatprep.subr.bf16.mxu0 0
      %990 = vmatpush1.bf16.msra.mxu0 %v973
      %991 = vmatprep.subr.bf16.mxu0 0
      %992 = vmatpush2.bf16.msra.mxu0 0
      %993 = vmatprep.subr.bf16.mxu0 0
      %994 = vmatpush2.bf16.msra.mxu0 0
      %995 = vmatprep.subr.bf16.mxu0 0
      %996 = vmatpush2.bf16.msra.mxu0 0
      %997 = vmatprep.subr.bf16.mxu0 0
      %998 = vmatpush2.bf16.msra.mxu0 0
      %999 = vmatprep.subr.bf16.mxu0 0
      %1000 = vmatpush2.bf16.msra.mxu0 0
      %1001 = vmatprep.subr.bf16.mxu0 0
      %1002 = vmatpush2.bf16.msra.mxu0 0
      %1003 = vmatprep.subr.bf16.mxu0 0
      %1004 = vmatpush2.bf16.msra.mxu0 0
      %1005 = vmatprep.subr.bf16.mxu0 0
      %1006 = vmatpush2.bf16.msra.mxu0 0
      %1007 = vmatprep.mubr.bf16.mxu0 0
      %1008 = vmatmul.mubr.bf16.gmra.mxu0 %v970
      %v1009 = vpop.f32.mrf.mxu0
      %v1010 = vadd.f32 0.0, %v1009
      %v1011 = vpop.f32.mrf.mxu0
      %v1012 = vpop.f32.mrf.mxu0
      %v1013 = vpop.f32.mrf.mxu0
      %1014 = vdwg.mxu0
      %v1015 = vadd.f32 %v854, %v1010
      %v1016 = vadd.f32 %v275, %v1015
      %v1017 = vld [vmem:[%s6] sm:$0x1]
      %v1019 = vlaneseq
      %v1020 = vshrl.u32 %v1019, 7
      %v1021 = vsub.s32 0, %v1020
      %v1022 = vrot.slane %v1017, %v1021
      %v1024 = vadd.f32 %v1016, %v1022
      %1025 = vst.msk [vmem:[%s273] sm:$0xff] %vm278, %v1024
      %p1026 = scmp.lt.s32.totalorder %s18, 2
      %s1027 = scalar_select %p1026, %s18, 2
      %s1028 = smul.addr %s1027, 8
      %s1029 = scalar_lea.vmem %s7, %s1028
      // Predicated region
      $region49: #{_lambda_.20} parent=47 // pred_check
        %p1030 = pneg %p188
      $region50: #{_lambda_.20} parent=47 // pred_check_branch
        %1032 = sbr.rel (%p1030) target = $region52
      $region51: #{_lambda_.20} parent=47 // pred_region
        _
      $region52: #{_lambda_.20} parent=47 // pred_fallthru
        _
    $region48: #{_lambda_.20} parent=5 // pred_fallthru
      _
    %p1033 = scmp.le.s32.totalorder 2, %s13
    // Predicated region
    $region53: #{_lambda_.20} parent=5 // pred_check
      %p1034 = pneg %p1033
    $region54: #{_lambda_.20} parent=5 // pred_check_branch
      %1036 = sbr.rel (%p1034) target = $region56
    $region55: #{_lambda_.20} parent=5 // pred_region
      %s1037 = ssub.s32 %s13, 2
      // Predicated region
      $region57: #{_lambda_.20} parent=55 // pred_check
        %p1038 = pneg %p194
      $region58: #{_lambda_.20} parent=55 // pred_check_branch
        %1040 = sbr.rel (%p1038) target = $region60
      $region59: #{_lambda_.20} parent=55 // pred_region
        %p1041 = scmp.lt.s32.totalorder %s19, 2
        %s1042 = scalar_select %p1041, %s19, 2
        %s1043 = smul.addr %s1042, 8
        %s1044 = scalar_lea.vmem %s7, %s1043
      $region60: #{_lambda_.20} parent=55 // pred_fallthru
        _
    $region56: #{_lambda_.20} parent=5 // pred_fallthru
      _
  $region6: #{_lambda_.20} parent=0 // loop_footer
    %s17 = sadd.s32 1, %s13
  $region7: #{_lambda_.20} parent=0 // loop_footer_branch
    %12 = sbr.rel target = $region3
  $region8: #{_lambda_.20} parent=0 // loop_exit
    _

// kernel: _lambda_.22
$region0: #{_lambda_.22}
  #allocation0 [shape = 'u32[]', space=smem, size = 0x4, offset = 0x4, fixed_abs, tag = 'smem constant byte address 0x4 - core index']
  #allocation1 [shape = 'u32[144,128]{1,0:T(1,128)}', space=vmem, size = 0x12000, scoped, tag = 'internal scratch']
  %s0 = inlined_call_operand.vmem [shape: f32[3,32], index: 0, kind: input, shape index: {}]
  %s1 = inlined_call_operand.vmem [shape: f32[1,32], index: 1, kind: input, shape index: {}]
  %s2 = inlined_call_operand.vmem [shape: f32[1,32], index: 2, kind: input, shape index: {}]
  %s3 = inlined_call_operand.vmem [shape: f32[32,32], index: 3, kind: input, shape index: {}]
  %s4 = inlined_call_operand.vmem [shape: f32[3,32], index: 4, kind: output, shape index: {}]
  %s5 = sld [smem:[#allocation0]]
  $region26: #{_lambda_.22} parent=0
    _
  %s7 = ssub.s32 1, %s5
  %s8 = scalar_select 0, %s7, %s5
  // Predicated region
  $region2: #{_lambda_.22} parent=0 // pred_check
    _
  $region3: #{_lambda_.22} parent=0 // pred_check_branch
    %10 = sbr.rel (0) target = $region5
  $region4: #{_lambda_.22} parent=0 // pred_region
    _
  $region5: #{_lambda_.22} parent=0 // pred_fallthru
    _
  // Predicated region
  $region6: #{_lambda_.22} parent=0 // pred_check
    _
  $region7: #{_lambda_.22} parent=0 // pred_check_branch
    %12 = sbr.rel (0) target = $region9
  $region8: #{_lambda_.22} parent=0 // pred_region
    _
  $region9: #{_lambda_.22} parent=0 // pred_fallthru
    _
  // Predicated region
  $region10: #{_lambda_.22} parent=0 // pred_check
    _
  $region11: #{_lambda_.22} parent=0 // pred_check_branch
    %14 = sbr.rel (0) target = $region13
  $region12: #{_lambda_.22} parent=0 // pred_region
    _
  $region13: #{_lambda_.22} parent=0 // pred_fallthru
    _
  // Predicated region
  $region14: #{_lambda_.22} parent=0 // pred_check
    _
  $region15: #{_lambda_.22} parent=0 // pred_check_branch
    %16 = sbr.rel (0) target = $region17
  $region16: #{_lambda_.22} parent=0 // pred_region
    _
  $region17: #{_lambda_.22} parent=0 // pred_fallthru
    _
  %v18 = vld [vmem:[%s0] sm:$0x7]
  %v19 = vld [vmem:[%s1] sm:$0x1]
  %v20 = vld [vmem:[%s2] sm:$0x1]
  %vm21 = vcmask 256000
  %v22 = vsel %vm21, %v18, 0.0
  %23 = vadd.xlane.f32.xlu0 %v22
  %v24 = vpop.xlane.xlu0 %23
  %v25 = vrcp.pop 32.0
  %v26 = vmul.f32 %v24, %v25
  %v27 = vsub.f32 %v18, %v26
  %v28 = vmul.f32 %v27, %v27
  %v29 = vsel %vm21, %v28, 0.0
  %30 = vadd.xlane.f32.xlu0 %v29
  %v31 = vpop.xlane.xlu0 %30
  %v32 = vmul.f32 %v31, %v25
  %v33 = vadd.f32 %v32, 1e-05
  %v34 = vrsqrt.pop %v33
  %v35 = vmul.f32 %v27, %v34
  %v37 = vlaneseq
  %v38 = vshrl.u32 %v37, 7
  %v39 = vsub.s32 0, %v38
  %v40 = vrot.slane %v19, %v39
  %v42 = vmul.f32 %v35, %v40
  %v44 = vlaneseq
  %v45 = vshrl.u32 %v44, 7
  %v46 = vsub.s32 0, %v45
  %v47 = vrot.slane %v20, %v46
  %v49 = vadd.f32 %v42, %v47
  %v50 = vpack.c.bf16 %v49, %v49
  %v51 = vld [vmem:[%s3] sm:$0xff]
  %v52 = vld [vmem:[%s3 + $0x8] sm:$0xff]
  %v53 = vld [vmem:[%s3 + $0x10] sm:$0xff]
  %v54 = vld [vmem:[%s3 + $0x18] sm:$0xff]
  %v55 = vpack.c.bf16 %v52, %v51
  %v56 = vpack.c.bf16 %v54, %v53
  %vm57 = vcmask 261120
  %v59 = vsel %vm57, %v50, 0
  %61 = vmatprep.subr.bf16.mxu0 0
  %62 = vmatpush1.bf16.msra.mxu0 0
  %63 = vmatprep.subr.bf16.mxu0 0
  %64 = vmatpush1.bf16.msra.mxu0 0
  %65 = vmatprep.subr.bf16.mxu0 0
  %66 = vmatpush1.bf16.msra.mxu0 0
  %67 = vmatprep.subr.bf16.mxu0 0
  %68 = vmatpush1.bf16.msra.mxu0 0
  %69 = vmatprep.subr.bf16.mxu0 0
  %70 = vmatpush1.bf16.msra.mxu0 0
  %71 = vmatprep.subr.bf16.mxu0 0
  %72 = vmatpush1.bf16.msra.mxu0 0
  %73 = vmatprep.subr.bf16.mxu0 0
  %74 = vmatpush1.bf16.msra.mxu0 %v56
  %75 = vmatprep.subr.bf16.mxu0 0
  %76 = vmatpush1.bf16.msra.mxu0 %v55
  %77 = vmatprep.subr.bf16.mxu0 0
  %78 = vmatpush2.bf16.msra.mxu0 0
  %79 = vmatprep.subr.bf16.mxu0 0
  %80 = vmatpush2.bf16.msra.mxu0 0
  %81 = vmatprep.subr.bf16.mxu0 0
  %82 = vmatpush2.bf16.msra.mxu0 0
  %83 = vmatprep.subr.bf16.mxu0 0
  %84 = vmatpush2.bf16.msra.mxu0 0
  %85 = vmatprep.subr.bf16.mxu0 0
  %86 = vmatpush2.bf16.msra.mxu0 0
  %87 = vmatprep.subr.bf16.mxu0 0
  %88 = vmatpush2.bf16.msra.mxu0 0
  %89 = vmatprep.subr.bf16.mxu0 0
  %90 = vmatpush2.bf16.msra.mxu0 0
  %91 = vmatprep.subr.bf16.mxu0 0
  %92 = vmatpush2.bf16.msra.mxu0 0
  %93 = vmatprep.mubr.bf16.mxu0 0
  %94 = vmatmul.mubr.bf16.gmra.mxu0 %v59
  %v95 = vpop.f32.mrf.mxu0
  %v96 = vadd.f32 0.0, %v95
  %v97 = vpop.f32.mrf.mxu0
  %v98 = vpop.f32.mrf.mxu0
  %v99 = vpop.f32.mrf.mxu0
  %100 = vdwg.mxu0
  %101 = vst.msk [vmem:[%s4] sm:$0x7] %vm21, %v96
  // Predicated region
  $region18: #{_lambda_.22} parent=0 // pred_check
    _
  $region19: #{_lambda_.22} parent=0 // pred_check_branch
    %103 = sbr.rel (0) target = $region21
  $region20: #{_lambda_.22} parent=0 // pred_region
    _
  $region21: #{_lambda_.22} parent=0 // pred_fallthru
    _
  // Predicated region
  $region22: #{_lambda_.22} parent=0 // pred_check
    _
  $region23: #{_lambda_.22} parent=0 // pred_check_branch
    %105 = sbr.rel (0) target = $region25
  $region24: #{_lambda_.22} parent=0 // pred_region
    _
  $region25: #{_lambda_.22} parent=0 // pred_fallthru
    _

// kernel: _lambda_.23
$region0: #{_lambda_.23}
  #allocation0 [shape = 'u32[]', space=smem, size = 0x4, offset = 0x4, fixed_abs, tag = 'smem constant byte address 0x4 - core index']
  #allocation1 [shape = 'u32[144,128]{1,0:T(1,128)}', space=vmem, size = 0x12000, scoped, tag = 'internal scratch']
  #allocation2 [shape = 'f32[1,1]{1,0:T(1,128)S(6)}', space=smem, size = 0x200, scoped, tag = 'scoped memory for _lambda_.23']
  %s0 = inlined_call_operand.vmem [shape: f32[2,32], index: 0, kind: input, shape index: {}]
  %s1 = inlined_call_operand.vmem [shape: f32[3,32], index: 1, kind: input, shape index: {}]
  %s2 = inlined_call_operand.<no memory space> [shape: f32[1,1], index: 2, kind: input, shape index: {}]
  %s3 = inlined_call_operand.hbm [shape: f32[2,3], index: 3, kind: output, shape index: {}]
  %s4 = sld [smem:[#allocation0]]
  $region22: #{_lambda_.23} parent=0
    _
  %s6 = ssub.s32 1, %s4
  %s7 = scalar_select 0, %s6, %s4
  %8 = sst [smem:[#allocation2]] %s2
  $region1: #{_lambda_.23} parent=0
    #allocation3 [shape = 'u8[1024]{0}', space=vmem, size = 0x400, scoped, tag = 'output window, operand 0, single buffered']
    #allocation4 [shape = 's32[1]{0}', space=sflag, size = 0x4, scoped, tag = 'scoped memory for _lambda_.23']
    %9 = vsyncpa [#allocation4], 0
    // Predicated region
    $region2: #{_lambda_.23} parent=1 // pred_check
      _
    $region3: #{_lambda_.23} parent=1 // pred_check_branch
      %11 = sbr.rel (0) target = $region5
    $region4: #{_lambda_.23} parent=1 // pred_region
      _
    $region5: #{_lambda_.23} parent=1 // pred_fallthru
      _
    // Predicated region
    $region6: #{_lambda_.23} parent=1 // pred_check
      _
    $region7: #{_lambda_.23} parent=1 // pred_check_branch
      %13 = sbr.rel (0) target = $region9
    $region8: #{_lambda_.23} parent=1 // pred_region
      _
    $region9: #{_lambda_.23} parent=1 // pred_fallthru
      _
    // Predicated region
    $region10: #{_lambda_.23} parent=1 // pred_check
      _
    $region11: #{_lambda_.23} parent=1 // pred_check_branch
      %15 = sbr.rel (0) target = $region13
    $region12: #{_lambda_.23} parent=1 // pred_region
      _
    $region13: #{_lambda_.23} parent=1 // pred_fallthru
      _
    %v16 = vld [vmem:[%s0] sm:$0x3]
    %v17 = vld [vmem:[%s1] sm:$0x7]
    %v18 = vmul.f32 %v16, %v16
    %vm19 = vcmask 254976
    %v20 = vsel %vm19, %v18, 0.0
    %21 = vadd.xlane.f32.xlu0 %v20
    %v22 = vpop.xlane.xlu0 %21
    %v23 = vrsqrt.pop %v22
    %v24 = vmul.f32 %v16, %v23
    %v25 = vmul.f32 %v17, %v17
    %vm26 = vcmask 256000
    %v27 = vsel %vm26, %v25, 0.0
    %28 = vadd.xlane.f32.xlu0 %v27
    %v29 = vpop.xlane.xlu0 %28
    %v30 = vrsqrt.pop %v29
    %v31 = vmul.f32 %v17, %v30
    %s32 = sld [smem:[#allocation2]]
    %v33 = vstv %s32
    %v34 = vmul.f32 %v33, 1.442695
    %v35 = vpow.pop %v34
    %s36 = vtos %v35
    %vm37 = vcmask 261120
    %v39 = vsel %vm37, %v24, 0
    %v42 = vsel %vm37, %v31, 0
    %44 = vmatprep.subr.mxu0 0.0
    %45 = vmatpush1.xpose.msra.mxu0 0.0
    %46 = vmatprep.subr.mxu0 0.0
    %47 = vmatpush1.xpose.msra.mxu0 0.0
    %48 = vmatprep.subr.mxu0 0.0
    %49 = vmatpush1.xpose.msra.mxu0 0.0
    %50 = vmatprep.subr.mxu0 0.0
    %51 = vmatpush1.xpose.msra.mxu0 0.0
    %52 = vmatprep.subr.mxu0 0.0
    %53 = vmatpush1.xpose.msra.mxu0 0.0
    %54 = vmatprep.subr.mxu0 0.0
    %55 = vmatpush1.xpose.msra.mxu0 0.0
    %56 = vmatprep.subr.mxu0 0.0
    %57 = vmatpush1.xpose.msra.mxu0 0.0
    %58 = vmatprep.subr.mxu0 0.0
    %59 = vmatpush1.xpose.msra.mxu0 0.0
    %60 = vmatprep.subr.mxu0 0.0
    %61 = vmatpush1.xpose.msra.mxu0 0.0
    %62 = vmatprep.subr.mxu0 0.0
    %63 = vmatpush1.xpose.msra.mxu0 0.0
    %64 = vmatprep.subr.mxu0 0.0
    %65 = vmatpush1.xpose.msra.mxu0 0.0
    %66 = vmatprep.subr.mxu0 0.0
    %67 = vmatpush1.xpose.msra.mxu0 0.0
    %68 = vmatprep.subr.mxu0 0.0
    %69 = vmatpush1.xpose.msra.mxu0 0.0
    %70 = vmatprep.subr.mxu0 0.0
    %71 = vmatpush1.xpose.msra.mxu0 0.0
    %72 = vmatprep.subr.mxu0 0.0
    %73 = vmatpush1.xpose.msra.mxu0 0.0
    %74 = vmatprep.subr.mxu0 0.0
    %75 = vmatpush1.xpose.msra.mxu0 %v42
    %76 = vmatprep.subr.mxu0 0.0
    %77 = vmatpush2.xpose.msra.mxu0 0.0
    %78 = vmatprep.subr.mxu0 0.0
    %79 = vmatpush2.xpose.msra.mxu0 0.0
    %80 = vmatprep.subr.mxu0 0.0
    %81 = vmatpush2.xpose.msra.mxu0 0.0
    %82 = vmatprep.subr.mxu0 0.0
    %83 = vmatpush2.xpose.msra.mxu0 0.0
    %84 = vmatprep.subr.mxu0 0.0
    %85 = vmatpush2.xpose.msra.mxu0 0.0
    %86 = vmatprep.subr.mxu0 0.0
    %87 = vmatpush2.xpose.msra.mxu0 0.0
    %88 = vmatprep.subr.mxu0 0.0
    %89 = vmatpush2.xpose.msra.mxu0 0.0
    %90 = vmatprep.subr.mxu0 0.0
    %91 = vmatpush2.xpose.msra.mxu0 0.0
    %92 = vmatprep.subr.mxu0 0.0
    %93 = vmatpush2.xpose.msra.mxu0 0.0
    %94 = vmatprep.subr.mxu0 0.0
    %95 = vmatpush2.xpose.msra.mxu0 0.0
    %96 = vmatprep.subr.mxu0 0.0
    %97 = vmatpush2.xpose.msra.mxu0 0.0
    %98 = vmatprep.subr.mxu0 0.0
    %99 = vmatpush2.xpose.msra.mxu0 0.0
    %100 = vmatprep.subr.mxu0 0.0
    %101 = vmatpush2.xpose.msra.mxu0 0.0
    %102 = vmatprep.subr.mxu0 0.0
    %103 = vmatpush2.xpose.msra.mxu0 0.0
    %104 = vmatprep.subr.mxu0 0.0
    %105 = vmatpush2.xpose.msra.mxu0 0.0
    %106 = vmatprep.subr.mxu0 0.0
    %107 = vmatpush2.xpose.msra.mxu0 0.0
    %108 = vmatprep.mubr.f32.mxu0 0.0
    %109 = vmatmul.mubr.f32.gmra.mxu0 %v39
    %v110 = vpop.f32.mrf.mxu0
    %v111 = vadd.f32 0.0, %v110
    %v112 = vpop.f32.mrf.mxu0
    %113 = vdwg.mxu0
    %v114 = vstv %s36
    %v115 = vmul.f32 %v114, %v111
    %vm116 = vcmask 17408
    %117 = vst.msk [vmem:[#allocation3] sm:$0x3] %vm116, %v115
    // Predicated region
    $region14: #{_lambda_.23} parent=1 // pred_check
      _
    $region15: #{_lambda_.23} parent=1 // pred_check_branch
      %119 = sbr.rel (0) target = $region17
    $region16: #{_lambda_.23} parent=1 // pred_region
      %s121 = ssub.s32 32, 32
      %122 = vsyncadd [#allocation4], %s121
      %s124 = sshll.u32 [#allocation3], 4
      %s125 = int_to_ptr.vmem [resolvable:$true] %s124
      %127 = dma.vmem_to_hbm [thread:$0]  %s125, 32, %s3, [#allocation4]
    $region17: #{_lambda_.23} parent=1 // pred_fallthru
      _
    // Predicated region
    $region18: #{_lambda_.23} parent=1 // pred_check
      _
    $region19: #{_lambda_.23} parent=1 // pred_check_branch
      %129 = sbr.rel (0) target = $region21
    $region20: #{_lambda_.23} parent=1 // pred_region
      %130 = dma.done [#allocation4], 32
    $region21: #{_lambda_.23} parent=1 // pred_fallthru
      _
    %131 = vsyncpa [#allocation4], 1

</llo_original>
